<compile_context>
chip_gen: v5e
topology: v5e:2x2
jax: 0.10.0
libtpu: 0.0.40
codegen_flags: <defaults>
</compile_context>

<pallas_src>
import functools
import string

import jax
import jax.numpy as jnp
from jax.experimental import pallas as pl
from jax.experimental.pallas import tpu as pltpu

HIDDEN_DIM = 128
NUM_CLASSES = len(string.ascii_letters + string.digits)  # 62
LSTM_INPUT = 1344  # = 64 channels * 21 rows after the conv/pool stack


# ----------------------------- Pallas kernels -----------------------------
def _conv_pool_kernel(p_ref, w_ref, b_ref, o_ref, *, cout):
    """Fused conv3x3 + bias + ReLU + maxpool2x2 as ONE parity-wide GEMM + max.

    p_ref: (TM, 16*Cin)        bf16  4x4 input patches of each pooled pixel
    w_ref: (16*Cin, 4*Cout)    bf16  conv weights, 4 pool parities along N
    b_ref: (1, Cout)           f32
    o_ref: (TM, Cout)          bf16
    """
    acc = jnp.dot(p_ref[...], w_ref[...],
                  preferred_element_type=jnp.float32)          # (TM, 4*Cout)
    m = jnp.maximum(
        jnp.maximum(acc[:, 0:cout], acc[:, cout:2 * cout]),
        jnp.maximum(acc[:, 2 * cout:3 * cout], acc[:, 3 * cout:4 * cout]))
    # max(relu(x_p + b)) == relu(max_p(x_p) + b)  (ReLU is monotone)
    o_ref[...] = jnp.maximum(m + b_ref[...], 0.0).astype(o_ref.dtype)


def _pick_grid(m):
    """(num_tiles, tile_m).  Split big M evenly in two (v7x megacore balance),
    otherwise keep one whole-array tile (best on single-TC v5e/v6e)."""
    if m >= 1024 and m % 16 == 0:
        return 2, m // 2
    return 1, m


def conv_pool(patches, w4, bias, *, cout):
    m, k = patches.shape
    ntiles, tm = _pick_grid(m)
    kernel = functools.partial(_conv_pool_kernel, cout=cout)
    return pl.pallas_call(
        kernel,
        out_shape=jax.ShapeDtypeStruct((m, cout), jnp.bfloat16),
        grid=(ntiles,),
        in_specs=[
            pl.BlockSpec((tm, k), lambda i: (i, 0)),
            pl.BlockSpec((k, 4 * cout), lambda i: (0, 0)),
            pl.BlockSpec((1, cout), lambda i: (0, 0)),
        ],
        out_specs=pl.BlockSpec((tm, cout), lambda i: (i, 0)),
        compiler_params=pltpu.CompilerParams(dimension_semantics=("parallel",)),
    )(patches, w4, bias)


def _lstm_fused_kernel(x_ref, wih1_ref, b1_ref, whh1_ref, w2_ref, b2_ref,
                       fcw_ref, fcb_ref, out_ref, *, hidden, T, B):
    """Whole LSTM stack + final Linear in one kernel invocation (grid=(1,)).

    x_ref   : (T*B, 1344) bf16   time-major sequence (rows ordered (t, b))
    wih1_ref: (1344, 512) bf16   layer-1 Wih^T
    whh1_ref: (128, 512)  bf16   layer-1 Whh^T
    w2_ref  : (256, 512)  bf16   layer-2 [Wih^T; Whh^T]
    fcw_ref : (128, 62)   bf16   fc W^T
    b*_ref  : f32 biases
    out_ref : (B, T, 62)  f32
    """
    # Prologue: input-to-hidden GEMM (K=1344) for ALL timesteps at once.
    gx1 = jnp.dot(x_ref[...], wih1_ref[...],
                  preferred_element_type=jnp.float32) + b1_ref[...]  # (T*B, 4H)

    whh1 = whh1_ref[...]
    w2 = w2_ref[...]
    b2 = b2_ref[...]
    fcw = fcw_ref[...]
    fcb = fcb_ref[...]

    def cell(gates, c_prev):
        # PyTorch gate order: i, f, g, o.  Gate / state math in f32.
        i = jax.nn.sigmoid(gates[:, 0:hidden])
        f = jax.nn.sigmoid(gates[:, hidden:2 * hidden])
        g = jnp.tanh(gates[:, 2 * hidden:3 * hidden])
        o = jax.nn.sigmoid(gates[:, 3 * hidden:4 * hidden])
        c_new = f * c_prev + i * g
        return o * jnp.tanh(c_new), c_new

    h1 = jnp.zeros((B, hidden), jnp.float32)
    c1 = jnp.zeros((B, hidden), jnp.float32)
    h2 = jnp.zeros((B, hidden), jnp.float32)
    c2 = jnp.zeros((B, hidden), jnp.float32)

    # NOTE: the recurrence is inherently serial; it runs inside a single grid
    # step (grid=(1,)), statically unrolled, so there is no risk of a parallel
    # grid axis breaking it.
    for t in range(T):
        # Layer 1: only the (B,128)@(128,512) recurrent dot is per-step.
        gates1 = gx1[t * B:(t + 1) * B, :] + jnp.dot(
            h1.astype(jnp.bfloat16), whh1, preferred_element_type=jnp.float32)
        h1, c1 = cell(gates1, c1)

        # Layer 2: single fused MXU push on [h1_t, h2_{t-1}].
        hcat = jnp.concatenate(
            [h1.astype(jnp.bfloat16), h2.astype(jnp.bfloat16)], axis=1)
        gates2 = jnp.dot(hcat, w2, preferred_element_type=jnp.float32) + b2
        h2, c2 = cell(gates2, c2)

        # Fused final Linear (128 -> 62); write straight into (B, T, 62).
        logits = (jnp.dot(h2.astype(jnp.bfloat16), fcw,
                          preferred_element_type=jnp.float32) + fcb)
        out_ref[:, t, :] = logits.astype(out_ref.dtype)


def lstm2_fc(x_tb, wih1_t, b1, whh1_t, w2cat, b2, fcw_t, fcb,
             *, hidden, nclass, T, B):
    feat = x_tb.shape[1]
    G = 4 * hidden
    kernel = functools.partial(_lstm_fused_kernel, hidden=hidden, T=T, B=B)
    return pl.pallas_call(
        kernel,
        out_shape=jax.ShapeDtypeStruct((B, T, nclass), jnp.float32),
        grid=(1,),
        in_specs=[
            pl.BlockSpec((T * B, feat), lambda i: (0, 0)),
            pl.BlockSpec((feat, G), lambda i: (0, 0)),
            pl.BlockSpec((1, G), lambda i: (0, 0)),
            pl.BlockSpec((hidden, G), lambda i: (0, 0)),
            pl.BlockSpec((2 * hidden, G), lambda i: (0, 0)),
            pl.BlockSpec((1, G), lambda i: (0, 0)),
            pl.BlockSpec((hidden, nclass), lambda i: (0, 0)),
            pl.BlockSpec((1, nclass), lambda i: (0, 0)),
        ],
        out_specs=pl.BlockSpec((B, T, nclass), lambda i: (0, 0, 0)),
        compiler_params=pltpu.CompilerParams(dimension_semantics=("arbitrary",)),
    )(x_tb, wih1_t, b1, whh1_t, w2cat, b2, fcw_t, fcb)


# ------------------------------- JAX glue ---------------------------------
def _pool_patches(x_nhwc, hp, wp):
    """4x4 input window (stride 2) of every pooled-output pixel.

    x_nhwc: (B, H, W, C) -> (B*hp*wp, 16*C); K order = (di*4 + dj)*C + cin.
    """
    b = x_nhwc.shape[0]
    c = x_nhwc.shape[3]
    slabs = []
    for di in range(4):
        for dj in range(4):
            slabs.append(x_nhwc[:, di:di + 2 * hp:2, dj:dj + 2 * wp:2, :])
    p = jnp.stack(slabs, axis=3)               # (B, hp, wp, 16, C)
    return p.reshape(b * hp * wp, 16 * c)


def _fused_conv_pool_weight(w):
    """(Cout, Cin, 3, 3) torch conv weight -> (16*Cin, 4*Cout).

    Parity p = ph*2+pw occupies N columns [p*Cout, (p+1)*Cout) and holds the
    3x3 kernel placed at offset (ph, pw) inside a 4x4 window, matching
    _pool_patches' (di, dj, cin) K ordering.
    """
    cout, cin = w.shape[0], w.shape[1]
    mats = []
    for ph in range(2):
        for pw in range(2):
            wp = jnp.pad(w, ((0, 0), (0, 0), (ph, 1 - ph), (pw, 1 - pw)))
            mats.append(wp.transpose(2, 3, 1, 0).reshape(16 * cin, cout))
    return jnp.concatenate(mats, axis=1)       # (16*Cin, 4*Cout)


def init_params(key):
    ks = jax.random.split(key, 14)
    s = 0.05
    p = {}
    p["conv1_w"] = s * jax.random.normal(ks[0], (32, 1, 3, 3), jnp.float32)
    p["conv1_b"] = s * jax.random.normal(ks[1], (32,), jnp.float32)
    p["conv2_w"] = s * jax.random.normal(ks[2], (64, 32, 3, 3), jnp.float32)
    p["conv2_b"] = s * jax.random.normal(ks[3], (64,), jnp.float32)
    p["lstm0_wih"] = s * jax.random.normal(ks[4], (4 * HIDDEN_DIM, LSTM_INPUT), jnp.float32)
    p["lstm0_whh"] = s * jax.random.normal(ks[5], (4 * HIDDEN_DIM, HIDDEN_DIM), jnp.float32)
    p["lstm0_bih"] = s * jax.random.normal(ks[6], (4 * HIDDEN_DIM,), jnp.float32)
    p["lstm0_bhh"] = s * jax.random.normal(ks[7], (4 * HIDDEN_DIM,), jnp.float32)
    p["lstm1_wih"] = s * jax.random.normal(ks[8], (4 * HIDDEN_DIM, HIDDEN_DIM), jnp.float32)
    p["lstm1_whh"] = s * jax.random.normal(ks[9], (4 * HIDDEN_DIM, HIDDEN_DIM), jnp.float32)
    p["lstm1_bih"] = s * jax.random.normal(ks[10], (4 * HIDDEN_DIM,), jnp.float32)
    p["lstm1_bhh"] = s * jax.random.normal(ks[11], (4 * HIDDEN_DIM,), jnp.float32)
    p["fc_w"] = s * jax.random.normal(ks[12], (NUM_CLASSES, HIDDEN_DIM), jnp.float32)
    p["fc_b"] = s * jax.random.normal(ks[13], (NUM_CLASSES,), jnp.float32)
    return p


def net_forward(params, x):
    bf16 = jnp.bfloat16
    B, _, H, W = x.shape

    # ---- conv1 -> ReLU -> pool: one fused Pallas kernel -------------------
    hp1, wp1 = (H - 2) // 2, (W - 2) // 2
    x_nhwc = x.transpose(0, 2, 3, 1).astype(bf16)                  # (B, H, W, 1)
    w1 = _fused_conv_pool_weight(params["conv1_w"]).astype(bf16)   # (16, 128)
    p1 = conv_pool(_pool_patches(x_nhwc, hp1, wp1), w1,
                   params["conv1_b"].reshape(1, -1), cout=32)      # bf16
    p1 = p1.reshape(B, hp1, wp1, 32)                               # NHWC

    # ---- conv2 -> ReLU -> pool: one fused Pallas kernel -------------------
    hp2, wp2 = (hp1 - 2) // 2, (wp1 - 2) // 2
    w2 = _fused_conv_pool_weight(params["conv2_w"]).astype(bf16)   # (512, 256)
    p2 = conv_pool(_pool_patches(p1, hp2, wp2), w2,
                   params["conv2_b"].reshape(1, -1), cout=64)      # bf16
    p2 = p2.reshape(B, hp2, wp2, 64)                               # NHWC

    # ---- torch: x.view(B, W, C*H) is a raw reshape of the NCHW buffer -----
    feat = 64 * hp2
    T = wp2
    assert feat == LSTM_INPUT, (feat, LSTM_INPUT)
    y_nchw = p2.transpose(0, 3, 1, 2)                 # (B, 64, hp2, wp2)
    seq = y_nchw.reshape(B, T, feat)                  # == torch .view
    x_tb = seq.transpose(1, 0, 2).reshape(T * B, feat)  # time-major, bf16

    # ---- single fused kernel: LSTM layer 1 + layer 2 + final Linear -------
    wih1_t = params["lstm0_wih"].T.astype(bf16)                    # (1344, 512)
    b1 = (params["lstm0_bih"] + params["lstm0_bhh"]).reshape(1, -1)
    whh1_t = params["lstm0_whh"].T.astype(bf16)                    # (128, 512)
    w2cat = jnp.concatenate(
        [params["lstm1_wih"].T, params["lstm1_whh"].T], axis=0).astype(bf16)
    b2 = (params["lstm1_bih"] + params["lstm1_bhh"]).reshape(1, -1)
    fcw_t = params["fc_w"].T.astype(bf16)                          # (128, 62)
    fcb = params["fc_b"].reshape(1, -1)
    return lstm2_fc(x_tb, wih1_t, b1, whh1_t, w2cat, b2, fcw_t, fcb,
                    hidden=HIDDEN_DIM, nclass=NUM_CLASSES, T=T, B=B)  # (B,T,62)


if __name__ == "__main__":
    key = jax.random.PRNGKey(0)
    pkey, xkey = jax.random.split(key)
    params = init_params(pkey)
    # Input height must give post-conv/pool height 21 so that 64*21 == 1344
    # (the LSTM input_size fixed in __init__): ((90-2)//2 - 2)//2 == 21.
    # Width 26 -> sequence length 5.
    x = jax.random.normal(xkey, (2, 1, 90, 26), jnp.float32)
    out = jax.jit(net_forward)(params, x)
    out = jax.block_until_ready(out)
    assert out.shape == (2, 5, NUM_CLASSES), out.shape
    print("KERNEL_OK")
</pallas_src>

<mosaic_0001>
module attributes {stable_mosaic.version = 11 : i64} {
  func.func @_conv_pool_kernel(%arg0: i32, %arg1: memref<528x16xbf16, #tpu.memory_space<vmem>>, %arg2: memref<16x128xbf16, #tpu.memory_space<vmem>>, %arg3: memref<1x32xf32, #tpu.memory_space<vmem>>, %arg4: memref<528x32xbf16, #tpu.memory_space<vmem>>) attributes {dimension_semantics = [#tpu.dimension_semantics<parallel>], iteration_bounds = array<i64: 2>, scalar_prefetch = 0 : i64, scratch_operands = 0 : i64, tpu.core_type = #tpu.core_type<tc>, window_params = [{transform_indices = @transform_0, window_bounds = array<i64: 528, 16>}, {pipeline_mode = #tpu.pipeline_mode<synchronous>, transform_indices = @transform_1, window_bounds = array<i64: 16, 128>}, {pipeline_mode = #tpu.pipeline_mode<synchronous>, transform_indices = @transform_2, window_bounds = array<i64: 1, 32>}, {transform_indices = @transform_3, window_bounds = array<i64: 528, 32>}]} {
    %c0 = arith.constant 0 : index
    %c0_0 = arith.constant 0 : index
    %0 = vector.load %arg1[%c0, %c0_0] : memref<528x16xbf16, #tpu.memory_space<vmem>>, vector<528x16xbf16>
    %c0_1 = arith.constant 0 : index
    %c0_2 = arith.constant 0 : index
    %1 = vector.load %arg2[%c0_1, %c0_2] : memref<16x128xbf16, #tpu.memory_space<vmem>>, vector<16x128xbf16>
    %cst = arith.constant dense<0.000000e+00> : vector<528x128xf32>
    %2 = tpu.matmul %0, %1, %cst {dimension_numbers = #tpu.dot_dimension_numbers<[1], [0], [0], [1], [0, 0, 1, 1], [], []>} : vector<528x16xbf16>, vector<16x128xbf16>, vector<528x128xf32> -> vector<528x128xf32>
    %3 = vector.extract_strided_slice %2 {offsets = [0, 0], sizes = [528, 32], strides = [1, 1]} : vector<528x128xf32> to vector<528x32xf32>
    %4 = vector.extract_strided_slice %2 {offsets = [0, 32], sizes = [528, 32], strides = [1, 1]} : vector<528x128xf32> to vector<528x32xf32>
    %5 = arith.maximumf %3, %4 : vector<528x32xf32>
    %6 = vector.extract_strided_slice %2 {offsets = [0, 64], sizes = [528, 32], strides = [1, 1]} : vector<528x128xf32> to vector<528x32xf32>
    %7 = vector.extract_strided_slice %2 {offsets = [0, 96], sizes = [528, 32], strides = [1, 1]} : vector<528x128xf32> to vector<528x32xf32>
    %8 = arith.maximumf %6, %7 : vector<528x32xf32>
    %9 = arith.maximumf %5, %8 : vector<528x32xf32>
    %c0_3 = arith.constant 0 : index
    %c0_4 = arith.constant 0 : index
    %10 = vector.load %arg3[%c0_3, %c0_4] : memref<1x32xf32, #tpu.memory_space<vmem>>, vector<1x32xf32>
    %11 = vector.broadcast %10 : vector<1x32xf32> to vector<528x32xf32>
    %12 = arith.addf %9, %11 : vector<528x32xf32>
    %cst_5 = arith.constant 0.000000e+00 : f32
    %13 = vector.broadcast %cst_5 : f32 to vector<528x32xf32>
    %14 = arith.maximumf %12, %13 : vector<528x32xf32>
    %15 = arith.truncf %14 : vector<528x32xf32> to vector<528x32xbf16>
    %c0_6 = arith.constant 0 : index
    %c0_7 = arith.constant 0 : index
    %16 = vector.load %arg4[%c0_6, %c0_7] : memref<528x32xbf16, #tpu.memory_space<vmem>>, vector<528x32xbf16>
    tpu.vector_store %arg4[%c0_6, %c0_7], %15 {strides = array<i32>} : memref<528x32xbf16, #tpu.memory_space<vmem>>, vector<528x32xbf16>,
    return
  }
  func.func @transform_0(%arg0: i32) -> (i32, i32) {
    %c0_i32 = arith.constant 0 : i32
    %c0_i32_0 = arith.constant 0 : i32
    return %arg0, %c0_i32 : i32, i32
  }
  func.func @transform_1(%arg0: i32) -> (i32, i32) {
    %c0_i32 = arith.constant 0 : i32
    %c0_i32_0 = arith.constant 0 : i32
    %c0_i32_1 = arith.constant 0 : i32
    return %c0_i32, %c0_i32_0 : i32, i32
  }
  func.func @transform_2(%arg0: i32) -> (i32, i32) {
    %c0_i32 = arith.constant 0 : i32
    %c0_i32_0 = arith.constant 0 : i32
    %c0_i32_1 = arith.constant 0 : i32
    return %c0_i32, %c0_i32_0 : i32, i32
  }
  func.func @transform_3(%arg0: i32) -> (i32, i32) {
    %c0_i32 = arith.constant 0 : i32
    %c0_i32_0 = arith.constant 0 : i32
    return %arg0, %c0_i32 : i32, i32
  }
}

module attributes {stable_mosaic.version = 11 : i64} {
  func.func @_conv_pool_kernel(%arg0: i32, %arg1: memref<210x512xbf16, #tpu.memory_space<vmem>>, %arg2: memref<512x256xbf16, #tpu.memory_space<vmem>>, %arg3: memref<1x64xf32, #tpu.memory_space<vmem>>, %arg4: memref<210x64xbf16, #tpu.memory_space<vmem>>) attributes {dimension_semantics = [#tpu.dimension_semantics<parallel>], iteration_bounds = array<i64: 1>, scalar_prefetch = 0 : i64, scratch_operands = 0 : i64, tpu.core_type = #tpu.core_type<tc>, window_params = [{transform_indices = @transform_0, window_bounds = array<i64: 210, 512>}, {pipeline_mode = #tpu.pipeline_mode<synchronous>, transform_indices = @transform_1, window_bounds = array<i64: 512, 256>}, {pipeline_mode = #tpu.pipeline_mode<synchronous>, transform_indices = @transform_2, window_bounds = array<i64: 1, 64>}, {transform_indices = @transform_3, window_bounds = array<i64: 210, 64>}]} {
    %c0 = arith.constant 0 : index
    %c0_0 = arith.constant 0 : index
    %0 = vector.load %arg1[%c0, %c0_0] : memref<210x512xbf16, #tpu.memory_space<vmem>>, vector<210x512xbf16>
    %c0_1 = arith.constant 0 : index
    %c0_2 = arith.constant 0 : index
    %1 = vector.load %arg2[%c0_1, %c0_2] : memref<512x256xbf16, #tpu.memory_space<vmem>>, vector<512x256xbf16>
    %cst = arith.constant dense<0.000000e+00> : vector<210x256xf32>
    %2 = tpu.matmul %0, %1, %cst {dimension_numbers = #tpu.dot_dimension_numbers<[1], [0], [0], [1], [0, 0, 1, 1], [], []>} : vector<210x512xbf16>, vector<512x256xbf16>, vector<210x256xf32> -> vector<210x256xf32>
    %3 = vector.extract_strided_slice %2 {offsets = [0, 0], sizes = [210, 64], strides = [1, 1]} : vector<210x256xf32> to vector<210x64xf32>
    %4 = vector.extract_strided_slice %2 {offsets = [0, 64], sizes = [210, 64], strides = [1, 1]} : vector<210x256xf32> to vector<210x64xf32>
    %5 = arith.maximumf %3, %4 : vector<210x64xf32>
    %6 = vector.extract_strided_slice %2 {offsets = [0, 128], sizes = [210, 64], strides = [1, 1]} : vector<210x256xf32> to vector<210x64xf32>
    %7 = vector.extract_strided_slice %2 {offsets = [0, 192], sizes = [210, 64], strides = [1, 1]} : vector<210x256xf32> to vector<210x64xf32>
    %8 = arith.maximumf %6, %7 : vector<210x64xf32>
    %9 = arith.maximumf %5, %8 : vector<210x64xf32>
    %c0_3 = arith.constant 0 : index
    %c0_4 = arith.constant 0 : index
    %10 = vector.load %arg3[%c0_3, %c0_4] : memref<1x64xf32, #tpu.memory_space<vmem>>, vector<1x64xf32>
    %11 = vector.broadcast %10 : vector<1x64xf32> to vector<210x64xf32>
    %12 = arith.addf %9, %11 : vector<210x64xf32>
    %cst_5 = arith.constant 0.000000e+00 : f32
    %13 = vector.broadcast %cst_5 : f32 to vector<210x64xf32>
    %14 = arith.maximumf %12, %13 : vector<210x64xf32>
    %15 = arith.truncf %14 : vector<210x64xf32> to vector<210x64xbf16>
    %c0_6 = arith.constant 0 : index
    %c0_7 = arith.constant 0 : index
    %16 = vector.load %arg4[%c0_6, %c0_7] : memref<210x64xbf16, #tpu.memory_space<vmem>>, vector<210x64xbf16>
    tpu.vector_store %arg4[%c0_6, %c0_7], %15 {strides = array<i32>} : memref<210x64xbf16, #tpu.memory_space<vmem>>, vector<210x64xbf16>,
    return
  }
  func.func @transform_0(%arg0: i32) -> (i32, i32) {
    %c0_i32 = arith.constant 0 : i32
    %c0_i32_0 = arith.constant 0 : i32
    return %arg0, %c0_i32 : i32, i32
  }
  func.func @transform_1(%arg0: i32) -> (i32, i32) {
    %c0_i32 = arith.constant 0 : i32
    %c0_i32_0 = arith.constant 0 : i32
    %c0_i32_1 = arith.constant 0 : i32
    return %c0_i32, %c0_i32_0 : i32, i32
  }
  func.func @transform_2(%arg0: i32) -> (i32, i32) {
    %c0_i32 = arith.constant 0 : i32
    %c0_i32_0 = arith.constant 0 : i32
    %c0_i32_1 = arith.constant 0 : i32
    return %c0_i32, %c0_i32_0 : i32, i32
  }
  func.func @transform_3(%arg0: i32) -> (i32, i32) {
    %c0_i32 = arith.constant 0 : i32
    %c0_i32_0 = arith.constant 0 : i32
    return %arg0, %c0_i32 : i32, i32
  }
}

module attributes {stable_mosaic.version = 11 : i64} {
  func.func @_lstm_fused_kernel(%arg0: i32, %arg1: memref<10x1344xbf16, #tpu.memory_space<vmem>>, %arg2: memref<1344x512xbf16, #tpu.memory_space<vmem>>, %arg3: memref<1x512xf32, #tpu.memory_space<vmem>>, %arg4: memref<128x512xbf16, #tpu.memory_space<vmem>>, %arg5: memref<256x512xbf16, #tpu.memory_space<vmem>>, %arg6: memref<1x512xf32, #tpu.memory_space<vmem>>, %arg7: memref<128x62xbf16, #tpu.memory_space<vmem>>, %arg8: memref<1x62xf32, #tpu.memory_space<vmem>>, %arg9: memref<2x5x62xf32, #tpu.memory_space<vmem>>) attributes {dimension_semantics = [#tpu.dimension_semantics<arbitrary>], iteration_bounds = array<i64: 1>, scalar_prefetch = 0 : i64, scratch_operands = 0 : i64, tpu.core_type = #tpu.core_type<tc>, window_params = [{pipeline_mode = #tpu.pipeline_mode<synchronous>, transform_indices = @transform_0, window_bounds = array<i64: 10, 1344>}, {pipeline_mode = #tpu.pipeline_mode<synchronous>, transform_indices = @transform_1, window_bounds = array<i64: 1344, 512>}, {pipeline_mode = #tpu.pipeline_mode<synchronous>, transform_indices = @transform_2, window_bounds = array<i64: 1, 512>}, {pipeline_mode = #tpu.pipeline_mode<synchronous>, transform_indices = @transform_3, window_bounds = array<i64: 128, 512>}, {pipeline_mode = #tpu.pipeline_mode<synchronous>, transform_indices = @transform_4, window_bounds = array<i64: 256, 512>}, {pipeline_mode = #tpu.pipeline_mode<synchronous>, transform_indices = @transform_5, window_bounds = array<i64: 1, 512>}, {pipeline_mode = #tpu.pipeline_mode<synchronous>, transform_indices = @transform_6, window_bounds = array<i64: 128, 62>}, {pipeline_mode = #tpu.pipeline_mode<synchronous>, transform_indices = @transform_7, window_bounds = array<i64: 1, 62>}, {pipeline_mode = #tpu.pipeline_mode<synchronous>, transform_indices = @transform_8, window_bounds = array<i64: 2, 5, 62>}]} {
    %c0 = arith.constant 0 : index
    %c0_0 = arith.constant 0 : index
    %0 = vector.load %arg1[%c0, %c0_0] : memref<10x1344xbf16, #tpu.memory_space<vmem>>, vector<10x1344xbf16>
    %c0_1 = arith.constant 0 : index
    %c0_2 = arith.constant 0 : index
    %1 = vector.load %arg2[%c0_1, %c0_2] : memref<1344x512xbf16, #tpu.memory_space<vmem>>, vector<1344x512xbf16>
    %cst = arith.constant dense<0.000000e+00> : vector<10x512xf32>
    %2 = tpu.matmul %0, %1, %cst {dimension_numbers = #tpu.dot_dimension_numbers<[1], [0], [0], [1], [0, 0, 1, 1], [], []>} : vector<10x1344xbf16>, vector<1344x512xbf16>, vector<10x512xf32> -> vector<10x512xf32>
    %c0_3 = arith.constant 0 : index
    %c0_4 = arith.constant 0 : index
    %3 = vector.load %arg3[%c0_3, %c0_4] : memref<1x512xf32, #tpu.memory_space<vmem>>, vector<1x512xf32>
    %4 = vector.broadcast %3 : vector<1x512xf32> to vector<10x512xf32>
    %5 = arith.addf %2, %4 : vector<10x512xf32>
    %c0_5 = arith.constant 0 : index
    %c0_6 = arith.constant 0 : index
    %6 = vector.load %arg4[%c0_5, %c0_6] : memref<128x512xbf16, #tpu.memory_space<vmem>>, vector<128x512xbf16>
    %c0_7 = arith.constant 0 : index
    %c0_8 = arith.constant 0 : index
    %7 = vector.load %arg5[%c0_7, %c0_8] : memref<256x512xbf16, #tpu.memory_space<vmem>>, vector<256x512xbf16>
    %c0_9 = arith.constant 0 : index
    %c0_10 = arith.constant 0 : index
    %8 = vector.load %arg6[%c0_9, %c0_10] : memref<1x512xf32, #tpu.memory_space<vmem>>, vector<1x512xf32>
    %c0_11 = arith.constant 0 : index
    %c0_12 = arith.constant 0 : index
    %9 = vector.load %arg7[%c0_11, %c0_12] : memref<128x62xbf16, #tpu.memory_space<vmem>>, vector<128x62xbf16>
    %c0_13 = arith.constant 0 : index
    %c0_14 = arith.constant 0 : index
    %10 = vector.load %arg8[%c0_13, %c0_14] : memref<1x62xf32, #tpu.memory_space<vmem>>, vector<1x62xf32>
    %cst_15 = arith.constant 0.000000e+00 : f32
    %11 = vector.broadcast %cst_15 : f32 to vector<2x128xf32>
    %cst_16 = arith.constant 0.000000e+00 : f32
    %12 = vector.broadcast %cst_16 : f32 to vector<2x128xf32>
    %cst_17 = arith.constant 0.000000e+00 : f32
    %13 = vector.broadcast %cst_17 : f32 to vector<2x128xf32>
    %cst_18 = arith.constant 0.000000e+00 : f32
    %14 = vector.broadcast %cst_18 : f32 to vector<2x128xf32>
    %15 = vector.extract_strided_slice %5 {offsets = [0, 0], sizes = [2, 512], strides = [1, 1]} : vector<10x512xf32> to vector<2x512xf32>
    %16 = arith.truncf %11 : vector<2x128xf32> to vector<2x128xbf16>
    %cst_19 = arith.constant dense<0.000000e+00> : vector<2x512xf32>
    %17 = tpu.matmul %16, %6, %cst_19 {dimension_numbers = #tpu.dot_dimension_numbers<[1], [0], [0], [1], [0, 0, 1, 1], [], []>} : vector<2x128xbf16>, vector<128x512xbf16>, vector<2x512xf32> -> vector<2x512xf32>
    %18 = arith.addf %15, %17 : vector<2x512xf32>
    %19 = vector.extract_strided_slice %18 {offsets = [0, 0], sizes = [2, 128], strides = [1, 1]} : vector<2x512xf32> to vector<2x128xf32>
    %20 = arith.negf %19 : vector<2x128xf32>
    %21 = math.exp %20 : vector<2x128xf32>
    %cst_20 = arith.constant 1.000000e+00 : f32
    %22 = vector.broadcast %cst_20 : f32 to vector<2x128xf32>
    %23 = arith.addf %22, %21 : vector<2x128xf32>
    %24 = arith.divf %22, %23 : vector<2x128xf32>
    %25 = vector.extract_strided_slice %18 {offsets = [0, 128], sizes = [2, 128], strides = [1, 1]} : vector<2x512xf32> to vector<2x128xf32>
    %26 = arith.negf %25 : vector<2x128xf32>
    %27 = math.exp %26 : vector<2x128xf32>
    %cst_21 = arith.constant 1.000000e+00 : f32
    %28 = vector.broadcast %cst_21 : f32 to vector<2x128xf32>
    %29 = arith.addf %28, %27 : vector<2x128xf32>
    %30 = arith.divf %28, %29 : vector<2x128xf32>
    %31 = vector.extract_strided_slice %18 {offsets = [0, 256], sizes = [2, 128], strides = [1, 1]} : vector<2x512xf32> to vector<2x128xf32>
    %32 = math.tanh %31 : vector<2x128xf32>
    %33 = vector.extract_strided_slice %18 {offsets = [0, 384], sizes = [2, 128], strides = [1, 1]} : vector<2x512xf32> to vector<2x128xf32>
    %34 = arith.negf %33 : vector<2x128xf32>
    %35 = math.exp %34 : vector<2x128xf32>
    %cst_22 = arith.constant 1.000000e+00 : f32
    %36 = vector.broadcast %cst_22 : f32 to vector<2x128xf32>
    %37 = arith.addf %36, %35 : vector<2x128xf32>
    %38 = arith.divf %36, %37 : vector<2x128xf32>
    %39 = arith.mulf %30, %12 : vector<2x128xf32>
    %40 = arith.mulf %24, %32 : vector<2x128xf32>
    %41 = arith.addf %39, %40 : vector<2x128xf32>
    %42 = math.tanh %41 : vector<2x128xf32>
    %43 = arith.mulf %38, %42 : vector<2x128xf32>
    %44 = arith.truncf %43 : vector<2x128xf32> to vector<2x128xbf16>
    %45 = arith.truncf %13 : vector<2x128xf32> to vector<2x128xbf16>
    %46 = tpu.concatenate %44, %45 in 1 : vector<2x128xbf16>, vector<2x128xbf16> -> vector<2x256xbf16>
    %cst_23 = arith.constant dense<0.000000e+00> : vector<2x512xf32>
    %47 = tpu.matmul %46, %7, %cst_23 {dimension_numbers = #tpu.dot_dimension_numbers<[1], [0], [0], [1], [0, 0, 1, 1], [], []>} : vector<2x256xbf16>, vector<256x512xbf16>, vector<2x512xf32> -> vector<2x512xf32>
    %48 = vector.broadcast %8 : vector<1x512xf32> to vector<2x512xf32>
    %49 = arith.addf %47, %48 : vector<2x512xf32>
    %50 = vector.extract_strided_slice %49 {offsets = [0, 0], sizes = [2, 128], strides = [1, 1]} : vector<2x512xf32> to vector<2x128xf32>
    %51 = arith.negf %50 : vector<2x128xf32>
    %52 = math.exp %51 : vector<2x128xf32>
    %cst_24 = arith.constant 1.000000e+00 : f32
    %53 = vector.broadcast %cst_24 : f32 to vector<2x128xf32>
    %54 = arith.addf %53, %52 : vector<2x128xf32>
    %55 = arith.divf %53, %54 : vector<2x128xf32>
    %56 = vector.extract_strided_slice %49 {offsets = [0, 128], sizes = [2, 128], strides = [1, 1]} : vector<2x512xf32> to vector<2x128xf32>
    %57 = arith.negf %56 : vector<2x128xf32>
    %58 = math.exp %57 : vector<2x128xf32>
    %cst_25 = arith.constant 1.000000e+00 : f32
    %59 = vector.broadcast %cst_25 : f32 to vector<2x128xf32>
    %60 = arith.addf %59, %58 : vector<2x128xf32>
    %61 = arith.divf %59, %60 : vector<2x128xf32>
    %62 = vector.extract_strided_slice %49 {offsets = [0, 256], sizes = [2, 128], strides = [1, 1]} : vector<2x512xf32> to vector<2x128xf32>
    %63 = math.tanh %62 : vector<2x128xf32>
    %64 = vector.extract_strided_slice %49 {offsets = [0, 384], sizes = [2, 128], strides = [1, 1]} : vector<2x512xf32> to vector<2x128xf32>
    %65 = arith.negf %64 : vector<2x128xf32>
    %66 = math.exp %65 : vector<2x128xf32>
    %cst_26 = arith.constant 1.000000e+00 : f32
    %67 = vector.broadcast %cst_26 : f32 to vector<2x128xf32>
    %68 = arith.addf %67, %66 : vector<2x128xf32>
    %69 = arith.divf %67, %68 : vector<2x128xf32>
    %70 = arith.mulf %61, %14 : vector<2x128xf32>
    %71 = arith.mulf %55, %63 : vector<2x128xf32>
    %72 = arith.addf %70, %71 : vector<2x128xf32>
    %73 = math.tanh %72 : vector<2x128xf32>
    %74 = arith.mulf %69, %73 : vector<2x128xf32>
    %75 = arith.truncf %74 : vector<2x128xf32> to vector<2x128xbf16>
    %cst_27 = arith.constant dense<0.000000e+00> : vector<2x62xf32>
    %76 = tpu.matmul %75, %9, %cst_27 {dimension_numbers = #tpu.dot_dimension_numbers<[1], [0], [0], [1], [0, 0, 1, 1], [], []>} : vector<2x128xbf16>, vector<128x62xbf16>, vector<2x62xf32> -> vector<2x62xf32>
    %77 = vector.broadcast %10 : vector<1x62xf32> to vector<2x62xf32>
    %78 = arith.addf %76, %77 : vector<2x62xf32>
    %c0_28 = arith.constant 0 : index
    %c0_29 = arith.constant 0 : index
    %c0_30 = arith.constant 0 : index
    %79 = vector.load %arg9[%c0_28, %c0_29, %c0_30] : memref<2x5x62xf32, #tpu.memory_space<vmem>>, vector<2x1x62xf32>
    %80 = vector.shape_cast %79 : vector<2x1x62xf32> to vector<2x62xf32>
    %81 = vector.shape_cast %78 : vector<2x62xf32> to vector<2x1x62xf32>
    tpu.vector_store %arg9[%c0_28, %c0_29, %c0_30], %81 {strides = array<i32>} : memref<2x5x62xf32, #tpu.memory_space<vmem>>, vector<2x1x62xf32>,
    %82 = vector.extract_strided_slice %5 {offsets = [2, 0], sizes = [2, 512], strides = [1, 1]} : vector<10x512xf32> to vector<2x512xf32>
    %83 = arith.truncf %43 : vector<2x128xf32> to vector<2x128xbf16>
    %cst_31 = arith.constant dense<0.000000e+00> : vector<2x512xf32>
    %84 = tpu.matmul %83, %6, %cst_31 {dimension_numbers = #tpu.dot_dimension_numbers<[1], [0], [0], [1], [0, 0, 1, 1], [], []>} : vector<2x128xbf16>, vector<128x512xbf16>, vector<2x512xf32> -> vector<2x512xf32>
    %85 = arith.addf %82, %84 : vector<2x512xf32>
    %86 = vector.extract_strided_slice %85 {offsets = [0, 0], sizes = [2, 128], strides = [1, 1]} : vector<2x512xf32> to vector<2x128xf32>
    %87 = arith.negf %86 : vector<2x128xf32>
    %88 = math.exp %87 : vector<2x128xf32>
    %cst_32 = arith.constant 1.000000e+00 : f32
    %89 = vector.broadcast %cst_32 : f32 to vector<2x128xf32>
    %90 = arith.addf %89, %88 : vector<2x128xf32>
    %91 = arith.divf %89, %90 : vector<2x128xf32>
    %92 = vector.extract_strided_slice %85 {offsets = [0, 128], sizes = [2, 128], strides = [1, 1]} : vector<2x512xf32> to vector<2x128xf32>
    %93 = arith.negf %92 : vector<2x128xf32>
    %94 = math.exp %93 : vector<2x128xf32>
    %cst_33 = arith.constant 1.000000e+00 : f32
    %95 = vector.broadcast %cst_33 : f32 to vector<2x128xf32>
    %96 = arith.addf %95, %94 : vector<2x128xf32>
    %97 = arith.divf %95, %96 : vector<2x128xf32>
    %98 = vector.extract_strided_slice %85 {offsets = [0, 256], sizes = [2, 128], strides = [1, 1]} : vector<2x512xf32> to vector<2x128xf32>
    %99 = math.tanh %98 : vector<2x128xf32>
    %100 = vector.extract_strided_slice %85 {offsets = [0, 384], sizes = [2, 128], strides = [1, 1]} : vector<2x512xf32> to vector<2x128xf32>
    %101 = arith.negf %100 : vector<2x128xf32>
    %102 = math.exp %101 : vector<2x128xf32>
    %cst_34 = arith.constant 1.000000e+00 : f32
    %103 = vector.broadcast %cst_34 : f32 to vector<2x128xf32>
    %104 = arith.addf %103, %102 : vector<2x128xf32>
    %105 = arith.divf %103, %104 : vector<2x128xf32>
    %106 = arith.mulf %97, %41 : vector<2x128xf32>
    %107 = arith.mulf %91, %99 : vector<2x128xf32>
    %108 = arith.addf %106, %107 : vector<2x128xf32>
    %109 = math.tanh %108 : vector<2x128xf32>
    %110 = arith.mulf %105, %109 : vector<2x128xf32>
    %111 = arith.truncf %110 : vector<2x128xf32> to vector<2x128xbf16>
    %112 = arith.truncf %74 : vector<2x128xf32> to vector<2x128xbf16>
    %113 = tpu.concatenate %111, %112 in 1 : vector<2x128xbf16>, vector<2x128xbf16> -> vector<2x256xbf16>
    %cst_35 = arith.constant dense<0.000000e+00> : vector<2x512xf32>
    %114 = tpu.matmul %113, %7, %cst_35 {dimension_numbers = #tpu.dot_dimension_numbers<[1], [0], [0], [1], [0, 0, 1, 1], [], []>} : vector<2x256xbf16>, vector<256x512xbf16>, vector<2x512xf32> -> vector<2x512xf32>
    %115 = vector.broadcast %8 : vector<1x512xf32> to vector<2x512xf32>
    %116 = arith.addf %114, %115 : vector<2x512xf32>
    %117 = vector.extract_strided_slice %116 {offsets = [0, 0], sizes = [2, 128], strides = [1, 1]} : vector<2x512xf32> to vector<2x128xf32>
    %118 = arith.negf %117 : vector<2x128xf32>
    %119 = math.exp %118 : vector<2x128xf32>
    %cst_36 = arith.constant 1.000000e+00 : f32
    %120 = vector.broadcast %cst_36 : f32 to vector<2x128xf32>
    %121 = arith.addf %120, %119 : vector<2x128xf32>
    %122 = arith.divf %120, %121 : vector<2x128xf32>
    %123 = vector.extract_strided_slice %116 {offsets = [0, 128], sizes = [2, 128], strides = [1, 1]} : vector<2x512xf32> to vector<2x128xf32>
    %124 = arith.negf %123 : vector<2x128xf32>
    %125 = math.exp %124 : vector<2x128xf32>
    %cst_37 = arith.constant 1.000000e+00 : f32
    %126 = vector.broadcast %cst_37 : f32 to vector<2x128xf32>
    %127 = arith.addf %126, %125 : vector<2x128xf32>
    %128 = arith.divf %126, %127 : vector<2x128xf32>
    %129 = vector.extract_strided_slice %116 {offsets = [0, 256], sizes = [2, 128], strides = [1, 1]} : vector<2x512xf32> to vector<2x128xf32>
    %130 = math.tanh %129 : vector<2x128xf32>
    %131 = vector.extract_strided_slice %116 {offsets = [0, 384], sizes = [2, 128], strides = [1, 1]} : vector<2x512xf32> to vector<2x128xf32>
    %132 = arith.negf %131 : vector<2x128xf32>
    %133 = math.exp %132 : vector<2x128xf32>
    %cst_38 = arith.constant 1.000000e+00 : f32
    %134 = vector.broadcast %cst_38 : f32 to vector<2x128xf32>
    %135 = arith.addf %134, %133 : vector<2x128xf32>
    %136 = arith.divf %134, %135 : vector<2x128xf32>
    %137 = arith.mulf %128, %72 : vector<2x128xf32>
    %138 = arith.mulf %122, %130 : vector<2x128xf32>
    %139 = arith.addf %137, %138 : vector<2x128xf32>
    %140 = math.tanh %139 : vector<2x128xf32>
    %141 = arith.mulf %136, %140 : vector<2x128xf32>
    %142 = arith.truncf %141 : vector<2x128xf32> to vector<2x128xbf16>
    %cst_39 = arith.constant dense<0.000000e+00> : vector<2x62xf32>
    %143 = tpu.matmul %142, %9, %cst_39 {dimension_numbers = #tpu.dot_dimension_numbers<[1], [0], [0], [1], [0, 0, 1, 1], [], []>} : vector<2x128xbf16>, vector<128x62xbf16>, vector<2x62xf32> -> vector<2x62xf32>
    %144 = vector.broadcast %10 : vector<1x62xf32> to vector<2x62xf32>
    %145 = arith.addf %143, %144 : vector<2x62xf32>
    %c0_40 = arith.constant 0 : index
    %c1 = arith.constant 1 : index
    %c0_41 = arith.constant 0 : index
    %146 = vector.load %arg9[%c0_40, %c1, %c0_41] : memref<2x5x62xf32, #tpu.memory_space<vmem>>, vector<2x1x62xf32>
    %147 = vector.shape_cast %146 : vector<2x1x62xf32> to vector<2x62xf32>
    %148 = vector.shape_cast %145 : vector<2x62xf32> to vector<2x1x62xf32>
    tpu.vector_store %arg9[%c0_40, %c1, %c0_41], %148 {strides = array<i32>} : memref<2x5x62xf32, #tpu.memory_space<vmem>>, vector<2x1x62xf32>,
    %149 = vector.extract_strided_slice %5 {offsets = [4, 0], sizes = [2, 512], strides = [1, 1]} : vector<10x512xf32> to vector<2x512xf32>
    %150 = arith.truncf %110 : vector<2x128xf32> to vector<2x128xbf16>
    %cst_42 = arith.constant dense<0.000000e+00> : vector<2x512xf32>
    %151 = tpu.matmul %150, %6, %cst_42 {dimension_numbers = #tpu.dot_dimension_numbers<[1], [0], [0], [1], [0, 0, 1, 1], [], []>} : vector<2x128xbf16>, vector<128x512xbf16>, vector<2x512xf32> -> vector<2x512xf32>
    %152 = arith.addf %149, %151 : vector<2x512xf32>
    %153 = vector.extract_strided_slice %152 {offsets = [0, 0], sizes = [2, 128], strides = [1, 1]} : vector<2x512xf32> to vector<2x128xf32>
    %154 = arith.negf %153 : vector<2x128xf32>
    %155 = math.exp %154 : vector<2x128xf32>
    %cst_43 = arith.constant 1.000000e+00 : f32
    %156 = vector.broadcast %cst_43 : f32 to vector<2x128xf32>
    %157 = arith.addf %156, %155 : vector<2x128xf32>
    %158 = arith.divf %156, %157 : vector<2x128xf32>
    %159 = vector.extract_strided_slice %152 {offsets = [0, 128], sizes = [2, 128], strides = [1, 1]} : vector<2x512xf32> to vector<2x128xf32>
    %160 = arith.negf %159 : vector<2x128xf32>
    %161 = math.exp %160 : vector<2x128xf32>
    %cst_44 = arith.constant 1.000000e+00 : f32
    %162 = vector.broadcast %cst_44 : f32 to vector<2x128xf32>
    %163 = arith.addf %162, %161 : vector<2x128xf32>
    %164 = arith.divf %162, %163 : vector<2x128xf32>
    %165 = vector.extract_strided_slice %152 {offsets = [0, 256], sizes = [2, 128], strides = [1, 1]} : vector<2x512xf32> to vector<2x128xf32>
    %166 = math.tanh %165 : vector<2x128xf32>
    %167 = vector.extract_strided_slice %152 {offsets = [0, 384], sizes = [2, 128], strides = [1, 1]} : vector<2x512xf32> to vector<2x128xf32>
    %168 = arith.negf %167 : vector<2x128xf32>
    %169 = math.exp %168 : vector<2x128xf32>
    %cst_45 = arith.constant 1.000000e+00 : f32
    %170 = vector.broadcast %cst_45 : f32 to vector<2x128xf32>
    %171 = arith.addf %170, %169 : vector<2x128xf32>
    %172 = arith.divf %170, %171 : vector<2x128xf32>
    %173 = arith.mulf %164, %108 : vector<2x128xf32>
    %174 = arith.mulf %158, %166 : vector<2x128xf32>
    %175 = arith.addf %173, %174 : vector<2x128xf32>
    %176 = math.tanh %175 : vector<2x128xf32>
    %177 = arith.mulf %172, %176 : vector<2x128xf32>
    %178 = arith.truncf %177 : vector<2x128xf32> to vector<2x128xbf16>
    %179 = arith.truncf %141 : vector<2x128xf32> to vector<2x128xbf16>
    %180 = tpu.concatenate %178, %179 in 1 : vector<2x128xbf16>, vector<2x128xbf16> -> vector<2x256xbf16>
    %cst_46 = arith.constant dense<0.000000e+00> : vector<2x512xf32>
    %181 = tpu.matmul %180, %7, %cst_46 {dimension_numbers = #tpu.dot_dimension_numbers<[1], [0], [0], [1], [0, 0, 1, 1], [], []>} : vector<2x256xbf16>, vector<256x512xbf16>, vector<2x512xf32> -> vector<2x512xf32>
    %182 = vector.broadcast %8 : vector<1x512xf32> to vector<2x512xf32>
    %183 = arith.addf %181, %182 : vector<2x512xf32>
    %184 = vector.extract_strided_slice %183 {offsets = [0, 0], sizes = [2, 128], strides = [1, 1]} : vector<2x512xf32> to vector<2x128xf32>
    %185 = arith.negf %184 : vector<2x128xf32>
    %186 = math.exp %185 : vector<2x128xf32>
    %cst_47 = arith.constant 1.000000e+00 : f32
    %187 = vector.broadcast %cst_47 : f32 to vector<2x128xf32>
    %188 = arith.addf %187, %186 : vector<2x128xf32>
    %189 = arith.divf %187, %188 : vector<2x128xf32>
    %190 = vector.extract_strided_slice %183 {offsets = [0, 128], sizes = [2, 128], strides = [1, 1]} : vector<2x512xf32> to vector<2x128xf32>
    %191 = arith.negf %190 : vector<2x128xf32>
    %192 = math.exp %191 : vector<2x128xf32>
    %cst_48 = arith.constant 1.000000e+00 : f32
    %193 = vector.broadcast %cst_48 : f32 to vector<2x128xf32>
    %194 = arith.addf %193, %192 : vector<2x128xf32>
    %195 = arith.divf %193, %194 : vector<2x128xf32>
    %196 = vector.extract_strided_slice %183 {offsets = [0, 256], sizes = [2, 128], strides = [1, 1]} : vector<2x512xf32> to vector<2x128xf32>
    %197 = math.tanh %196 : vector<2x128xf32>
    %198 = vector.extract_strided_slice %183 {offsets = [0, 384], sizes = [2, 128], strides = [1, 1]} : vector<2x512xf32> to vector<2x128xf32>
    %199 = arith.negf %198 : vector<2x128xf32>
    %200 = math.exp %199 : vector<2x128xf32>
    %cst_49 = arith.constant 1.000000e+00 : f32
    %201 = vector.broadcast %cst_49 : f32 to vector<2x128xf32>
    %202 = arith.addf %201, %200 : vector<2x128xf32>
    %203 = arith.divf %201, %202 : vector<2x128xf32>
    %204 = arith.mulf %195, %139 : vector<2x128xf32>
    %205 = arith.mulf %189, %197 : vector<2x128xf32>
    %206 = arith.addf %204, %205 : vector<2x128xf32>
    %207 = math.tanh %206 : vector<2x128xf32>
    %208 = arith.mulf %203, %207 : vector<2x128xf32>
    %209 = arith.truncf %208 : vector<2x128xf32> to vector<2x128xbf16>
    %cst_50 = arith.constant dense<0.000000e+00> : vector<2x62xf32>
    %210 = tpu.matmul %209, %9, %cst_50 {dimension_numbers = #tpu.dot_dimension_numbers<[1], [0], [0], [1], [0, 0, 1, 1], [], []>} : vector<2x128xbf16>, vector<128x62xbf16>, vector<2x62xf32> -> vector<2x62xf32>
    %211 = vector.broadcast %10 : vector<1x62xf32> to vector<2x62xf32>
    %212 = arith.addf %210, %211 : vector<2x62xf32>
    %c0_51 = arith.constant 0 : index
    %c2 = arith.constant 2 : index
    %c0_52 = arith.constant 0 : index
    %213 = vector.load %arg9[%c0_51, %c2, %c0_52] : memref<2x5x62xf32, #tpu.memory_space<vmem>>, vector<2x1x62xf32>
    %214 = vector.shape_cast %213 : vector<2x1x62xf32> to vector<2x62xf32>
    %215 = vector.shape_cast %212 : vector<2x62xf32> to vector<2x1x62xf32>
    tpu.vector_store %arg9[%c0_51, %c2, %c0_52], %215 {strides = array<i32>} : memref<2x5x62xf32, #tpu.memory_space<vmem>>, vector<2x1x62xf32>,
    %216 = vector.extract_strided_slice %5 {offsets = [6, 0], sizes = [2, 512], strides = [1, 1]} : vector<10x512xf32> to vector<2x512xf32>
    %217 = arith.truncf %177 : vector<2x128xf32> to vector<2x128xbf16>
    %cst_53 = arith.constant dense<0.000000e+00> : vector<2x512xf32>
    %218 = tpu.matmul %217, %6, %cst_53 {dimension_numbers = #tpu.dot_dimension_numbers<[1], [0], [0], [1], [0, 0, 1, 1], [], []>} : vector<2x128xbf16>, vector<128x512xbf16>, vector<2x512xf32> -> vector<2x512xf32>
    %219 = arith.addf %216, %218 : vector<2x512xf32>
    %220 = vector.extract_strided_slice %219 {offsets = [0, 0], sizes = [2, 128], strides = [1, 1]} : vector<2x512xf32> to vector<2x128xf32>
    %221 = arith.negf %220 : vector<2x128xf32>
    %222 = math.exp %221 : vector<2x128xf32>
    %cst_54 = arith.constant 1.000000e+00 : f32
    %223 = vector.broadcast %cst_54 : f32 to vector<2x128xf32>
    %224 = arith.addf %223, %222 : vector<2x128xf32>
    %225 = arith.divf %223, %224 : vector<2x128xf32>
    %226 = vector.extract_strided_slice %219 {offsets = [0, 128], sizes = [2, 128], strides = [1, 1]} : vector<2x512xf32> to vector<2x128xf32>
    %227 = arith.negf %226 : vector<2x128xf32>
    %228 = math.exp %227 : vector<2x128xf32>
    %cst_55 = arith.constant 1.000000e+00 : f32
    %229 = vector.broadcast %cst_55 : f32 to vector<2x128xf32>
    %230 = arith.addf %229, %228 : vector<2x128xf32>
    %231 = arith.divf %229, %230 : vector<2x128xf32>
    %232 = vector.extract_strided_slice %219 {offsets = [0, 256], sizes = [2, 128], strides = [1, 1]} : vector<2x512xf32> to vector<2x128xf32>
    %233 = math.tanh %232 : vector<2x128xf32>
    %234 = vector.extract_strided_slice %219 {offsets = [0, 384], sizes = [2, 128], strides = [1, 1]} : vector<2x512xf32> to vector<2x128xf32>
    %235 = arith.negf %234 : vector<2x128xf32>
    %236 = math.exp %235 : vector<2x128xf32>
    %cst_56 = arith.constant 1.000000e+00 : f32
    %237 = vector.broadcast %cst_56 : f32 to vector<2x128xf32>
    %238 = arith.addf %237, %236 : vector<2x128xf32>
    %239 = arith.divf %237, %238 : vector<2x128xf32>
    %240 = arith.mulf %231, %175 : vector<2x128xf32>
    %241 = arith.mulf %225, %233 : vector<2x128xf32>
    %242 = arith.addf %240, %241 : vector<2x128xf32>
    %243 = math.tanh %242 : vector<2x128xf32>
    %244 = arith.mulf %239, %243 : vector<2x128xf32>
    %245 = arith.truncf %244 : vector<2x128xf32> to vector<2x128xbf16>
    %246 = arith.truncf %208 : vector<2x128xf32> to vector<2x128xbf16>
    %247 = tpu.concatenate %245, %246 in 1 : vector<2x128xbf16>, vector<2x128xbf16> -> vector<2x256xbf16>
    %cst_57 = arith.constant dense<0.000000e+00> : vector<2x512xf32>
    %248 = tpu.matmul %247, %7, %cst_57 {dimension_numbers = #tpu.dot_dimension_numbers<[1], [0], [0], [1], [0, 0, 1, 1], [], []>} : vector<2x256xbf16>, vector<256x512xbf16>, vector<2x512xf32> -> vector<2x512xf32>
    %249 = vector.broadcast %8 : vector<1x512xf32> to vector<2x512xf32>
    %250 = arith.addf %248, %249 : vector<2x512xf32>
    %251 = vector.extract_strided_slice %250 {offsets = [0, 0], sizes = [2, 128], strides = [1, 1]} : vector<2x512xf32> to vector<2x128xf32>
    %252 = arith.negf %251 : vector<2x128xf32>
    %253 = math.exp %252 : vector<2x128xf32>
    %cst_58 = arith.constant 1.000000e+00 : f32
    %254 = vector.broadcast %cst_58 : f32 to vector<2x128xf32>
    %255 = arith.addf %254, %253 : vector<2x128xf32>
    %256 = arith.divf %254, %255 : vector<2x128xf32>
    %257 = vector.extract_strided_slice %250 {offsets = [0, 128], sizes = [2, 128], strides = [1, 1]} : vector<2x512xf32> to vector<2x128xf32>
    %258 = arith.negf %257 : vector<2x128xf32>
    %259 = math.exp %258 : vector<2x128xf32>
    %cst_59 = arith.constant 1.000000e+00 : f32
    %260 = vector.broadcast %cst_59 : f32 to vector<2x128xf32>
    %261 = arith.addf %260, %259 : vector<2x128xf32>
    %262 = arith.divf %260, %261 : vector<2x128xf32>
    %263 = vector.extract_strided_slice %250 {offsets = [0, 256], sizes = [2, 128], strides = [1, 1]} : vector<2x512xf32> to vector<2x128xf32>
    %264 = math.tanh %263 : vector<2x128xf32>
    %265 = vector.extract_strided_slice %250 {offsets = [0, 384], sizes = [2, 128], strides = [1, 1]} : vector<2x512xf32> to vector<2x128xf32>
    %266 = arith.negf %265 : vector<2x128xf32>
    %267 = math.exp %266 : vector<2x128xf32>
    %cst_60 = arith.constant 1.000000e+00 : f32
    %268 = vector.broadcast %cst_60 : f32 to vector<2x128xf32>
    %269 = arith.addf %268, %267 : vector<2x128xf32>
    %270 = arith.divf %268, %269 : vector<2x128xf32>
    %271 = arith.mulf %262, %206 : vector<2x128xf32>
    %272 = arith.mulf %256, %264 : vector<2x128xf32>
    %273 = arith.addf %271, %272 : vector<2x128xf32>
    %274 = math.tanh %273 : vector<2x128xf32>
    %275 = arith.mulf %270, %274 : vector<2x128xf32>
    %276 = arith.truncf %275 : vector<2x128xf32> to vector<2x128xbf16>
    %cst_61 = arith.constant dense<0.000000e+00> : vector<2x62xf32>
    %277 = tpu.matmul %276, %9, %cst_61 {dimension_numbers = #tpu.dot_dimension_numbers<[1], [0], [0], [1], [0, 0, 1, 1], [], []>} : vector<2x128xbf16>, vector<128x62xbf16>, vector<2x62xf32> -> vector<2x62xf32>
    %278 = vector.broadcast %10 : vector<1x62xf32> to vector<2x62xf32>
    %279 = arith.addf %277, %278 : vector<2x62xf32>
    %c0_62 = arith.constant 0 : index
    %c3 = arith.constant 3 : index
    %c0_63 = arith.constant 0 : index
    %280 = vector.load %arg9[%c0_62, %c3, %c0_63] : memref<2x5x62xf32, #tpu.memory_space<vmem>>, vector<2x1x62xf32>
    %281 = vector.shape_cast %280 : vector<2x1x62xf32> to vector<2x62xf32>
    %282 = vector.shape_cast %279 : vector<2x62xf32> to vector<2x1x62xf32>
    tpu.vector_store %arg9[%c0_62, %c3, %c0_63], %282 {strides = array<i32>} : memref<2x5x62xf32, #tpu.memory_space<vmem>>, vector<2x1x62xf32>,
    %283 = vector.extract_strided_slice %5 {offsets = [8, 0], sizes = [2, 512], strides = [1, 1]} : vector<10x512xf32> to vector<2x512xf32>
    %284 = arith.truncf %244 : vector<2x128xf32> to vector<2x128xbf16>
    %cst_64 = arith.constant dense<0.000000e+00> : vector<2x512xf32>
    %285 = tpu.matmul %284, %6, %cst_64 {dimension_numbers = #tpu.dot_dimension_numbers<[1], [0], [0], [1], [0, 0, 1, 1], [], []>} : vector<2x128xbf16>, vector<128x512xbf16>, vector<2x512xf32> -> vector<2x512xf32>
    %286 = arith.addf %283, %285 : vector<2x512xf32>
    %287 = vector.extract_strided_slice %286 {offsets = [0, 0], sizes = [2, 128], strides = [1, 1]} : vector<2x512xf32> to vector<2x128xf32>
    %288 = arith.negf %287 : vector<2x128xf32>
    %289 = math.exp %288 : vector<2x128xf32>
    %cst_65 = arith.constant 1.000000e+00 : f32
    %290 = vector.broadcast %cst_65 : f32 to vector<2x128xf32>
    %291 = arith.addf %290, %289 : vector<2x128xf32>
    %292 = arith.divf %290, %291 : vector<2x128xf32>
    %293 = vector.extract_strided_slice %286 {offsets = [0, 128], sizes = [2, 128], strides = [1, 1]} : vector<2x512xf32> to vector<2x128xf32>
    %294 = arith.negf %293 : vector<2x128xf32>
    %295 = math.exp %294 : vector<2x128xf32>
    %cst_66 = arith.constant 1.000000e+00 : f32
    %296 = vector.broadcast %cst_66 : f32 to vector<2x128xf32>
    %297 = arith.addf %296, %295 : vector<2x128xf32>
    %298 = arith.divf %296, %297 : vector<2x128xf32>
    %299 = vector.extract_strided_slice %286 {offsets = [0, 256], sizes = [2, 128], strides = [1, 1]} : vector<2x512xf32> to vector<2x128xf32>
    %300 = math.tanh %299 : vector<2x128xf32>
    %301 = vector.extract_strided_slice %286 {offsets = [0, 384], sizes = [2, 128], strides = [1, 1]} : vector<2x512xf32> to vector<2x128xf32>
    %302 = arith.negf %301 : vector<2x128xf32>
    %303 = math.exp %302 : vector<2x128xf32>
    %cst_67 = arith.constant 1.000000e+00 : f32
    %304 = vector.broadcast %cst_67 : f32 to vector<2x128xf32>
    %305 = arith.addf %304, %303 : vector<2x128xf32>
    %306 = arith.divf %304, %305 : vector<2x128xf32>
    %307 = arith.mulf %298, %242 : vector<2x128xf32>
    %308 = arith.mulf %292, %300 : vector<2x128xf32>
    %309 = arith.addf %307, %308 : vector<2x128xf32>
    %310 = math.tanh %309 : vector<2x128xf32>
    %311 = arith.mulf %306, %310 : vector<2x128xf32>
    %312 = arith.truncf %311 : vector<2x128xf32> to vector<2x128xbf16>
    %313 = arith.truncf %275 : vector<2x128xf32> to vector<2x128xbf16>
    %314 = tpu.concatenate %312, %313 in 1 : vector<2x128xbf16>, vector<2x128xbf16> -> vector<2x256xbf16>
    %cst_68 = arith.constant dense<0.000000e+00> : vector<2x512xf32>
    %315 = tpu.matmul %314, %7, %cst_68 {dimension_numbers = #tpu.dot_dimension_numbers<[1], [0], [0], [1], [0, 0, 1, 1], [], []>} : vector<2x256xbf16>, vector<256x512xbf16>, vector<2x512xf32> -> vector<2x512xf32>
    %316 = vector.broadcast %8 : vector<1x512xf32> to vector<2x512xf32>
    %317 = arith.addf %315, %316 : vector<2x512xf32>
    %318 = vector.extract_strided_slice %317 {offsets = [0, 0], sizes = [2, 128], strides = [1, 1]} : vector<2x512xf32> to vector<2x128xf32>
    %319 = arith.negf %318 : vector<2x128xf32>
    %320 = math.exp %319 : vector<2x128xf32>
    %cst_69 = arith.constant 1.000000e+00 : f32
    %321 = vector.broadcast %cst_69 : f32 to vector<2x128xf32>
    %322 = arith.addf %321, %320 : vector<2x128xf32>
    %323 = arith.divf %321, %322 : vector<2x128xf32>
    %324 = vector.extract_strided_slice %317 {offsets = [0, 128], sizes = [2, 128], strides = [1, 1]} : vector<2x512xf32> to vector<2x128xf32>
    %325 = arith.negf %324 : vector<2x128xf32>
    %326 = math.exp %325 : vector<2x128xf32>
    %cst_70 = arith.constant 1.000000e+00 : f32
    %327 = vector.broadcast %cst_70 : f32 to vector<2x128xf32>
    %328 = arith.addf %327, %326 : vector<2x128xf32>
    %329 = arith.divf %327, %328 : vector<2x128xf32>
    %330 = vector.extract_strided_slice %317 {offsets = [0, 256], sizes = [2, 128], strides = [1, 1]} : vector<2x512xf32> to vector<2x128xf32>
    %331 = math.tanh %330 : vector<2x128xf32>
    %332 = vector.extract_strided_slice %317 {offsets = [0, 384], sizes = [2, 128], strides = [1, 1]} : vector<2x512xf32> to vector<2x128xf32>
    %333 = arith.negf %332 : vector<2x128xf32>
    %334 = math.exp %333 : vector<2x128xf32>
    %cst_71 = arith.constant 1.000000e+00 : f32
    %335 = vector.broadcast %cst_71 : f32 to vector<2x128xf32>
    %336 = arith.addf %335, %334 : vector<2x128xf32>
    %337 = arith.divf %335, %336 : vector<2x128xf32>
    %338 = arith.mulf %329, %273 : vector<2x128xf32>
    %339 = arith.mulf %323, %331 : vector<2x128xf32>
    %340 = arith.addf %338, %339 : vector<2x128xf32>
    %341 = math.tanh %340 : vector<2x128xf32>
    %342 = arith.mulf %337, %341 : vector<2x128xf32>
    %343 = arith.truncf %342 : vector<2x128xf32> to vector<2x128xbf16>
    %cst_72 = arith.constant dense<0.000000e+00> : vector<2x62xf32>
    %344 = tpu.matmul %343, %9, %cst_72 {dimension_numbers = #tpu.dot_dimension_numbers<[1], [0], [0], [1], [0, 0, 1, 1], [], []>} : vector<2x128xbf16>, vector<128x62xbf16>, vector<2x62xf32> -> vector<2x62xf32>
    %345 = vector.broadcast %10 : vector<1x62xf32> to vector<2x62xf32>
    %346 = arith.addf %344, %345 : vector<2x62xf32>
    %c0_73 = arith.constant 0 : index
    %c4 = arith.constant 4 : index
    %c0_74 = arith.constant 0 : index
    %347 = vector.load %arg9[%c0_73, %c4, %c0_74] : memref<2x5x62xf32, #tpu.memory_space<vmem>>, vector<2x1x62xf32>
    %348 = vector.shape_cast %347 : vector<2x1x62xf32> to vector<2x62xf32>
    %349 = vector.shape_cast %346 : vector<2x62xf32> to vector<2x1x62xf32>
    tpu.vector_store %arg9[%c0_73, %c4, %c0_74], %349 {strides = array<i32>} : memref<2x5x62xf32, #tpu.memory_space<vmem>>, vector<2x1x62xf32>,
    return
  }
  func.func @transform_0(%arg0: i32) -> (i32, i32) {
    %c0_i32 = arith.constant 0 : i32
    %c0_i32_0 = arith.constant 0 : i32
    %c0_i32_1 = arith.constant 0 : i32
    return %c0_i32, %c0_i32_0 : i32, i32
  }
  func.func @transform_1(%arg0: i32) -> (i32, i32) {
    %c0_i32 = arith.constant 0 : i32
    %c0_i32_0 = arith.constant 0 : i32
    %c0_i32_1 = arith.constant 0 : i32
    return %c0_i32, %c0_i32_0 : i32, i32
  }
  func.func @transform_2(%arg0: i32) -> (i32, i32) {
    %c0_i32 = arith.constant 0 : i32
    %c0_i32_0 = arith.constant 0 : i32
    %c0_i32_1 = arith.constant 0 : i32
    return %c0_i32, %c0_i32_0 : i32, i32
  }
  func.func @transform_3(%arg0: i32) -> (i32, i32) {
    %c0_i32 = arith.constant 0 : i32
    %c0_i32_0 = arith.constant 0 : i32
    %c0_i32_1 = arith.constant 0 : i32
    return %c0_i32, %c0_i32_0 : i32, i32
  }
  func.func @transform_4(%arg0: i32) -> (i32, i32) {
    %c0_i32 = arith.constant 0 : i32
    %c0_i32_0 = arith.constant 0 : i32
    %c0_i32_1 = arith.constant 0 : i32
    return %c0_i32, %c0_i32_0 : i32, i32
  }
  func.func @transform_5(%arg0: i32) -> (i32, i32) {
    %c0_i32 = arith.constant 0 : i32
    %c0_i32_0 = arith.constant 0 : i32
    %c0_i32_1 = arith.constant 0 : i32
    return %c0_i32, %c0_i32_0 : i32, i32
  }
  func.func @transform_6(%arg0: i32) -> (i32, i32) {
    %c0_i32 = arith.constant 0 : i32
    %c0_i32_0 = arith.constant 0 : i32
    %c0_i32_1 = arith.constant 0 : i32
    return %c0_i32, %c0_i32_0 : i32, i32
  }
  func.func @transform_7(%arg0: i32) -> (i32, i32) {
    %c0_i32 = arith.constant 0 : i32
    %c0_i32_0 = arith.constant 0 : i32
    %c0_i32_1 = arith.constant 0 : i32
    return %c0_i32, %c0_i32_0 : i32, i32
  }
  func.func @transform_8(%arg0: i32) -> (i32, i32, i32) {
    %c0_i32 = arith.constant 0 : i32
    %c0_i32_0 = arith.constant 0 : i32
    %c0_i32_1 = arith.constant 0 : i32
    %c0_i32_2 = arith.constant 0 : i32
    return %c0_i32, %c0_i32_0, %c0_i32_1 : i32, i32, i32
  }
}

</mosaic_0001>

<llo_original>
// kernel: net_forward.3
$region0: #{net_forward.3}
  #allocation0 [shape = 'u32[]', space=smem, size = 0x4, offset = 0x4, fixed_abs, tag = 'smem constant byte address 0x4 - core index']
  #allocation1 [shape = 'u32[72,128]{1,0:T(1,128)}', space=vmem, size = 0x9000, scoped, tag = 'internal scratch']
  %s0 = inlined_call_operand.vmem [shape: bf16[1056,16], index: 0, kind: input, shape index: {}]
  %s1 = inlined_call_operand.vmem [shape: bf16[16,128], index: 1, kind: input, shape index: {}]
  %s2 = inlined_call_operand.vmem [shape: f32[1,32], index: 2, kind: input, shape index: {}]
  %s3 = inlined_call_operand.vmem [shape: bf16[1056,32], index: 3, kind: output, shape index: {}]
  %s4 = sld [smem:[#allocation0]]
  $region45: #{net_forward.3} parent=0
    _
  %s6 = ssub.s32 1, %s4
  %s7 = scalar_select 0, %s6, %s4
  loop: start=0, step=1, limit=4
  $region2: #{net_forward.3} parent=0 // loop_pre_header
    _
  $region3: #{net_forward.3} parent=0 // loop_header
    %s9 = sphi 0, %s13
    %p10 = scmp.ge.s32.totalorder %s9, 4
    %s19 = sphi 0, %s21
    %s22 = sphi 0, %s19
    %s23 = sphi 0, %s22
    %s39 = sphi 0, %s23
    %s43 = sphi 0, %s43
    %s45 = sphi 0, %s43
    %s46 = sphi 0, %s45
    %s60 = sphi 0, %s46
    %s64 = sphi 0, %s64
    %s66 = sphi 0, %s64
    %s67 = sphi 0, %s66
    %s81 = sphi 0, %s67
    %s87 = sphi 0, %s89
    %s90 = sphi 0, %s87
    %s91 = sphi 0, %s90
    %s107 = sphi 0, %s91
  $region4: #{net_forward.3} parent=0 // loop_header_branch
    %12 = sbr.rel (%p10) target = $region8
  $region5: #{net_forward.3} parent=0 // loop_body
    %s14 = ssub.s32 %s9, 1
    %s15 = ssub.s32 %s9, 2
    %s16 = sadd.s32 %s9, 1
    %s17 = ssub.s32 %s9, %s16
    %p18 = scmp.eq.s32.totalorder %s17, 0
    %s20 = sadd.s32 %s19, 1
    %s21 = scalar_select %p18, %s19, %s20
    %p24 = pneg %p18
    %p25 = scmp.eq.s32.totalorder %s9, 1
    %p26 = por %p24, %p25
    %p27 = scmp.ne.s32.totalorder %s19, %s22
    %p28 = scmp.eq.s32.totalorder %s9, 0
    %p29 = por %p27, %p28
    %p30 = scmp.ne.s32.totalorder %s19, %s22
    %p31 = scmp.eq.s32.totalorder %s14, 1
    %p32 = por %p30, %p31
    %p33 = scmp.ne.s32.totalorder %s22, %s23
    %p34 = scmp.eq.s32.totalorder %s14, 0
    %p35 = por %p33, %p34
    %p36 = scmp.ne.s32.totalorder %s22, %s23
    %p37 = scmp.eq.s32.totalorder %s15, 1
    %p38 = por %p36, %p37
    %p40 = scmp.ne.s32.totalorder %s23, %s39
    %p41 = scmp.eq.s32.totalorder %s15, 0
    %p42 = por %p40, %p41
    %s44 = sadd.s32 %s43, 1
    %p47 = scmp.eq.s32.totalorder %s9, 1
    %p48 = scmp.ne.s32.totalorder %s43, %s45
    %p49 = scmp.eq.s32.totalorder %s9, 0
    %p50 = por %p48, %p49
    %p51 = scmp.ne.s32.totalorder %s43, %s45
    %p52 = scmp.eq.s32.totalorder %s14, 1
    %p53 = por %p51, %p52
    %p54 = scmp.ne.s32.totalorder %s45, %s46
    %p55 = scmp.eq.s32.totalorder %s14, 0
    %p56 = por %p54, %p55
    %p57 = scmp.ne.s32.totalorder %s45, %s46
    %p58 = scmp.eq.s32.totalorder %s15, 1
    %p59 = por %p57, %p58
    %p61 = scmp.ne.s32.totalorder %s46, %s60
    %p62 = scmp.eq.s32.totalorder %s15, 0
    %p63 = por %p61, %p62
    %s65 = sadd.s32 %s64, 1
    %p68 = scmp.eq.s32.totalorder %s9, 1
    %p69 = scmp.ne.s32.totalorder %s64, %s66
    %p70 = scmp.eq.s32.totalorder %s9, 0
    %p71 = por %p69, %p70
    %p72 = scmp.ne.s32.totalorder %s64, %s66
    %p73 = scmp.eq.s32.totalorder %s14, 1
    %p74 = por %p72, %p73
    %p75 = scmp.ne.s32.totalorder %s66, %s67
    %p76 = scmp.eq.s32.totalorder %s14, 0
    %p77 = por %p75, %p76
    %p78 = scmp.ne.s32.totalorder %s66, %s67
    %p79 = scmp.eq.s32.totalorder %s15, 1
    %p80 = por %p78, %p79
    %p82 = scmp.ne.s32.totalorder %s67, %s81
    %p83 = scmp.eq.s32.totalorder %s15, 0
    %p84 = por %p82, %p83
    %s85 = ssub.s32 %s9, %s16
    %p86 = scmp.eq.s32.totalorder %s85, 0
    %s88 = sadd.s32 %s87, 1
    %s89 = scalar_select %p86, %s87, %s88
    %p92 = pneg %p86
    %p93 = scmp.eq.s32.totalorder %s9, 1
    %p94 = por %p92, %p93
    %p95 = scmp.ne.s32.totalorder %s87, %s90
    %p96 = scmp.eq.s32.totalorder %s9, 0
    %p97 = por %p95, %p96
    %p98 = scmp.ne.s32.totalorder %s87, %s90
    %p99 = scmp.eq.s32.totalorder %s14, 1
    %p100 = por %p98, %p99
    %p101 = scmp.ne.s32.totalorder %s90, %s91
    %p102 = scmp.eq.s32.totalorder %s14, 0
    %p103 = por %p101, %p102
    %p104 = scmp.ne.s32.totalorder %s90, %s91
    %p105 = scmp.eq.s32.totalorder %s15, 1
    %p106 = por %p104, %p105
    %p108 = scmp.ne.s32.totalorder %s91, %s107
    %p109 = scmp.eq.s32.totalorder %s15, 0
    %p110 = por %p108, %p109
    %p111 = scmp.le.s32.totalorder 1, %s9
    %p112 = scmp.lt.s32.totalorder %s9, 3
    %p113 = pnand %p111, %p112
    %p114 = pneg %p113
    // Predicated region
    $region9: #{net_forward.3} parent=5 // pred_check
      _
    $region10: #{net_forward.3} parent=5 // pred_check_branch
      %116 = sbr.rel (%p113) target = $region12
    $region11: #{net_forward.3} parent=5 // pred_region
      %s117 = ssub.s32 %s9, 1
      // Predicated region
      $region13: #{net_forward.3} parent=11 // pred_check
        %p118 = pneg %p56
      $region14: #{net_forward.3} parent=11 // pred_check_branch
        %120 = sbr.rel (%p118) target = $region16
      $region15: #{net_forward.3} parent=11 // pred_region
        _
      $region16: #{net_forward.3} parent=11 // pred_fallthru
        _
      // Predicated region
      $region17: #{net_forward.3} parent=11 // pred_check
        %p121 = pneg %p77
      $region18: #{net_forward.3} parent=11 // pred_check_branch
        %123 = sbr.rel (%p121) target = $region20
      $region19: #{net_forward.3} parent=11 // pred_region
        _
      $region20: #{net_forward.3} parent=11 // pred_fallthru
        _
    $region12: #{net_forward.3} parent=5 // pred_fallthru
      _
    %p124 = scmp.lt.s32.totalorder %s9, 2
    // Predicated region
    $region21: #{net_forward.3} parent=5 // pred_check
      %p125 = pneg %p124
    $region22: #{net_forward.3} parent=5 // pred_check_branch
      %127 = sbr.rel (%p125) target = $region24
    $region23: #{net_forward.3} parent=5 // pred_region
      // Predicated region
      $region25: #{net_forward.3} parent=23 // pred_check
        %p128 = pneg %p29
      $region26: #{net_forward.3} parent=23 // pred_check_branch
        %130 = sbr.rel (%p128) target = $region28
      $region27: #{net_forward.3} parent=23 // pred_region
        %s131 = smul.u32 66, %s9
        %p132 = scmp.lt.s32.totalorder %s131, 131
        %s133 = scalar_select %p132, %s131, 131
        %s134 = smul.addr %s133, 4
        %s135 = scalar_lea.vmem %s0, %s134
        %s136 = smul.u32 66, %s9
      $region28: #{net_forward.3} parent=23 // pred_fallthru
        _
    $region24: #{net_forward.3} parent=5 // pred_fallthru
      _
    %p137 = scmp.le.s32.totalorder 1, %s9
    %p138 = scmp.lt.s32.totalorder %s9, 3
    %p139 = pnand %p137, %p138
    %p140 = pneg %p139
    // Predicated region
    $region29: #{net_forward.3} parent=5 // pred_check
      _
    $region30: #{net_forward.3} parent=5 // pred_check_branch
      %142 = sbr.rel (%p139) target = $region32
    $region31: #{net_forward.3} parent=5 // pred_region
      %s143 = ssub.s32 %s9, 1
      %s144 = smul.u32 66, %s14
      %p145 = scmp.lt.s32.totalorder %s144, 131
      %s146 = scalar_select %p145, %s144, 131
      %s147 = smul.addr %s146, 4
      %s148 = scalar_lea.vmem %s0, %s147
      %p149 = pneg %p35
      %p150 = pneg %p32
      %p151 = pneg %p56
      %p152 = pneg %p53
      %p153 = pneg %p77
      %p154 = pneg %p74
      %p155 = pneg %p103
      %p156 = pneg %p100
      %s157 = smul.u32 66, %s14
      %p158 = scmp.lt.s32.totalorder %s157, 131
      %s159 = scalar_select %p158, %s157, 131
      %s160 = smul.addr %s159, 4
      %s161 = scalar_lea.vmem %s3, %s160
      %s162 = smul.u32 66, %s14
      %p163 = scmp.lt.s32.totalorder %s162, 131
      %s164 = scalar_select %p163, %s162, 131
      %s165 = smul.addr %s164, 4
      %s166 = scalar_lea.vmem %s0, %s165
      %s167 = smul.u32 66, %s14
      %s168 = smul.u32 66, %s14
      %p169 = scmp.lt.s32.totalorder %s168, 131
      %s170 = scalar_select %p169, %s168, 131
      %s171 = smul.addr %s170, 4
      %s172 = scalar_lea.vmem %s3, %s171
      %s173 = smul.u32 66, %s14
      %v175 = vld [vmem:[%s166] sm:$0xf]
      %v176 = vld [vmem:[%s166 + $0x4] sm:$0xf]
      %v177 = vld [vmem:[%s166 + $0x8] sm:$0xf]
      %v178 = vld [vmem:[%s166 + $0xc] sm:$0xf]
      %v179 = vld [vmem:[%s166 + $0x10] sm:$0xf]
      %v180 = vld [vmem:[%s166 + $0x14] sm:$0xf]
      %v181 = vld [vmem:[%s166 + $0x18] sm:$0xf]
      %v182 = vld [vmem:[%s166 + $0x1c] sm:$0xf]
      %v183 = vld [vmem:[%s166 + $0x20] sm:$0xf]
      %v184 = vld [vmem:[%s166 + $0x24] sm:$0xf]
      %v185 = vld [vmem:[%s166 + $0x28] sm:$0xf]
      %v186 = vld [vmem:[%s166 + $0x2c] sm:$0xf]
      %v187 = vld [vmem:[%s166 + $0x30] sm:$0xf]
      %v188 = vld [vmem:[%s166 + $0x34] sm:$0xf]
      %v189 = vld [vmem:[%s166 + $0x38] sm:$0xf]
      %v190 = vld [vmem:[%s166 + $0x3c] sm:$0xf]
      %v191 = vld [vmem:[%s166 + $0x40] sm:$0xf]
      %v192 = vld [vmem:[%s166 + $0x44] sm:$0xf]
      %v193 = vld [vmem:[%s166 + $0x48] sm:$0xf]
      %v194 = vld [vmem:[%s166 + $0x4c] sm:$0xf]
      %v195 = vld [vmem:[%s166 + $0x50] sm:$0xf]
      %v196 = vld [vmem:[%s166 + $0x54] sm:$0xf]
      %v197 = vld [vmem:[%s166 + $0x58] sm:$0xf]
      %v198 = vld [vmem:[%s166 + $0x5c] sm:$0xf]
      %v199 = vld [vmem:[%s166 + $0x60] sm:$0xf]
      %v200 = vld [vmem:[%s166 + $0x64] sm:$0xf]
      %v201 = vld [vmem:[%s166 + $0x68] sm:$0xf]
      %v202 = vld [vmem:[%s166 + $0x6c] sm:$0xf]
      %v203 = vld [vmem:[%s166 + $0x70] sm:$0xf]
      %v204 = vld [vmem:[%s166 + $0x74] sm:$0xf]
      %v205 = vld [vmem:[%s166 + $0x78] sm:$0xf]
      %v206 = vld [vmem:[%s166 + $0x7c] sm:$0xf]
      %v207 = vld [vmem:[%s166 + $0x80] sm:$0xf]
      %v208 = vld [vmem:[%s166 + $0x84] sm:$0xf]
      %v209 = vld [vmem:[%s166 + $0x88] sm:$0xf]
      %v210 = vld [vmem:[%s166 + $0x8c] sm:$0xf]
      %v211 = vld [vmem:[%s166 + $0x90] sm:$0xf]
      %v212 = vld [vmem:[%s166 + $0x94] sm:$0xf]
      %v213 = vld [vmem:[%s166 + $0x98] sm:$0xf]
      %v214 = vld [vmem:[%s166 + $0x9c] sm:$0xf]
      %v215 = vld [vmem:[%s166 + $0xa0] sm:$0xf]
      %v216 = vld [vmem:[%s166 + $0xa4] sm:$0xf]
      %v217 = vld [vmem:[%s166 + $0xa8] sm:$0xf]
      %v218 = vld [vmem:[%s166 + $0xac] sm:$0xf]
      %v219 = vld [vmem:[%s166 + $0xb0] sm:$0xf]
      %v220 = vld [vmem:[%s166 + $0xb4] sm:$0xf]
      %v221 = vld [vmem:[%s166 + $0xb8] sm:$0xf]
      %v222 = vld [vmem:[%s166 + $0xbc] sm:$0xf]
      %v223 = vld [vmem:[%s166 + $0xc0] sm:$0xf]
      %v224 = vld [vmem:[%s166 + $0xc4] sm:$0xf]
      %v225 = vld [vmem:[%s166 + $0xc8] sm:$0xf]
      %v226 = vld [vmem:[%s166 + $0xcc] sm:$0xf]
      %v227 = vld [vmem:[%s166 + $0xd0] sm:$0xf]
      %v228 = vld [vmem:[%s166 + $0xd4] sm:$0xf]
      %v229 = vld [vmem:[%s166 + $0xd8] sm:$0xf]
      %v230 = vld [vmem:[%s166 + $0xdc] sm:$0xf]
      %v231 = vld [vmem:[%s166 + $0xe0] sm:$0xf]
      %v232 = vld [vmem:[%s166 + $0xe4] sm:$0xf]
      %v233 = vld [vmem:[%s166 + $0xe8] sm:$0xf]
      %v234 = vld [vmem:[%s166 + $0xec] sm:$0xf]
      %v235 = vld [vmem:[%s166 + $0xf0] sm:$0xf]
      %v236 = vld [vmem:[%s166 + $0xf4] sm:$0xf]
      %v237 = vld [vmem:[%s166 + $0xf8] sm:$0xf]
      %v238 = vld [vmem:[%s166 + $0xfc] sm:$0xf]
      %v239 = vld [vmem:[%s166 + $0x100] sm:$0xf]
      %v240 = vld [vmem:[%s166 + $0x104] sm:$0xf]
      %v241 = vld [vmem:[%s1] sm:$0xf]
      %v242 = vld [vmem:[%s1 + $0x4] sm:$0xf]
      %v309 = vunpack.c.l.b16 %v175
      %v310 = vunpack.c.l.b16 %v176
      %v311 = vunpack.c.l.b16 %v177
      %v312 = vunpack.c.l.b16 %v178
      %v313 = vunpack.c.l.b16 %v179
      %v314 = vunpack.c.l.b16 %v180
      %v315 = vunpack.c.l.b16 %v181
      %v316 = vunpack.c.l.b16 %v182
      %v317 = vunpack.c.l.b16 %v183
      %v318 = vunpack.c.l.b16 %v184
      %v319 = vunpack.c.l.b16 %v185
      %v320 = vunpack.c.l.b16 %v186
      %v321 = vunpack.c.l.b16 %v187
      %v322 = vunpack.c.l.b16 %v188
      %v323 = vunpack.c.l.b16 %v189
      %v324 = vunpack.c.l.b16 %v190
      %v325 = vunpack.c.l.b16 %v191
      %v326 = vunpack.c.l.b16 %v192
      %v327 = vunpack.c.l.b16 %v193
      %v328 = vunpack.c.l.b16 %v194
      %v329 = vunpack.c.l.b16 %v195
      %v330 = vunpack.c.l.b16 %v196
      %v331 = vunpack.c.l.b16 %v197
      %v332 = vunpack.c.l.b16 %v198
      %v333 = vunpack.c.l.b16 %v199
      %v334 = vunpack.c.l.b16 %v200
      %v335 = vunpack.c.l.b16 %v201
      %v336 = vunpack.c.l.b16 %v202
      %v337 = vunpack.c.l.b16 %v203
      %v338 = vunpack.c.l.b16 %v204
      %v339 = vunpack.c.l.b16 %v205
      %v340 = vunpack.c.l.b16 %v206
      %v341 = vunpack.c.l.b16 %v207
      %v342 = vunpack.c.l.b16 %v208
      %v343 = vunpack.c.l.b16 %v209
      %v344 = vunpack.c.l.b16 %v210
      %v345 = vunpack.c.l.b16 %v211
      %v346 = vunpack.c.l.b16 %v212
      %v347 = vunpack.c.l.b16 %v213
      %v348 = vunpack.c.l.b16 %v214
      %v349 = vunpack.c.l.b16 %v215
      %v350 = vunpack.c.l.b16 %v216
      %v351 = vunpack.c.l.b16 %v217
      %v352 = vunpack.c.l.b16 %v218
      %v353 = vunpack.c.l.b16 %v219
      %v354 = vunpack.c.l.b16 %v220
      %v355 = vunpack.c.l.b16 %v221
      %v356 = vunpack.c.l.b16 %v222
      %v357 = vunpack.c.l.b16 %v223
      %v358 = vunpack.c.l.b16 %v224
      %v359 = vunpack.c.l.b16 %v225
      %v360 = vunpack.c.l.b16 %v226
      %v361 = vunpack.c.l.b16 %v227
      %v362 = vunpack.c.l.b16 %v228
      %v363 = vunpack.c.l.b16 %v229
      %v364 = vunpack.c.l.b16 %v230
      %v365 = vunpack.c.l.b16 %v231
      %v366 = vunpack.c.l.b16 %v232
      %v367 = vunpack.c.l.b16 %v233
      %v368 = vunpack.c.l.b16 %v234
      %v369 = vunpack.c.l.b16 %v235
      %v370 = vunpack.c.l.b16 %v236
      %v371 = vunpack.c.l.b16 %v237
      %v372 = vunpack.c.l.b16 %v238
      %v373 = vunpack.c.l.b16 %v239
      %v374 = vunpack.c.l.b16 %v240
      %v375 = vpack.c.b16 %v310, %v309
      %v376 = vpack.c.b16 %v312, %v311
      %v377 = vpack.c.b16 %v314, %v313
      %v378 = vpack.c.b16 %v316, %v315
      %v379 = vpack.c.b16 %v318, %v317
      %v380 = vpack.c.b16 %v320, %v319
      %v381 = vpack.c.b16 %v322, %v321
      %v382 = vpack.c.b16 %v324, %v323
      %v383 = vpack.c.b16 %v326, %v325
      %v384 = vpack.c.b16 %v328, %v327
      %v385 = vpack.c.b16 %v330, %v329
      %v386 = vpack.c.b16 %v332, %v331
      %v387 = vpack.c.b16 %v334, %v333
      %v388 = vpack.c.b16 %v336, %v335
      %v389 = vpack.c.b16 %v338, %v337
      %v390 = vpack.c.b16 %v340, %v339
      %v391 = vpack.c.b16 %v342, %v341
      %v392 = vpack.c.b16 %v344, %v343
      %v393 = vpack.c.b16 %v346, %v345
      %v394 = vpack.c.b16 %v348, %v347
      %v395 = vpack.c.b16 %v350, %v349
      %v396 = vpack.c.b16 %v352, %v351
      %v397 = vpack.c.b16 %v354, %v353
      %v398 = vpack.c.b16 %v356, %v355
      %v399 = vpack.c.b16 %v358, %v357
      %v400 = vpack.c.b16 %v360, %v359
      %v401 = vpack.c.b16 %v362, %v361
      %v402 = vpack.c.b16 %v364, %v363
      %v403 = vpack.c.b16 %v366, %v365
      %v404 = vpack.c.b16 %v368, %v367
      %v405 = vpack.c.b16 %v370, %v369
      %v406 = vpack.c.b16 %v372, %v371
      %v407 = vpack.c.b16 %v374, %v373
      %v410 = vunpack.c.l.b16 %v241
      %v411 = vunpack.c.l.b16 %v242
      %v412 = vpack.c.b16 %v411, %v410
      %vm414 = vcmask 130048
      %v416 = vsel %vm414, %v375, 0
      %v419 = vsel %vm414, %v376, 0
      %v422 = vsel %vm414, %v377, 0
      %v425 = vsel %vm414, %v378, 0
      %v428 = vsel %vm414, %v379, 0
      %v431 = vsel %vm414, %v380, 0
      %v434 = vsel %vm414, %v381, 0
      %v437 = vsel %vm414, %v382, 0
      %v440 = vsel %vm414, %v383, 0
      %v443 = vsel %vm414, %v384, 0
      %v446 = vsel %vm414, %v385, 0
      %v449 = vsel %vm414, %v386, 0
      %v452 = vsel %vm414, %v387, 0
      %v455 = vsel %vm414, %v388, 0
      %v458 = vsel %vm414, %v389, 0
      %v461 = vsel %vm414, %v390, 0
      %v464 = vsel %vm414, %v391, 0
      %v467 = vsel %vm414, %v392, 0
      %v470 = vsel %vm414, %v393, 0
      %v473 = vsel %vm414, %v394, 0
      %v476 = vsel %vm414, %v395, 0
      %v479 = vsel %vm414, %v396, 0
      %v482 = vsel %vm414, %v397, 0
      %v485 = vsel %vm414, %v398, 0
      %v488 = vsel %vm414, %v399, 0
      %v491 = vsel %vm414, %v400, 0
      %v494 = vsel %vm414, %v401, 0
      %v497 = vsel %vm414, %v402, 0
      %v500 = vsel %vm414, %v403, 0
      %v503 = vsel %vm414, %v404, 0
      %v506 = vsel %vm414, %v405, 0
      %v509 = vsel %vm414, %v406, 0
      %v512 = vsel %vm414, %v407, 0
      %514 = vmatpush.bf16.msra.mxu0 0
      %515 = vmatpush.bf16.msra.mxu0 0
      %516 = vmatpush.bf16.msra.mxu0 0
      %517 = vmatpush.bf16.msra.mxu0 0
      %518 = vmatpush.bf16.msra.mxu0 0
      %519 = vmatpush.bf16.msra.mxu0 0
      %520 = vmatpush.bf16.msra.mxu0 0
      %521 = vmatpush.bf16.msra.mxu0 %v412
      %522 = vmatmul.bf16.gmra.mxu0 %v416
      %v523 = vpop.f32.mrf.mxu0
      %v524 = vadd.f32 0.0, %v523
      %v525 = vpop.f32.mrf.mxu0
      %v526 = vadd.f32 0.0, %v525
      %527 = vmatmul.bf16.gmra.mxu0 %v419
      %v528 = vpop.f32.mrf.mxu0
      %v529 = vadd.f32 0.0, %v528
      %v530 = vpop.f32.mrf.mxu0
      %v531 = vadd.f32 0.0, %v530
      %532 = vmatmul.bf16.gmra.mxu0 %v422
      %v533 = vpop.f32.mrf.mxu0
      %v534 = vadd.f32 0.0, %v533
      %v535 = vpop.f32.mrf.mxu0
      %v536 = vadd.f32 0.0, %v535
      %537 = vmatmul.bf16.gmra.mxu0 %v425
      %v538 = vpop.f32.mrf.mxu0
      %v539 = vadd.f32 0.0, %v538
      %v540 = vpop.f32.mrf.mxu0
      %v541 = vadd.f32 0.0, %v540
      %542 = vmatmul.bf16.gmra.mxu0 %v428
      %v543 = vpop.f32.mrf.mxu0
      %v544 = vadd.f32 0.0, %v543
      %v545 = vpop.f32.mrf.mxu0
      %v546 = vadd.f32 0.0, %v545
      %547 = vmatmul.bf16.gmra.mxu0 %v431
      %v548 = vpop.f32.mrf.mxu0
      %v549 = vadd.f32 0.0, %v548
      %v550 = vpop.f32.mrf.mxu0
      %v551 = vadd.f32 0.0, %v550
      %552 = vmatmul.bf16.gmra.mxu0 %v434
      %v553 = vpop.f32.mrf.mxu0
      %v554 = vadd.f32 0.0, %v553
      %v555 = vpop.f32.mrf.mxu0
      %v556 = vadd.f32 0.0, %v555
      %557 = vmatmul.bf16.gmra.mxu0 %v437
      %v558 = vpop.f32.mrf.mxu0
      %v559 = vadd.f32 0.0, %v558
      %v560 = vpop.f32.mrf.mxu0
      %v561 = vadd.f32 0.0, %v560
      %562 = vmatmul.bf16.gmra.mxu0 %v440
      %v563 = vpop.f32.mrf.mxu0
      %v564 = vadd.f32 0.0, %v563
      %v565 = vpop.f32.mrf.mxu0
      %v566 = vadd.f32 0.0, %v565
      %567 = vmatmul.bf16.gmra.mxu0 %v443
      %v568 = vpop.f32.mrf.mxu0
      %v569 = vadd.f32 0.0, %v568
      %v570 = vpop.f32.mrf.mxu0
      %v571 = vadd.f32 0.0, %v570
      %572 = vmatmul.bf16.gmra.mxu0 %v446
      %v573 = vpop.f32.mrf.mxu0
      %v574 = vadd.f32 0.0, %v573
      %v575 = vpop.f32.mrf.mxu0
      %v576 = vadd.f32 0.0, %v575
      %577 = vmatmul.bf16.gmra.mxu0 %v449
      %v578 = vpop.f32.mrf.mxu0
      %v579 = vadd.f32 0.0, %v578
      %v580 = vpop.f32.mrf.mxu0
      %v581 = vadd.f32 0.0, %v580
      %582 = vmatmul.bf16.gmra.mxu0 %v452
      %v583 = vpop.f32.mrf.mxu0
      %v584 = vadd.f32 0.0, %v583
      %v585 = vpop.f32.mrf.mxu0
      %v586 = vadd.f32 0.0, %v585
      %587 = vmatmul.bf16.gmra.mxu0 %v455
      %v588 = vpop.f32.mrf.mxu0
      %v589 = vadd.f32 0.0, %v588
      %v590 = vpop.f32.mrf.mxu0
      %v591 = vadd.f32 0.0, %v590
      %592 = vmatmul.bf16.gmra.mxu0 %v458
      %v593 = vpop.f32.mrf.mxu0
      %v594 = vadd.f32 0.0, %v593
      %v595 = vpop.f32.mrf.mxu0
      %v596 = vadd.f32 0.0, %v595
      %597 = vmatmul.bf16.gmra.mxu0 %v461
      %v598 = vpop.f32.mrf.mxu0
      %v599 = vadd.f32 0.0, %v598
      %v600 = vpop.f32.mrf.mxu0
      %v601 = vadd.f32 0.0, %v600
      %602 = vmatmul.bf16.gmra.mxu0 %v464
      %v603 = vpop.f32.mrf.mxu0
      %v604 = vadd.f32 0.0, %v603
      %v605 = vpop.f32.mrf.mxu0
      %v606 = vadd.f32 0.0, %v605
      %607 = vmatmul.bf16.gmra.mxu0 %v467
      %v608 = vpop.f32.mrf.mxu0
      %v609 = vadd.f32 0.0, %v608
      %v610 = vpop.f32.mrf.mxu0
      %v611 = vadd.f32 0.0, %v610
      %612 = vmatmul.bf16.gmra.mxu0 %v470
      %v613 = vpop.f32.mrf.mxu0
      %v614 = vadd.f32 0.0, %v613
      %v615 = vpop.f32.mrf.mxu0
      %v616 = vadd.f32 0.0, %v615
      %617 = vmatmul.bf16.gmra.mxu0 %v473
      %v618 = vpop.f32.mrf.mxu0
      %v619 = vadd.f32 0.0, %v618
      %v620 = vpop.f32.mrf.mxu0
      %v621 = vadd.f32 0.0, %v620
      %622 = vmatmul.bf16.gmra.mxu0 %v476
      %v623 = vpop.f32.mrf.mxu0
      %v624 = vadd.f32 0.0, %v623
      %v625 = vpop.f32.mrf.mxu0
      %v626 = vadd.f32 0.0, %v625
      %627 = vmatmul.bf16.gmra.mxu0 %v479
      %v628 = vpop.f32.mrf.mxu0
      %v629 = vadd.f32 0.0, %v628
      %v630 = vpop.f32.mrf.mxu0
      %v631 = vadd.f32 0.0, %v630
      %632 = vmatmul.bf16.gmra.mxu0 %v482
      %v633 = vpop.f32.mrf.mxu0
      %v634 = vadd.f32 0.0, %v633
      %v635 = vpop.f32.mrf.mxu0
      %v636 = vadd.f32 0.0, %v635
      %637 = vmatmul.bf16.gmra.mxu0 %v485
      %v638 = vpop.f32.mrf.mxu0
      %v639 = vadd.f32 0.0, %v638
      %v640 = vpop.f32.mrf.mxu0
      %v641 = vadd.f32 0.0, %v640
      %642 = vmatmul.bf16.gmra.mxu0 %v488
      %v643 = vpop.f32.mrf.mxu0
      %v644 = vadd.f32 0.0, %v643
      %v645 = vpop.f32.mrf.mxu0
      %v646 = vadd.f32 0.0, %v645
      %647 = vmatmul.bf16.gmra.mxu0 %v491
      %v648 = vpop.f32.mrf.mxu0
      %v649 = vadd.f32 0.0, %v648
      %v650 = vpop.f32.mrf.mxu0
      %v651 = vadd.f32 0.0, %v650
      %652 = vmatmul.bf16.gmra.mxu0 %v494
      %v653 = vpop.f32.mrf.mxu0
      %v654 = vadd.f32 0.0, %v653
      %v655 = vpop.f32.mrf.mxu0
      %v656 = vadd.f32 0.0, %v655
      %657 = vmatmul.bf16.gmra.mxu0 %v497
      %v658 = vpop.f32.mrf.mxu0
      %v659 = vadd.f32 0.0, %v658
      %v660 = vpop.f32.mrf.mxu0
      %v661 = vadd.f32 0.0, %v660
      %662 = vmatmul.bf16.gmra.mxu0 %v500
      %v663 = vpop.f32.mrf.mxu0
      %v664 = vadd.f32 0.0, %v663
      %v665 = vpop.f32.mrf.mxu0
      %v666 = vadd.f32 0.0, %v665
      %667 = vmatmul.bf16.gmra.mxu0 %v503
      %v668 = vpop.f32.mrf.mxu0
      %v669 = vadd.f32 0.0, %v668
      %v670 = vpop.f32.mrf.mxu0
      %v671 = vadd.f32 0.0, %v670
      %672 = vmatmul.bf16.gmra.mxu0 %v506
      %v673 = vpop.f32.mrf.mxu0
      %v674 = vadd.f32 0.0, %v673
      %v675 = vpop.f32.mrf.mxu0
      %v676 = vadd.f32 0.0, %v675
      %677 = vmatmul.bf16.gmra.mxu0 %v509
      %v678 = vpop.f32.mrf.mxu0
      %v679 = vadd.f32 0.0, %v678
      %v680 = vpop.f32.mrf.mxu0
      %v681 = vadd.f32 0.0, %v680
      %682 = vmatmul.bf16.gmra.mxu0 %v512
      %v683 = vpop.f32.mrf.mxu0
      %v684 = vadd.f32 0.0, %v683
      %v685 = vpop.f32.mrf.mxu0
      %v686 = vadd.f32 0.0, %v685
      %687 = vdwg.mxu0
      %754 = vrot.lane.b32.xlu0 %v524, 96
      %v755 = vpop.permute.xlu0 %754
      %756 = vrot.lane.b32.xlu0 %v526, 96
      %v757 = vpop.permute.xlu0 %756
      %758 = vrot.lane.b32.xlu0 %v529, 96
      %v759 = vpop.permute.xlu0 %758
      %760 = vrot.lane.b32.xlu0 %v531, 96
      %v761 = vpop.permute.xlu0 %760
      %762 = vrot.lane.b32.xlu0 %v534, 96
      %v763 = vpop.permute.xlu0 %762
      %764 = vrot.lane.b32.xlu0 %v536, 96
      %v765 = vpop.permute.xlu0 %764
      %766 = vrot.lane.b32.xlu0 %v539, 96
      %v767 = vpop.permute.xlu0 %766
      %768 = vrot.lane.b32.xlu0 %v541, 96
      %v769 = vpop.permute.xlu0 %768
      %770 = vrot.lane.b32.xlu0 %v544, 96
      %v771 = vpop.permute.xlu0 %770
      %772 = vrot.lane.b32.xlu0 %v546, 96
      %v773 = vpop.permute.xlu0 %772
      %774 = vrot.lane.b32.xlu0 %v549, 96
      %v775 = vpop.permute.xlu0 %774
      %776 = vrot.lane.b32.xlu0 %v551, 96
      %v777 = vpop.permute.xlu0 %776
      %778 = vrot.lane.b32.xlu0 %v554, 96
      %v779 = vpop.permute.xlu0 %778
      %780 = vrot.lane.b32.xlu0 %v556, 96
      %v781 = vpop.permute.xlu0 %780
      %782 = vrot.lane.b32.xlu0 %v559, 96
      %v783 = vpop.permute.xlu0 %782
      %784 = vrot.lane.b32.xlu0 %v561, 96
      %v785 = vpop.permute.xlu0 %784
      %786 = vrot.lane.b32.xlu0 %v564, 96
      %v787 = vpop.permute.xlu0 %786
      %788 = vrot.lane.b32.xlu0 %v566, 96
      %v789 = vpop.permute.xlu0 %788
      %790 = vrot.lane.b32.xlu0 %v569, 96
      %v791 = vpop.permute.xlu0 %790
      %792 = vrot.lane.b32.xlu0 %v571, 96
      %v793 = vpop.permute.xlu0 %792
      %794 = vrot.lane.b32.xlu0 %v574, 96
      %v795 = vpop.permute.xlu0 %794
      %796 = vrot.lane.b32.xlu0 %v576, 96
      %v797 = vpop.permute.xlu0 %796
      %798 = vrot.lane.b32.xlu0 %v579, 96
      %v799 = vpop.permute.xlu0 %798
      %800 = vrot.lane.b32.xlu0 %v581, 96
      %v801 = vpop.permute.xlu0 %800
      %802 = vrot.lane.b32.xlu0 %v584, 96
      %v803 = vpop.permute.xlu0 %802
      %804 = vrot.lane.b32.xlu0 %v586, 96
      %v805 = vpop.permute.xlu0 %804
      %806 = vrot.lane.b32.xlu0 %v589, 96
      %v807 = vpop.permute.xlu0 %806
      %808 = vrot.lane.b32.xlu0 %v591, 96
      %v809 = vpop.permute.xlu0 %808
      %810 = vrot.lane.b32.xlu0 %v594, 96
      %v811 = vpop.permute.xlu0 %810
      %812 = vrot.lane.b32.xlu0 %v596, 96
      %v813 = vpop.permute.xlu0 %812
      %814 = vrot.lane.b32.xlu0 %v599, 96
      %v815 = vpop.permute.xlu0 %814
      %816 = vrot.lane.b32.xlu0 %v601, 96
      %v817 = vpop.permute.xlu0 %816
      %818 = vrot.lane.b32.xlu0 %v604, 96
      %v819 = vpop.permute.xlu0 %818
      %820 = vrot.lane.b32.xlu0 %v606, 96
      %v821 = vpop.permute.xlu0 %820
      %822 = vrot.lane.b32.xlu0 %v609, 96
      %v823 = vpop.permute.xlu0 %822
      %824 = vrot.lane.b32.xlu0 %v611, 96
      %v825 = vpop.permute.xlu0 %824
      %826 = vrot.lane.b32.xlu0 %v614, 96
      %v827 = vpop.permute.xlu0 %826
      %828 = vrot.lane.b32.xlu0 %v616, 96
      %v829 = vpop.permute.xlu0 %828
      %830 = vrot.lane.b32.xlu0 %v619, 96
      %v831 = vpop.permute.xlu0 %830
      %832 = vrot.lane.b32.xlu0 %v621, 96
      %v833 = vpop.permute.xlu0 %832
      %834 = vrot.lane.b32.xlu0 %v624, 96
      %v835 = vpop.permute.xlu0 %834
      %836 = vrot.lane.b32.xlu0 %v626, 96
      %v837 = vpop.permute.xlu0 %836
      %838 = vrot.lane.b32.xlu0 %v629, 96
      %v839 = vpop.permute.xlu0 %838
      %840 = vrot.lane.b32.xlu0 %v631, 96
      %v841 = vpop.permute.xlu0 %840
      %842 = vrot.lane.b32.xlu0 %v634, 96
      %v843 = vpop.permute.xlu0 %842
      %844 = vrot.lane.b32.xlu0 %v636, 96
      %v845 = vpop.permute.xlu0 %844
      %846 = vrot.lane.b32.xlu0 %v639, 96
      %v847 = vpop.permute.xlu0 %846
      %848 = vrot.lane.b32.xlu0 %v641, 96
      %v849 = vpop.permute.xlu0 %848
      %850 = vrot.lane.b32.xlu0 %v644, 96
      %v851 = vpop.permute.xlu0 %850
      %852 = vrot.lane.b32.xlu0 %v646, 96
      %v853 = vpop.permute.xlu0 %852
      %854 = vrot.lane.b32.xlu0 %v649, 96
      %v855 = vpop.permute.xlu0 %854
      %856 = vrot.lane.b32.xlu0 %v651, 96
      %v857 = vpop.permute.xlu0 %856
      %858 = vrot.lane.b32.xlu0 %v654, 96
      %v859 = vpop.permute.xlu0 %858
      %860 = vrot.lane.b32.xlu0 %v656, 96
      %v861 = vpop.permute.xlu0 %860
      %862 = vrot.lane.b32.xlu0 %v659, 96
      %v863 = vpop.permute.xlu0 %862
      %864 = vrot.lane.b32.xlu0 %v661, 96
      %v865 = vpop.permute.xlu0 %864
      %866 = vrot.lane.b32.xlu0 %v664, 96
      %v867 = vpop.permute.xlu0 %866
      %868 = vrot.lane.b32.xlu0 %v666, 96
      %v869 = vpop.permute.xlu0 %868
      %870 = vrot.lane.b32.xlu0 %v669, 96
      %v871 = vpop.permute.xlu0 %870
      %872 = vrot.lane.b32.xlu0 %v671, 96
      %v873 = vpop.permute.xlu0 %872
      %874 = vrot.lane.b32.xlu0 %v674, 96
      %v875 = vpop.permute.xlu0 %874
      %876 = vrot.lane.b32.xlu0 %v676, 96
      %v877 = vpop.permute.xlu0 %876
      %878 = vrot.lane.b32.xlu0 %v679, 96
      %v879 = vpop.permute.xlu0 %878
      %880 = vrot.lane.b32.xlu0 %v681, 96
      %v881 = vpop.permute.xlu0 %880
      %882 = vrot.lane.b32.xlu0 %v684, 96
      %v883 = vpop.permute.xlu0 %882
      %884 = vrot.lane.b32.xlu0 %v686, 96
      %v885 = vpop.permute.xlu0 %884
      %v952 = vmax.f32 %v524, %v755
      %v953 = vmax.f32 %v526, %v757
      %v954 = vmax.f32 %v529, %v759
      %v955 = vmax.f32 %v531, %v761
      %v956 = vmax.f32 %v534, %v763
      %v957 = vmax.f32 %v536, %v765
      %v958 = vmax.f32 %v539, %v767
      %v959 = vmax.f32 %v541, %v769
      %v960 = vmax.f32 %v544, %v771
      %v961 = vmax.f32 %v546, %v773
      %v962 = vmax.f32 %v549, %v775
      %v963 = vmax.f32 %v551, %v777
      %v964 = vmax.f32 %v554, %v779
      %v965 = vmax.f32 %v556, %v781
      %v966 = vmax.f32 %v559, %v783
      %v967 = vmax.f32 %v561, %v785
      %v968 = vmax.f32 %v564, %v787
      %v969 = vmax.f32 %v566, %v789
      %v970 = vmax.f32 %v569, %v791
      %v971 = vmax.f32 %v571, %v793
      %v972 = vmax.f32 %v574, %v795
      %v973 = vmax.f32 %v576, %v797
      %v974 = vmax.f32 %v579, %v799
      %v975 = vmax.f32 %v581, %v801
      %v976 = vmax.f32 %v584, %v803
      %v977 = vmax.f32 %v586, %v805
      %v978 = vmax.f32 %v589, %v807
      %v979 = vmax.f32 %v591, %v809
      %v980 = vmax.f32 %v594, %v811
      %v981 = vmax.f32 %v596, %v813
      %v982 = vmax.f32 %v599, %v815
      %v983 = vmax.f32 %v601, %v817
      %v984 = vmax.f32 %v604, %v819
      %v985 = vmax.f32 %v606, %v821
      %v986 = vmax.f32 %v609, %v823
      %v987 = vmax.f32 %v611, %v825
      %v988 = vmax.f32 %v614, %v827
      %v989 = vmax.f32 %v616, %v829
      %v990 = vmax.f32 %v619, %v831
      %v991 = vmax.f32 %v621, %v833
      %v992 = vmax.f32 %v624, %v835
      %v993 = vmax.f32 %v626, %v837
      %v994 = vmax.f32 %v629, %v839
      %v995 = vmax.f32 %v631, %v841
      %v996 = vmax.f32 %v634, %v843
      %v997 = vmax.f32 %v636, %v845
      %v998 = vmax.f32 %v639, %v847
      %v999 = vmax.f32 %v641, %v849
      %v1000 = vmax.f32 %v644, %v851
      %v1001 = vmax.f32 %v646, %v853
      %v1002 = vmax.f32 %v649, %v855
      %v1003 = vmax.f32 %v651, %v857
      %v1004 = vmax.f32 %v654, %v859
      %v1005 = vmax.f32 %v656, %v861
      %v1006 = vmax.f32 %v659, %v863
      %v1007 = vmax.f32 %v661, %v865
      %v1008 = vmax.f32 %v664, %v867
      %v1009 = vmax.f32 %v666, %v869
      %v1010 = vmax.f32 %v669, %v871
      %v1011 = vmax.f32 %v671, %v873
      %v1012 = vmax.f32 %v674, %v875
      %v1013 = vmax.f32 %v676, %v877
      %v1014 = vmax.f32 %v679, %v879
      %v1015 = vmax.f32 %v681, %v881
      %v1016 = vmax.f32 %v684, %v883
      %v1017 = vmax.f32 %v686, %v885
      %1084 = vrot.lane.b32.xlu0 %v952, 64
      %v1085 = vpop.permute.xlu0 %1084
      %1086 = vrot.lane.b32.xlu0 %v953, 64
      %v1087 = vpop.permute.xlu0 %1086
      %1088 = vrot.lane.b32.xlu0 %v954, 64
      %v1089 = vpop.permute.xlu0 %1088
      %1090 = vrot.lane.b32.xlu0 %v955, 64
      %v1091 = vpop.permute.xlu0 %1090
      %1092 = vrot.lane.b32.xlu0 %v956, 64
      %v1093 = vpop.permute.xlu0 %1092
      %1094 = vrot.lane.b32.xlu0 %v957, 64
      %v1095 = vpop.permute.xlu0 %1094
      %1096 = vrot.lane.b32.xlu0 %v958, 64
      %v1097 = vpop.permute.xlu0 %1096
      %1098 = vrot.lane.b32.xlu0 %v959, 64
      %v1099 = vpop.permute.xlu0 %1098
      %1100 = vrot.lane.b32.xlu0 %v960, 64
      %v1101 = vpop.permute.xlu0 %1100
      %1102 = vrot.lane.b32.xlu0 %v961, 64
      %v1103 = vpop.permute.xlu0 %1102
      %1104 = vrot.lane.b32.xlu0 %v962, 64
      %v1105 = vpop.permute.xlu0 %1104
      %1106 = vrot.lane.b32.xlu0 %v963, 64
      %v1107 = vpop.permute.xlu0 %1106
      %1108 = vrot.lane.b32.xlu0 %v964, 64
      %v1109 = vpop.permute.xlu0 %1108
      %1110 = vrot.lane.b32.xlu0 %v965, 64
      %v1111 = vpop.permute.xlu0 %1110
      %1112 = vrot.lane.b32.xlu0 %v966, 64
      %v1113 = vpop.permute.xlu0 %1112
      %1114 = vrot.lane.b32.xlu0 %v967, 64
      %v1115 = vpop.permute.xlu0 %1114
      %1116 = vrot.lane.b32.xlu0 %v968, 64
      %v1117 = vpop.permute.xlu0 %1116
      %1118 = vrot.lane.b32.xlu0 %v969, 64
      %v1119 = vpop.permute.xlu0 %1118
      %1120 = vrot.lane.b32.xlu0 %v970, 64
      %v1121 = vpop.permute.xlu0 %1120
      %1122 = vrot.lane.b32.xlu0 %v971, 64
      %v1123 = vpop.permute.xlu0 %1122
      %1124 = vrot.lane.b32.xlu0 %v972, 64
      %v1125 = vpop.permute.xlu0 %1124
      %1126 = vrot.lane.b32.xlu0 %v973, 64
      %v1127 = vpop.permute.xlu0 %1126
      %1128 = vrot.lane.b32.xlu0 %v974, 64
      %v1129 = vpop.permute.xlu0 %1128
      %1130 = vrot.lane.b32.xlu0 %v975, 64
      %v1131 = vpop.permute.xlu0 %1130
      %1132 = vrot.lane.b32.xlu0 %v976, 64
      %v1133 = vpop.permute.xlu0 %1132
      %1134 = vrot.lane.b32.xlu0 %v977, 64
      %v1135 = vpop.permute.xlu0 %1134
      %1136 = vrot.lane.b32.xlu0 %v978, 64
      %v1137 = vpop.permute.xlu0 %1136
      %1138 = vrot.lane.b32.xlu0 %v979, 64
      %v1139 = vpop.permute.xlu0 %1138
      %1140 = vrot.lane.b32.xlu0 %v980, 64
      %v1141 = vpop.permute.xlu0 %1140
      %1142 = vrot.lane.b32.xlu0 %v981, 64
      %v1143 = vpop.permute.xlu0 %1142
      %1144 = vrot.lane.b32.xlu0 %v982, 64
      %v1145 = vpop.permute.xlu0 %1144
      %1146 = vrot.lane.b32.xlu0 %v983, 64
      %v1147 = vpop.permute.xlu0 %1146
      %1148 = vrot.lane.b32.xlu0 %v984, 64
      %v1149 = vpop.permute.xlu0 %1148
      %1150 = vrot.lane.b32.xlu0 %v985, 64
      %v1151 = vpop.permute.xlu0 %1150
      %1152 = vrot.lane.b32.xlu0 %v986, 64
      %v1153 = vpop.permute.xlu0 %1152
      %1154 = vrot.lane.b32.xlu0 %v987, 64
      %v1155 = vpop.permute.xlu0 %1154
      %1156 = vrot.lane.b32.xlu0 %v988, 64
      %v1157 = vpop.permute.xlu0 %1156
      %1158 = vrot.lane.b32.xlu0 %v989, 64
      %v1159 = vpop.permute.xlu0 %1158
      %1160 = vrot.lane.b32.xlu0 %v990, 64
      %v1161 = vpop.permute.xlu0 %1160
      %1162 = vrot.lane.b32.xlu0 %v991, 64
      %v1163 = vpop.permute.xlu0 %1162
      %1164 = vrot.lane.b32.xlu0 %v992, 64
      %v1165 = vpop.permute.xlu0 %1164
      %1166 = vrot.lane.b32.xlu0 %v993, 64
      %v1167 = vpop.permute.xlu0 %1166
      %1168 = vrot.lane.b32.xlu0 %v994, 64
      %v1169 = vpop.permute.xlu0 %1168
      %1170 = vrot.lane.b32.xlu0 %v995, 64
      %v1171 = vpop.permute.xlu0 %1170
      %1172 = vrot.lane.b32.xlu0 %v996, 64
      %v1173 = vpop.permute.xlu0 %1172
      %1174 = vrot.lane.b32.xlu0 %v997, 64
      %v1175 = vpop.permute.xlu0 %1174
      %1176 = vrot.lane.b32.xlu0 %v998, 64
      %v1177 = vpop.permute.xlu0 %1176
      %1178 = vrot.lane.b32.xlu0 %v999, 64
      %v1179 = vpop.permute.xlu0 %1178
      %1180 = vrot.lane.b32.xlu0 %v1000, 64
      %v1181 = vpop.permute.xlu0 %1180
      %1182 = vrot.lane.b32.xlu0 %v1001, 64
      %v1183 = vpop.permute.xlu0 %1182
      %1184 = vrot.lane.b32.xlu0 %v1002, 64
      %v1185 = vpop.permute.xlu0 %1184
      %1186 = vrot.lane.b32.xlu0 %v1003, 64
      %v1187 = vpop.permute.xlu0 %1186
      %1188 = vrot.lane.b32.xlu0 %v1004, 64
      %v1189 = vpop.permute.xlu0 %1188
      %1190 = vrot.lane.b32.xlu0 %v1005, 64
      %v1191 = vpop.permute.xlu0 %1190
      %1192 = vrot.lane.b32.xlu0 %v1006, 64
      %v1193 = vpop.permute.xlu0 %1192
      %1194 = vrot.lane.b32.xlu0 %v1007, 64
      %v1195 = vpop.permute.xlu0 %1194
      %1196 = vrot.lane.b32.xlu0 %v1008, 64
      %v1197 = vpop.permute.xlu0 %1196
      %1198 = vrot.lane.b32.xlu0 %v1009, 64
      %v1199 = vpop.permute.xlu0 %1198
      %1200 = vrot.lane.b32.xlu0 %v1010, 64
      %v1201 = vpop.permute.xlu0 %1200
      %1202 = vrot.lane.b32.xlu0 %v1011, 64
      %v1203 = vpop.permute.xlu0 %1202
      %1204 = vrot.lane.b32.xlu0 %v1012, 64
      %v1205 = vpop.permute.xlu0 %1204
      %1206 = vrot.lane.b32.xlu0 %v1013, 64
      %v1207 = vpop.permute.xlu0 %1206
      %1208 = vrot.lane.b32.xlu0 %v1014, 64
      %v1209 = vpop.permute.xlu0 %1208
      %1210 = vrot.lane.b32.xlu0 %v1015, 64
      %v1211 = vpop.permute.xlu0 %1210
      %1212 = vrot.lane.b32.xlu0 %v1016, 64
      %v1213 = vpop.permute.xlu0 %1212
      %1214 = vrot.lane.b32.xlu0 %v1017, 64
      %v1215 = vpop.permute.xlu0 %1214
      %v1282 = vmax.f32 %v952, %v1085
      %v1283 = vmax.f32 %v953, %v1087
      %v1284 = vmax.f32 %v954, %v1089
      %v1285 = vmax.f32 %v955, %v1091
      %v1286 = vmax.f32 %v956, %v1093
      %v1287 = vmax.f32 %v957, %v1095
      %v1288 = vmax.f32 %v958, %v1097
      %v1289 = vmax.f32 %v959, %v1099
      %v1290 = vmax.f32 %v960, %v1101
      %v1291 = vmax.f32 %v961, %v1103
      %v1292 = vmax.f32 %v962, %v1105
      %v1293 = vmax.f32 %v963, %v1107
      %v1294 = vmax.f32 %v964, %v1109
      %v1295 = vmax.f32 %v965, %v1111
      %v1296 = vmax.f32 %v966, %v1113
      %v1297 = vmax.f32 %v967, %v1115
      %v1298 = vmax.f32 %v968, %v1117
      %v1299 = vmax.f32 %v969, %v1119
      %v1300 = vmax.f32 %v970, %v1121
      %v1301 = vmax.f32 %v971, %v1123
      %v1302 = vmax.f32 %v972, %v1125
      %v1303 = vmax.f32 %v973, %v1127
      %v1304 = vmax.f32 %v974, %v1129
      %v1305 = vmax.f32 %v975, %v1131
      %v1306 = vmax.f32 %v976, %v1133
      %v1307 = vmax.f32 %v977, %v1135
      %v1308 = vmax.f32 %v978, %v1137
      %v1309 = vmax.f32 %v979, %v1139
      %v1310 = vmax.f32 %v980, %v1141
      %v1311 = vmax.f32 %v981, %v1143
      %v1312 = vmax.f32 %v982, %v1145
      %v1313 = vmax.f32 %v983, %v1147
      %v1314 = vmax.f32 %v984, %v1149
      %v1315 = vmax.f32 %v985, %v1151
      %v1316 = vmax.f32 %v986, %v1153
      %v1317 = vmax.f32 %v987, %v1155
      %v1318 = vmax.f32 %v988, %v1157
      %v1319 = vmax.f32 %v989, %v1159
      %v1320 = vmax.f32 %v990, %v1161
      %v1321 = vmax.f32 %v991, %v1163
      %v1322 = vmax.f32 %v992, %v1165
      %v1323 = vmax.f32 %v993, %v1167
      %v1324 = vmax.f32 %v994, %v1169
      %v1325 = vmax.f32 %v995, %v1171
      %v1326 = vmax.f32 %v996, %v1173
      %v1327 = vmax.f32 %v997, %v1175
      %v1328 = vmax.f32 %v998, %v1177
      %v1329 = vmax.f32 %v999, %v1179
      %v1330 = vmax.f32 %v1000, %v1181
      %v1331 = vmax.f32 %v1001, %v1183
      %v1332 = vmax.f32 %v1002, %v1185
      %v1333 = vmax.f32 %v1003, %v1187
      %v1334 = vmax.f32 %v1004, %v1189
      %v1335 = vmax.f32 %v1005, %v1191
      %v1336 = vmax.f32 %v1006, %v1193
      %v1337 = vmax.f32 %v1007, %v1195
      %v1338 = vmax.f32 %v1008, %v1197
      %v1339 = vmax.f32 %v1009, %v1199
      %v1340 = vmax.f32 %v1010, %v1201
      %v1341 = vmax.f32 %v1011, %v1203
      %v1342 = vmax.f32 %v1012, %v1205
      %v1343 = vmax.f32 %v1013, %v1207
      %v1344 = vmax.f32 %v1014, %v1209
      %v1345 = vmax.f32 %v1015, %v1211
      %v1346 = vmax.f32 %v1016, %v1213
      %v1347 = vmax.f32 %v1017, %v1215
      %v1348 = vld [vmem:[%s2] sm:$0x1]
      %v1350 = vperm.slane %v1348, 0
      %v1352 = vadd.f32 %v1282, %v1350
      %v1353 = vadd.f32 %v1283, %v1350
      %v1354 = vadd.f32 %v1284, %v1350
      %v1355 = vadd.f32 %v1285, %v1350
      %v1356 = vadd.f32 %v1286, %v1350
      %v1357 = vadd.f32 %v1287, %v1350
      %v1358 = vadd.f32 %v1288, %v1350
      %v1359 = vadd.f32 %v1289, %v1350
      %v1360 = vadd.f32 %v1290, %v1350
      %v1361 = vadd.f32 %v1291, %v1350
      %v1362 = vadd.f32 %v1292, %v1350
      %v1363 = vadd.f32 %v1293, %v1350
      %v1364 = vadd.f32 %v1294, %v1350
      %v1365 = vadd.f32 %v1295, %v1350
      %v1366 = vadd.f32 %v1296, %v1350
      %v1367 = vadd.f32 %v1297, %v1350
      %v1368 = vadd.f32 %v1298, %v1350
      %v1369 = vadd.f32 %v1299, %v1350
      %v1370 = vadd.f32 %v1300, %v1350
      %v1371 = vadd.f32 %v1301, %v1350
      %v1372 = vadd.f32 %v1302, %v1350
      %v1373 = vadd.f32 %v1303, %v1350
      %v1374 = vadd.f32 %v1304, %v1350
      %v1375 = vadd.f32 %v1305, %v1350
      %v1376 = vadd.f32 %v1306, %v1350
      %v1377 = vadd.f32 %v1307, %v1350
      %v1378 = vadd.f32 %v1308, %v1350
      %v1379 = vadd.f32 %v1309, %v1350
      %v1380 = vadd.f32 %v1310, %v1350
      %v1381 = vadd.f32 %v1311, %v1350
      %v1382 = vadd.f32 %v1312, %v1350
      %v1383 = vadd.f32 %v1313, %v1350
      %v1384 = vadd.f32 %v1314, %v1350
      %v1385 = vadd.f32 %v1315, %v1350
      %v1386 = vadd.f32 %v1316, %v1350
      %v1387 = vadd.f32 %v1317, %v1350
      %v1388 = vadd.f32 %v1318, %v1350
      %v1389 = vadd.f32 %v1319, %v1350
      %v1390 = vadd.f32 %v1320, %v1350
      %v1391 = vadd.f32 %v1321, %v1350
      %v1392 = vadd.f32 %v1322, %v1350
      %v1393 = vadd.f32 %v1323, %v1350
      %v1394 = vadd.f32 %v1324, %v1350
      %v1395 = vadd.f32 %v1325, %v1350
      %v1396 = vadd.f32 %v1326, %v1350
      %v1397 = vadd.f32 %v1327, %v1350
      %v1398 = vadd.f32 %v1328, %v1350
      %v1399 = vadd.f32 %v1329, %v1350
      %v1400 = vadd.f32 %v1330, %v1350
      %v1401 = vadd.f32 %v1331, %v1350
      %v1402 = vadd.f32 %v1332, %v1350
      %v1403 = vadd.f32 %v1333, %v1350
      %v1404 = vadd.f32 %v1334, %v1350
      %v1405 = vadd.f32 %v1335, %v1350
      %v1406 = vadd.f32 %v1336, %v1350
      %v1407 = vadd.f32 %v1337, %v1350
      %v1408 = vadd.f32 %v1338, %v1350
      %v1409 = vadd.f32 %v1339, %v1350
      %v1410 = vadd.f32 %v1340, %v1350
      %v1411 = vadd.f32 %v1341, %v1350
      %v1412 = vadd.f32 %v1342, %v1350
      %v1413 = vadd.f32 %v1343, %v1350
      %v1414 = vadd.f32 %v1344, %v1350
      %v1415 = vadd.f32 %v1345, %v1350
      %v1416 = vadd.f32 %v1346, %v1350
      %v1417 = vadd.f32 %v1347, %v1350
      %v1418 = vmax.f32 %v1352, 0.0
      %v1419 = vmax.f32 %v1353, 0.0
      %v1420 = vmax.f32 %v1354, 0.0
      %v1421 = vmax.f32 %v1355, 0.0
      %v1422 = vmax.f32 %v1356, 0.0
      %v1423 = vmax.f32 %v1357, 0.0
      %v1424 = vmax.f32 %v1358, 0.0
      %v1425 = vmax.f32 %v1359, 0.0
      %v1426 = vmax.f32 %v1360, 0.0
      %v1427 = vmax.f32 %v1361, 0.0
      %v1428 = vmax.f32 %v1362, 0.0
      %v1429 = vmax.f32 %v1363, 0.0
      %v1430 = vmax.f32 %v1364, 0.0
      %v1431 = vmax.f32 %v1365, 0.0
      %v1432 = vmax.f32 %v1366, 0.0
      %v1433 = vmax.f32 %v1367, 0.0
      %v1434 = vmax.f32 %v1368, 0.0
      %v1435 = vmax.f32 %v1369, 0.0
      %v1436 = vmax.f32 %v1370, 0.0
      %v1437 = vmax.f32 %v1371, 0.0
      %v1438 = vmax.f32 %v1372, 0.0
      %v1439 = vmax.f32 %v1373, 0.0
      %v1440 = vmax.f32 %v1374, 0.0
      %v1441 = vmax.f32 %v1375, 0.0
      %v1442 = vmax.f32 %v1376, 0.0
      %v1443 = vmax.f32 %v1377, 0.0
      %v1444 = vmax.f32 %v1378, 0.0
      %v1445 = vmax.f32 %v1379, 0.0
      %v1446 = vmax.f32 %v1380, 0.0
      %v1447 = vmax.f32 %v1381, 0.0
      %v1448 = vmax.f32 %v1382, 0.0
      %v1449 = vmax.f32 %v1383, 0.0
      %v1450 = vmax.f32 %v1384, 0.0
      %v1451 = vmax.f32 %v1385, 0.0
      %v1452 = vmax.f32 %v1386, 0.0
      %v1453 = vmax.f32 %v1387, 0.0
      %v1454 = vmax.f32 %v1388, 0.0
      %v1455 = vmax.f32 %v1389, 0.0
      %v1456 = vmax.f32 %v1390, 0.0
      %v1457 = vmax.f32 %v1391, 0.0
      %v1458 = vmax.f32 %v1392, 0.0
      %v1459 = vmax.f32 %v1393, 0.0
      %v1460 = vmax.f32 %v1394, 0.0
      %v1461 = vmax.f32 %v1395, 0.0
      %v1462 = vmax.f32 %v1396, 0.0
      %v1463 = vmax.f32 %v1397, 0.0
      %v1464 = vmax.f32 %v1398, 0.0
      %v1465 = vmax.f32 %v1399, 0.0
      %v1466 = vmax.f32 %v1400, 0.0
      %v1467 = vmax.f32 %v1401, 0.0
      %v1468 = vmax.f32 %v1402, 0.0
      %v1469 = vmax.f32 %v1403, 0.0
      %v1470 = vmax.f32 %v1404, 0.0
      %v1471 = vmax.f32 %v1405, 0.0
      %v1472 = vmax.f32 %v1406, 0.0
      %v1473 = vmax.f32 %v1407, 0.0
      %v1474 = vmax.f32 %v1408, 0.0
      %v1475 = vmax.f32 %v1409, 0.0
      %v1476 = vmax.f32 %v1410, 0.0
      %v1477 = vmax.f32 %v1411, 0.0
      %v1478 = vmax.f32 %v1412, 0.0
      %v1479 = vmax.f32 %v1413, 0.0
      %v1480 = vmax.f32 %v1414, 0.0
      %v1481 = vmax.f32 %v1415, 0.0
      %v1482 = vmax.f32 %v1416, 0.0
      %v1483 = vmax.f32 %v1417, 0.0
      %v1484 = vpack.c.bf16 %v1418, %v1418
      %v1485 = vpack.c.bf16 %v1419, %v1419
      %v1486 = vpack.c.bf16 %v1420, %v1420
      %v1487 = vpack.c.bf16 %v1421, %v1421
      %v1488 = vpack.c.bf16 %v1422, %v1422
      %v1489 = vpack.c.bf16 %v1423, %v1423
      %v1490 = vpack.c.bf16 %v1424, %v1424
      %v1491 = vpack.c.bf16 %v1425, %v1425
      %v1492 = vpack.c.bf16 %v1426, %v1426
      %v1493 = vpack.c.bf16 %v1427, %v1427
      %v1494 = vpack.c.bf16 %v1428, %v1428
      %v1495 = vpack.c.bf16 %v1429, %v1429
      %v1496 = vpack.c.bf16 %v1430, %v1430
      %v1497 = vpack.c.bf16 %v1431, %v1431
      %v1498 = vpack.c.bf16 %v1432, %v1432
      %v1499 = vpack.c.bf16 %v1433, %v1433
      %v1500 = vpack.c.bf16 %v1434, %v1434
      %v1501 = vpack.c.bf16 %v1435, %v1435
      %v1502 = vpack.c.bf16 %v1436, %v1436
      %v1503 = vpack.c.bf16 %v1437, %v1437
      %v1504 = vpack.c.bf16 %v1438, %v1438
      %v1505 = vpack.c.bf16 %v1439, %v1439
      %v1506 = vpack.c.bf16 %v1440, %v1440
      %v1507 = vpack.c.bf16 %v1441, %v1441
      %v1508 = vpack.c.bf16 %v1442, %v1442
      %v1509 = vpack.c.bf16 %v1443, %v1443
      %v1510 = vpack.c.bf16 %v1444, %v1444
      %v1511 = vpack.c.bf16 %v1445, %v1445
      %v1512 = vpack.c.bf16 %v1446, %v1446
      %v1513 = vpack.c.bf16 %v1447, %v1447
      %v1514 = vpack.c.bf16 %v1448, %v1448
      %v1515 = vpack.c.bf16 %v1449, %v1449
      %v1516 = vpack.c.bf16 %v1450, %v1450
      %v1517 = vpack.c.bf16 %v1451, %v1451
      %v1518 = vpack.c.bf16 %v1452, %v1452
      %v1519 = vpack.c.bf16 %v1453, %v1453
      %v1520 = vpack.c.bf16 %v1454, %v1454
      %v1521 = vpack.c.bf16 %v1455, %v1455
      %v1522 = vpack.c.bf16 %v1456, %v1456
      %v1523 = vpack.c.bf16 %v1457, %v1457
      %v1524 = vpack.c.bf16 %v1458, %v1458
      %v1525 = vpack.c.bf16 %v1459, %v1459
      %v1526 = vpack.c.bf16 %v1460, %v1460
      %v1527 = vpack.c.bf16 %v1461, %v1461
      %v1528 = vpack.c.bf16 %v1462, %v1462
      %v1529 = vpack.c.bf16 %v1463, %v1463
      %v1530 = vpack.c.bf16 %v1464, %v1464
      %v1531 = vpack.c.bf16 %v1465, %v1465
      %v1532 = vpack.c.bf16 %v1466, %v1466
      %v1533 = vpack.c.bf16 %v1467, %v1467
      %v1534 = vpack.c.bf16 %v1468, %v1468
      %v1535 = vpack.c.bf16 %v1469, %v1469
      %v1536 = vpack.c.bf16 %v1470, %v1470
      %v1537 = vpack.c.bf16 %v1471, %v1471
      %v1538 = vpack.c.bf16 %v1472, %v1472
      %v1539 = vpack.c.bf16 %v1473, %v1473
      %v1540 = vpack.c.bf16 %v1474, %v1474
      %v1541 = vpack.c.bf16 %v1475, %v1475
      %v1542 = vpack.c.bf16 %v1476, %v1476
      %v1543 = vpack.c.bf16 %v1477, %v1477
      %v1544 = vpack.c.bf16 %v1478, %v1478
      %v1545 = vpack.c.bf16 %v1479, %v1479
      %v1546 = vpack.c.bf16 %v1480, %v1480
      %v1547 = vpack.c.bf16 %v1481, %v1481
      %v1548 = vpack.c.bf16 %v1482, %v1482
      %v1549 = vpack.c.bf16 %v1483, %v1483
      %vm1550 = vcmask 257024
      %1551 = vst.msk [vmem:[%s172] sm:$0xf] %vm1550, %v1484
      %1552 = vst.msk [vmem:[%s172 + $0x4] sm:$0xf] %vm1550, %v1485
      %1553 = vst.msk [vmem:[%s172 + $0x8] sm:$0xf] %vm1550, %v1486
      %1554 = vst.msk [vmem:[%s172 + $0xc] sm:$0xf] %vm1550, %v1487
      %1555 = vst.msk [vmem:[%s172 + $0x10] sm:$0xf] %vm1550, %v1488
      %1556 = vst.msk [vmem:[%s172 + $0x14] sm:$0xf] %vm1550, %v1489
      %1557 = vst.msk [vmem:[%s172 + $0x18] sm:$0xf] %vm1550, %v1490
      %1558 = vst.msk [vmem:[%s172 + $0x1c] sm:$0xf] %vm1550, %v1491
      %1559 = vst.msk [vmem:[%s172 + $0x20] sm:$0xf] %vm1550, %v1492
      %1560 = vst.msk [vmem:[%s172 + $0x24] sm:$0xf] %vm1550, %v1493
      %1561 = vst.msk [vmem:[%s172 + $0x28] sm:$0xf] %vm1550, %v1494
      %1562 = vst.msk [vmem:[%s172 + $0x2c] sm:$0xf] %vm1550, %v1495
      %1563 = vst.msk [vmem:[%s172 + $0x30] sm:$0xf] %vm1550, %v1496
      %1564 = vst.msk [vmem:[%s172 + $0x34] sm:$0xf] %vm1550, %v1497
      %1565 = vst.msk [vmem:[%s172 + $0x38] sm:$0xf] %vm1550, %v1498
      %1566 = vst.msk [vmem:[%s172 + $0x3c] sm:$0xf] %vm1550, %v1499
      %1567 = vst.msk [vmem:[%s172 + $0x40] sm:$0xf] %vm1550, %v1500
      %1568 = vst.msk [vmem:[%s172 + $0x44] sm:$0xf] %vm1550, %v1501
      %1569 = vst.msk [vmem:[%s172 + $0x48] sm:$0xf] %vm1550, %v1502
      %1570 = vst.msk [vmem:[%s172 + $0x4c] sm:$0xf] %vm1550, %v1503
      %1571 = vst.msk [vmem:[%s172 + $0x50] sm:$0xf] %vm1550, %v1504
      %1572 = vst.msk [vmem:[%s172 + $0x54] sm:$0xf] %vm1550, %v1505
      %1573 = vst.msk [vmem:[%s172 + $0x58] sm:$0xf] %vm1550, %v1506
      %1574 = vst.msk [vmem:[%s172 + $0x5c] sm:$0xf] %vm1550, %v1507
      %1575 = vst.msk [vmem:[%s172 + $0x60] sm:$0xf] %vm1550, %v1508
      %1576 = vst.msk [vmem:[%s172 + $0x64] sm:$0xf] %vm1550, %v1509
      %1577 = vst.msk [vmem:[%s172 + $0x68] sm:$0xf] %vm1550, %v1510
      %1578 = vst.msk [vmem:[%s172 + $0x6c] sm:$0xf] %vm1550, %v1511
      %1579 = vst.msk [vmem:[%s172 + $0x70] sm:$0xf] %vm1550, %v1512
      %1580 = vst.msk [vmem:[%s172 + $0x74] sm:$0xf] %vm1550, %v1513
      %1581 = vst.msk [vmem:[%s172 + $0x78] sm:$0xf] %vm1550, %v1514
      %1582 = vst.msk [vmem:[%s172 + $0x7c] sm:$0xf] %vm1550, %v1515
      %1583 = vst.msk [vmem:[%s172 + $0x80] sm:$0xf] %vm1550, %v1516
      %1584 = vst.msk [vmem:[%s172 + $0x84] sm:$0xf] %vm1550, %v1517
      %1585 = vst.msk [vmem:[%s172 + $0x88] sm:$0xf] %vm1550, %v1518
      %1586 = vst.msk [vmem:[%s172 + $0x8c] sm:$0xf] %vm1550, %v1519
      %1587 = vst.msk [vmem:[%s172 + $0x90] sm:$0xf] %vm1550, %v1520
      %1588 = vst.msk [vmem:[%s172 + $0x94] sm:$0xf] %vm1550, %v1521
      %1589 = vst.msk [vmem:[%s172 + $0x98] sm:$0xf] %vm1550, %v1522
      %1590 = vst.msk [vmem:[%s172 + $0x9c] sm:$0xf] %vm1550, %v1523
      %1591 = vst.msk [vmem:[%s172 + $0xa0] sm:$0xf] %vm1550, %v1524
      %1592 = vst.msk [vmem:[%s172 + $0xa4] sm:$0xf] %vm1550, %v1525
      %1593 = vst.msk [vmem:[%s172 + $0xa8] sm:$0xf] %vm1550, %v1526
      %1594 = vst.msk [vmem:[%s172 + $0xac] sm:$0xf] %vm1550, %v1527
      %1595 = vst.msk [vmem:[%s172 + $0xb0] sm:$0xf] %vm1550, %v1528
      %1596 = vst.msk [vmem:[%s172 + $0xb4] sm:$0xf] %vm1550, %v1529
      %1597 = vst.msk [vmem:[%s172 + $0xb8] sm:$0xf] %vm1550, %v1530
      %1598 = vst.msk [vmem:[%s172 + $0xbc] sm:$0xf] %vm1550, %v1531
      %1599 = vst.msk [vmem:[%s172 + $0xc0] sm:$0xf] %vm1550, %v1532
      %1600 = vst.msk [vmem:[%s172 + $0xc4] sm:$0xf] %vm1550, %v1533
      %1601 = vst.msk [vmem:[%s172 + $0xc8] sm:$0xf] %vm1550, %v1534
      %1602 = vst.msk [vmem:[%s172 + $0xcc] sm:$0xf] %vm1550, %v1535
      %1603 = vst.msk [vmem:[%s172 + $0xd0] sm:$0xf] %vm1550, %v1536
      %1604 = vst.msk [vmem:[%s172 + $0xd4] sm:$0xf] %vm1550, %v1537
      %1605 = vst.msk [vmem:[%s172 + $0xd8] sm:$0xf] %vm1550, %v1538
      %1606 = vst.msk [vmem:[%s172 + $0xdc] sm:$0xf] %vm1550, %v1539
      %1607 = vst.msk [vmem:[%s172 + $0xe0] sm:$0xf] %vm1550, %v1540
      %1608 = vst.msk [vmem:[%s172 + $0xe4] sm:$0xf] %vm1550, %v1541
      %1609 = vst.msk [vmem:[%s172 + $0xe8] sm:$0xf] %vm1550, %v1542
      %1610 = vst.msk [vmem:[%s172 + $0xec] sm:$0xf] %vm1550, %v1543
      %1611 = vst.msk [vmem:[%s172 + $0xf0] sm:$0xf] %vm1550, %v1544
      %1612 = vst.msk [vmem:[%s172 + $0xf4] sm:$0xf] %vm1550, %v1545
      %1613 = vst.msk [vmem:[%s172 + $0xf8] sm:$0xf] %vm1550, %v1546
      %1614 = vst.msk [vmem:[%s172 + $0xfc] sm:$0xf] %vm1550, %v1547
      %1615 = vst.msk [vmem:[%s172 + $0x100] sm:$0xf] %vm1550, %v1548
      %1616 = vst.msk [vmem:[%s172 + $0x104] sm:$0xf] %vm1550, %v1549
      %s1617 = smul.u32 66, %s14
      %p1618 = scmp.lt.s32.totalorder %s1617, 131
      %s1619 = scalar_select %p1618, %s1617, 131
      %s1620 = smul.addr %s1619, 4
      %s1621 = scalar_lea.vmem %s3, %s1620
      // Predicated region
      $region33: #{net_forward.3} parent=31 // pred_check
        %p1622 = pneg %p100
      $region34: #{net_forward.3} parent=31 // pred_check_branch
        %1624 = sbr.rel (%p1622) target = $region36
      $region35: #{net_forward.3} parent=31 // pred_region
        %s1625 = smul.u32 66, %s14
      $region36: #{net_forward.3} parent=31 // pred_fallthru
        _
    $region32: #{net_forward.3} parent=5 // pred_fallthru
      _
    %p1626 = scmp.le.s32.totalorder 2, %s9
    // Predicated region
    $region37: #{net_forward.3} parent=5 // pred_check
      %p1627 = pneg %p1626
    $region38: #{net_forward.3} parent=5 // pred_check_branch
      %1629 = sbr.rel (%p1627) target = $region40
    $region39: #{net_forward.3} parent=5 // pred_region
      %s1630 = ssub.s32 %s9, 2
      // Predicated region
      $region41: #{net_forward.3} parent=39 // pred_check
        %p1631 = pneg %p106
      $region42: #{net_forward.3} parent=39 // pred_check_branch
        %1633 = sbr.rel (%p1631) target = $region44
      $region43: #{net_forward.3} parent=39 // pred_region
        %s1634 = smul.u32 66, %s15
        %p1635 = scmp.lt.s32.totalorder %s1634, 131
        %s1636 = scalar_select %p1635, %s1634, 131
        %s1637 = smul.addr %s1636, 4
        %s1638 = scalar_lea.vmem %s3, %s1637
      $region44: #{net_forward.3} parent=39 // pred_fallthru
        _
    $region40: #{net_forward.3} parent=5 // pred_fallthru
      _
  $region6: #{net_forward.3} parent=0 // loop_footer
    %s13 = sadd.s32 1, %s9
  $region7: #{net_forward.3} parent=0 // loop_footer_branch
    %8 = sbr.rel target = $region3
  $region8: #{net_forward.3} parent=0 // loop_exit
    _

// kernel: net_forward.4
$region0: #{net_forward.4}
  #allocation0 [shape = 'u32[]', space=smem, size = 0x4, offset = 0x4, fixed_abs, tag = 'smem constant byte address 0x4 - core index']
  #allocation1 [shape = 'u32[72,128]{1,0:T(1,128)}', space=vmem, size = 0x9000, scoped, tag = 'internal scratch']
  %s0 = inlined_call_operand.vmem [shape: bf16[210,512], index: 0, kind: input, shape index: {}]
  %s1 = inlined_call_operand.vmem [shape: bf16[512,256], index: 1, kind: input, shape index: {}]
  %s2 = inlined_call_operand.vmem [shape: f32[1,64], index: 2, kind: input, shape index: {}]
  %s3 = inlined_call_operand.vmem [shape: bf16[210,64], index: 3, kind: output, shape index: {}]
  %s4 = sld [smem:[#allocation0]]
  $region22: #{net_forward.4} parent=0
    _
  %s6 = ssub.s32 1, %s4
  %s7 = scalar_select 0, %s6, %s4
  // Predicated region
  $region2: #{net_forward.4} parent=0 // pred_check
    _
  $region3: #{net_forward.4} parent=0 // pred_check_branch
    %9 = sbr.rel (0) target = $region5
  $region4: #{net_forward.4} parent=0 // pred_region
    _
  $region5: #{net_forward.4} parent=0 // pred_fallthru
    _
  // Predicated region
  $region6: #{net_forward.4} parent=0 // pred_check
    _
  $region7: #{net_forward.4} parent=0 // pred_check_branch
    %11 = sbr.rel (0) target = $region9
  $region8: #{net_forward.4} parent=0 // pred_region
    _
  $region9: #{net_forward.4} parent=0 // pred_fallthru
    _
  // Predicated region
  $region10: #{net_forward.4} parent=0 // pred_check
    _
  $region11: #{net_forward.4} parent=0 // pred_check_branch
    %13 = sbr.rel (0) target = $region13
  $region12: #{net_forward.4} parent=0 // pred_region
    _
  $region13: #{net_forward.4} parent=0 // pred_fallthru
    _
  %v14 = vld [vmem:[%s0] sm:$0xff]
  %v15 = vld [vmem:[%s0 + $0x8] sm:$0xff]
  %v16 = vld [vmem:[%s0 + $0x10] sm:$0xff]
  %v17 = vld [vmem:[%s0 + $0x18] sm:$0xff]
  %v18 = vld [vmem:[%s0 + $0x20] sm:$0xff]
  %v19 = vld [vmem:[%s0 + $0x28] sm:$0xff]
  %v20 = vld [vmem:[%s0 + $0x30] sm:$0xff]
  %v21 = vld [vmem:[%s0 + $0x38] sm:$0xff]
  %v22 = vld [vmem:[%s0 + $0x40] sm:$0xff]
  %v23 = vld [vmem:[%s0 + $0x48] sm:$0xff]
  %v24 = vld [vmem:[%s0 + $0x50] sm:$0xff]
  %v25 = vld [vmem:[%s0 + $0x58] sm:$0xff]
  %v26 = vld [vmem:[%s0 + $0x60] sm:$0xff]
  %v27 = vld [vmem:[%s0 + $0x68] sm:$0xff]
  %v28 = vld [vmem:[%s0 + $0x70] sm:$0xff]
  %v29 = vld [vmem:[%s0 + $0x78] sm:$0xff]
  %v30 = vld [vmem:[%s0 + $0x80] sm:$0xff]
  %v31 = vld [vmem:[%s0 + $0x88] sm:$0xff]
  %v32 = vld [vmem:[%s0 + $0x90] sm:$0xff]
  %v33 = vld [vmem:[%s0 + $0x98] sm:$0xff]
  %v34 = vld [vmem:[%s0 + $0xa0] sm:$0xff]
  %v35 = vld [vmem:[%s0 + $0xa8] sm:$0xff]
  %v36 = vld [vmem:[%s0 + $0xb0] sm:$0xff]
  %v37 = vld [vmem:[%s0 + $0xb8] sm:$0xff]
  %v38 = vld [vmem:[%s0 + $0xc0] sm:$0xff]
  %v39 = vld [vmem:[%s0 + $0xc8] sm:$0xff]
  %v40 = vld [vmem:[%s0 + $0xd0] sm:$0xff]
  %v41 = vld [vmem:[%s0 + $0xd8] sm:$0xff]
  %v42 = vld [vmem:[%s0 + $0xe0] sm:$0xff]
  %v43 = vld [vmem:[%s0 + $0xe8] sm:$0xff]
  %v44 = vld [vmem:[%s0 + $0xf0] sm:$0xff]
  %v45 = vld [vmem:[%s0 + $0xf8] sm:$0xff]
  %v46 = vld [vmem:[%s0 + $0x100] sm:$0xff]
  %v47 = vld [vmem:[%s0 + $0x108] sm:$0xff]
  %v48 = vld [vmem:[%s0 + $0x110] sm:$0xff]
  %v49 = vld [vmem:[%s0 + $0x118] sm:$0xff]
  %v50 = vld [vmem:[%s0 + $0x120] sm:$0xff]
  %v51 = vld [vmem:[%s0 + $0x128] sm:$0xff]
  %v52 = vld [vmem:[%s0 + $0x130] sm:$0xff]
  %v53 = vld [vmem:[%s0 + $0x138] sm:$0xff]
  %v54 = vld [vmem:[%s0 + $0x140] sm:$0xff]
  %v55 = vld [vmem:[%s0 + $0x148] sm:$0xff]
  %v56 = vld [vmem:[%s0 + $0x150] sm:$0xff]
  %v57 = vld [vmem:[%s0 + $0x158] sm:$0xff]
  %v58 = vld [vmem:[%s0 + $0x160] sm:$0xff]
  %v59 = vld [vmem:[%s0 + $0x168] sm:$0xff]
  %v60 = vld [vmem:[%s0 + $0x170] sm:$0xff]
  %v61 = vld [vmem:[%s0 + $0x178] sm:$0xff]
  %v62 = vld [vmem:[%s0 + $0x180] sm:$0xff]
  %v63 = vld [vmem:[%s0 + $0x188] sm:$0xff]
  %v64 = vld [vmem:[%s0 + $0x190] sm:$0xff]
  %v65 = vld [vmem:[%s0 + $0x198] sm:$0xff]
  %v66 = vld [vmem:[%s0 + $0x1a0] sm:$0x11]
  %v67 = vld [vmem:[%s0 + $0x1a8] sm:$0x11]
  %v68 = vld [vmem:[%s1] sm:$0xff]
  %v69 = vld [vmem:[%s1 + $0x8] sm:$0xff]
  %v70 = vld [vmem:[%s1 + $0x10] sm:$0xff]
  %v71 = vld [vmem:[%s1 + $0x18] sm:$0xff]
  %v72 = vld [vmem:[%s1 + $0x20] sm:$0xff]
  %v73 = vld [vmem:[%s1 + $0x28] sm:$0xff]
  %v74 = vld [vmem:[%s1 + $0x30] sm:$0xff]
  %v75 = vld [vmem:[%s1 + $0x38] sm:$0xff]
  %v76 = vld [vmem:[%s1 + $0x40] sm:$0xff]
  %v77 = vld [vmem:[%s1 + $0x48] sm:$0xff]
  %v78 = vld [vmem:[%s1 + $0x50] sm:$0xff]
  %v79 = vld [vmem:[%s1 + $0x58] sm:$0xff]
  %v80 = vld [vmem:[%s1 + $0x60] sm:$0xff]
  %v81 = vld [vmem:[%s1 + $0x68] sm:$0xff]
  %v82 = vld [vmem:[%s1 + $0x70] sm:$0xff]
  %v83 = vld [vmem:[%s1 + $0x78] sm:$0xff]
  %v84 = vld [vmem:[%s1 + $0x80] sm:$0xff]
  %v85 = vld [vmem:[%s1 + $0x88] sm:$0xff]
  %v86 = vld [vmem:[%s1 + $0x90] sm:$0xff]
  %v87 = vld [vmem:[%s1 + $0x98] sm:$0xff]
  %v88 = vld [vmem:[%s1 + $0xa0] sm:$0xff]
  %v89 = vld [vmem:[%s1 + $0xa8] sm:$0xff]
  %v90 = vld [vmem:[%s1 + $0xb0] sm:$0xff]
  %v91 = vld [vmem:[%s1 + $0xb8] sm:$0xff]
  %v92 = vld [vmem:[%s1 + $0xc0] sm:$0xff]
  %v93 = vld [vmem:[%s1 + $0xc8] sm:$0xff]
  %v94 = vld [vmem:[%s1 + $0xd0] sm:$0xff]
  %v95 = vld [vmem:[%s1 + $0xd8] sm:$0xff]
  %v96 = vld [vmem:[%s1 + $0xe0] sm:$0xff]
  %v97 = vld [vmem:[%s1 + $0xe8] sm:$0xff]
  %v98 = vld [vmem:[%s1 + $0xf0] sm:$0xff]
  %v99 = vld [vmem:[%s1 + $0xf8] sm:$0xff]
  %v100 = vld [vmem:[%s1 + $0x100] sm:$0xff]
  %v101 = vld [vmem:[%s1 + $0x108] sm:$0xff]
  %v102 = vld [vmem:[%s1 + $0x110] sm:$0xff]
  %v103 = vld [vmem:[%s1 + $0x118] sm:$0xff]
  %v104 = vld [vmem:[%s1 + $0x120] sm:$0xff]
  %v105 = vld [vmem:[%s1 + $0x128] sm:$0xff]
  %v106 = vld [vmem:[%s1 + $0x130] sm:$0xff]
  %v107 = vld [vmem:[%s1 + $0x138] sm:$0xff]
  %v108 = vld [vmem:[%s1 + $0x140] sm:$0xff]
  %v109 = vld [vmem:[%s1 + $0x148] sm:$0xff]
  %v110 = vld [vmem:[%s1 + $0x150] sm:$0xff]
  %v111 = vld [vmem:[%s1 + $0x158] sm:$0xff]
  %v112 = vld [vmem:[%s1 + $0x160] sm:$0xff]
  %v113 = vld [vmem:[%s1 + $0x168] sm:$0xff]
  %v114 = vld [vmem:[%s1 + $0x170] sm:$0xff]
  %v115 = vld [vmem:[%s1 + $0x178] sm:$0xff]
  %v116 = vld [vmem:[%s1 + $0x180] sm:$0xff]
  %v117 = vld [vmem:[%s1 + $0x188] sm:$0xff]
  %v118 = vld [vmem:[%s1 + $0x190] sm:$0xff]
  %v119 = vld [vmem:[%s1 + $0x198] sm:$0xff]
  %v120 = vld [vmem:[%s1 + $0x1a0] sm:$0xff]
  %v121 = vld [vmem:[%s1 + $0x1a8] sm:$0xff]
  %v122 = vld [vmem:[%s1 + $0x1b0] sm:$0xff]
  %v123 = vld [vmem:[%s1 + $0x1b8] sm:$0xff]
  %v124 = vld [vmem:[%s1 + $0x1c0] sm:$0xff]
  %v125 = vld [vmem:[%s1 + $0x1c8] sm:$0xff]
  %v126 = vld [vmem:[%s1 + $0x1d0] sm:$0xff]
  %v127 = vld [vmem:[%s1 + $0x1d8] sm:$0xff]
  %v128 = vld [vmem:[%s1 + $0x1e0] sm:$0xff]
  %v129 = vld [vmem:[%s1 + $0x1e8] sm:$0xff]
  %v130 = vld [vmem:[%s1 + $0x1f0] sm:$0xff]
  %v131 = vld [vmem:[%s1 + $0x1f8] sm:$0xff]
  %v186 = vunpack.c.l.b16 %v14
  %v187 = vunpack.c.h.b16 %v14
  %v188 = vunpack.c.l.b16 %v15
  %v189 = vunpack.c.h.b16 %v15
  %v190 = vunpack.c.l.b16 %v16
  %v191 = vunpack.c.h.b16 %v16
  %v192 = vunpack.c.l.b16 %v17
  %v193 = vunpack.c.h.b16 %v17
  %v194 = vunpack.c.l.b16 %v18
  %v195 = vunpack.c.h.b16 %v18
  %v196 = vunpack.c.l.b16 %v19
  %v197 = vunpack.c.h.b16 %v19
  %v198 = vunpack.c.l.b16 %v20
  %v199 = vunpack.c.h.b16 %v20
  %v200 = vunpack.c.l.b16 %v21
  %v201 = vunpack.c.h.b16 %v21
  %v202 = vunpack.c.l.b16 %v22
  %v203 = vunpack.c.h.b16 %v22
  %v204 = vunpack.c.l.b16 %v23
  %v205 = vunpack.c.h.b16 %v23
  %v206 = vunpack.c.l.b16 %v24
  %v207 = vunpack.c.h.b16 %v24
  %v208 = vunpack.c.l.b16 %v25
  %v209 = vunpack.c.h.b16 %v25
  %v210 = vunpack.c.l.b16 %v26
  %v211 = vunpack.c.h.b16 %v26
  %v212 = vunpack.c.l.b16 %v27
  %v213 = vunpack.c.h.b16 %v27
  %v214 = vunpack.c.l.b16 %v28
  %v215 = vunpack.c.h.b16 %v28
  %v216 = vunpack.c.l.b16 %v29
  %v217 = vunpack.c.h.b16 %v29
  %v218 = vunpack.c.l.b16 %v30
  %v219 = vunpack.c.h.b16 %v30
  %v220 = vunpack.c.l.b16 %v31
  %v221 = vunpack.c.h.b16 %v31
  %v222 = vunpack.c.l.b16 %v32
  %v223 = vunpack.c.h.b16 %v32
  %v224 = vunpack.c.l.b16 %v33
  %v225 = vunpack.c.h.b16 %v33
  %v226 = vunpack.c.l.b16 %v34
  %v227 = vunpack.c.h.b16 %v34
  %v228 = vunpack.c.l.b16 %v35
  %v229 = vunpack.c.h.b16 %v35
  %v230 = vunpack.c.l.b16 %v36
  %v231 = vunpack.c.h.b16 %v36
  %v232 = vunpack.c.l.b16 %v37
  %v233 = vunpack.c.h.b16 %v37
  %v234 = vunpack.c.l.b16 %v38
  %v235 = vunpack.c.h.b16 %v38
  %v236 = vunpack.c.l.b16 %v39
  %v237 = vunpack.c.h.b16 %v39
  %v238 = vunpack.c.l.b16 %v40
  %v239 = vunpack.c.h.b16 %v40
  %v240 = vunpack.c.l.b16 %v41
  %v241 = vunpack.c.h.b16 %v41
  %v242 = vunpack.c.l.b16 %v42
  %v243 = vunpack.c.h.b16 %v42
  %v244 = vunpack.c.l.b16 %v43
  %v245 = vunpack.c.h.b16 %v43
  %v246 = vunpack.c.l.b16 %v44
  %v247 = vunpack.c.h.b16 %v44
  %v248 = vunpack.c.l.b16 %v45
  %v249 = vunpack.c.h.b16 %v45
  %v250 = vunpack.c.l.b16 %v46
  %v251 = vunpack.c.h.b16 %v46
  %v252 = vunpack.c.l.b16 %v47
  %v253 = vunpack.c.h.b16 %v47
  %v254 = vunpack.c.l.b16 %v48
  %v255 = vunpack.c.h.b16 %v48
  %v256 = vunpack.c.l.b16 %v49
  %v257 = vunpack.c.h.b16 %v49
  %v258 = vunpack.c.l.b16 %v50
  %v259 = vunpack.c.h.b16 %v50
  %v260 = vunpack.c.l.b16 %v51
  %v261 = vunpack.c.h.b16 %v51
  %v262 = vunpack.c.l.b16 %v52
  %v263 = vunpack.c.h.b16 %v52
  %v264 = vunpack.c.l.b16 %v53
  %v265 = vunpack.c.h.b16 %v53
  %v266 = vunpack.c.l.b16 %v54
  %v267 = vunpack.c.h.b16 %v54
  %v268 = vunpack.c.l.b16 %v55
  %v269 = vunpack.c.h.b16 %v55
  %v270 = vunpack.c.l.b16 %v56
  %v271 = vunpack.c.h.b16 %v56
  %v272 = vunpack.c.l.b16 %v57
  %v273 = vunpack.c.h.b16 %v57
  %v274 = vunpack.c.l.b16 %v58
  %v275 = vunpack.c.h.b16 %v58
  %v276 = vunpack.c.l.b16 %v59
  %v277 = vunpack.c.h.b16 %v59
  %v278 = vunpack.c.l.b16 %v60
  %v279 = vunpack.c.h.b16 %v60
  %v280 = vunpack.c.l.b16 %v61
  %v281 = vunpack.c.h.b16 %v61
  %v282 = vunpack.c.l.b16 %v62
  %v283 = vunpack.c.h.b16 %v62
  %v284 = vunpack.c.l.b16 %v63
  %v285 = vunpack.c.h.b16 %v63
  %v286 = vunpack.c.l.b16 %v64
  %v287 = vunpack.c.h.b16 %v64
  %v288 = vunpack.c.l.b16 %v65
  %v289 = vunpack.c.h.b16 %v65
  %v290 = vunpack.c.l.b16 %v66
  %v291 = vunpack.c.h.b16 %v66
  %v292 = vunpack.c.l.b16 %v67
  %v293 = vunpack.c.h.b16 %v67
  %v294 = vpack.c.b16 %v190, %v186
  %v295 = vpack.c.b16 %v191, %v187
  %v296 = vpack.c.b16 %v192, %v188
  %v297 = vpack.c.b16 %v193, %v189
  %v298 = vpack.c.b16 %v198, %v194
  %v299 = vpack.c.b16 %v199, %v195
  %v300 = vpack.c.b16 %v200, %v196
  %v301 = vpack.c.b16 %v201, %v197
  %v302 = vpack.c.b16 %v206, %v202
  %v303 = vpack.c.b16 %v207, %v203
  %v304 = vpack.c.b16 %v208, %v204
  %v305 = vpack.c.b16 %v209, %v205
  %v306 = vpack.c.b16 %v214, %v210
  %v307 = vpack.c.b16 %v215, %v211
  %v308 = vpack.c.b16 %v216, %v212
  %v309 = vpack.c.b16 %v217, %v213
  %v310 = vpack.c.b16 %v222, %v218
  %v311 = vpack.c.b16 %v223, %v219
  %v312 = vpack.c.b16 %v224, %v220
  %v313 = vpack.c.b16 %v225, %v221
  %v314 = vpack.c.b16 %v230, %v226
  %v315 = vpack.c.b16 %v231, %v227
  %v316 = vpack.c.b16 %v232, %v228
  %v317 = vpack.c.b16 %v233, %v229
  %v318 = vpack.c.b16 %v238, %v234
  %v319 = vpack.c.b16 %v239, %v235
  %v320 = vpack.c.b16 %v240, %v236
  %v321 = vpack.c.b16 %v241, %v237
  %v322 = vpack.c.b16 %v246, %v242
  %v323 = vpack.c.b16 %v247, %v243
  %v324 = vpack.c.b16 %v248, %v244
  %v325 = vpack.c.b16 %v249, %v245
  %v326 = vpack.c.b16 %v254, %v250
  %v327 = vpack.c.b16 %v255, %v251
  %v328 = vpack.c.b16 %v256, %v252
  %v329 = vpack.c.b16 %v257, %v253
  %v330 = vpack.c.b16 %v262, %v258
  %v331 = vpack.c.b16 %v263, %v259
  %v332 = vpack.c.b16 %v264, %v260
  %v333 = vpack.c.b16 %v265, %v261
  %v334 = vpack.c.b16 %v270, %v266
  %v335 = vpack.c.b16 %v271, %v267
  %v336 = vpack.c.b16 %v272, %v268
  %v337 = vpack.c.b16 %v273, %v269
  %v338 = vpack.c.b16 %v278, %v274
  %v339 = vpack.c.b16 %v279, %v275
  %v340 = vpack.c.b16 %v280, %v276
  %v341 = vpack.c.b16 %v281, %v277
  %v342 = vpack.c.b16 %v286, %v282
  %v343 = vpack.c.b16 %v287, %v283
  %v344 = vpack.c.b16 %v288, %v284
  %v345 = vpack.c.b16 %v289, %v285
  %v346 = vpack.c.b16 %v290, %v290
  %v347 = vpack.c.b16 %v291, %v291
  %v348 = vpack.c.b16 %v292, %v292
  %v349 = vpack.c.b16 %v293, %v293
  %v470 = vunpack.c.l.b16 %v68
  %v471 = vunpack.c.h.b16 %v68
  %v472 = vunpack.c.l.b16 %v69
  %v473 = vunpack.c.h.b16 %v69
  %v474 = vunpack.c.l.b16 %v70
  %v475 = vunpack.c.h.b16 %v70
  %v476 = vunpack.c.l.b16 %v71
  %v477 = vunpack.c.h.b16 %v71
  %v478 = vunpack.c.l.b16 %v72
  %v479 = vunpack.c.h.b16 %v72
  %v480 = vunpack.c.l.b16 %v73
  %v481 = vunpack.c.h.b16 %v73
  %v482 = vunpack.c.l.b16 %v74
  %v483 = vunpack.c.h.b16 %v74
  %v484 = vunpack.c.l.b16 %v75
  %v485 = vunpack.c.h.b16 %v75
  %v486 = vunpack.c.l.b16 %v76
  %v487 = vunpack.c.h.b16 %v76
  %v488 = vunpack.c.l.b16 %v77
  %v489 = vunpack.c.h.b16 %v77
  %v490 = vunpack.c.l.b16 %v78
  %v491 = vunpack.c.h.b16 %v78
  %v492 = vunpack.c.l.b16 %v79
  %v493 = vunpack.c.h.b16 %v79
  %v494 = vunpack.c.l.b16 %v80
  %v495 = vunpack.c.h.b16 %v80
  %v496 = vunpack.c.l.b16 %v81
  %v497 = vunpack.c.h.b16 %v81
  %v498 = vunpack.c.l.b16 %v82
  %v499 = vunpack.c.h.b16 %v82
  %v500 = vunpack.c.l.b16 %v83
  %v501 = vunpack.c.h.b16 %v83
  %v502 = vunpack.c.l.b16 %v84
  %v503 = vunpack.c.h.b16 %v84
  %v504 = vunpack.c.l.b16 %v85
  %v505 = vunpack.c.h.b16 %v85
  %v506 = vunpack.c.l.b16 %v86
  %v507 = vunpack.c.h.b16 %v86
  %v508 = vunpack.c.l.b16 %v87
  %v509 = vunpack.c.h.b16 %v87
  %v510 = vunpack.c.l.b16 %v88
  %v511 = vunpack.c.h.b16 %v88
  %v512 = vunpack.c.l.b16 %v89
  %v513 = vunpack.c.h.b16 %v89
  %v514 = vunpack.c.l.b16 %v90
  %v515 = vunpack.c.h.b16 %v90
  %v516 = vunpack.c.l.b16 %v91
  %v517 = vunpack.c.h.b16 %v91
  %v518 = vunpack.c.l.b16 %v92
  %v519 = vunpack.c.h.b16 %v92
  %v520 = vunpack.c.l.b16 %v93
  %v521 = vunpack.c.h.b16 %v93
  %v522 = vunpack.c.l.b16 %v94
  %v523 = vunpack.c.h.b16 %v94
  %v524 = vunpack.c.l.b16 %v95
  %v525 = vunpack.c.h.b16 %v95
  %v526 = vunpack.c.l.b16 %v96
  %v527 = vunpack.c.h.b16 %v96
  %v528 = vunpack.c.l.b16 %v97
  %v529 = vunpack.c.h.b16 %v97
  %v530 = vunpack.c.l.b16 %v98
  %v531 = vunpack.c.h.b16 %v98
  %v532 = vunpack.c.l.b16 %v99
  %v533 = vunpack.c.h.b16 %v99
  %v534 = vunpack.c.l.b16 %v100
  %v535 = vunpack.c.h.b16 %v100
  %v536 = vunpack.c.l.b16 %v101
  %v537 = vunpack.c.h.b16 %v101
  %v538 = vunpack.c.l.b16 %v102
  %v539 = vunpack.c.h.b16 %v102
  %v540 = vunpack.c.l.b16 %v103
  %v541 = vunpack.c.h.b16 %v103
  %v542 = vunpack.c.l.b16 %v104
  %v543 = vunpack.c.h.b16 %v104
  %v544 = vunpack.c.l.b16 %v105
  %v545 = vunpack.c.h.b16 %v105
  %v546 = vunpack.c.l.b16 %v106
  %v547 = vunpack.c.h.b16 %v106
  %v548 = vunpack.c.l.b16 %v107
  %v549 = vunpack.c.h.b16 %v107
  %v550 = vunpack.c.l.b16 %v108
  %v551 = vunpack.c.h.b16 %v108
  %v552 = vunpack.c.l.b16 %v109
  %v553 = vunpack.c.h.b16 %v109
  %v554 = vunpack.c.l.b16 %v110
  %v555 = vunpack.c.h.b16 %v110
  %v556 = vunpack.c.l.b16 %v111
  %v557 = vunpack.c.h.b16 %v111
  %v558 = vunpack.c.l.b16 %v112
  %v559 = vunpack.c.h.b16 %v112
  %v560 = vunpack.c.l.b16 %v113
  %v561 = vunpack.c.h.b16 %v113
  %v562 = vunpack.c.l.b16 %v114
  %v563 = vunpack.c.h.b16 %v114
  %v564 = vunpack.c.l.b16 %v115
  %v565 = vunpack.c.h.b16 %v115
  %v566 = vunpack.c.l.b16 %v116
  %v567 = vunpack.c.h.b16 %v116
  %v568 = vunpack.c.l.b16 %v117
  %v569 = vunpack.c.h.b16 %v117
  %v570 = vunpack.c.l.b16 %v118
  %v571 = vunpack.c.h.b16 %v118
  %v572 = vunpack.c.l.b16 %v119
  %v573 = vunpack.c.h.b16 %v119
  %v574 = vunpack.c.l.b16 %v120
  %v575 = vunpack.c.h.b16 %v120
  %v576 = vunpack.c.l.b16 %v121
  %v577 = vunpack.c.h.b16 %v121
  %v578 = vunpack.c.l.b16 %v122
  %v579 = vunpack.c.h.b16 %v122
  %v580 = vunpack.c.l.b16 %v123
  %v581 = vunpack.c.h.b16 %v123
  %v582 = vunpack.c.l.b16 %v124
  %v583 = vunpack.c.h.b16 %v124
  %v584 = vunpack.c.l.b16 %v125
  %v585 = vunpack.c.h.b16 %v125
  %v586 = vunpack.c.l.b16 %v126
  %v587 = vunpack.c.h.b16 %v126
  %v588 = vunpack.c.l.b16 %v127
  %v589 = vunpack.c.h.b16 %v127
  %v590 = vunpack.c.l.b16 %v128
  %v591 = vunpack.c.h.b16 %v128
  %v592 = vunpack.c.l.b16 %v129
  %v593 = vunpack.c.h.b16 %v129
  %v594 = vunpack.c.l.b16 %v130
  %v595 = vunpack.c.h.b16 %v130
  %v596 = vunpack.c.l.b16 %v131
  %v597 = vunpack.c.h.b16 %v131
  %v598 = vpack.c.b16 %v472, %v470
  %v599 = vpack.c.b16 %v473, %v471
  %v600 = vpack.c.b16 %v476, %v474
  %v601 = vpack.c.b16 %v477, %v475
  %v602 = vpack.c.b16 %v480, %v478
  %v603 = vpack.c.b16 %v481, %v479
  %v604 = vpack.c.b16 %v484, %v482
  %v605 = vpack.c.b16 %v485, %v483
  %v606 = vpack.c.b16 %v488, %v486
  %v607 = vpack.c.b16 %v489, %v487
  %v608 = vpack.c.b16 %v492, %v490
  %v609 = vpack.c.b16 %v493, %v491
  %v610 = vpack.c.b16 %v496, %v494
  %v611 = vpack.c.b16 %v497, %v495
  %v612 = vpack.c.b16 %v500, %v498
  %v613 = vpack.c.b16 %v501, %v499
  %v614 = vpack.c.b16 %v504, %v502
  %v615 = vpack.c.b16 %v505, %v503
  %v616 = vpack.c.b16 %v508, %v506
  %v617 = vpack.c.b16 %v509, %v507
  %v618 = vpack.c.b16 %v512, %v510
  %v619 = vpack.c.b16 %v513, %v511
  %v620 = vpack.c.b16 %v516, %v514
  %v621 = vpack.c.b16 %v517, %v515
  %v622 = vpack.c.b16 %v520, %v518
  %v623 = vpack.c.b16 %v521, %v519
  %v624 = vpack.c.b16 %v524, %v522
  %v625 = vpack.c.b16 %v525, %v523
  %v626 = vpack.c.b16 %v528, %v526
  %v627 = vpack.c.b16 %v529, %v527
  %v628 = vpack.c.b16 %v532, %v530
  %v629 = vpack.c.b16 %v533, %v531
  %v630 = vpack.c.b16 %v536, %v534
  %v631 = vpack.c.b16 %v537, %v535
  %v632 = vpack.c.b16 %v540, %v538
  %v633 = vpack.c.b16 %v541, %v539
  %v634 = vpack.c.b16 %v544, %v542
  %v635 = vpack.c.b16 %v545, %v543
  %v636 = vpack.c.b16 %v548, %v546
  %v637 = vpack.c.b16 %v549, %v547
  %v638 = vpack.c.b16 %v552, %v550
  %v639 = vpack.c.b16 %v553, %v551
  %v640 = vpack.c.b16 %v556, %v554
  %v641 = vpack.c.b16 %v557, %v555
  %v642 = vpack.c.b16 %v560, %v558
  %v643 = vpack.c.b16 %v561, %v559
  %v644 = vpack.c.b16 %v564, %v562
  %v645 = vpack.c.b16 %v565, %v563
  %v646 = vpack.c.b16 %v568, %v566
  %v647 = vpack.c.b16 %v569, %v567
  %v648 = vpack.c.b16 %v572, %v570
  %v649 = vpack.c.b16 %v573, %v571
  %v650 = vpack.c.b16 %v576, %v574
  %v651 = vpack.c.b16 %v577, %v575
  %v652 = vpack.c.b16 %v580, %v578
  %v653 = vpack.c.b16 %v581, %v579
  %v654 = vpack.c.b16 %v584, %v582
  %v655 = vpack.c.b16 %v585, %v583
  %v656 = vpack.c.b16 %v588, %v586
  %v657 = vpack.c.b16 %v589, %v587
  %v658 = vpack.c.b16 %v592, %v590
  %v659 = vpack.c.b16 %v593, %v591
  %v660 = vpack.c.b16 %v596, %v594
  %v661 = vpack.c.b16 %v597, %v595
  %726 = vmatpush.bf16.msra.mxu0 %v612
  %727 = vmatpush.bf16.msra.mxu0 %v610
  %728 = vmatpush.bf16.msra.mxu0 %v608
  %729 = vmatpush.bf16.msra.mxu0 %v606
  %730 = vmatpush.bf16.msra.mxu0 %v604
  %731 = vmatpush.bf16.msra.mxu0 %v602
  %732 = vmatpush.bf16.msra.mxu0 %v600
  %733 = vmatpush.bf16.msra.mxu0 %v598
  %734 = vmatmul.bf16.gmra.mxu0 %v294
  %v735 = vpop.f32.mrf.mxu0
  %v736 = vadd.f32 0.0, %v735
  %v737 = vpop.f32.mrf.mxu0
  %v738 = vadd.f32 0.0, %v737
  %739 = vmatmul.bf16.gmra.mxu0 %v298
  %v740 = vpop.f32.mrf.mxu0
  %v741 = vadd.f32 0.0, %v740
  %v742 = vpop.f32.mrf.mxu0
  %v743 = vadd.f32 0.0, %v742
  %744 = vmatmul.bf16.gmra.mxu0 %v302
  %v745 = vpop.f32.mrf.mxu0
  %v746 = vadd.f32 0.0, %v745
  %v747 = vpop.f32.mrf.mxu0
  %v748 = vadd.f32 0.0, %v747
  %749 = vmatmul.bf16.gmra.mxu0 %v306
  %v750 = vpop.f32.mrf.mxu0
  %v751 = vadd.f32 0.0, %v750
  %v752 = vpop.f32.mrf.mxu0
  %v753 = vadd.f32 0.0, %v752
  %754 = vmatmul.bf16.gmra.mxu0 %v310
  %v755 = vpop.f32.mrf.mxu0
  %v756 = vadd.f32 0.0, %v755
  %v757 = vpop.f32.mrf.mxu0
  %v758 = vadd.f32 0.0, %v757
  %759 = vmatmul.bf16.gmra.mxu0 %v314
  %v760 = vpop.f32.mrf.mxu0
  %v761 = vadd.f32 0.0, %v760
  %v762 = vpop.f32.mrf.mxu0
  %v763 = vadd.f32 0.0, %v762
  %764 = vmatmul.bf16.gmra.mxu0 %v318
  %v765 = vpop.f32.mrf.mxu0
  %v766 = vadd.f32 0.0, %v765
  %v767 = vpop.f32.mrf.mxu0
  %v768 = vadd.f32 0.0, %v767
  %769 = vmatmul.bf16.gmra.mxu0 %v322
  %v770 = vpop.f32.mrf.mxu0
  %v771 = vadd.f32 0.0, %v770
  %v772 = vpop.f32.mrf.mxu0
  %v773 = vadd.f32 0.0, %v772
  %774 = vmatmul.bf16.gmra.mxu0 %v326
  %v775 = vpop.f32.mrf.mxu0
  %v776 = vadd.f32 0.0, %v775
  %v777 = vpop.f32.mrf.mxu0
  %v778 = vadd.f32 0.0, %v777
  %779 = vmatmul.bf16.gmra.mxu0 %v330
  %v780 = vpop.f32.mrf.mxu0
  %v781 = vadd.f32 0.0, %v780
  %v782 = vpop.f32.mrf.mxu0
  %v783 = vadd.f32 0.0, %v782
  %784 = vmatmul.bf16.gmra.mxu0 %v334
  %v785 = vpop.f32.mrf.mxu0
  %v786 = vadd.f32 0.0, %v785
  %v787 = vpop.f32.mrf.mxu0
  %v788 = vadd.f32 0.0, %v787
  %789 = vmatmul.bf16.gmra.mxu0 %v338
  %v790 = vpop.f32.mrf.mxu0
  %v791 = vadd.f32 0.0, %v790
  %v792 = vpop.f32.mrf.mxu0
  %v793 = vadd.f32 0.0, %v792
  %794 = vmatmul.bf16.gmra.mxu0 %v342
  %v795 = vpop.f32.mrf.mxu0
  %v796 = vadd.f32 0.0, %v795
  %v797 = vpop.f32.mrf.mxu0
  %v798 = vadd.f32 0.0, %v797
  %799 = vmatmul.bf16.gmra.mxu0 %v346
  %v800 = vpop.f32.mrf.mxu0
  %v801 = vadd.f32 0.0, %v800
  %v802 = vpop.f32.mrf.mxu0
  %803 = vdwg.mxu0
  %804 = vmatpush.bf16.msra.mxu0 %v628
  %805 = vmatpush.bf16.msra.mxu0 %v626
  %806 = vmatpush.bf16.msra.mxu0 %v624
  %807 = vmatpush.bf16.msra.mxu0 %v622
  %808 = vmatpush.bf16.msra.mxu0 %v620
  %809 = vmatpush.bf16.msra.mxu0 %v618
  %810 = vmatpush.bf16.msra.mxu0 %v616
  %811 = vmatpush.bf16.msra.mxu0 %v614
  %812 = vmatmul.bf16.gmra.mxu0 %v295
  %v813 = vpop.f32.mrf.mxu0
  %v814 = vadd.f32 %v736, %v813
  %v815 = vpop.f32.mrf.mxu0
  %v816 = vadd.f32 %v738, %v815
  %817 = vmatmul.bf16.gmra.mxu0 %v299
  %v818 = vpop.f32.mrf.mxu0
  %v819 = vadd.f32 %v741, %v818
  %v820 = vpop.f32.mrf.mxu0
  %v821 = vadd.f32 %v743, %v820
  %822 = vmatmul.bf16.gmra.mxu0 %v303
  %v823 = vpop.f32.mrf.mxu0
  %v824 = vadd.f32 %v746, %v823
  %v825 = vpop.f32.mrf.mxu0
  %v826 = vadd.f32 %v748, %v825
  %827 = vmatmul.bf16.gmra.mxu0 %v307
  %v828 = vpop.f32.mrf.mxu0
  %v829 = vadd.f32 %v751, %v828
  %v830 = vpop.f32.mrf.mxu0
  %v831 = vadd.f32 %v753, %v830
  %832 = vmatmul.bf16.gmra.mxu0 %v311
  %v833 = vpop.f32.mrf.mxu0
  %v834 = vadd.f32 %v756, %v833
  %v835 = vpop.f32.mrf.mxu0
  %v836 = vadd.f32 %v758, %v835
  %837 = vmatmul.bf16.gmra.mxu0 %v315
  %v838 = vpop.f32.mrf.mxu0
  %v839 = vadd.f32 %v761, %v838
  %v840 = vpop.f32.mrf.mxu0
  %v841 = vadd.f32 %v763, %v840
  %842 = vmatmul.bf16.gmra.mxu0 %v319
  %v843 = vpop.f32.mrf.mxu0
  %v844 = vadd.f32 %v766, %v843
  %v845 = vpop.f32.mrf.mxu0
  %v846 = vadd.f32 %v768, %v845
  %847 = vmatmul.bf16.gmra.mxu0 %v323
  %v848 = vpop.f32.mrf.mxu0
  %v849 = vadd.f32 %v771, %v848
  %v850 = vpop.f32.mrf.mxu0
  %v851 = vadd.f32 %v773, %v850
  %852 = vmatmul.bf16.gmra.mxu0 %v327
  %v853 = vpop.f32.mrf.mxu0
  %v854 = vadd.f32 %v776, %v853
  %v855 = vpop.f32.mrf.mxu0
  %v856 = vadd.f32 %v778, %v855
  %857 = vmatmul.bf16.gmra.mxu0 %v331
  %v858 = vpop.f32.mrf.mxu0
  %v859 = vadd.f32 %v781, %v858
  %v860 = vpop.f32.mrf.mxu0
  %v861 = vadd.f32 %v783, %v860
  %862 = vmatmul.bf16.gmra.mxu0 %v335
  %v863 = vpop.f32.mrf.mxu0
  %v864 = vadd.f32 %v786, %v863
  %v865 = vpop.f32.mrf.mxu0
  %v866 = vadd.f32 %v788, %v865
  %867 = vmatmul.bf16.gmra.mxu0 %v339
  %v868 = vpop.f32.mrf.mxu0
  %v869 = vadd.f32 %v791, %v868
  %v870 = vpop.f32.mrf.mxu0
  %v871 = vadd.f32 %v793, %v870
  %872 = vmatmul.bf16.gmra.mxu0 %v343
  %v873 = vpop.f32.mrf.mxu0
  %v874 = vadd.f32 %v796, %v873
  %v875 = vpop.f32.mrf.mxu0
  %v876 = vadd.f32 %v798, %v875
  %877 = vmatmul.bf16.gmra.mxu0 %v347
  %v878 = vpop.f32.mrf.mxu0
  %v879 = vadd.f32 %v801, %v878
  %v880 = vpop.f32.mrf.mxu0
  %881 = vdwg.mxu0
  %882 = vmatpush.bf16.msra.mxu0 %v644
  %883 = vmatpush.bf16.msra.mxu0 %v642
  %884 = vmatpush.bf16.msra.mxu0 %v640
  %885 = vmatpush.bf16.msra.mxu0 %v638
  %886 = vmatpush.bf16.msra.mxu0 %v636
  %887 = vmatpush.bf16.msra.mxu0 %v634
  %888 = vmatpush.bf16.msra.mxu0 %v632
  %889 = vmatpush.bf16.msra.mxu0 %v630
  %890 = vmatmul.bf16.gmra.mxu0 %v296
  %v891 = vpop.f32.mrf.mxu0
  %v892 = vadd.f32 %v814, %v891
  %v893 = vpop.f32.mrf.mxu0
  %v894 = vadd.f32 %v816, %v893
  %895 = vmatmul.bf16.gmra.mxu0 %v300
  %v896 = vpop.f32.mrf.mxu0
  %v897 = vadd.f32 %v819, %v896
  %v898 = vpop.f32.mrf.mxu0
  %v899 = vadd.f32 %v821, %v898
  %900 = vmatmul.bf16.gmra.mxu0 %v304
  %v901 = vpop.f32.mrf.mxu0
  %v902 = vadd.f32 %v824, %v901
  %v903 = vpop.f32.mrf.mxu0
  %v904 = vadd.f32 %v826, %v903
  %905 = vmatmul.bf16.gmra.mxu0 %v308
  %v906 = vpop.f32.mrf.mxu0
  %v907 = vadd.f32 %v829, %v906
  %v908 = vpop.f32.mrf.mxu0
  %v909 = vadd.f32 %v831, %v908
  %910 = vmatmul.bf16.gmra.mxu0 %v312
  %v911 = vpop.f32.mrf.mxu0
  %v912 = vadd.f32 %v834, %v911
  %v913 = vpop.f32.mrf.mxu0
  %v914 = vadd.f32 %v836, %v913
  %915 = vmatmul.bf16.gmra.mxu0 %v316
  %v916 = vpop.f32.mrf.mxu0
  %v917 = vadd.f32 %v839, %v916
  %v918 = vpop.f32.mrf.mxu0
  %v919 = vadd.f32 %v841, %v918
  %920 = vmatmul.bf16.gmra.mxu0 %v320
  %v921 = vpop.f32.mrf.mxu0
  %v922 = vadd.f32 %v844, %v921
  %v923 = vpop.f32.mrf.mxu0
  %v924 = vadd.f32 %v846, %v923
  %925 = vmatmul.bf16.gmra.mxu0 %v324
  %v926 = vpop.f32.mrf.mxu0
  %v927 = vadd.f32 %v849, %v926
  %v928 = vpop.f32.mrf.mxu0
  %v929 = vadd.f32 %v851, %v928
  %930 = vmatmul.bf16.gmra.mxu0 %v328
  %v931 = vpop.f32.mrf.mxu0
  %v932 = vadd.f32 %v854, %v931
  %v933 = vpop.f32.mrf.mxu0
  %v934 = vadd.f32 %v856, %v933
  %935 = vmatmul.bf16.gmra.mxu0 %v332
  %v936 = vpop.f32.mrf.mxu0
  %v937 = vadd.f32 %v859, %v936
  %v938 = vpop.f32.mrf.mxu0
  %v939 = vadd.f32 %v861, %v938
  %940 = vmatmul.bf16.gmra.mxu0 %v336
  %v941 = vpop.f32.mrf.mxu0
  %v942 = vadd.f32 %v864, %v941
  %v943 = vpop.f32.mrf.mxu0
  %v944 = vadd.f32 %v866, %v943
  %945 = vmatmul.bf16.gmra.mxu0 %v340
  %v946 = vpop.f32.mrf.mxu0
  %v947 = vadd.f32 %v869, %v946
  %v948 = vpop.f32.mrf.mxu0
  %v949 = vadd.f32 %v871, %v948
  %950 = vmatmul.bf16.gmra.mxu0 %v344
  %v951 = vpop.f32.mrf.mxu0
  %v952 = vadd.f32 %v874, %v951
  %v953 = vpop.f32.mrf.mxu0
  %v954 = vadd.f32 %v876, %v953
  %955 = vmatmul.bf16.gmra.mxu0 %v348
  %v956 = vpop.f32.mrf.mxu0
  %v957 = vadd.f32 %v879, %v956
  %v958 = vpop.f32.mrf.mxu0
  %959 = vdwg.mxu0
  %960 = vmatpush.bf16.msra.mxu0 %v660
  %961 = vmatpush.bf16.msra.mxu0 %v658
  %962 = vmatpush.bf16.msra.mxu0 %v656
  %963 = vmatpush.bf16.msra.mxu0 %v654
  %964 = vmatpush.bf16.msra.mxu0 %v652
  %965 = vmatpush.bf16.msra.mxu0 %v650
  %966 = vmatpush.bf16.msra.mxu0 %v648
  %967 = vmatpush.bf16.msra.mxu0 %v646
  %968 = vmatmul.bf16.gmra.mxu0 %v297
  %v969 = vpop.f32.mrf.mxu0
  %v970 = vadd.f32 %v892, %v969
  %v971 = vpop.f32.mrf.mxu0
  %v972 = vadd.f32 %v894, %v971
  %973 = vmatmul.bf16.gmra.mxu0 %v301
  %v974 = vpop.f32.mrf.mxu0
  %v975 = vadd.f32 %v897, %v974
  %v976 = vpop.f32.mrf.mxu0
  %v977 = vadd.f32 %v899, %v976
  %978 = vmatmul.bf16.gmra.mxu0 %v305
  %v979 = vpop.f32.mrf.mxu0
  %v980 = vadd.f32 %v902, %v979
  %v981 = vpop.f32.mrf.mxu0
  %v982 = vadd.f32 %v904, %v981
  %983 = vmatmul.bf16.gmra.mxu0 %v309
  %v984 = vpop.f32.mrf.mxu0
  %v985 = vadd.f32 %v907, %v984
  %v986 = vpop.f32.mrf.mxu0
  %v987 = vadd.f32 %v909, %v986
  %988 = vmatmul.bf16.gmra.mxu0 %v313
  %v989 = vpop.f32.mrf.mxu0
  %v990 = vadd.f32 %v912, %v989
  %v991 = vpop.f32.mrf.mxu0
  %v992 = vadd.f32 %v914, %v991
  %993 = vmatmul.bf16.gmra.mxu0 %v317
  %v994 = vpop.f32.mrf.mxu0
  %v995 = vadd.f32 %v917, %v994
  %v996 = vpop.f32.mrf.mxu0
  %v997 = vadd.f32 %v919, %v996
  %998 = vmatmul.bf16.gmra.mxu0 %v321
  %v999 = vpop.f32.mrf.mxu0
  %v1000 = vadd.f32 %v922, %v999
  %v1001 = vpop.f32.mrf.mxu0
  %v1002 = vadd.f32 %v924, %v1001
  %1003 = vmatmul.bf16.gmra.mxu0 %v325
  %v1004 = vpop.f32.mrf.mxu0
  %v1005 = vadd.f32 %v927, %v1004
  %v1006 = vpop.f32.mrf.mxu0
  %v1007 = vadd.f32 %v929, %v1006
  %1008 = vmatmul.bf16.gmra.mxu0 %v329
  %v1009 = vpop.f32.mrf.mxu0
  %v1010 = vadd.f32 %v932, %v1009
  %v1011 = vpop.f32.mrf.mxu0
  %v1012 = vadd.f32 %v934, %v1011
  %1013 = vmatmul.bf16.gmra.mxu0 %v333
  %v1014 = vpop.f32.mrf.mxu0
  %v1015 = vadd.f32 %v937, %v1014
  %v1016 = vpop.f32.mrf.mxu0
  %v1017 = vadd.f32 %v939, %v1016
  %1018 = vmatmul.bf16.gmra.mxu0 %v337
  %v1019 = vpop.f32.mrf.mxu0
  %v1020 = vadd.f32 %v942, %v1019
  %v1021 = vpop.f32.mrf.mxu0
  %v1022 = vadd.f32 %v944, %v1021
  %1023 = vmatmul.bf16.gmra.mxu0 %v341
  %v1024 = vpop.f32.mrf.mxu0
  %v1025 = vadd.f32 %v947, %v1024
  %v1026 = vpop.f32.mrf.mxu0
  %v1027 = vadd.f32 %v949, %v1026
  %1028 = vmatmul.bf16.gmra.mxu0 %v345
  %v1029 = vpop.f32.mrf.mxu0
  %v1030 = vadd.f32 %v952, %v1029
  %v1031 = vpop.f32.mrf.mxu0
  %v1032 = vadd.f32 %v954, %v1031
  %1033 = vmatmul.bf16.gmra.mxu0 %v349
  %v1034 = vpop.f32.mrf.mxu0
  %v1035 = vadd.f32 %v957, %v1034
  %v1036 = vpop.f32.mrf.mxu0
  %1037 = vdwg.mxu0
  %1038 = vmatpush.bf16.msra.mxu0 %v613
  %1039 = vmatpush.bf16.msra.mxu0 %v611
  %1040 = vmatpush.bf16.msra.mxu0 %v609
  %1041 = vmatpush.bf16.msra.mxu0 %v607
  %1042 = vmatpush.bf16.msra.mxu0 %v605
  %1043 = vmatpush.bf16.msra.mxu0 %v603
  %1044 = vmatpush.bf16.msra.mxu0 %v601
  %1045 = vmatpush.bf16.msra.mxu0 %v599
  %1046 = vmatmul.bf16.gmra.mxu0 %v294
  %v1047 = vpop.f32.mrf.mxu0
  %v1048 = vadd.f32 0.0, %v1047
  %v1049 = vpop.f32.mrf.mxu0
  %v1050 = vadd.f32 0.0, %v1049
  %1051 = vmatmul.bf16.gmra.mxu0 %v298
  %v1052 = vpop.f32.mrf.mxu0
  %v1053 = vadd.f32 0.0, %v1052
  %v1054 = vpop.f32.mrf.mxu0
  %v1055 = vadd.f32 0.0, %v1054
  %1056 = vmatmul.bf16.gmra.mxu0 %v302
  %v1057 = vpop.f32.mrf.mxu0
  %v1058 = vadd.f32 0.0, %v1057
  %v1059 = vpop.f32.mrf.mxu0
  %v1060 = vadd.f32 0.0, %v1059
  %1061 = vmatmul.bf16.gmra.mxu0 %v306
  %v1062 = vpop.f32.mrf.mxu0
  %v1063 = vadd.f32 0.0, %v1062
  %v1064 = vpop.f32.mrf.mxu0
  %v1065 = vadd.f32 0.0, %v1064
  %1066 = vmatmul.bf16.gmra.mxu0 %v310
  %v1067 = vpop.f32.mrf.mxu0
  %v1068 = vadd.f32 0.0, %v1067
  %v1069 = vpop.f32.mrf.mxu0
  %v1070 = vadd.f32 0.0, %v1069
  %1071 = vmatmul.bf16.gmra.mxu0 %v314
  %v1072 = vpop.f32.mrf.mxu0
  %v1073 = vadd.f32 0.0, %v1072
  %v1074 = vpop.f32.mrf.mxu0
  %v1075 = vadd.f32 0.0, %v1074
  %1076 = vmatmul.bf16.gmra.mxu0 %v318
  %v1077 = vpop.f32.mrf.mxu0
  %v1078 = vadd.f32 0.0, %v1077
  %v1079 = vpop.f32.mrf.mxu0
  %v1080 = vadd.f32 0.0, %v1079
  %1081 = vmatmul.bf16.gmra.mxu0 %v322
  %v1082 = vpop.f32.mrf.mxu0
  %v1083 = vadd.f32 0.0, %v1082
  %v1084 = vpop.f32.mrf.mxu0
  %v1085 = vadd.f32 0.0, %v1084
  %1086 = vmatmul.bf16.gmra.mxu0 %v326
  %v1087 = vpop.f32.mrf.mxu0
  %v1088 = vadd.f32 0.0, %v1087
  %v1089 = vpop.f32.mrf.mxu0
  %v1090 = vadd.f32 0.0, %v1089
  %1091 = vmatmul.bf16.gmra.mxu0 %v330
  %v1092 = vpop.f32.mrf.mxu0
  %v1093 = vadd.f32 0.0, %v1092
  %v1094 = vpop.f32.mrf.mxu0
  %v1095 = vadd.f32 0.0, %v1094
  %1096 = vmatmul.bf16.gmra.mxu0 %v334
  %v1097 = vpop.f32.mrf.mxu0
  %v1098 = vadd.f32 0.0, %v1097
  %v1099 = vpop.f32.mrf.mxu0
  %v1100 = vadd.f32 0.0, %v1099
  %1101 = vmatmul.bf16.gmra.mxu0 %v338
  %v1102 = vpop.f32.mrf.mxu0
  %v1103 = vadd.f32 0.0, %v1102
  %v1104 = vpop.f32.mrf.mxu0
  %v1105 = vadd.f32 0.0, %v1104
  %1106 = vmatmul.bf16.gmra.mxu0 %v342
  %v1107 = vpop.f32.mrf.mxu0
  %v1108 = vadd.f32 0.0, %v1107
  %v1109 = vpop.f32.mrf.mxu0
  %v1110 = vadd.f32 0.0, %v1109
  %1111 = vmatmul.bf16.gmra.mxu0 %v346
  %v1112 = vpop.f32.mrf.mxu0
  %v1113 = vadd.f32 0.0, %v1112
  %v1114 = vpop.f32.mrf.mxu0
  %1115 = vdwg.mxu0
  %1116 = vmatpush.bf16.msra.mxu0 %v629
  %1117 = vmatpush.bf16.msra.mxu0 %v627
  %1118 = vmatpush.bf16.msra.mxu0 %v625
  %1119 = vmatpush.bf16.msra.mxu0 %v623
  %1120 = vmatpush.bf16.msra.mxu0 %v621
  %1121 = vmatpush.bf16.msra.mxu0 %v619
  %1122 = vmatpush.bf16.msra.mxu0 %v617
  %1123 = vmatpush.bf16.msra.mxu0 %v615
  %1124 = vmatmul.bf16.gmra.mxu0 %v295
  %v1125 = vpop.f32.mrf.mxu0
  %v1126 = vadd.f32 %v1048, %v1125
  %v1127 = vpop.f32.mrf.mxu0
  %v1128 = vadd.f32 %v1050, %v1127
  %1129 = vmatmul.bf16.gmra.mxu0 %v299
  %v1130 = vpop.f32.mrf.mxu0
  %v1131 = vadd.f32 %v1053, %v1130
  %v1132 = vpop.f32.mrf.mxu0
  %v1133 = vadd.f32 %v1055, %v1132
  %1134 = vmatmul.bf16.gmra.mxu0 %v303
  %v1135 = vpop.f32.mrf.mxu0
  %v1136 = vadd.f32 %v1058, %v1135
  %v1137 = vpop.f32.mrf.mxu0
  %v1138 = vadd.f32 %v1060, %v1137
  %1139 = vmatmul.bf16.gmra.mxu0 %v307
  %v1140 = vpop.f32.mrf.mxu0
  %v1141 = vadd.f32 %v1063, %v1140
  %v1142 = vpop.f32.mrf.mxu0
  %v1143 = vadd.f32 %v1065, %v1142
  %1144 = vmatmul.bf16.gmra.mxu0 %v311
  %v1145 = vpop.f32.mrf.mxu0
  %v1146 = vadd.f32 %v1068, %v1145
  %v1147 = vpop.f32.mrf.mxu0
  %v1148 = vadd.f32 %v1070, %v1147
  %1149 = vmatmul.bf16.gmra.mxu0 %v315
  %v1150 = vpop.f32.mrf.mxu0
  %v1151 = vadd.f32 %v1073, %v1150
  %v1152 = vpop.f32.mrf.mxu0
  %v1153 = vadd.f32 %v1075, %v1152
  %1154 = vmatmul.bf16.gmra.mxu0 %v319
  %v1155 = vpop.f32.mrf.mxu0
  %v1156 = vadd.f32 %v1078, %v1155
  %v1157 = vpop.f32.mrf.mxu0
  %v1158 = vadd.f32 %v1080, %v1157
  %1159 = vmatmul.bf16.gmra.mxu0 %v323
  %v1160 = vpop.f32.mrf.mxu0
  %v1161 = vadd.f32 %v1083, %v1160
  %v1162 = vpop.f32.mrf.mxu0
  %v1163 = vadd.f32 %v1085, %v1162
  %1164 = vmatmul.bf16.gmra.mxu0 %v327
  %v1165 = vpop.f32.mrf.mxu0
  %v1166 = vadd.f32 %v1088, %v1165
  %v1167 = vpop.f32.mrf.mxu0
  %v1168 = vadd.f32 %v1090, %v1167
  %1169 = vmatmul.bf16.gmra.mxu0 %v331
  %v1170 = vpop.f32.mrf.mxu0
  %v1171 = vadd.f32 %v1093, %v1170
  %v1172 = vpop.f32.mrf.mxu0
  %v1173 = vadd.f32 %v1095, %v1172
  %1174 = vmatmul.bf16.gmra.mxu0 %v335
  %v1175 = vpop.f32.mrf.mxu0
  %v1176 = vadd.f32 %v1098, %v1175
  %v1177 = vpop.f32.mrf.mxu0
  %v1178 = vadd.f32 %v1100, %v1177
  %1179 = vmatmul.bf16.gmra.mxu0 %v339
  %v1180 = vpop.f32.mrf.mxu0
  %v1181 = vadd.f32 %v1103, %v1180
  %v1182 = vpop.f32.mrf.mxu0
  %v1183 = vadd.f32 %v1105, %v1182
  %1184 = vmatmul.bf16.gmra.mxu0 %v343
  %v1185 = vpop.f32.mrf.mxu0
  %v1186 = vadd.f32 %v1108, %v1185
  %v1187 = vpop.f32.mrf.mxu0
  %v1188 = vadd.f32 %v1110, %v1187
  %1189 = vmatmul.bf16.gmra.mxu0 %v347
  %v1190 = vpop.f32.mrf.mxu0
  %v1191 = vadd.f32 %v1113, %v1190
  %v1192 = vpop.f32.mrf.mxu0
  %1193 = vdwg.mxu0
  %1194 = vmatpush.bf16.msra.mxu0 %v645
  %1195 = vmatpush.bf16.msra.mxu0 %v643
  %1196 = vmatpush.bf16.msra.mxu0 %v641
  %1197 = vmatpush.bf16.msra.mxu0 %v639
  %1198 = vmatpush.bf16.msra.mxu0 %v637
  %1199 = vmatpush.bf16.msra.mxu0 %v635
  %1200 = vmatpush.bf16.msra.mxu0 %v633
  %1201 = vmatpush.bf16.msra.mxu0 %v631
  %1202 = vmatmul.bf16.gmra.mxu0 %v296
  %v1203 = vpop.f32.mrf.mxu0
  %v1204 = vadd.f32 %v1126, %v1203
  %v1205 = vpop.f32.mrf.mxu0
  %v1206 = vadd.f32 %v1128, %v1205
  %1207 = vmatmul.bf16.gmra.mxu0 %v300
  %v1208 = vpop.f32.mrf.mxu0
  %v1209 = vadd.f32 %v1131, %v1208
  %v1210 = vpop.f32.mrf.mxu0
  %v1211 = vadd.f32 %v1133, %v1210
  %1212 = vmatmul.bf16.gmra.mxu0 %v304
  %v1213 = vpop.f32.mrf.mxu0
  %v1214 = vadd.f32 %v1136, %v1213
  %v1215 = vpop.f32.mrf.mxu0
  %v1216 = vadd.f32 %v1138, %v1215
  %1217 = vmatmul.bf16.gmra.mxu0 %v308
  %v1218 = vpop.f32.mrf.mxu0
  %v1219 = vadd.f32 %v1141, %v1218
  %v1220 = vpop.f32.mrf.mxu0
  %v1221 = vadd.f32 %v1143, %v1220
  %1222 = vmatmul.bf16.gmra.mxu0 %v312
  %v1223 = vpop.f32.mrf.mxu0
  %v1224 = vadd.f32 %v1146, %v1223
  %v1225 = vpop.f32.mrf.mxu0
  %v1226 = vadd.f32 %v1148, %v1225
  %1227 = vmatmul.bf16.gmra.mxu0 %v316
  %v1228 = vpop.f32.mrf.mxu0
  %v1229 = vadd.f32 %v1151, %v1228
  %v1230 = vpop.f32.mrf.mxu0
  %v1231 = vadd.f32 %v1153, %v1230
  %1232 = vmatmul.bf16.gmra.mxu0 %v320
  %v1233 = vpop.f32.mrf.mxu0
  %v1234 = vadd.f32 %v1156, %v1233
  %v1235 = vpop.f32.mrf.mxu0
  %v1236 = vadd.f32 %v1158, %v1235
  %1237 = vmatmul.bf16.gmra.mxu0 %v324
  %v1238 = vpop.f32.mrf.mxu0
  %v1239 = vadd.f32 %v1161, %v1238
  %v1240 = vpop.f32.mrf.mxu0
  %v1241 = vadd.f32 %v1163, %v1240
  %1242 = vmatmul.bf16.gmra.mxu0 %v328
  %v1243 = vpop.f32.mrf.mxu0
  %v1244 = vadd.f32 %v1166, %v1243
  %v1245 = vpop.f32.mrf.mxu0
  %v1246 = vadd.f32 %v1168, %v1245
  %1247 = vmatmul.bf16.gmra.mxu0 %v332
  %v1248 = vpop.f32.mrf.mxu0
  %v1249 = vadd.f32 %v1171, %v1248
  %v1250 = vpop.f32.mrf.mxu0
  %v1251 = vadd.f32 %v1173, %v1250
  %1252 = vmatmul.bf16.gmra.mxu0 %v336
  %v1253 = vpop.f32.mrf.mxu0
  %v1254 = vadd.f32 %v1176, %v1253
  %v1255 = vpop.f32.mrf.mxu0
  %v1256 = vadd.f32 %v1178, %v1255
  %1257 = vmatmul.bf16.gmra.mxu0 %v340
  %v1258 = vpop.f32.mrf.mxu0
  %v1259 = vadd.f32 %v1181, %v1258
  %v1260 = vpop.f32.mrf.mxu0
  %v1261 = vadd.f32 %v1183, %v1260
  %1262 = vmatmul.bf16.gmra.mxu0 %v344
  %v1263 = vpop.f32.mrf.mxu0
  %v1264 = vadd.f32 %v1186, %v1263
  %v1265 = vpop.f32.mrf.mxu0
  %v1266 = vadd.f32 %v1188, %v1265
  %1267 = vmatmul.bf16.gmra.mxu0 %v348
  %v1268 = vpop.f32.mrf.mxu0
  %v1269 = vadd.f32 %v1191, %v1268
  %v1270 = vpop.f32.mrf.mxu0
  %1271 = vdwg.mxu0
  %1272 = vmatpush.bf16.msra.mxu0 %v661
  %1273 = vmatpush.bf16.msra.mxu0 %v659
  %1274 = vmatpush.bf16.msra.mxu0 %v657
  %1275 = vmatpush.bf16.msra.mxu0 %v655
  %1276 = vmatpush.bf16.msra.mxu0 %v653
  %1277 = vmatpush.bf16.msra.mxu0 %v651
  %1278 = vmatpush.bf16.msra.mxu0 %v649
  %1279 = vmatpush.bf16.msra.mxu0 %v647
  %1280 = vmatmul.bf16.gmra.mxu0 %v297
  %v1281 = vpop.f32.mrf.mxu0
  %v1282 = vadd.f32 %v1204, %v1281
  %v1283 = vpop.f32.mrf.mxu0
  %v1284 = vadd.f32 %v1206, %v1283
  %1285 = vmatmul.bf16.gmra.mxu0 %v301
  %v1286 = vpop.f32.mrf.mxu0
  %v1287 = vadd.f32 %v1209, %v1286
  %v1288 = vpop.f32.mrf.mxu0
  %v1289 = vadd.f32 %v1211, %v1288
  %1290 = vmatmul.bf16.gmra.mxu0 %v305
  %v1291 = vpop.f32.mrf.mxu0
  %v1292 = vadd.f32 %v1214, %v1291
  %v1293 = vpop.f32.mrf.mxu0
  %v1294 = vadd.f32 %v1216, %v1293
  %1295 = vmatmul.bf16.gmra.mxu0 %v309
  %v1296 = vpop.f32.mrf.mxu0
  %v1297 = vadd.f32 %v1219, %v1296
  %v1298 = vpop.f32.mrf.mxu0
  %v1299 = vadd.f32 %v1221, %v1298
  %1300 = vmatmul.bf16.gmra.mxu0 %v313
  %v1301 = vpop.f32.mrf.mxu0
  %v1302 = vadd.f32 %v1224, %v1301
  %v1303 = vpop.f32.mrf.mxu0
  %v1304 = vadd.f32 %v1226, %v1303
  %1305 = vmatmul.bf16.gmra.mxu0 %v317
  %v1306 = vpop.f32.mrf.mxu0
  %v1307 = vadd.f32 %v1229, %v1306
  %v1308 = vpop.f32.mrf.mxu0
  %v1309 = vadd.f32 %v1231, %v1308
  %1310 = vmatmul.bf16.gmra.mxu0 %v321
  %v1311 = vpop.f32.mrf.mxu0
  %v1312 = vadd.f32 %v1234, %v1311
  %v1313 = vpop.f32.mrf.mxu0
  %v1314 = vadd.f32 %v1236, %v1313
  %1315 = vmatmul.bf16.gmra.mxu0 %v325
  %v1316 = vpop.f32.mrf.mxu0
  %v1317 = vadd.f32 %v1239, %v1316
  %v1318 = vpop.f32.mrf.mxu0
  %v1319 = vadd.f32 %v1241, %v1318
  %1320 = vmatmul.bf16.gmra.mxu0 %v329
  %v1321 = vpop.f32.mrf.mxu0
  %v1322 = vadd.f32 %v1244, %v1321
  %v1323 = vpop.f32.mrf.mxu0
  %v1324 = vadd.f32 %v1246, %v1323
  %1325 = vmatmul.bf16.gmra.mxu0 %v333
  %v1326 = vpop.f32.mrf.mxu0
  %v1327 = vadd.f32 %v1249, %v1326
  %v1328 = vpop.f32.mrf.mxu0
  %v1329 = vadd.f32 %v1251, %v1328
  %1330 = vmatmul.bf16.gmra.mxu0 %v337
  %v1331 = vpop.f32.mrf.mxu0
  %v1332 = vadd.f32 %v1254, %v1331
  %v1333 = vpop.f32.mrf.mxu0
  %v1334 = vadd.f32 %v1256, %v1333
  %1335 = vmatmul.bf16.gmra.mxu0 %v341
  %v1336 = vpop.f32.mrf.mxu0
  %v1337 = vadd.f32 %v1259, %v1336
  %v1338 = vpop.f32.mrf.mxu0
  %v1339 = vadd.f32 %v1261, %v1338
  %1340 = vmatmul.bf16.gmra.mxu0 %v345
  %v1341 = vpop.f32.mrf.mxu0
  %v1342 = vadd.f32 %v1264, %v1341
  %v1343 = vpop.f32.mrf.mxu0
  %v1344 = vadd.f32 %v1266, %v1343
  %1345 = vmatmul.bf16.gmra.mxu0 %v349
  %v1346 = vpop.f32.mrf.mxu0
  %v1347 = vadd.f32 %v1269, %v1346
  %v1348 = vpop.f32.mrf.mxu0
  %1349 = vdwg.mxu0
  %1377 = vrot.lane.b32.xlu0 %v970, 64
  %v1378 = vpop.permute.xlu0 %1377
  %1379 = vrot.lane.b32.xlu0 %v972, 64
  %v1380 = vpop.permute.xlu0 %1379
  %1381 = vrot.lane.b32.xlu0 %v975, 64
  %v1382 = vpop.permute.xlu0 %1381
  %1383 = vrot.lane.b32.xlu0 %v977, 64
  %v1384 = vpop.permute.xlu0 %1383
  %1385 = vrot.lane.b32.xlu0 %v980, 64
  %v1386 = vpop.permute.xlu0 %1385
  %1387 = vrot.lane.b32.xlu0 %v982, 64
  %v1388 = vpop.permute.xlu0 %1387
  %1389 = vrot.lane.b32.xlu0 %v985, 64
  %v1390 = vpop.permute.xlu0 %1389
  %1391 = vrot.lane.b32.xlu0 %v987, 64
  %v1392 = vpop.permute.xlu0 %1391
  %1393 = vrot.lane.b32.xlu0 %v990, 64
  %v1394 = vpop.permute.xlu0 %1393
  %1395 = vrot.lane.b32.xlu0 %v992, 64
  %v1396 = vpop.permute.xlu0 %1395
  %1397 = vrot.lane.b32.xlu0 %v995, 64
  %v1398 = vpop.permute.xlu0 %1397
  %1399 = vrot.lane.b32.xlu0 %v997, 64
  %v1400 = vpop.permute.xlu0 %1399
  %1401 = vrot.lane.b32.xlu0 %v1000, 64
  %v1402 = vpop.permute.xlu0 %1401
  %1403 = vrot.lane.b32.xlu0 %v1002, 64
  %v1404 = vpop.permute.xlu0 %1403
  %1405 = vrot.lane.b32.xlu0 %v1005, 64
  %v1406 = vpop.permute.xlu0 %1405
  %1407 = vrot.lane.b32.xlu0 %v1007, 64
  %v1408 = vpop.permute.xlu0 %1407
  %1409 = vrot.lane.b32.xlu0 %v1010, 64
  %v1410 = vpop.permute.xlu0 %1409
  %1411 = vrot.lane.b32.xlu0 %v1012, 64
  %v1412 = vpop.permute.xlu0 %1411
  %1413 = vrot.lane.b32.xlu0 %v1015, 64
  %v1414 = vpop.permute.xlu0 %1413
  %1415 = vrot.lane.b32.xlu0 %v1017, 64
  %v1416 = vpop.permute.xlu0 %1415
  %1417 = vrot.lane.b32.xlu0 %v1020, 64
  %v1418 = vpop.permute.xlu0 %1417
  %1419 = vrot.lane.b32.xlu0 %v1022, 64
  %v1420 = vpop.permute.xlu0 %1419
  %1421 = vrot.lane.b32.xlu0 %v1025, 64
  %v1422 = vpop.permute.xlu0 %1421
  %1423 = vrot.lane.b32.xlu0 %v1027, 64
  %v1424 = vpop.permute.xlu0 %1423
  %1425 = vrot.lane.b32.xlu0 %v1030, 64
  %v1426 = vpop.permute.xlu0 %1425
  %1427 = vrot.lane.b32.xlu0 %v1032, 64
  %v1428 = vpop.permute.xlu0 %1427
  %1429 = vrot.lane.b32.xlu0 %v1035, 64
  %v1430 = vpop.permute.xlu0 %1429
  %v1458 = vmax.f32 %v970, %v1378
  %v1459 = vmax.f32 %v972, %v1380
  %v1460 = vmax.f32 %v975, %v1382
  %v1461 = vmax.f32 %v977, %v1384
  %v1462 = vmax.f32 %v980, %v1386
  %v1463 = vmax.f32 %v982, %v1388
  %v1464 = vmax.f32 %v985, %v1390
  %v1465 = vmax.f32 %v987, %v1392
  %v1466 = vmax.f32 %v990, %v1394
  %v1467 = vmax.f32 %v992, %v1396
  %v1468 = vmax.f32 %v995, %v1398
  %v1469 = vmax.f32 %v997, %v1400
  %v1470 = vmax.f32 %v1000, %v1402
  %v1471 = vmax.f32 %v1002, %v1404
  %v1472 = vmax.f32 %v1005, %v1406
  %v1473 = vmax.f32 %v1007, %v1408
  %v1474 = vmax.f32 %v1010, %v1410
  %v1475 = vmax.f32 %v1012, %v1412
  %v1476 = vmax.f32 %v1015, %v1414
  %v1477 = vmax.f32 %v1017, %v1416
  %v1478 = vmax.f32 %v1020, %v1418
  %v1479 = vmax.f32 %v1022, %v1420
  %v1480 = vmax.f32 %v1025, %v1422
  %v1481 = vmax.f32 %v1027, %v1424
  %v1482 = vmax.f32 %v1030, %v1426
  %v1483 = vmax.f32 %v1032, %v1428
  %v1484 = vmax.f32 %v1035, %v1430
  %1512 = vrot.lane.b32.xlu0 %v1282, 64
  %v1513 = vpop.permute.xlu0 %1512
  %1514 = vrot.lane.b32.xlu0 %v1284, 64
  %v1515 = vpop.permute.xlu0 %1514
  %1516 = vrot.lane.b32.xlu0 %v1287, 64
  %v1517 = vpop.permute.xlu0 %1516
  %1518 = vrot.lane.b32.xlu0 %v1289, 64
  %v1519 = vpop.permute.xlu0 %1518
  %1520 = vrot.lane.b32.xlu0 %v1292, 64
  %v1521 = vpop.permute.xlu0 %1520
  %1522 = vrot.lane.b32.xlu0 %v1294, 64
  %v1523 = vpop.permute.xlu0 %1522
  %1524 = vrot.lane.b32.xlu0 %v1297, 64
  %v1525 = vpop.permute.xlu0 %1524
  %1526 = vrot.lane.b32.xlu0 %v1299, 64
  %v1527 = vpop.permute.xlu0 %1526
  %1528 = vrot.lane.b32.xlu0 %v1302, 64
  %v1529 = vpop.permute.xlu0 %1528
  %1530 = vrot.lane.b32.xlu0 %v1304, 64
  %v1531 = vpop.permute.xlu0 %1530
  %1532 = vrot.lane.b32.xlu0 %v1307, 64
  %v1533 = vpop.permute.xlu0 %1532
  %1534 = vrot.lane.b32.xlu0 %v1309, 64
  %v1535 = vpop.permute.xlu0 %1534
  %1536 = vrot.lane.b32.xlu0 %v1312, 64
  %v1537 = vpop.permute.xlu0 %1536
  %1538 = vrot.lane.b32.xlu0 %v1314, 64
  %v1539 = vpop.permute.xlu0 %1538
  %1540 = vrot.lane.b32.xlu0 %v1317, 64
  %v1541 = vpop.permute.xlu0 %1540
  %1542 = vrot.lane.b32.xlu0 %v1319, 64
  %v1543 = vpop.permute.xlu0 %1542
  %1544 = vrot.lane.b32.xlu0 %v1322, 64
  %v1545 = vpop.permute.xlu0 %1544
  %1546 = vrot.lane.b32.xlu0 %v1324, 64
  %v1547 = vpop.permute.xlu0 %1546
  %1548 = vrot.lane.b32.xlu0 %v1327, 64
  %v1549 = vpop.permute.xlu0 %1548
  %1550 = vrot.lane.b32.xlu0 %v1329, 64
  %v1551 = vpop.permute.xlu0 %1550
  %1552 = vrot.lane.b32.xlu0 %v1332, 64
  %v1553 = vpop.permute.xlu0 %1552
  %1554 = vrot.lane.b32.xlu0 %v1334, 64
  %v1555 = vpop.permute.xlu0 %1554
  %1556 = vrot.lane.b32.xlu0 %v1337, 64
  %v1557 = vpop.permute.xlu0 %1556
  %1558 = vrot.lane.b32.xlu0 %v1339, 64
  %v1559 = vpop.permute.xlu0 %1558
  %1560 = vrot.lane.b32.xlu0 %v1342, 64
  %v1561 = vpop.permute.xlu0 %1560
  %1562 = vrot.lane.b32.xlu0 %v1344, 64
  %v1563 = vpop.permute.xlu0 %1562
  %1564 = vrot.lane.b32.xlu0 %v1347, 64
  %v1565 = vpop.permute.xlu0 %1564
  %v1593 = vmax.f32 %v1282, %v1513
  %v1594 = vmax.f32 %v1284, %v1515
  %v1595 = vmax.f32 %v1287, %v1517
  %v1596 = vmax.f32 %v1289, %v1519
  %v1597 = vmax.f32 %v1292, %v1521
  %v1598 = vmax.f32 %v1294, %v1523
  %v1599 = vmax.f32 %v1297, %v1525
  %v1600 = vmax.f32 %v1299, %v1527
  %v1601 = vmax.f32 %v1302, %v1529
  %v1602 = vmax.f32 %v1304, %v1531
  %v1603 = vmax.f32 %v1307, %v1533
  %v1604 = vmax.f32 %v1309, %v1535
  %v1605 = vmax.f32 %v1312, %v1537
  %v1606 = vmax.f32 %v1314, %v1539
  %v1607 = vmax.f32 %v1317, %v1541
  %v1608 = vmax.f32 %v1319, %v1543
  %v1609 = vmax.f32 %v1322, %v1545
  %v1610 = vmax.f32 %v1324, %v1547
  %v1611 = vmax.f32 %v1327, %v1549
  %v1612 = vmax.f32 %v1329, %v1551
  %v1613 = vmax.f32 %v1332, %v1553
  %v1614 = vmax.f32 %v1334, %v1555
  %v1615 = vmax.f32 %v1337, %v1557
  %v1616 = vmax.f32 %v1339, %v1559
  %v1617 = vmax.f32 %v1342, %v1561
  %v1618 = vmax.f32 %v1344, %v1563
  %v1619 = vmax.f32 %v1347, %v1565
  %v1620 = vmax.f32 %v1458, %v1593
  %v1621 = vmax.f32 %v1459, %v1594
  %v1622 = vmax.f32 %v1460, %v1595
  %v1623 = vmax.f32 %v1461, %v1596
  %v1624 = vmax.f32 %v1462, %v1597
  %v1625 = vmax.f32 %v1463, %v1598
  %v1626 = vmax.f32 %v1464, %v1599
  %v1627 = vmax.f32 %v1465, %v1600
  %v1628 = vmax.f32 %v1466, %v1601
  %v1629 = vmax.f32 %v1467, %v1602
  %v1630 = vmax.f32 %v1468, %v1603
  %v1631 = vmax.f32 %v1469, %v1604
  %v1632 = vmax.f32 %v1470, %v1605
  %v1633 = vmax.f32 %v1471, %v1606
  %v1634 = vmax.f32 %v1472, %v1607
  %v1635 = vmax.f32 %v1473, %v1608
  %v1636 = vmax.f32 %v1474, %v1609
  %v1637 = vmax.f32 %v1475, %v1610
  %v1638 = vmax.f32 %v1476, %v1611
  %v1639 = vmax.f32 %v1477, %v1612
  %v1640 = vmax.f32 %v1478, %v1613
  %v1641 = vmax.f32 %v1479, %v1614
  %v1642 = vmax.f32 %v1480, %v1615
  %v1643 = vmax.f32 %v1481, %v1616
  %v1644 = vmax.f32 %v1482, %v1617
  %v1645 = vmax.f32 %v1483, %v1618
  %v1646 = vmax.f32 %v1484, %v1619
  %v1647 = vld [vmem:[%s2] sm:$0x1]
  %v1649 = vperm.slane %v1647, 0
  %v1651 = vadd.f32 %v1620, %v1649
  %v1652 = vadd.f32 %v1621, %v1649
  %v1653 = vadd.f32 %v1622, %v1649
  %v1654 = vadd.f32 %v1623, %v1649
  %v1655 = vadd.f32 %v1624, %v1649
  %v1656 = vadd.f32 %v1625, %v1649
  %v1657 = vadd.f32 %v1626, %v1649
  %v1658 = vadd.f32 %v1627, %v1649
  %v1659 = vadd.f32 %v1628, %v1649
  %v1660 = vadd.f32 %v1629, %v1649
  %v1661 = vadd.f32 %v1630, %v1649
  %v1662 = vadd.f32 %v1631, %v1649
  %v1663 = vadd.f32 %v1632, %v1649
  %v1664 = vadd.f32 %v1633, %v1649
  %v1665 = vadd.f32 %v1634, %v1649
  %v1666 = vadd.f32 %v1635, %v1649
  %v1667 = vadd.f32 %v1636, %v1649
  %v1668 = vadd.f32 %v1637, %v1649
  %v1669 = vadd.f32 %v1638, %v1649
  %v1670 = vadd.f32 %v1639, %v1649
  %v1671 = vadd.f32 %v1640, %v1649
  %v1672 = vadd.f32 %v1641, %v1649
  %v1673 = vadd.f32 %v1642, %v1649
  %v1674 = vadd.f32 %v1643, %v1649
  %v1675 = vadd.f32 %v1644, %v1649
  %v1676 = vadd.f32 %v1645, %v1649
  %v1677 = vadd.f32 %v1646, %v1649
  %v1678 = vmax.f32 %v1651, 0.0
  %v1679 = vmax.f32 %v1652, 0.0
  %v1680 = vmax.f32 %v1653, 0.0
  %v1681 = vmax.f32 %v1654, 0.0
  %v1682 = vmax.f32 %v1655, 0.0
  %v1683 = vmax.f32 %v1656, 0.0
  %v1684 = vmax.f32 %v1657, 0.0
  %v1685 = vmax.f32 %v1658, 0.0
  %v1686 = vmax.f32 %v1659, 0.0
  %v1687 = vmax.f32 %v1660, 0.0
  %v1688 = vmax.f32 %v1661, 0.0
  %v1689 = vmax.f32 %v1662, 0.0
  %v1690 = vmax.f32 %v1663, 0.0
  %v1691 = vmax.f32 %v1664, 0.0
  %v1692 = vmax.f32 %v1665, 0.0
  %v1693 = vmax.f32 %v1666, 0.0
  %v1694 = vmax.f32 %v1667, 0.0
  %v1695 = vmax.f32 %v1668, 0.0
  %v1696 = vmax.f32 %v1669, 0.0
  %v1697 = vmax.f32 %v1670, 0.0
  %v1698 = vmax.f32 %v1671, 0.0
  %v1699 = vmax.f32 %v1672, 0.0
  %v1700 = vmax.f32 %v1673, 0.0
  %v1701 = vmax.f32 %v1674, 0.0
  %v1702 = vmax.f32 %v1675, 0.0
  %v1703 = vmax.f32 %v1676, 0.0
  %v1704 = vmax.f32 %v1677, 0.0
  %v1705 = vpack.c.bf16 %v1678, %v1678
  %v1706 = vpack.c.bf16 %v1679, %v1679
  %v1707 = vpack.c.bf16 %v1680, %v1680
  %v1708 = vpack.c.bf16 %v1681, %v1681
  %v1709 = vpack.c.bf16 %v1682, %v1682
  %v1710 = vpack.c.bf16 %v1683, %v1683
  %v1711 = vpack.c.bf16 %v1684, %v1684
  %v1712 = vpack.c.bf16 %v1685, %v1685
  %v1713 = vpack.c.bf16 %v1686, %v1686
  %v1714 = vpack.c.bf16 %v1687, %v1687
  %v1715 = vpack.c.bf16 %v1688, %v1688
  %v1716 = vpack.c.bf16 %v1689, %v1689
  %v1717 = vpack.c.bf16 %v1690, %v1690
  %v1718 = vpack.c.bf16 %v1691, %v1691
  %v1719 = vpack.c.bf16 %v1692, %v1692
  %v1720 = vpack.c.bf16 %v1693, %v1693
  %v1721 = vpack.c.bf16 %v1694, %v1694
  %v1722 = vpack.c.bf16 %v1695, %v1695
  %v1723 = vpack.c.bf16 %v1696, %v1696
  %v1724 = vpack.c.bf16 %v1697, %v1697
  %v1725 = vpack.c.bf16 %v1698, %v1698
  %v1726 = vpack.c.bf16 %v1699, %v1699
  %v1727 = vpack.c.bf16 %v1700, %v1700
  %v1728 = vpack.c.bf16 %v1701, %v1701
  %v1729 = vpack.c.bf16 %v1702, %v1702
  %v1730 = vpack.c.bf16 %v1703, %v1703
  %v1731 = vpack.c.bf16 %v1704, %v1704
  %vm1732 = vcmask 519168
  %1733 = vst.msk [vmem:[%s3] sm:$0xf] %vm1732, %v1705
  %1734 = vst.msk [vmem:[%s3 + $0x4] sm:$0xf] %vm1732, %v1706
  %1735 = vst.msk [vmem:[%s3 + $0x8] sm:$0xf] %vm1732, %v1707
  %1736 = vst.msk [vmem:[%s3 + $0xc] sm:$0xf] %vm1732, %v1708
  %1737 = vst.msk [vmem:[%s3 + $0x10] sm:$0xf] %vm1732, %v1709
  %1738 = vst.msk [vmem:[%s3 + $0x14] sm:$0xf] %vm1732, %v1710
  %1739 = vst.msk [vmem:[%s3 + $0x18] sm:$0xf] %vm1732, %v1711
  %1740 = vst.msk [vmem:[%s3 + $0x1c] sm:$0xf] %vm1732, %v1712
  %1741 = vst.msk [vmem:[%s3 + $0x20] sm:$0xf] %vm1732, %v1713
  %1742 = vst.msk [vmem:[%s3 + $0x24] sm:$0xf] %vm1732, %v1714
  %1743 = vst.msk [vmem:[%s3 + $0x28] sm:$0xf] %vm1732, %v1715
  %1744 = vst.msk [vmem:[%s3 + $0x2c] sm:$0xf] %vm1732, %v1716
  %1745 = vst.msk [vmem:[%s3 + $0x30] sm:$0xf] %vm1732, %v1717
  %1746 = vst.msk [vmem:[%s3 + $0x34] sm:$0xf] %vm1732, %v1718
  %1747 = vst.msk [vmem:[%s3 + $0x38] sm:$0xf] %vm1732, %v1719
  %1748 = vst.msk [vmem:[%s3 + $0x3c] sm:$0xf] %vm1732, %v1720
  %1749 = vst.msk [vmem:[%s3 + $0x40] sm:$0xf] %vm1732, %v1721
  %1750 = vst.msk [vmem:[%s3 + $0x44] sm:$0xf] %vm1732, %v1722
  %1751 = vst.msk [vmem:[%s3 + $0x48] sm:$0xf] %vm1732, %v1723
  %1752 = vst.msk [vmem:[%s3 + $0x4c] sm:$0xf] %vm1732, %v1724
  %1753 = vst.msk [vmem:[%s3 + $0x50] sm:$0xf] %vm1732, %v1725
  %1754 = vst.msk [vmem:[%s3 + $0x54] sm:$0xf] %vm1732, %v1726
  %1755 = vst.msk [vmem:[%s3 + $0x58] sm:$0xf] %vm1732, %v1727
  %1756 = vst.msk [vmem:[%s3 + $0x5c] sm:$0xf] %vm1732, %v1728
  %1757 = vst.msk [vmem:[%s3 + $0x60] sm:$0xf] %vm1732, %v1729
  %1758 = vst.msk [vmem:[%s3 + $0x64] sm:$0xf] %vm1732, %v1730
  %vm1759 = vcmask 516096
  %1760 = vst.msk [vmem:[%s3 + $0x68] sm:$0x1] %vm1759, %v1731
  // Predicated region
  $region14: #{net_forward.4} parent=0 // pred_check
    _
  $region15: #{net_forward.4} parent=0 // pred_check_branch
    %1762 = sbr.rel (0) target = $region17
  $region16: #{net_forward.4} parent=0 // pred_region
    _
  $region17: #{net_forward.4} parent=0 // pred_fallthru
    _
  // Predicated region
  $region18: #{net_forward.4} parent=0 // pred_check
    _
  $region19: #{net_forward.4} parent=0 // pred_check_branch
    %1764 = sbr.rel (0) target = $region21
  $region20: #{net_forward.4} parent=0 // pred_region
    _
  $region21: #{net_forward.4} parent=0 // pred_fallthru
    _

// kernel: net_forward.5
$region0: #{net_forward.5}
  #allocation0 [shape = 'u32[]', space=smem, size = 0x4, offset = 0x4, fixed_abs, tag = 'smem constant byte address 0x4 - core index']
  #allocation1 [shape = 'u32[72,128]{1,0:T(1,128)}', space=vmem, size = 0x9000, scoped, tag = 'internal scratch']
  %s0 = inlined_call_operand.vmem [shape: bf16[10,1344], index: 0, kind: input, shape index: {}]
  %s1 = inlined_call_operand.vmem [shape: bf16[1344,512], index: 1, kind: input, shape index: {}]
  %s2 = inlined_call_operand.vmem [shape: f32[1,512], index: 2, kind: input, shape index: {}]
  %s3 = inlined_call_operand.vmem [shape: bf16[128,512], index: 3, kind: input, shape index: {}]
  %s4 = inlined_call_operand.vmem [shape: bf16[256,512], index: 4, kind: input, shape index: {}]
  %s5 = inlined_call_operand.vmem [shape: f32[1,512], index: 5, kind: input, shape index: {}]
  %s6 = inlined_call_operand.vmem [shape: bf16[128,62], index: 6, kind: input, shape index: {}]
  %s7 = inlined_call_operand.vmem [shape: f32[1,62], index: 7, kind: input, shape index: {}]
  %s8 = inlined_call_operand.vmem [shape: f32[2,5,62], index: 8, kind: output, shape index: {}]
  %s9 = sld [smem:[#allocation0]]
  $region42: #{net_forward.5} parent=0
    _
  %s11 = ssub.s32 1, %s9
  %s12 = scalar_select 0, %s11, %s9
  // Predicated region
  $region2: #{net_forward.5} parent=0 // pred_check
    _
  $region3: #{net_forward.5} parent=0 // pred_check_branch
    %14 = sbr.rel (0) target = $region5
  $region4: #{net_forward.5} parent=0 // pred_region
    _
  $region5: #{net_forward.5} parent=0 // pred_fallthru
    _
  // Predicated region
  $region6: #{net_forward.5} parent=0 // pred_check
    _
  $region7: #{net_forward.5} parent=0 // pred_check_branch
    %16 = sbr.rel (0) target = $region9
  $region8: #{net_forward.5} parent=0 // pred_region
    _
  $region9: #{net_forward.5} parent=0 // pred_fallthru
    _
  // Predicated region
  $region10: #{net_forward.5} parent=0 // pred_check
    _
  $region11: #{net_forward.5} parent=0 // pred_check_branch
    %18 = sbr.rel (0) target = $region13
  $region12: #{net_forward.5} parent=0 // pred_region
    _
  $region13: #{net_forward.5} parent=0 // pred_fallthru
    _
  // Predicated region
  $region14: #{net_forward.5} parent=0 // pred_check
    _
  $region15: #{net_forward.5} parent=0 // pred_check_branch
    %20 = sbr.rel (0) target = $region17
  $region16: #{net_forward.5} parent=0 // pred_region
    _
  $region17: #{net_forward.5} parent=0 // pred_fallthru
    _
  // Predicated region
  $region18: #{net_forward.5} parent=0 // pred_check
    _
  $region19: #{net_forward.5} parent=0 // pred_check_branch
    %22 = sbr.rel (0) target = $region21
  $region20: #{net_forward.5} parent=0 // pred_region
    _
  $region21: #{net_forward.5} parent=0 // pred_fallthru
    _
  // Predicated region
  $region22: #{net_forward.5} parent=0 // pred_check
    _
  $region23: #{net_forward.5} parent=0 // pred_check_branch
    %24 = sbr.rel (0) target = $region25
  $region24: #{net_forward.5} parent=0 // pred_region
    _
  $region25: #{net_forward.5} parent=0 // pred_fallthru
    _
  // Predicated region
  $region26: #{net_forward.5} parent=0 // pred_check
    _
  $region27: #{net_forward.5} parent=0 // pred_check_branch
    %26 = sbr.rel (0) target = $region29
  $region28: #{net_forward.5} parent=0 // pred_region
    _
  $region29: #{net_forward.5} parent=0 // pred_fallthru
    _
  // Predicated region
  $region30: #{net_forward.5} parent=0 // pred_check
    _
  $region31: #{net_forward.5} parent=0 // pred_check_branch
    %28 = sbr.rel (0) target = $region33
  $region32: #{net_forward.5} parent=0 // pred_region
    _
  $region33: #{net_forward.5} parent=0 // pred_fallthru
    _
  %v30 = vld [vmem:[%s0] sm:$0xff]
  %v31 = vld [vmem:[%s0 + $0x8] sm:$0xff]
  %v32 = vld [vmem:[%s0 + $0x10] sm:$0xff]
  %v33 = vld [vmem:[%s0 + $0x18] sm:$0xff]
  %v34 = vld [vmem:[%s0 + $0x20] sm:$0xff]
  %v35 = vld [vmem:[%s0 + $0x28] sm:$0xf]
  %v36 = vld [vmem:[%s0 + $0x2c] sm:$0x11]
  %v37 = vld [vmem:[%s0 + $0x34] sm:$0x11]
  %v38 = vld [vmem:[%s0 + $0x3c] sm:$0x11]
  %v39 = vld [vmem:[%s0 + $0x44] sm:$0x11]
  %v40 = vld [vmem:[%s0 + $0x4c] sm:$0x11]
  %v41 = vld [vmem:[%s0 + $0x54] sm:$0x1]
  %v42 = vld [vmem:[%s1] sm:$0xff]
  %v43 = vld [vmem:[%s1 + $0x8] sm:$0xff]
  %v44 = vld [vmem:[%s1 + $0x10] sm:$0xff]
  %v45 = vld [vmem:[%s1 + $0x18] sm:$0xff]
  %v46 = vld [vmem:[%s1 + $0x20] sm:$0xff]
  %v47 = vld [vmem:[%s1 + $0x28] sm:$0xff]
  %v48 = vld [vmem:[%s1 + $0x30] sm:$0xff]
  %v49 = vld [vmem:[%s1 + $0x38] sm:$0xff]
  %v50 = vld [vmem:[%s1 + $0x40] sm:$0xff]
  %v51 = vld [vmem:[%s1 + $0x48] sm:$0xff]
  %v52 = vld [vmem:[%s1 + $0x50] sm:$0xff]
  %v53 = vld [vmem:[%s1 + $0x58] sm:$0xff]
  %v54 = vld [vmem:[%s1 + $0x60] sm:$0xff]
  %v55 = vld [vmem:[%s1 + $0x68] sm:$0xff]
  %v56 = vld [vmem:[%s1 + $0x70] sm:$0xff]
  %v57 = vld [vmem:[%s1 + $0x78] sm:$0xff]
  %v58 = vld [vmem:[%s1 + $0x80] sm:$0xff]
  %v59 = vld [vmem:[%s1 + $0x88] sm:$0xff]
  %v60 = vld [vmem:[%s1 + $0x90] sm:$0xff]
  %v61 = vld [vmem:[%s1 + $0x98] sm:$0xff]
  %v62 = vld [vmem:[%s1 + $0xa0] sm:$0xff]
  %v63 = vld [vmem:[%s1 + $0xa8] sm:$0xff]
  %v64 = vld [vmem:[%s1 + $0xb0] sm:$0xff]
  %v65 = vld [vmem:[%s1 + $0xb8] sm:$0xff]
  %v66 = vld [vmem:[%s1 + $0xc0] sm:$0xff]
  %v67 = vld [vmem:[%s1 + $0xc8] sm:$0xff]
  %v68 = vld [vmem:[%s1 + $0xd0] sm:$0xff]
  %v69 = vld [vmem:[%s1 + $0xd8] sm:$0xff]
  %v70 = vld [vmem:[%s1 + $0xe0] sm:$0xff]
  %v71 = vld [vmem:[%s1 + $0xe8] sm:$0xff]
  %v72 = vld [vmem:[%s1 + $0xf0] sm:$0xff]
  %v73 = vld [vmem:[%s1 + $0xf8] sm:$0xff]
  %v74 = vld [vmem:[%s1 + $0x100] sm:$0xff]
  %v75 = vld [vmem:[%s1 + $0x108] sm:$0xff]
  %v76 = vld [vmem:[%s1 + $0x110] sm:$0xff]
  %v77 = vld [vmem:[%s1 + $0x118] sm:$0xff]
  %v78 = vld [vmem:[%s1 + $0x120] sm:$0xff]
  %v79 = vld [vmem:[%s1 + $0x128] sm:$0xff]
  %v80 = vld [vmem:[%s1 + $0x130] sm:$0xff]
  %v81 = vld [vmem:[%s1 + $0x138] sm:$0xff]
  %v82 = vld [vmem:[%s1 + $0x140] sm:$0xff]
  %v83 = vld [vmem:[%s1 + $0x148] sm:$0xff]
  %v84 = vld [vmem:[%s1 + $0x150] sm:$0xff]
  %v85 = vld [vmem:[%s1 + $0x158] sm:$0xff]
  %v86 = vld [vmem:[%s1 + $0x160] sm:$0xff]
  %v87 = vld [vmem:[%s1 + $0x168] sm:$0xff]
  %v88 = vld [vmem:[%s1 + $0x170] sm:$0xff]
  %v89 = vld [vmem:[%s1 + $0x178] sm:$0xff]
  %v90 = vld [vmem:[%s1 + $0x180] sm:$0xff]
  %v91 = vld [vmem:[%s1 + $0x188] sm:$0xff]
  %v92 = vld [vmem:[%s1 + $0x190] sm:$0xff]
  %v93 = vld [vmem:[%s1 + $0x198] sm:$0xff]
  %v94 = vld [vmem:[%s1 + $0x1a0] sm:$0xff]
  %v95 = vld [vmem:[%s1 + $0x1a8] sm:$0xff]
  %v96 = vld [vmem:[%s1 + $0x1b0] sm:$0xff]
  %v97 = vld [vmem:[%s1 + $0x1b8] sm:$0xff]
  %v98 = vld [vmem:[%s1 + $0x1c0] sm:$0xff]
  %v99 = vld [vmem:[%s1 + $0x1c8] sm:$0xff]
  %v100 = vld [vmem:[%s1 + $0x1d0] sm:$0xff]
  %v101 = vld [vmem:[%s1 + $0x1d8] sm:$0xff]
  %v102 = vld [vmem:[%s1 + $0x1e0] sm:$0xff]
  %v103 = vld [vmem:[%s1 + $0x1e8] sm:$0xff]
  %v104 = vld [vmem:[%s1 + $0x1f0] sm:$0xff]
  %v105 = vld [vmem:[%s1 + $0x1f8] sm:$0xff]
  %v106 = vld [vmem:[%s1 + $0x200] sm:$0xff]
  %v107 = vld [vmem:[%s1 + $0x208] sm:$0xff]
  %v108 = vld [vmem:[%s1 + $0x210] sm:$0xff]
  %v109 = vld [vmem:[%s1 + $0x218] sm:$0xff]
  %v110 = vld [vmem:[%s1 + $0x220] sm:$0xff]
  %v111 = vld [vmem:[%s1 + $0x228] sm:$0xff]
  %v112 = vld [vmem:[%s1 + $0x230] sm:$0xff]
  %v113 = vld [vmem:[%s1 + $0x238] sm:$0xff]
  %v114 = vld [vmem:[%s1 + $0x240] sm:$0xff]
  %v115 = vld [vmem:[%s1 + $0x248] sm:$0xff]
  %v116 = vld [vmem:[%s1 + $0x250] sm:$0xff]
  %v117 = vld [vmem:[%s1 + $0x258] sm:$0xff]
  %v118 = vld [vmem:[%s1 + $0x260] sm:$0xff]
  %v119 = vld [vmem:[%s1 + $0x268] sm:$0xff]
  %v120 = vld [vmem:[%s1 + $0x270] sm:$0xff]
  %v121 = vld [vmem:[%s1 + $0x278] sm:$0xff]
  %v122 = vld [vmem:[%s1 + $0x280] sm:$0xff]
  %v123 = vld [vmem:[%s1 + $0x288] sm:$0xff]
  %v124 = vld [vmem:[%s1 + $0x290] sm:$0xff]
  %v125 = vld [vmem:[%s1 + $0x298] sm:$0xff]
  %v126 = vld [vmem:[%s1 + $0x2a0] sm:$0xff]
  %v127 = vld [vmem:[%s1 + $0x2a8] sm:$0xff]
  %v128 = vld [vmem:[%s1 + $0x2b0] sm:$0xff]
  %v129 = vld [vmem:[%s1 + $0x2b8] sm:$0xff]
  %v130 = vld [vmem:[%s1 + $0x2c0] sm:$0xff]
  %v131 = vld [vmem:[%s1 + $0x2c8] sm:$0xff]
  %v132 = vld [vmem:[%s1 + $0x2d0] sm:$0xff]
  %v133 = vld [vmem:[%s1 + $0x2d8] sm:$0xff]
  %v134 = vld [vmem:[%s1 + $0x2e0] sm:$0xff]
  %v135 = vld [vmem:[%s1 + $0x2e8] sm:$0xff]
  %v136 = vld [vmem:[%s1 + $0x2f0] sm:$0xff]
  %v137 = vld [vmem:[%s1 + $0x2f8] sm:$0xff]
  %v138 = vld [vmem:[%s1 + $0x300] sm:$0xff]
  %v139 = vld [vmem:[%s1 + $0x308] sm:$0xff]
  %v140 = vld [vmem:[%s1 + $0x310] sm:$0xff]
  %v141 = vld [vmem:[%s1 + $0x318] sm:$0xff]
  %v142 = vld [vmem:[%s1 + $0x320] sm:$0xff]
  %v143 = vld [vmem:[%s1 + $0x328] sm:$0xff]
  %v144 = vld [vmem:[%s1 + $0x330] sm:$0xff]
  %v145 = vld [vmem:[%s1 + $0x338] sm:$0xff]
  %v146 = vld [vmem:[%s1 + $0x340] sm:$0xff]
  %v147 = vld [vmem:[%s1 + $0x348] sm:$0xff]
  %v148 = vld [vmem:[%s1 + $0x350] sm:$0xff]
  %v149 = vld [vmem:[%s1 + $0x358] sm:$0xff]
  %v150 = vld [vmem:[%s1 + $0x360] sm:$0xff]
  %v151 = vld [vmem:[%s1 + $0x368] sm:$0xff]
  %v152 = vld [vmem:[%s1 + $0x370] sm:$0xff]
  %v153 = vld [vmem:[%s1 + $0x378] sm:$0xff]
  %v154 = vld [vmem:[%s1 + $0x380] sm:$0xff]
  %v155 = vld [vmem:[%s1 + $0x388] sm:$0xff]
  %v156 = vld [vmem:[%s1 + $0x390] sm:$0xff]
  %v157 = vld [vmem:[%s1 + $0x398] sm:$0xff]
  %v158 = vld [vmem:[%s1 + $0x3a0] sm:$0xff]
  %v159 = vld [vmem:[%s1 + $0x3a8] sm:$0xff]
  %v160 = vld [vmem:[%s1 + $0x3b0] sm:$0xff]
  %v161 = vld [vmem:[%s1 + $0x3b8] sm:$0xff]
  %v162 = vld [vmem:[%s1 + $0x3c0] sm:$0xff]
  %v163 = vld [vmem:[%s1 + $0x3c8] sm:$0xff]
  %v164 = vld [vmem:[%s1 + $0x3d0] sm:$0xff]
  %v165 = vld [vmem:[%s1 + $0x3d8] sm:$0xff]
  %v166 = vld [vmem:[%s1 + $0x3e0] sm:$0xff]
  %v167 = vld [vmem:[%s1 + $0x3e8] sm:$0xff]
  %v168 = vld [vmem:[%s1 + $0x3f0] sm:$0xff]
  %v169 = vld [vmem:[%s1 + $0x3f8] sm:$0xff]
  %v170 = vld [vmem:[%s1 + $0x400] sm:$0xff]
  %v171 = vld [vmem:[%s1 + $0x408] sm:$0xff]
  %v172 = vld [vmem:[%s1 + $0x410] sm:$0xff]
  %v173 = vld [vmem:[%s1 + $0x418] sm:$0xff]
  %v174 = vld [vmem:[%s1 + $0x420] sm:$0xff]
  %v175 = vld [vmem:[%s1 + $0x428] sm:$0xff]
  %v176 = vld [vmem:[%s1 + $0x430] sm:$0xff]
  %v177 = vld [vmem:[%s1 + $0x438] sm:$0xff]
  %v178 = vld [vmem:[%s1 + $0x440] sm:$0xff]
  %v179 = vld [vmem:[%s1 + $0x448] sm:$0xff]
  %v180 = vld [vmem:[%s1 + $0x450] sm:$0xff]
  %v181 = vld [vmem:[%s1 + $0x458] sm:$0xff]
  %v182 = vld [vmem:[%s1 + $0x460] sm:$0xff]
  %v183 = vld [vmem:[%s1 + $0x468] sm:$0xff]
  %v184 = vld [vmem:[%s1 + $0x470] sm:$0xff]
  %v185 = vld [vmem:[%s1 + $0x478] sm:$0xff]
  %v186 = vld [vmem:[%s1 + $0x480] sm:$0xff]
  %v187 = vld [vmem:[%s1 + $0x488] sm:$0xff]
  %v188 = vld [vmem:[%s1 + $0x490] sm:$0xff]
  %v189 = vld [vmem:[%s1 + $0x498] sm:$0xff]
  %v190 = vld [vmem:[%s1 + $0x4a0] sm:$0xff]
  %v191 = vld [vmem:[%s1 + $0x4a8] sm:$0xff]
  %v192 = vld [vmem:[%s1 + $0x4b0] sm:$0xff]
  %v193 = vld [vmem:[%s1 + $0x4b8] sm:$0xff]
  %v194 = vld [vmem:[%s1 + $0x4c0] sm:$0xff]
  %v195 = vld [vmem:[%s1 + $0x4c8] sm:$0xff]
  %v196 = vld [vmem:[%s1 + $0x4d0] sm:$0xff]
  %v197 = vld [vmem:[%s1 + $0x4d8] sm:$0xff]
  %v198 = vld [vmem:[%s1 + $0x4e0] sm:$0xff]
  %v199 = vld [vmem:[%s1 + $0x4e8] sm:$0xff]
  %v200 = vld [vmem:[%s1 + $0x4f0] sm:$0xff]
  %v201 = vld [vmem:[%s1 + $0x4f8] sm:$0xff]
  %v202 = vld [vmem:[%s1 + $0x500] sm:$0xff]
  %v203 = vld [vmem:[%s1 + $0x508] sm:$0xff]
  %v204 = vld [vmem:[%s1 + $0x510] sm:$0xff]
  %v205 = vld [vmem:[%s1 + $0x518] sm:$0xff]
  %v206 = vld [vmem:[%s1 + $0x520] sm:$0xff]
  %v207 = vld [vmem:[%s1 + $0x528] sm:$0xff]
  %v208 = vld [vmem:[%s1 + $0x530] sm:$0xff]
  %v209 = vld [vmem:[%s1 + $0x538] sm:$0xff]
  %v210 = vld [vmem:[%s1 + $0x540] sm:$0xff]
  %v211 = vld [vmem:[%s1 + $0x548] sm:$0xff]
  %v212 = vld [vmem:[%s1 + $0x550] sm:$0xff]
  %v213 = vld [vmem:[%s1 + $0x558] sm:$0xff]
  %v214 = vld [vmem:[%s1 + $0x560] sm:$0xff]
  %v215 = vld [vmem:[%s1 + $0x568] sm:$0xff]
  %v216 = vld [vmem:[%s1 + $0x570] sm:$0xff]
  %v217 = vld [vmem:[%s1 + $0x578] sm:$0xff]
  %v218 = vld [vmem:[%s1 + $0x580] sm:$0xff]
  %v219 = vld [vmem:[%s1 + $0x588] sm:$0xff]
  %v220 = vld [vmem:[%s1 + $0x590] sm:$0xff]
  %v221 = vld [vmem:[%s1 + $0x598] sm:$0xff]
  %v222 = vld [vmem:[%s1 + $0x5a0] sm:$0xff]
  %v223 = vld [vmem:[%s1 + $0x5a8] sm:$0xff]
  %v224 = vld [vmem:[%s1 + $0x5b0] sm:$0xff]
  %v225 = vld [vmem:[%s1 + $0x5b8] sm:$0xff]
  %v226 = vld [vmem:[%s1 + $0x5c0] sm:$0xff]
  %v227 = vld [vmem:[%s1 + $0x5c8] sm:$0xff]
  %v228 = vld [vmem:[%s1 + $0x5d0] sm:$0xff]
  %v229 = vld [vmem:[%s1 + $0x5d8] sm:$0xff]
  %v230 = vld [vmem:[%s1 + $0x5e0] sm:$0xff]
  %v231 = vld [vmem:[%s1 + $0x5e8] sm:$0xff]
  %v232 = vld [vmem:[%s1 + $0x5f0] sm:$0xff]
  %v233 = vld [vmem:[%s1 + $0x5f8] sm:$0xff]
  %v234 = vld [vmem:[%s1 + $0x600] sm:$0xff]
  %v235 = vld [vmem:[%s1 + $0x608] sm:$0xff]
  %v236 = vld [vmem:[%s1 + $0x610] sm:$0xff]
  %v237 = vld [vmem:[%s1 + $0x618] sm:$0xff]
  %v238 = vld [vmem:[%s1 + $0x620] sm:$0xff]
  %v239 = vld [vmem:[%s1 + $0x628] sm:$0xff]
  %v240 = vld [vmem:[%s1 + $0x630] sm:$0xff]
  %v241 = vld [vmem:[%s1 + $0x638] sm:$0xff]
  %v242 = vld [vmem:[%s1 + $0x640] sm:$0xff]
  %v243 = vld [vmem:[%s1 + $0x648] sm:$0xff]
  %v244 = vld [vmem:[%s1 + $0x650] sm:$0xff]
  %v245 = vld [vmem:[%s1 + $0x658] sm:$0xff]
  %v246 = vld [vmem:[%s1 + $0x660] sm:$0xff]
  %v247 = vld [vmem:[%s1 + $0x668] sm:$0xff]
  %v248 = vld [vmem:[%s1 + $0x670] sm:$0xff]
  %v249 = vld [vmem:[%s1 + $0x678] sm:$0xff]
  %v250 = vld [vmem:[%s1 + $0x680] sm:$0xff]
  %v251 = vld [vmem:[%s1 + $0x688] sm:$0xff]
  %v252 = vld [vmem:[%s1 + $0x690] sm:$0xff]
  %v253 = vld [vmem:[%s1 + $0x698] sm:$0xff]
  %v254 = vld [vmem:[%s1 + $0x6a0] sm:$0xff]
  %v255 = vld [vmem:[%s1 + $0x6a8] sm:$0xff]
  %v256 = vld [vmem:[%s1 + $0x6b0] sm:$0xff]
  %v257 = vld [vmem:[%s1 + $0x6b8] sm:$0xff]
  %v258 = vld [vmem:[%s1 + $0x6c0] sm:$0xff]
  %v259 = vld [vmem:[%s1 + $0x6c8] sm:$0xff]
  %v260 = vld [vmem:[%s1 + $0x6d0] sm:$0xff]
  %v261 = vld [vmem:[%s1 + $0x6d8] sm:$0xff]
  %v262 = vld [vmem:[%s1 + $0x6e0] sm:$0xff]
  %v263 = vld [vmem:[%s1 + $0x6e8] sm:$0xff]
  %v264 = vld [vmem:[%s1 + $0x6f0] sm:$0xff]
  %v265 = vld [vmem:[%s1 + $0x6f8] sm:$0xff]
  %v266 = vld [vmem:[%s1 + $0x700] sm:$0xff]
  %v267 = vld [vmem:[%s1 + $0x708] sm:$0xff]
  %v268 = vld [vmem:[%s1 + $0x710] sm:$0xff]
  %v269 = vld [vmem:[%s1 + $0x718] sm:$0xff]
  %v270 = vld [vmem:[%s1 + $0x720] sm:$0xff]
  %v271 = vld [vmem:[%s1 + $0x728] sm:$0xff]
  %v272 = vld [vmem:[%s1 + $0x730] sm:$0xff]
  %v273 = vld [vmem:[%s1 + $0x738] sm:$0xff]
  %v274 = vld [vmem:[%s1 + $0x740] sm:$0xff]
  %v275 = vld [vmem:[%s1 + $0x748] sm:$0xff]
  %v276 = vld [vmem:[%s1 + $0x750] sm:$0xff]
  %v277 = vld [vmem:[%s1 + $0x758] sm:$0xff]
  %v278 = vld [vmem:[%s1 + $0x760] sm:$0xff]
  %v279 = vld [vmem:[%s1 + $0x768] sm:$0xff]
  %v280 = vld [vmem:[%s1 + $0x770] sm:$0xff]
  %v281 = vld [vmem:[%s1 + $0x778] sm:$0xff]
  %v282 = vld [vmem:[%s1 + $0x780] sm:$0xff]
  %v283 = vld [vmem:[%s1 + $0x788] sm:$0xff]
  %v284 = vld [vmem:[%s1 + $0x790] sm:$0xff]
  %v285 = vld [vmem:[%s1 + $0x798] sm:$0xff]
  %v286 = vld [vmem:[%s1 + $0x7a0] sm:$0xff]
  %v287 = vld [vmem:[%s1 + $0x7a8] sm:$0xff]
  %v288 = vld [vmem:[%s1 + $0x7b0] sm:$0xff]
  %v289 = vld [vmem:[%s1 + $0x7b8] sm:$0xff]
  %v290 = vld [vmem:[%s1 + $0x7c0] sm:$0xff]
  %v291 = vld [vmem:[%s1 + $0x7c8] sm:$0xff]
  %v292 = vld [vmem:[%s1 + $0x7d0] sm:$0xff]
  %v293 = vld [vmem:[%s1 + $0x7d8] sm:$0xff]
  %v294 = vld [vmem:[%s1 + $0x7e0] sm:$0xff]
  %v295 = vld [vmem:[%s1 + $0x7e8] sm:$0xff]
  %v296 = vld [vmem:[%s1 + $0x7f0] sm:$0xff]
  %v297 = vld [vmem:[%s1 + $0x7f8] sm:$0xff]
  %v298 = vld [vmem:[%s1 + $0x800] sm:$0xff]
  %v299 = vld [vmem:[%s1 + $0x808] sm:$0xff]
  %v300 = vld [vmem:[%s1 + $0x810] sm:$0xff]
  %v301 = vld [vmem:[%s1 + $0x818] sm:$0xff]
  %v302 = vld [vmem:[%s1 + $0x820] sm:$0xff]
  %v303 = vld [vmem:[%s1 + $0x828] sm:$0xff]
  %v304 = vld [vmem:[%s1 + $0x830] sm:$0xff]
  %v305 = vld [vmem:[%s1 + $0x838] sm:$0xff]
  %v306 = vld [vmem:[%s1 + $0x840] sm:$0xff]
  %v307 = vld [vmem:[%s1 + $0x848] sm:$0xff]
  %v308 = vld [vmem:[%s1 + $0x850] sm:$0xff]
  %v309 = vld [vmem:[%s1 + $0x858] sm:$0xff]
  %v310 = vld [vmem:[%s1 + $0x860] sm:$0xff]
  %v311 = vld [vmem:[%s1 + $0x868] sm:$0xff]
  %v312 = vld [vmem:[%s1 + $0x870] sm:$0xff]
  %v313 = vld [vmem:[%s1 + $0x878] sm:$0xff]
  %v314 = vld [vmem:[%s1 + $0x880] sm:$0xff]
  %v315 = vld [vmem:[%s1 + $0x888] sm:$0xff]
  %v316 = vld [vmem:[%s1 + $0x890] sm:$0xff]
  %v317 = vld [vmem:[%s1 + $0x898] sm:$0xff]
  %v318 = vld [vmem:[%s1 + $0x8a0] sm:$0xff]
  %v319 = vld [vmem:[%s1 + $0x8a8] sm:$0xff]
  %v320 = vld [vmem:[%s1 + $0x8b0] sm:$0xff]
  %v321 = vld [vmem:[%s1 + $0x8b8] sm:$0xff]
  %v322 = vld [vmem:[%s1 + $0x8c0] sm:$0xff]
  %v323 = vld [vmem:[%s1 + $0x8c8] sm:$0xff]
  %v324 = vld [vmem:[%s1 + $0x8d0] sm:$0xff]
  %v325 = vld [vmem:[%s1 + $0x8d8] sm:$0xff]
  %v326 = vld [vmem:[%s1 + $0x8e0] sm:$0xff]
  %v327 = vld [vmem:[%s1 + $0x8e8] sm:$0xff]
  %v328 = vld [vmem:[%s1 + $0x8f0] sm:$0xff]
  %v329 = vld [vmem:[%s1 + $0x8f8] sm:$0xff]
  %v330 = vld [vmem:[%s1 + $0x900] sm:$0xff]
  %v331 = vld [vmem:[%s1 + $0x908] sm:$0xff]
  %v332 = vld [vmem:[%s1 + $0x910] sm:$0xff]
  %v333 = vld [vmem:[%s1 + $0x918] sm:$0xff]
  %v334 = vld [vmem:[%s1 + $0x920] sm:$0xff]
  %v335 = vld [vmem:[%s1 + $0x928] sm:$0xff]
  %v336 = vld [vmem:[%s1 + $0x930] sm:$0xff]
  %v337 = vld [vmem:[%s1 + $0x938] sm:$0xff]
  %v338 = vld [vmem:[%s1 + $0x940] sm:$0xff]
  %v339 = vld [vmem:[%s1 + $0x948] sm:$0xff]
  %v340 = vld [vmem:[%s1 + $0x950] sm:$0xff]
  %v341 = vld [vmem:[%s1 + $0x958] sm:$0xff]
  %v342 = vld [vmem:[%s1 + $0x960] sm:$0xff]
  %v343 = vld [vmem:[%s1 + $0x968] sm:$0xff]
  %v344 = vld [vmem:[%s1 + $0x970] sm:$0xff]
  %v345 = vld [vmem:[%s1 + $0x978] sm:$0xff]
  %v346 = vld [vmem:[%s1 + $0x980] sm:$0xff]
  %v347 = vld [vmem:[%s1 + $0x988] sm:$0xff]
  %v348 = vld [vmem:[%s1 + $0x990] sm:$0xff]
  %v349 = vld [vmem:[%s1 + $0x998] sm:$0xff]
  %v350 = vld [vmem:[%s1 + $0x9a0] sm:$0xff]
  %v351 = vld [vmem:[%s1 + $0x9a8] sm:$0xff]
  %v352 = vld [vmem:[%s1 + $0x9b0] sm:$0xff]
  %v353 = vld [vmem:[%s1 + $0x9b8] sm:$0xff]
  %v354 = vld [vmem:[%s1 + $0x9c0] sm:$0xff]
  %v355 = vld [vmem:[%s1 + $0x9c8] sm:$0xff]
  %v356 = vld [vmem:[%s1 + $0x9d0] sm:$0xff]
  %v357 = vld [vmem:[%s1 + $0x9d8] sm:$0xff]
  %v358 = vld [vmem:[%s1 + $0x9e0] sm:$0xff]
  %v359 = vld [vmem:[%s1 + $0x9e8] sm:$0xff]
  %v360 = vld [vmem:[%s1 + $0x9f0] sm:$0xff]
  %v361 = vld [vmem:[%s1 + $0x9f8] sm:$0xff]
  %v362 = vld [vmem:[%s1 + $0xa00] sm:$0xff]
  %v363 = vld [vmem:[%s1 + $0xa08] sm:$0xff]
  %v364 = vld [vmem:[%s1 + $0xa10] sm:$0xff]
  %v365 = vld [vmem:[%s1 + $0xa18] sm:$0xff]
  %v366 = vld [vmem:[%s1 + $0xa20] sm:$0xff]
  %v367 = vld [vmem:[%s1 + $0xa28] sm:$0xff]
  %v368 = vld [vmem:[%s1 + $0xa30] sm:$0xff]
  %v369 = vld [vmem:[%s1 + $0xa38] sm:$0xff]
  %v370 = vld [vmem:[%s1 + $0xa40] sm:$0xff]
  %v371 = vld [vmem:[%s1 + $0xa48] sm:$0xff]
  %v372 = vld [vmem:[%s1 + $0xa50] sm:$0xff]
  %v373 = vld [vmem:[%s1 + $0xa58] sm:$0xff]
  %v374 = vld [vmem:[%s1 + $0xa60] sm:$0xff]
  %v375 = vld [vmem:[%s1 + $0xa68] sm:$0xff]
  %v376 = vld [vmem:[%s1 + $0xa70] sm:$0xff]
  %v377 = vld [vmem:[%s1 + $0xa78] sm:$0xff]
  %v378 = vld [vmem:[%s2] sm:$0xf]
  %v380 = vperm.slane %v378, 0
  %v381 = vperm.slane %v378, 1
  %v382 = vperm.slane %v378, 2
  %v383 = vperm.slane %v378, 3
  %v400 = vunpack.c.l.b16 %v30
  %v401 = vunpack.c.h.b16 %v30
  %v402 = vunpack.c.l.b16 %v31
  %v403 = vunpack.c.h.b16 %v31
  %v404 = vunpack.c.l.b16 %v32
  %v405 = vunpack.c.h.b16 %v32
  %v406 = vunpack.c.l.b16 %v33
  %v407 = vunpack.c.h.b16 %v33
  %v408 = vunpack.c.l.b16 %v34
  %v409 = vunpack.c.h.b16 %v34
  %v410 = vunpack.c.l.b16 %v35
  %v411 = vunpack.c.l.b16 %v36
  %v412 = vunpack.c.h.b16 %v36
  %v413 = vunpack.c.l.b16 %v37
  %v414 = vunpack.c.h.b16 %v37
  %v415 = vunpack.c.l.b16 %v38
  %v416 = vunpack.c.h.b16 %v38
  %v417 = vunpack.c.l.b16 %v39
  %v418 = vunpack.c.h.b16 %v39
  %v419 = vunpack.c.l.b16 %v40
  %v420 = vunpack.c.h.b16 %v40
  %v421 = vunpack.c.l.b16 %v41
  %v422 = vpack.c.b16 %v411, %v400
  %v423 = vpack.c.b16 %v412, %v401
  %v424 = vpack.c.b16 %v413, %v402
  %v425 = vpack.c.b16 %v414, %v403
  %v426 = vpack.c.b16 %v415, %v404
  %v427 = vpack.c.b16 %v416, %v405
  %v428 = vpack.c.b16 %v417, %v406
  %v429 = vpack.c.b16 %v418, %v407
  %v430 = vpack.c.b16 %v419, %v408
  %v431 = vpack.c.b16 %v420, %v409
  %v432 = vpack.c.b16 %v421, %v410
  %v779 = vunpack.c.l.b16 %v42
  %v780 = vunpack.c.h.b16 %v42
  %v781 = vunpack.c.l.b16 %v43
  %v782 = vunpack.c.h.b16 %v43
  %v783 = vunpack.c.l.b16 %v44
  %v784 = vunpack.c.h.b16 %v44
  %v785 = vunpack.c.l.b16 %v45
  %v786 = vunpack.c.h.b16 %v45
  %v787 = vunpack.c.l.b16 %v46
  %v788 = vunpack.c.h.b16 %v46
  %v789 = vunpack.c.l.b16 %v47
  %v790 = vunpack.c.h.b16 %v47
  %v791 = vunpack.c.l.b16 %v48
  %v792 = vunpack.c.h.b16 %v48
  %v793 = vunpack.c.l.b16 %v49
  %v794 = vunpack.c.h.b16 %v49
  %v795 = vunpack.c.l.b16 %v50
  %v796 = vunpack.c.h.b16 %v50
  %v797 = vunpack.c.l.b16 %v51
  %v798 = vunpack.c.h.b16 %v51
  %v799 = vunpack.c.l.b16 %v52
  %v800 = vunpack.c.h.b16 %v52
  %v801 = vunpack.c.l.b16 %v53
  %v802 = vunpack.c.h.b16 %v53
  %v803 = vunpack.c.l.b16 %v54
  %v804 = vunpack.c.h.b16 %v54
  %v805 = vunpack.c.l.b16 %v55
  %v806 = vunpack.c.h.b16 %v55
  %v807 = vunpack.c.l.b16 %v56
  %v808 = vunpack.c.h.b16 %v56
  %v809 = vunpack.c.l.b16 %v57
  %v810 = vunpack.c.h.b16 %v57
  %v811 = vunpack.c.l.b16 %v58
  %v812 = vunpack.c.h.b16 %v58
  %v813 = vunpack.c.l.b16 %v59
  %v814 = vunpack.c.h.b16 %v59
  %v815 = vunpack.c.l.b16 %v60
  %v816 = vunpack.c.h.b16 %v60
  %v817 = vunpack.c.l.b16 %v61
  %v818 = vunpack.c.h.b16 %v61
  %v819 = vunpack.c.l.b16 %v62
  %v820 = vunpack.c.h.b16 %v62
  %v821 = vunpack.c.l.b16 %v63
  %v822 = vunpack.c.h.b16 %v63
  %v823 = vunpack.c.l.b16 %v64
  %v824 = vunpack.c.h.b16 %v64
  %v825 = vunpack.c.l.b16 %v65
  %v826 = vunpack.c.h.b16 %v65
  %v827 = vunpack.c.l.b16 %v66
  %v828 = vunpack.c.h.b16 %v66
  %v829 = vunpack.c.l.b16 %v67
  %v830 = vunpack.c.h.b16 %v67
  %v831 = vunpack.c.l.b16 %v68
  %v832 = vunpack.c.h.b16 %v68
  %v833 = vunpack.c.l.b16 %v69
  %v834 = vunpack.c.h.b16 %v69
  %v835 = vunpack.c.l.b16 %v70
  %v836 = vunpack.c.h.b16 %v70
  %v837 = vunpack.c.l.b16 %v71
  %v838 = vunpack.c.h.b16 %v71
  %v839 = vunpack.c.l.b16 %v72
  %v840 = vunpack.c.h.b16 %v72
  %v841 = vunpack.c.l.b16 %v73
  %v842 = vunpack.c.h.b16 %v73
  %v843 = vunpack.c.l.b16 %v74
  %v844 = vunpack.c.h.b16 %v74
  %v845 = vunpack.c.l.b16 %v75
  %v846 = vunpack.c.h.b16 %v75
  %v847 = vunpack.c.l.b16 %v76
  %v848 = vunpack.c.h.b16 %v76
  %v849 = vunpack.c.l.b16 %v77
  %v850 = vunpack.c.h.b16 %v77
  %v851 = vunpack.c.l.b16 %v78
  %v852 = vunpack.c.h.b16 %v78
  %v853 = vunpack.c.l.b16 %v79
  %v854 = vunpack.c.h.b16 %v79
  %v855 = vunpack.c.l.b16 %v80
  %v856 = vunpack.c.h.b16 %v80
  %v857 = vunpack.c.l.b16 %v81
  %v858 = vunpack.c.h.b16 %v81
  %v859 = vunpack.c.l.b16 %v82
  %v860 = vunpack.c.h.b16 %v82
  %v861 = vunpack.c.l.b16 %v83
  %v862 = vunpack.c.h.b16 %v83
  %v863 = vunpack.c.l.b16 %v84
  %v864 = vunpack.c.h.b16 %v84
  %v865 = vunpack.c.l.b16 %v85
  %v866 = vunpack.c.h.b16 %v85
  %v867 = vunpack.c.l.b16 %v86
  %v868 = vunpack.c.h.b16 %v86
  %v869 = vunpack.c.l.b16 %v87
  %v870 = vunpack.c.h.b16 %v87
  %v871 = vunpack.c.l.b16 %v88
  %v872 = vunpack.c.h.b16 %v88
  %v873 = vunpack.c.l.b16 %v89
  %v874 = vunpack.c.h.b16 %v89
  %v875 = vunpack.c.l.b16 %v90
  %v876 = vunpack.c.h.b16 %v90
  %v877 = vunpack.c.l.b16 %v91
  %v878 = vunpack.c.h.b16 %v91
  %v879 = vunpack.c.l.b16 %v92
  %v880 = vunpack.c.h.b16 %v92
  %v881 = vunpack.c.l.b16 %v93
  %v882 = vunpack.c.h.b16 %v93
  %v883 = vunpack.c.l.b16 %v94
  %v884 = vunpack.c.h.b16 %v94
  %v885 = vunpack.c.l.b16 %v95
  %v886 = vunpack.c.h.b16 %v95
  %v887 = vunpack.c.l.b16 %v96
  %v888 = vunpack.c.h.b16 %v96
  %v889 = vunpack.c.l.b16 %v97
  %v890 = vunpack.c.h.b16 %v97
  %v891 = vunpack.c.l.b16 %v98
  %v892 = vunpack.c.h.b16 %v98
  %v893 = vunpack.c.l.b16 %v99
  %v894 = vunpack.c.h.b16 %v99
  %v895 = vunpack.c.l.b16 %v100
  %v896 = vunpack.c.h.b16 %v100
  %v897 = vunpack.c.l.b16 %v101
  %v898 = vunpack.c.h.b16 %v101
  %v899 = vunpack.c.l.b16 %v102
  %v900 = vunpack.c.h.b16 %v102
  %v901 = vunpack.c.l.b16 %v103
  %v902 = vunpack.c.h.b16 %v103
  %v903 = vunpack.c.l.b16 %v104
  %v904 = vunpack.c.h.b16 %v104
  %v905 = vunpack.c.l.b16 %v105
  %v906 = vunpack.c.h.b16 %v105
  %v907 = vunpack.c.l.b16 %v106
  %v908 = vunpack.c.h.b16 %v106
  %v909 = vunpack.c.l.b16 %v107
  %v910 = vunpack.c.h.b16 %v107
  %v911 = vunpack.c.l.b16 %v108
  %v912 = vunpack.c.h.b16 %v108
  %v913 = vunpack.c.l.b16 %v109
  %v914 = vunpack.c.h.b16 %v109
  %v915 = vunpack.c.l.b16 %v110
  %v916 = vunpack.c.h.b16 %v110
  %v917 = vunpack.c.l.b16 %v111
  %v918 = vunpack.c.h.b16 %v111
  %v919 = vunpack.c.l.b16 %v112
  %v920 = vunpack.c.h.b16 %v112
  %v921 = vunpack.c.l.b16 %v113
  %v922 = vunpack.c.h.b16 %v113
  %v923 = vunpack.c.l.b16 %v114
  %v924 = vunpack.c.h.b16 %v114
  %v925 = vunpack.c.l.b16 %v115
  %v926 = vunpack.c.h.b16 %v115
  %v927 = vunpack.c.l.b16 %v116
  %v928 = vunpack.c.h.b16 %v116
  %v929 = vunpack.c.l.b16 %v117
  %v930 = vunpack.c.h.b16 %v117
  %v931 = vunpack.c.l.b16 %v118
  %v932 = vunpack.c.h.b16 %v118
  %v933 = vunpack.c.l.b16 %v119
  %v934 = vunpack.c.h.b16 %v119
  %v935 = vunpack.c.l.b16 %v120
  %v936 = vunpack.c.h.b16 %v120
  %v937 = vunpack.c.l.b16 %v121
  %v938 = vunpack.c.h.b16 %v121
  %v939 = vunpack.c.l.b16 %v122
  %v940 = vunpack.c.h.b16 %v122
  %v941 = vunpack.c.l.b16 %v123
  %v942 = vunpack.c.h.b16 %v123
  %v943 = vunpack.c.l.b16 %v124
  %v944 = vunpack.c.h.b16 %v124
  %v945 = vunpack.c.l.b16 %v125
  %v946 = vunpack.c.h.b16 %v125
  %v947 = vunpack.c.l.b16 %v126
  %v948 = vunpack.c.h.b16 %v126
  %v949 = vunpack.c.l.b16 %v127
  %v950 = vunpack.c.h.b16 %v127
  %v951 = vunpack.c.l.b16 %v128
  %v952 = vunpack.c.h.b16 %v128
  %v953 = vunpack.c.l.b16 %v129
  %v954 = vunpack.c.h.b16 %v129
  %v955 = vunpack.c.l.b16 %v130
  %v956 = vunpack.c.h.b16 %v130
  %v957 = vunpack.c.l.b16 %v131
  %v958 = vunpack.c.h.b16 %v131
  %v959 = vunpack.c.l.b16 %v132
  %v960 = vunpack.c.h.b16 %v132
  %v961 = vunpack.c.l.b16 %v133
  %v962 = vunpack.c.h.b16 %v133
  %v963 = vunpack.c.l.b16 %v134
  %v964 = vunpack.c.h.b16 %v134
  %v965 = vunpack.c.l.b16 %v135
  %v966 = vunpack.c.h.b16 %v135
  %v967 = vunpack.c.l.b16 %v136
  %v968 = vunpack.c.h.b16 %v136
  %v969 = vunpack.c.l.b16 %v137
  %v970 = vunpack.c.h.b16 %v137
  %v971 = vunpack.c.l.b16 %v138
  %v972 = vunpack.c.h.b16 %v138
  %v973 = vunpack.c.l.b16 %v139
  %v974 = vunpack.c.h.b16 %v139
  %v975 = vunpack.c.l.b16 %v140
  %v976 = vunpack.c.h.b16 %v140
  %v977 = vunpack.c.l.b16 %v141
  %v978 = vunpack.c.h.b16 %v141
  %v979 = vunpack.c.l.b16 %v142
  %v980 = vunpack.c.h.b16 %v142
  %v981 = vunpack.c.l.b16 %v143
  %v982 = vunpack.c.h.b16 %v143
  %v983 = vunpack.c.l.b16 %v144
  %v984 = vunpack.c.h.b16 %v144
  %v985 = vunpack.c.l.b16 %v145
  %v986 = vunpack.c.h.b16 %v145
  %v987 = vunpack.c.l.b16 %v146
  %v988 = vunpack.c.h.b16 %v146
  %v989 = vunpack.c.l.b16 %v147
  %v990 = vunpack.c.h.b16 %v147
  %v991 = vunpack.c.l.b16 %v148
  %v992 = vunpack.c.h.b16 %v148
  %v993 = vunpack.c.l.b16 %v149
  %v994 = vunpack.c.h.b16 %v149
  %v995 = vunpack.c.l.b16 %v150
  %v996 = vunpack.c.h.b16 %v150
  %v997 = vunpack.c.l.b16 %v151
  %v998 = vunpack.c.h.b16 %v151
  %v999 = vunpack.c.l.b16 %v152
  %v1000 = vunpack.c.h.b16 %v152
  %v1001 = vunpack.c.l.b16 %v153
  %v1002 = vunpack.c.h.b16 %v153
  %v1003 = vunpack.c.l.b16 %v154
  %v1004 = vunpack.c.h.b16 %v154
  %v1005 = vunpack.c.l.b16 %v155
  %v1006 = vunpack.c.h.b16 %v155
  %v1007 = vunpack.c.l.b16 %v156
  %v1008 = vunpack.c.h.b16 %v156
  %v1009 = vunpack.c.l.b16 %v157
  %v1010 = vunpack.c.h.b16 %v157
  %v1011 = vunpack.c.l.b16 %v158
  %v1012 = vunpack.c.h.b16 %v158
  %v1013 = vunpack.c.l.b16 %v159
  %v1014 = vunpack.c.h.b16 %v159
  %v1015 = vunpack.c.l.b16 %v160
  %v1016 = vunpack.c.h.b16 %v160
  %v1017 = vunpack.c.l.b16 %v161
  %v1018 = vunpack.c.h.b16 %v161
  %v1019 = vunpack.c.l.b16 %v162
  %v1020 = vunpack.c.h.b16 %v162
  %v1021 = vunpack.c.l.b16 %v163
  %v1022 = vunpack.c.h.b16 %v163
  %v1023 = vunpack.c.l.b16 %v164
  %v1024 = vunpack.c.h.b16 %v164
  %v1025 = vunpack.c.l.b16 %v165
  %v1026 = vunpack.c.h.b16 %v165
  %v1027 = vunpack.c.l.b16 %v166
  %v1028 = vunpack.c.h.b16 %v166
  %v1029 = vunpack.c.l.b16 %v167
  %v1030 = vunpack.c.h.b16 %v167
  %v1031 = vunpack.c.l.b16 %v168
  %v1032 = vunpack.c.h.b16 %v168
  %v1033 = vunpack.c.l.b16 %v169
  %v1034 = vunpack.c.h.b16 %v169
  %v1035 = vunpack.c.l.b16 %v170
  %v1036 = vunpack.c.h.b16 %v170
  %v1037 = vunpack.c.l.b16 %v171
  %v1038 = vunpack.c.h.b16 %v171
  %v1039 = vunpack.c.l.b16 %v172
  %v1040 = vunpack.c.h.b16 %v172
  %v1041 = vunpack.c.l.b16 %v173
  %v1042 = vunpack.c.h.b16 %v173
  %v1043 = vunpack.c.l.b16 %v174
  %v1044 = vunpack.c.h.b16 %v174
  %v1045 = vunpack.c.l.b16 %v175
  %v1046 = vunpack.c.h.b16 %v175
  %v1047 = vunpack.c.l.b16 %v176
  %v1048 = vunpack.c.h.b16 %v176
  %v1049 = vunpack.c.l.b16 %v177
  %v1050 = vunpack.c.h.b16 %v177
  %v1051 = vunpack.c.l.b16 %v178
  %v1052 = vunpack.c.h.b16 %v178
  %v1053 = vunpack.c.l.b16 %v179
  %v1054 = vunpack.c.h.b16 %v179
  %v1055 = vunpack.c.l.b16 %v180
  %v1056 = vunpack.c.h.b16 %v180
  %v1057 = vunpack.c.l.b16 %v181
  %v1058 = vunpack.c.h.b16 %v181
  %v1059 = vunpack.c.l.b16 %v182
  %v1060 = vunpack.c.h.b16 %v182
  %v1061 = vunpack.c.l.b16 %v183
  %v1062 = vunpack.c.h.b16 %v183
  %v1063 = vunpack.c.l.b16 %v184
  %v1064 = vunpack.c.h.b16 %v184
  %v1065 = vunpack.c.l.b16 %v185
  %v1066 = vunpack.c.h.b16 %v185
  %v1067 = vunpack.c.l.b16 %v186
  %v1068 = vunpack.c.h.b16 %v186
  %v1069 = vunpack.c.l.b16 %v187
  %v1070 = vunpack.c.h.b16 %v187
  %v1071 = vunpack.c.l.b16 %v188
  %v1072 = vunpack.c.h.b16 %v188
  %v1073 = vunpack.c.l.b16 %v189
  %v1074 = vunpack.c.h.b16 %v189
  %v1075 = vunpack.c.l.b16 %v190
  %v1076 = vunpack.c.h.b16 %v190
  %v1077 = vunpack.c.l.b16 %v191
  %v1078 = vunpack.c.h.b16 %v191
  %v1079 = vunpack.c.l.b16 %v192
  %v1080 = vunpack.c.h.b16 %v192
  %v1081 = vunpack.c.l.b16 %v193
  %v1082 = vunpack.c.h.b16 %v193
  %v1083 = vunpack.c.l.b16 %v194
  %v1084 = vunpack.c.h.b16 %v194
  %v1085 = vunpack.c.l.b16 %v195
  %v1086 = vunpack.c.h.b16 %v195
  %v1087 = vunpack.c.l.b16 %v196
  %v1088 = vunpack.c.h.b16 %v196
  %v1089 = vunpack.c.l.b16 %v197
  %v1090 = vunpack.c.h.b16 %v197
  %v1091 = vunpack.c.l.b16 %v198
  %v1092 = vunpack.c.h.b16 %v198
  %v1093 = vunpack.c.l.b16 %v199
  %v1094 = vunpack.c.h.b16 %v199
  %v1095 = vunpack.c.l.b16 %v200
  %v1096 = vunpack.c.h.b16 %v200
  %v1097 = vunpack.c.l.b16 %v201
  %v1098 = vunpack.c.h.b16 %v201
  %v1099 = vunpack.c.l.b16 %v202
  %v1100 = vunpack.c.h.b16 %v202
  %v1101 = vunpack.c.l.b16 %v203
  %v1102 = vunpack.c.h.b16 %v203
  %v1103 = vunpack.c.l.b16 %v204
  %v1104 = vunpack.c.h.b16 %v204
  %v1105 = vunpack.c.l.b16 %v205
  %v1106 = vunpack.c.h.b16 %v205
  %v1107 = vunpack.c.l.b16 %v206
  %v1108 = vunpack.c.h.b16 %v206
  %v1109 = vunpack.c.l.b16 %v207
  %v1110 = vunpack.c.h.b16 %v207
  %v1111 = vunpack.c.l.b16 %v208
  %v1112 = vunpack.c.h.b16 %v208
  %v1113 = vunpack.c.l.b16 %v209
  %v1114 = vunpack.c.h.b16 %v209
  %v1115 = vunpack.c.l.b16 %v210
  %v1116 = vunpack.c.h.b16 %v210
  %v1117 = vunpack.c.l.b16 %v211
  %v1118 = vunpack.c.h.b16 %v211
  %v1119 = vunpack.c.l.b16 %v212
  %v1120 = vunpack.c.h.b16 %v212
  %v1121 = vunpack.c.l.b16 %v213
  %v1122 = vunpack.c.h.b16 %v213
  %v1123 = vunpack.c.l.b16 %v214
  %v1124 = vunpack.c.h.b16 %v214
  %v1125 = vunpack.c.l.b16 %v215
  %v1126 = vunpack.c.h.b16 %v215
  %v1127 = vunpack.c.l.b16 %v216
  %v1128 = vunpack.c.h.b16 %v216
  %v1129 = vunpack.c.l.b16 %v217
  %v1130 = vunpack.c.h.b16 %v217
  %v1131 = vunpack.c.l.b16 %v218
  %v1132 = vunpack.c.h.b16 %v218
  %v1133 = vunpack.c.l.b16 %v219
  %v1134 = vunpack.c.h.b16 %v219
  %v1135 = vunpack.c.l.b16 %v220
  %v1136 = vunpack.c.h.b16 %v220
  %v1137 = vunpack.c.l.b16 %v221
  %v1138 = vunpack.c.h.b16 %v221
  %v1139 = vunpack.c.l.b16 %v222
  %v1140 = vunpack.c.h.b16 %v222
  %v1141 = vunpack.c.l.b16 %v223
  %v1142 = vunpack.c.h.b16 %v223
  %v1143 = vunpack.c.l.b16 %v224
  %v1144 = vunpack.c.h.b16 %v224
  %v1145 = vunpack.c.l.b16 %v225
  %v1146 = vunpack.c.h.b16 %v225
  %v1147 = vunpack.c.l.b16 %v226
  %v1148 = vunpack.c.h.b16 %v226
  %v1149 = vunpack.c.l.b16 %v227
  %v1150 = vunpack.c.h.b16 %v227
  %v1151 = vunpack.c.l.b16 %v228
  %v1152 = vunpack.c.h.b16 %v228
  %v1153 = vunpack.c.l.b16 %v229
  %v1154 = vunpack.c.h.b16 %v229
  %v1155 = vunpack.c.l.b16 %v230
  %v1156 = vunpack.c.h.b16 %v230
  %v1157 = vunpack.c.l.b16 %v231
  %v1158 = vunpack.c.h.b16 %v231
  %v1159 = vunpack.c.l.b16 %v232
  %v1160 = vunpack.c.h.b16 %v232
  %v1161 = vunpack.c.l.b16 %v233
  %v1162 = vunpack.c.h.b16 %v233
  %v1163 = vunpack.c.l.b16 %v234
  %v1164 = vunpack.c.h.b16 %v234
  %v1165 = vunpack.c.l.b16 %v235
  %v1166 = vunpack.c.h.b16 %v235
  %v1167 = vunpack.c.l.b16 %v236
  %v1168 = vunpack.c.h.b16 %v236
  %v1169 = vunpack.c.l.b16 %v237
  %v1170 = vunpack.c.h.b16 %v237
  %v1171 = vunpack.c.l.b16 %v238
  %v1172 = vunpack.c.h.b16 %v238
  %v1173 = vunpack.c.l.b16 %v239
  %v1174 = vunpack.c.h.b16 %v239
  %v1175 = vunpack.c.l.b16 %v240
  %v1176 = vunpack.c.h.b16 %v240
  %v1177 = vunpack.c.l.b16 %v241
  %v1178 = vunpack.c.h.b16 %v241
  %v1179 = vunpack.c.l.b16 %v242
  %v1180 = vunpack.c.h.b16 %v242
  %v1181 = vunpack.c.l.b16 %v243
  %v1182 = vunpack.c.h.b16 %v243
  %v1183 = vunpack.c.l.b16 %v244
  %v1184 = vunpack.c.h.b16 %v244
  %v1185 = vunpack.c.l.b16 %v245
  %v1186 = vunpack.c.h.b16 %v245
  %v1187 = vunpack.c.l.b16 %v246
  %v1188 = vunpack.c.h.b16 %v246
  %v1189 = vunpack.c.l.b16 %v247
  %v1190 = vunpack.c.h.b16 %v247
  %v1191 = vunpack.c.l.b16 %v248
  %v1192 = vunpack.c.h.b16 %v248
  %v1193 = vunpack.c.l.b16 %v249
  %v1194 = vunpack.c.h.b16 %v249
  %v1195 = vunpack.c.l.b16 %v250
  %v1196 = vunpack.c.h.b16 %v250
  %v1197 = vunpack.c.l.b16 %v251
  %v1198 = vunpack.c.h.b16 %v251
  %v1199 = vunpack.c.l.b16 %v252
  %v1200 = vunpack.c.h.b16 %v252
  %v1201 = vunpack.c.l.b16 %v253
  %v1202 = vunpack.c.h.b16 %v253
  %v1203 = vunpack.c.l.b16 %v254
  %v1204 = vunpack.c.h.b16 %v254
  %v1205 = vunpack.c.l.b16 %v255
  %v1206 = vunpack.c.h.b16 %v255
  %v1207 = vunpack.c.l.b16 %v256
  %v1208 = vunpack.c.h.b16 %v256
  %v1209 = vunpack.c.l.b16 %v257
  %v1210 = vunpack.c.h.b16 %v257
  %v1211 = vunpack.c.l.b16 %v258
  %v1212 = vunpack.c.h.b16 %v258
  %v1213 = vunpack.c.l.b16 %v259
  %v1214 = vunpack.c.h.b16 %v259
  %v1215 = vunpack.c.l.b16 %v260
  %v1216 = vunpack.c.h.b16 %v260
  %v1217 = vunpack.c.l.b16 %v261
  %v1218 = vunpack.c.h.b16 %v261
  %v1219 = vunpack.c.l.b16 %v262
  %v1220 = vunpack.c.h.b16 %v262
  %v1221 = vunpack.c.l.b16 %v263
  %v1222 = vunpack.c.h.b16 %v263
  %v1223 = vunpack.c.l.b16 %v264
  %v1224 = vunpack.c.h.b16 %v264
  %v1225 = vunpack.c.l.b16 %v265
  %v1226 = vunpack.c.h.b16 %v265
  %v1227 = vunpack.c.l.b16 %v266
  %v1228 = vunpack.c.h.b16 %v266
  %v1229 = vunpack.c.l.b16 %v267
  %v1230 = vunpack.c.h.b16 %v267
  %v1231 = vunpack.c.l.b16 %v268
  %v1232 = vunpack.c.h.b16 %v268
  %v1233 = vunpack.c.l.b16 %v269
  %v1234 = vunpack.c.h.b16 %v269
  %v1235 = vunpack.c.l.b16 %v270
  %v1236 = vunpack.c.h.b16 %v270
  %v1237 = vunpack.c.l.b16 %v271
  %v1238 = vunpack.c.h.b16 %v271
  %v1239 = vunpack.c.l.b16 %v272
  %v1240 = vunpack.c.h.b16 %v272
  %v1241 = vunpack.c.l.b16 %v273
  %v1242 = vunpack.c.h.b16 %v273
  %v1243 = vunpack.c.l.b16 %v274
  %v1244 = vunpack.c.h.b16 %v274
  %v1245 = vunpack.c.l.b16 %v275
  %v1246 = vunpack.c.h.b16 %v275
  %v1247 = vunpack.c.l.b16 %v276
  %v1248 = vunpack.c.h.b16 %v276
  %v1249 = vunpack.c.l.b16 %v277
  %v1250 = vunpack.c.h.b16 %v277
  %v1251 = vunpack.c.l.b16 %v278
  %v1252 = vunpack.c.h.b16 %v278
  %v1253 = vunpack.c.l.b16 %v279
  %v1254 = vunpack.c.h.b16 %v279
  %v1255 = vunpack.c.l.b16 %v280
  %v1256 = vunpack.c.h.b16 %v280
  %v1257 = vunpack.c.l.b16 %v281
  %v1258 = vunpack.c.h.b16 %v281
  %v1259 = vunpack.c.l.b16 %v282
  %v1260 = vunpack.c.h.b16 %v282
  %v1261 = vunpack.c.l.b16 %v283
  %v1262 = vunpack.c.h.b16 %v283
  %v1263 = vunpack.c.l.b16 %v284
  %v1264 = vunpack.c.h.b16 %v284
  %v1265 = vunpack.c.l.b16 %v285
  %v1266 = vunpack.c.h.b16 %v285
  %v1267 = vunpack.c.l.b16 %v286
  %v1268 = vunpack.c.h.b16 %v286
  %v1269 = vunpack.c.l.b16 %v287
  %v1270 = vunpack.c.h.b16 %v287
  %v1271 = vunpack.c.l.b16 %v288
  %v1272 = vunpack.c.h.b16 %v288
  %v1273 = vunpack.c.l.b16 %v289
  %v1274 = vunpack.c.h.b16 %v289
  %v1275 = vunpack.c.l.b16 %v290
  %v1276 = vunpack.c.h.b16 %v290
  %v1277 = vunpack.c.l.b16 %v291
  %v1278 = vunpack.c.h.b16 %v291
  %v1279 = vunpack.c.l.b16 %v292
  %v1280 = vunpack.c.h.b16 %v292
  %v1281 = vunpack.c.l.b16 %v293
  %v1282 = vunpack.c.h.b16 %v293
  %v1283 = vunpack.c.l.b16 %v294
  %v1284 = vunpack.c.h.b16 %v294
  %v1285 = vunpack.c.l.b16 %v295
  %v1286 = vunpack.c.h.b16 %v295
  %v1287 = vunpack.c.l.b16 %v296
  %v1288 = vunpack.c.h.b16 %v296
  %v1289 = vunpack.c.l.b16 %v297
  %v1290 = vunpack.c.h.b16 %v297
  %v1291 = vunpack.c.l.b16 %v298
  %v1292 = vunpack.c.h.b16 %v298
  %v1293 = vunpack.c.l.b16 %v299
  %v1294 = vunpack.c.h.b16 %v299
  %v1295 = vunpack.c.l.b16 %v300
  %v1296 = vunpack.c.h.b16 %v300
  %v1297 = vunpack.c.l.b16 %v301
  %v1298 = vunpack.c.h.b16 %v301
  %v1299 = vunpack.c.l.b16 %v302
  %v1300 = vunpack.c.h.b16 %v302
  %v1301 = vunpack.c.l.b16 %v303
  %v1302 = vunpack.c.h.b16 %v303
  %v1303 = vunpack.c.l.b16 %v304
  %v1304 = vunpack.c.h.b16 %v304
  %v1305 = vunpack.c.l.b16 %v305
  %v1306 = vunpack.c.h.b16 %v305
  %v1307 = vunpack.c.l.b16 %v306
  %v1308 = vunpack.c.h.b16 %v306
  %v1309 = vunpack.c.l.b16 %v307
  %v1310 = vunpack.c.h.b16 %v307
  %v1311 = vunpack.c.l.b16 %v308
  %v1312 = vunpack.c.h.b16 %v308
  %v1313 = vunpack.c.l.b16 %v309
  %v1314 = vunpack.c.h.b16 %v309
  %v1315 = vunpack.c.l.b16 %v310
  %v1316 = vunpack.c.h.b16 %v310
  %v1317 = vunpack.c.l.b16 %v311
  %v1318 = vunpack.c.h.b16 %v311
  %v1319 = vunpack.c.l.b16 %v312
  %v1320 = vunpack.c.h.b16 %v312
  %v1321 = vunpack.c.l.b16 %v313
  %v1322 = vunpack.c.h.b16 %v313
  %v1323 = vunpack.c.l.b16 %v314
  %v1324 = vunpack.c.h.b16 %v314
  %v1325 = vunpack.c.l.b16 %v315
  %v1326 = vunpack.c.h.b16 %v315
  %v1327 = vunpack.c.l.b16 %v316
  %v1328 = vunpack.c.h.b16 %v316
  %v1329 = vunpack.c.l.b16 %v317
  %v1330 = vunpack.c.h.b16 %v317
  %v1331 = vunpack.c.l.b16 %v318
  %v1332 = vunpack.c.h.b16 %v318
  %v1333 = vunpack.c.l.b16 %v319
  %v1334 = vunpack.c.h.b16 %v319
  %v1335 = vunpack.c.l.b16 %v320
  %v1336 = vunpack.c.h.b16 %v320
  %v1337 = vunpack.c.l.b16 %v321
  %v1338 = vunpack.c.h.b16 %v321
  %v1339 = vunpack.c.l.b16 %v322
  %v1340 = vunpack.c.h.b16 %v322
  %v1341 = vunpack.c.l.b16 %v323
  %v1342 = vunpack.c.h.b16 %v323
  %v1343 = vunpack.c.l.b16 %v324
  %v1344 = vunpack.c.h.b16 %v324
  %v1345 = vunpack.c.l.b16 %v325
  %v1346 = vunpack.c.h.b16 %v325
  %v1347 = vunpack.c.l.b16 %v326
  %v1348 = vunpack.c.h.b16 %v326
  %v1349 = vunpack.c.l.b16 %v327
  %v1350 = vunpack.c.h.b16 %v327
  %v1351 = vunpack.c.l.b16 %v328
  %v1352 = vunpack.c.h.b16 %v328
  %v1353 = vunpack.c.l.b16 %v329
  %v1354 = vunpack.c.h.b16 %v329
  %v1355 = vunpack.c.l.b16 %v330
  %v1356 = vunpack.c.h.b16 %v330
  %v1357 = vunpack.c.l.b16 %v331
  %v1358 = vunpack.c.h.b16 %v331
  %v1359 = vunpack.c.l.b16 %v332
  %v1360 = vunpack.c.h.b16 %v332
  %v1361 = vunpack.c.l.b16 %v333
  %v1362 = vunpack.c.h.b16 %v333
  %v1363 = vunpack.c.l.b16 %v334
  %v1364 = vunpack.c.h.b16 %v334
  %v1365 = vunpack.c.l.b16 %v335
  %v1366 = vunpack.c.h.b16 %v335
  %v1367 = vunpack.c.l.b16 %v336
  %v1368 = vunpack.c.h.b16 %v336
  %v1369 = vunpack.c.l.b16 %v337
  %v1370 = vunpack.c.h.b16 %v337
  %v1371 = vunpack.c.l.b16 %v338
  %v1372 = vunpack.c.h.b16 %v338
  %v1373 = vunpack.c.l.b16 %v339
  %v1374 = vunpack.c.h.b16 %v339
  %v1375 = vunpack.c.l.b16 %v340
  %v1376 = vunpack.c.h.b16 %v340
  %v1377 = vunpack.c.l.b16 %v341
  %v1378 = vunpack.c.h.b16 %v341
  %v1379 = vunpack.c.l.b16 %v342
  %v1380 = vunpack.c.h.b16 %v342
  %v1381 = vunpack.c.l.b16 %v343
  %v1382 = vunpack.c.h.b16 %v343
  %v1383 = vunpack.c.l.b16 %v344
  %v1384 = vunpack.c.h.b16 %v344
  %v1385 = vunpack.c.l.b16 %v345
  %v1386 = vunpack.c.h.b16 %v345
  %v1387 = vunpack.c.l.b16 %v346
  %v1388 = vunpack.c.h.b16 %v346
  %v1389 = vunpack.c.l.b16 %v347
  %v1390 = vunpack.c.h.b16 %v347
  %v1391 = vunpack.c.l.b16 %v348
  %v1392 = vunpack.c.h.b16 %v348
  %v1393 = vunpack.c.l.b16 %v349
  %v1394 = vunpack.c.h.b16 %v349
  %v1395 = vunpack.c.l.b16 %v350
  %v1396 = vunpack.c.h.b16 %v350
  %v1397 = vunpack.c.l.b16 %v351
  %v1398 = vunpack.c.h.b16 %v351
  %v1399 = vunpack.c.l.b16 %v352
  %v1400 = vunpack.c.h.b16 %v352
  %v1401 = vunpack.c.l.b16 %v353
  %v1402 = vunpack.c.h.b16 %v353
  %v1403 = vunpack.c.l.b16 %v354
  %v1404 = vunpack.c.h.b16 %v354
  %v1405 = vunpack.c.l.b16 %v355
  %v1406 = vunpack.c.h.b16 %v355
  %v1407 = vunpack.c.l.b16 %v356
  %v1408 = vunpack.c.h.b16 %v356
  %v1409 = vunpack.c.l.b16 %v357
  %v1410 = vunpack.c.h.b16 %v357
  %v1411 = vunpack.c.l.b16 %v358
  %v1412 = vunpack.c.h.b16 %v358
  %v1413 = vunpack.c.l.b16 %v359
  %v1414 = vunpack.c.h.b16 %v359
  %v1415 = vunpack.c.l.b16 %v360
  %v1416 = vunpack.c.h.b16 %v360
  %v1417 = vunpack.c.l.b16 %v361
  %v1418 = vunpack.c.h.b16 %v361
  %v1419 = vunpack.c.l.b16 %v362
  %v1420 = vunpack.c.h.b16 %v362
  %v1421 = vunpack.c.l.b16 %v363
  %v1422 = vunpack.c.h.b16 %v363
  %v1423 = vunpack.c.l.b16 %v364
  %v1424 = vunpack.c.h.b16 %v364
  %v1425 = vunpack.c.l.b16 %v365
  %v1426 = vunpack.c.h.b16 %v365
  %v1427 = vunpack.c.l.b16 %v366
  %v1428 = vunpack.c.h.b16 %v366
  %v1429 = vunpack.c.l.b16 %v367
  %v1430 = vunpack.c.h.b16 %v367
  %v1431 = vunpack.c.l.b16 %v368
  %v1432 = vunpack.c.h.b16 %v368
  %v1433 = vunpack.c.l.b16 %v369
  %v1434 = vunpack.c.h.b16 %v369
  %v1435 = vunpack.c.l.b16 %v370
  %v1436 = vunpack.c.h.b16 %v370
  %v1437 = vunpack.c.l.b16 %v371
  %v1438 = vunpack.c.h.b16 %v371
  %v1439 = vunpack.c.l.b16 %v372
  %v1440 = vunpack.c.h.b16 %v372
  %v1441 = vunpack.c.l.b16 %v373
  %v1442 = vunpack.c.h.b16 %v373
  %v1443 = vunpack.c.l.b16 %v374
  %v1444 = vunpack.c.h.b16 %v374
  %v1445 = vunpack.c.l.b16 %v375
  %v1446 = vunpack.c.h.b16 %v375
  %v1447 = vunpack.c.l.b16 %v376
  %v1448 = vunpack.c.h.b16 %v376
  %v1449 = vunpack.c.l.b16 %v377
  %v1450 = vunpack.c.h.b16 %v377
  %v1451 = vpack.c.b16 %v783, %v779
  %v1452 = vpack.c.b16 %v784, %v780
  %v1453 = vpack.c.b16 %v785, %v781
  %v1454 = vpack.c.b16 %v786, %v782
  %v1455 = vpack.c.b16 %v791, %v787
  %v1456 = vpack.c.b16 %v792, %v788
  %v1457 = vpack.c.b16 %v793, %v789
  %v1458 = vpack.c.b16 %v794, %v790
  %v1459 = vpack.c.b16 %v799, %v795
  %v1460 = vpack.c.b16 %v800, %v796
  %v1461 = vpack.c.b16 %v801, %v797
  %v1462 = vpack.c.b16 %v802, %v798
  %v1463 = vpack.c.b16 %v807, %v803
  %v1464 = vpack.c.b16 %v808, %v804
  %v1465 = vpack.c.b16 %v809, %v805
  %v1466 = vpack.c.b16 %v810, %v806
  %v1467 = vpack.c.b16 %v815, %v811
  %v1468 = vpack.c.b16 %v816, %v812
  %v1469 = vpack.c.b16 %v817, %v813
  %v1470 = vpack.c.b16 %v818, %v814
  %v1471 = vpack.c.b16 %v823, %v819
  %v1472 = vpack.c.b16 %v824, %v820
  %v1473 = vpack.c.b16 %v825, %v821
  %v1474 = vpack.c.b16 %v826, %v822
  %v1475 = vpack.c.b16 %v831, %v827
  %v1476 = vpack.c.b16 %v832, %v828
  %v1477 = vpack.c.b16 %v833, %v829
  %v1478 = vpack.c.b16 %v834, %v830
  %v1479 = vpack.c.b16 %v839, %v835
  %v1480 = vpack.c.b16 %v840, %v836
  %v1481 = vpack.c.b16 %v841, %v837
  %v1482 = vpack.c.b16 %v842, %v838
  %v1483 = vpack.c.b16 %v847, %v843
  %v1484 = vpack.c.b16 %v848, %v844
  %v1485 = vpack.c.b16 %v849, %v845
  %v1486 = vpack.c.b16 %v850, %v846
  %v1487 = vpack.c.b16 %v855, %v851
  %v1488 = vpack.c.b16 %v856, %v852
  %v1489 = vpack.c.b16 %v857, %v853
  %v1490 = vpack.c.b16 %v858, %v854
  %v1491 = vpack.c.b16 %v863, %v859
  %v1492 = vpack.c.b16 %v864, %v860
  %v1493 = vpack.c.b16 %v865, %v861
  %v1494 = vpack.c.b16 %v866, %v862
  %v1495 = vpack.c.b16 %v871, %v867
  %v1496 = vpack.c.b16 %v872, %v868
  %v1497 = vpack.c.b16 %v873, %v869
  %v1498 = vpack.c.b16 %v874, %v870
  %v1499 = vpack.c.b16 %v879, %v875
  %v1500 = vpack.c.b16 %v880, %v876
  %v1501 = vpack.c.b16 %v881, %v877
  %v1502 = vpack.c.b16 %v882, %v878
  %v1503 = vpack.c.b16 %v887, %v883
  %v1504 = vpack.c.b16 %v888, %v884
  %v1505 = vpack.c.b16 %v889, %v885
  %v1506 = vpack.c.b16 %v890, %v886
  %v1507 = vpack.c.b16 %v895, %v891
  %v1508 = vpack.c.b16 %v896, %v892
  %v1509 = vpack.c.b16 %v897, %v893
  %v1510 = vpack.c.b16 %v898, %v894
  %v1511 = vpack.c.b16 %v903, %v899
  %v1512 = vpack.c.b16 %v904, %v900
  %v1513 = vpack.c.b16 %v905, %v901
  %v1514 = vpack.c.b16 %v906, %v902
  %v1515 = vpack.c.b16 %v911, %v907
  %v1516 = vpack.c.b16 %v912, %v908
  %v1517 = vpack.c.b16 %v913, %v909
  %v1518 = vpack.c.b16 %v914, %v910
  %v1519 = vpack.c.b16 %v919, %v915
  %v1520 = vpack.c.b16 %v920, %v916
  %v1521 = vpack.c.b16 %v921, %v917
  %v1522 = vpack.c.b16 %v922, %v918
  %v1523 = vpack.c.b16 %v927, %v923
  %v1524 = vpack.c.b16 %v928, %v924
  %v1525 = vpack.c.b16 %v929, %v925
  %v1526 = vpack.c.b16 %v930, %v926
  %v1527 = vpack.c.b16 %v935, %v931
  %v1528 = vpack.c.b16 %v936, %v932
  %v1529 = vpack.c.b16 %v937, %v933
  %v1530 = vpack.c.b16 %v938, %v934
  %v1531 = vpack.c.b16 %v943, %v939
  %v1532 = vpack.c.b16 %v944, %v940
  %v1533 = vpack.c.b16 %v945, %v941
  %v1534 = vpack.c.b16 %v946, %v942
  %v1535 = vpack.c.b16 %v951, %v947
  %v1536 = vpack.c.b16 %v952, %v948
  %v1537 = vpack.c.b16 %v953, %v949
  %v1538 = vpack.c.b16 %v954, %v950
  %v1539 = vpack.c.b16 %v959, %v955
  %v1540 = vpack.c.b16 %v960, %v956
  %v1541 = vpack.c.b16 %v961, %v957
  %v1542 = vpack.c.b16 %v962, %v958
  %v1543 = vpack.c.b16 %v967, %v963
  %v1544 = vpack.c.b16 %v968, %v964
  %v1545 = vpack.c.b16 %v969, %v965
  %v1546 = vpack.c.b16 %v970, %v966
  %v1547 = vpack.c.b16 %v975, %v971
  %v1548 = vpack.c.b16 %v976, %v972
  %v1549 = vpack.c.b16 %v977, %v973
  %v1550 = vpack.c.b16 %v978, %v974
  %v1551 = vpack.c.b16 %v983, %v979
  %v1552 = vpack.c.b16 %v984, %v980
  %v1553 = vpack.c.b16 %v985, %v981
  %v1554 = vpack.c.b16 %v986, %v982
  %v1555 = vpack.c.b16 %v991, %v987
  %v1556 = vpack.c.b16 %v992, %v988
  %v1557 = vpack.c.b16 %v993, %v989
  %v1558 = vpack.c.b16 %v994, %v990
  %v1559 = vpack.c.b16 %v999, %v995
  %v1560 = vpack.c.b16 %v1000, %v996
  %v1561 = vpack.c.b16 %v1001, %v997
  %v1562 = vpack.c.b16 %v1002, %v998
  %v1563 = vpack.c.b16 %v1007, %v1003
  %v1564 = vpack.c.b16 %v1008, %v1004
  %v1565 = vpack.c.b16 %v1009, %v1005
  %v1566 = vpack.c.b16 %v1010, %v1006
  %v1567 = vpack.c.b16 %v1015, %v1011
  %v1568 = vpack.c.b16 %v1016, %v1012
  %v1569 = vpack.c.b16 %v1017, %v1013
  %v1570 = vpack.c.b16 %v1018, %v1014
  %v1571 = vpack.c.b16 %v1023, %v1019
  %v1572 = vpack.c.b16 %v1024, %v1020
  %v1573 = vpack.c.b16 %v1025, %v1021
  %v1574 = vpack.c.b16 %v1026, %v1022
  %v1575 = vpack.c.b16 %v1031, %v1027
  %v1576 = vpack.c.b16 %v1032, %v1028
  %v1577 = vpack.c.b16 %v1033, %v1029
  %v1578 = vpack.c.b16 %v1034, %v1030
  %v1579 = vpack.c.b16 %v1039, %v1035
  %v1580 = vpack.c.b16 %v1040, %v1036
  %v1581 = vpack.c.b16 %v1041, %v1037
  %v1582 = vpack.c.b16 %v1042, %v1038
  %v1583 = vpack.c.b16 %v1047, %v1043
  %v1584 = vpack.c.b16 %v1048, %v1044
  %v1585 = vpack.c.b16 %v1049, %v1045
  %v1586 = vpack.c.b16 %v1050, %v1046
  %v1587 = vpack.c.b16 %v1055, %v1051
  %v1588 = vpack.c.b16 %v1056, %v1052
  %v1589 = vpack.c.b16 %v1057, %v1053
  %v1590 = vpack.c.b16 %v1058, %v1054
  %v1591 = vpack.c.b16 %v1063, %v1059
  %v1592 = vpack.c.b16 %v1064, %v1060
  %v1593 = vpack.c.b16 %v1065, %v1061
  %v1594 = vpack.c.b16 %v1066, %v1062
  %v1595 = vpack.c.b16 %v1071, %v1067
  %v1596 = vpack.c.b16 %v1072, %v1068
  %v1597 = vpack.c.b16 %v1073, %v1069
  %v1598 = vpack.c.b16 %v1074, %v1070
  %v1599 = vpack.c.b16 %v1079, %v1075
  %v1600 = vpack.c.b16 %v1080, %v1076
  %v1601 = vpack.c.b16 %v1081, %v1077
  %v1602 = vpack.c.b16 %v1082, %v1078
  %v1603 = vpack.c.b16 %v1087, %v1083
  %v1604 = vpack.c.b16 %v1088, %v1084
  %v1605 = vpack.c.b16 %v1089, %v1085
  %v1606 = vpack.c.b16 %v1090, %v1086
  %v1607 = vpack.c.b16 %v1095, %v1091
  %v1608 = vpack.c.b16 %v1096, %v1092
  %v1609 = vpack.c.b16 %v1097, %v1093
  %v1610 = vpack.c.b16 %v1098, %v1094
  %v1611 = vpack.c.b16 %v1103, %v1099
  %v1612 = vpack.c.b16 %v1104, %v1100
  %v1613 = vpack.c.b16 %v1105, %v1101
  %v1614 = vpack.c.b16 %v1106, %v1102
  %v1615 = vpack.c.b16 %v1111, %v1107
  %v1616 = vpack.c.b16 %v1112, %v1108
  %v1617 = vpack.c.b16 %v1113, %v1109
  %v1618 = vpack.c.b16 %v1114, %v1110
  %v1619 = vpack.c.b16 %v1119, %v1115
  %v1620 = vpack.c.b16 %v1120, %v1116
  %v1621 = vpack.c.b16 %v1121, %v1117
  %v1622 = vpack.c.b16 %v1122, %v1118
  %v1623 = vpack.c.b16 %v1127, %v1123
  %v1624 = vpack.c.b16 %v1128, %v1124
  %v1625 = vpack.c.b16 %v1129, %v1125
  %v1626 = vpack.c.b16 %v1130, %v1126
  %v1627 = vpack.c.b16 %v1135, %v1131
  %v1628 = vpack.c.b16 %v1136, %v1132
  %v1629 = vpack.c.b16 %v1137, %v1133
  %v1630 = vpack.c.b16 %v1138, %v1134
  %v1631 = vpack.c.b16 %v1143, %v1139
  %v1632 = vpack.c.b16 %v1144, %v1140
  %v1633 = vpack.c.b16 %v1145, %v1141
  %v1634 = vpack.c.b16 %v1146, %v1142
  %v1635 = vpack.c.b16 %v1151, %v1147
  %v1636 = vpack.c.b16 %v1152, %v1148
  %v1637 = vpack.c.b16 %v1153, %v1149
  %v1638 = vpack.c.b16 %v1154, %v1150
  %v1639 = vpack.c.b16 %v1159, %v1155
  %v1640 = vpack.c.b16 %v1160, %v1156
  %v1641 = vpack.c.b16 %v1161, %v1157
  %v1642 = vpack.c.b16 %v1162, %v1158
  %v1643 = vpack.c.b16 %v1167, %v1163
  %v1644 = vpack.c.b16 %v1168, %v1164
  %v1645 = vpack.c.b16 %v1169, %v1165
  %v1646 = vpack.c.b16 %v1170, %v1166
  %v1647 = vpack.c.b16 %v1175, %v1171
  %v1648 = vpack.c.b16 %v1176, %v1172
  %v1649 = vpack.c.b16 %v1177, %v1173
  %v1650 = vpack.c.b16 %v1178, %v1174
  %v1651 = vpack.c.b16 %v1183, %v1179
  %v1652 = vpack.c.b16 %v1184, %v1180
  %v1653 = vpack.c.b16 %v1185, %v1181
  %v1654 = vpack.c.b16 %v1186, %v1182
  %v1655 = vpack.c.b16 %v1191, %v1187
  %v1656 = vpack.c.b16 %v1192, %v1188
  %v1657 = vpack.c.b16 %v1193, %v1189
  %v1658 = vpack.c.b16 %v1194, %v1190
  %v1659 = vpack.c.b16 %v1199, %v1195
  %v1660 = vpack.c.b16 %v1200, %v1196
  %v1661 = vpack.c.b16 %v1201, %v1197
  %v1662 = vpack.c.b16 %v1202, %v1198
  %v1663 = vpack.c.b16 %v1207, %v1203
  %v1664 = vpack.c.b16 %v1208, %v1204
  %v1665 = vpack.c.b16 %v1209, %v1205
  %v1666 = vpack.c.b16 %v1210, %v1206
  %v1667 = vpack.c.b16 %v1215, %v1211
  %v1668 = vpack.c.b16 %v1216, %v1212
  %v1669 = vpack.c.b16 %v1217, %v1213
  %v1670 = vpack.c.b16 %v1218, %v1214
  %v1671 = vpack.c.b16 %v1223, %v1219
  %v1672 = vpack.c.b16 %v1224, %v1220
  %v1673 = vpack.c.b16 %v1225, %v1221
  %v1674 = vpack.c.b16 %v1226, %v1222
  %v1675 = vpack.c.b16 %v1231, %v1227
  %v1676 = vpack.c.b16 %v1232, %v1228
  %v1677 = vpack.c.b16 %v1233, %v1229
  %v1678 = vpack.c.b16 %v1234, %v1230
  %v1679 = vpack.c.b16 %v1239, %v1235
  %v1680 = vpack.c.b16 %v1240, %v1236
  %v1681 = vpack.c.b16 %v1241, %v1237
  %v1682 = vpack.c.b16 %v1242, %v1238
  %v1683 = vpack.c.b16 %v1247, %v1243
  %v1684 = vpack.c.b16 %v1248, %v1244
  %v1685 = vpack.c.b16 %v1249, %v1245
  %v1686 = vpack.c.b16 %v1250, %v1246
  %v1687 = vpack.c.b16 %v1255, %v1251
  %v1688 = vpack.c.b16 %v1256, %v1252
  %v1689 = vpack.c.b16 %v1257, %v1253
  %v1690 = vpack.c.b16 %v1258, %v1254
  %v1691 = vpack.c.b16 %v1263, %v1259
  %v1692 = vpack.c.b16 %v1264, %v1260
  %v1693 = vpack.c.b16 %v1265, %v1261
  %v1694 = vpack.c.b16 %v1266, %v1262
  %v1695 = vpack.c.b16 %v1271, %v1267
  %v1696 = vpack.c.b16 %v1272, %v1268
  %v1697 = vpack.c.b16 %v1273, %v1269
  %v1698 = vpack.c.b16 %v1274, %v1270
  %v1699 = vpack.c.b16 %v1279, %v1275
  %v1700 = vpack.c.b16 %v1280, %v1276
  %v1701 = vpack.c.b16 %v1281, %v1277
  %v1702 = vpack.c.b16 %v1282, %v1278
  %v1703 = vpack.c.b16 %v1287, %v1283
  %v1704 = vpack.c.b16 %v1288, %v1284
  %v1705 = vpack.c.b16 %v1289, %v1285
  %v1706 = vpack.c.b16 %v1290, %v1286
  %v1707 = vpack.c.b16 %v1295, %v1291
  %v1708 = vpack.c.b16 %v1296, %v1292
  %v1709 = vpack.c.b16 %v1297, %v1293
  %v1710 = vpack.c.b16 %v1298, %v1294
  %v1711 = vpack.c.b16 %v1303, %v1299
  %v1712 = vpack.c.b16 %v1304, %v1300
  %v1713 = vpack.c.b16 %v1305, %v1301
  %v1714 = vpack.c.b16 %v1306, %v1302
  %v1715 = vpack.c.b16 %v1311, %v1307
  %v1716 = vpack.c.b16 %v1312, %v1308
  %v1717 = vpack.c.b16 %v1313, %v1309
  %v1718 = vpack.c.b16 %v1314, %v1310
  %v1719 = vpack.c.b16 %v1319, %v1315
  %v1720 = vpack.c.b16 %v1320, %v1316
  %v1721 = vpack.c.b16 %v1321, %v1317
  %v1722 = vpack.c.b16 %v1322, %v1318
  %v1723 = vpack.c.b16 %v1327, %v1323
  %v1724 = vpack.c.b16 %v1328, %v1324
  %v1725 = vpack.c.b16 %v1329, %v1325
  %v1726 = vpack.c.b16 %v1330, %v1326
  %v1727 = vpack.c.b16 %v1335, %v1331
  %v1728 = vpack.c.b16 %v1336, %v1332
  %v1729 = vpack.c.b16 %v1337, %v1333
  %v1730 = vpack.c.b16 %v1338, %v1334
  %v1731 = vpack.c.b16 %v1343, %v1339
  %v1732 = vpack.c.b16 %v1344, %v1340
  %v1733 = vpack.c.b16 %v1345, %v1341
  %v1734 = vpack.c.b16 %v1346, %v1342
  %v1735 = vpack.c.b16 %v1351, %v1347
  %v1736 = vpack.c.b16 %v1352, %v1348
  %v1737 = vpack.c.b16 %v1353, %v1349
  %v1738 = vpack.c.b16 %v1354, %v1350
  %v1739 = vpack.c.b16 %v1359, %v1355
  %v1740 = vpack.c.b16 %v1360, %v1356
  %v1741 = vpack.c.b16 %v1361, %v1357
  %v1742 = vpack.c.b16 %v1362, %v1358
  %v1743 = vpack.c.b16 %v1367, %v1363
  %v1744 = vpack.c.b16 %v1368, %v1364
  %v1745 = vpack.c.b16 %v1369, %v1365
  %v1746 = vpack.c.b16 %v1370, %v1366
  %v1747 = vpack.c.b16 %v1375, %v1371
  %v1748 = vpack.c.b16 %v1376, %v1372
  %v1749 = vpack.c.b16 %v1377, %v1373
  %v1750 = vpack.c.b16 %v1378, %v1374
  %v1751 = vpack.c.b16 %v1383, %v1379
  %v1752 = vpack.c.b16 %v1384, %v1380
  %v1753 = vpack.c.b16 %v1385, %v1381
  %v1754 = vpack.c.b16 %v1386, %v1382
  %v1755 = vpack.c.b16 %v1391, %v1387
  %v1756 = vpack.c.b16 %v1392, %v1388
  %v1757 = vpack.c.b16 %v1393, %v1389
  %v1758 = vpack.c.b16 %v1394, %v1390
  %v1759 = vpack.c.b16 %v1399, %v1395
  %v1760 = vpack.c.b16 %v1400, %v1396
  %v1761 = vpack.c.b16 %v1401, %v1397
  %v1762 = vpack.c.b16 %v1402, %v1398
  %v1763 = vpack.c.b16 %v1407, %v1403
  %v1764 = vpack.c.b16 %v1408, %v1404
  %v1765 = vpack.c.b16 %v1409, %v1405
  %v1766 = vpack.c.b16 %v1410, %v1406
  %v1767 = vpack.c.b16 %v1415, %v1411
  %v1768 = vpack.c.b16 %v1416, %v1412
  %v1769 = vpack.c.b16 %v1417, %v1413
  %v1770 = vpack.c.b16 %v1418, %v1414
  %v1771 = vpack.c.b16 %v1423, %v1419
  %v1772 = vpack.c.b16 %v1424, %v1420
  %v1773 = vpack.c.b16 %v1425, %v1421
  %v1774 = vpack.c.b16 %v1426, %v1422
  %v1775 = vpack.c.b16 %v1431, %v1427
  %v1776 = vpack.c.b16 %v1432, %v1428
  %v1777 = vpack.c.b16 %v1433, %v1429
  %v1778 = vpack.c.b16 %v1434, %v1430
  %v1779 = vpack.c.b16 %v1439, %v1435
  %v1780 = vpack.c.b16 %v1440, %v1436
  %v1781 = vpack.c.b16 %v1441, %v1437
  %v1782 = vpack.c.b16 %v1442, %v1438
  %v1783 = vpack.c.b16 %v1447, %v1443
  %v1784 = vpack.c.b16 %v1448, %v1444
  %v1785 = vpack.c.b16 %v1449, %v1445
  %v1786 = vpack.c.b16 %v1450, %v1446
  %vm2123 = vcmask 523264
  %v2125 = vsel %vm2123, %v432, 0
  %2127 = vmatpush.bf16.msra.mxu0 %v1479
  %2128 = vmatpush.bf16.msra.mxu0 %v1475
  %2129 = vmatpush.bf16.msra.mxu0 %v1471
  %2130 = vmatpush.bf16.msra.mxu0 %v1467
  %2131 = vmatpush.bf16.msra.mxu0 %v1463
  %2132 = vmatpush.bf16.msra.mxu0 %v1459
  %2133 = vmatpush.bf16.msra.mxu0 %v1455
  %2134 = vmatpush.bf16.msra.mxu0 %v1451
  %2135 = vmatmul.bf16.gmra.mxu0 %v422
  %v2136 = vpop.f32.mrf.mxu0
  %v2137 = vadd.f32 %v380, %v2136
  %v2138 = vpop.f32.mrf.mxu0
  %v2139 = vadd.f32 %v380, %v2138
  %2140 = vdwg.mxu0
  %2141 = vmatpush.bf16.msra.mxu0 %v1511
  %2142 = vmatpush.bf16.msra.mxu0 %v1507
  %2143 = vmatpush.bf16.msra.mxu0 %v1503
  %2144 = vmatpush.bf16.msra.mxu0 %v1499
  %2145 = vmatpush.bf16.msra.mxu0 %v1495
  %2146 = vmatpush.bf16.msra.mxu0 %v1491
  %2147 = vmatpush.bf16.msra.mxu0 %v1487
  %2148 = vmatpush.bf16.msra.mxu0 %v1483
  %2149 = vmatmul.bf16.gmra.mxu0 %v423
  %v2150 = vpop.f32.mrf.mxu0
  %v2151 = vadd.f32 %v2137, %v2150
  %v2152 = vpop.f32.mrf.mxu0
  %v2153 = vadd.f32 %v2139, %v2152
  %2154 = vdwg.mxu0
  %2155 = vmatpush.bf16.msra.mxu0 %v1543
  %2156 = vmatpush.bf16.msra.mxu0 %v1539
  %2157 = vmatpush.bf16.msra.mxu0 %v1535
  %2158 = vmatpush.bf16.msra.mxu0 %v1531
  %2159 = vmatpush.bf16.msra.mxu0 %v1527
  %2160 = vmatpush.bf16.msra.mxu0 %v1523
  %2161 = vmatpush.bf16.msra.mxu0 %v1519
  %2162 = vmatpush.bf16.msra.mxu0 %v1515
  %2163 = vmatmul.bf16.gmra.mxu0 %v424
  %v2164 = vpop.f32.mrf.mxu0
  %v2165 = vadd.f32 %v2151, %v2164
  %v2166 = vpop.f32.mrf.mxu0
  %v2167 = vadd.f32 %v2153, %v2166
  %2168 = vdwg.mxu0
  %2169 = vmatpush.bf16.msra.mxu0 %v1575
  %2170 = vmatpush.bf16.msra.mxu0 %v1571
  %2171 = vmatpush.bf16.msra.mxu0 %v1567
  %2172 = vmatpush.bf16.msra.mxu0 %v1563
  %2173 = vmatpush.bf16.msra.mxu0 %v1559
  %2174 = vmatpush.bf16.msra.mxu0 %v1555
  %2175 = vmatpush.bf16.msra.mxu0 %v1551
  %2176 = vmatpush.bf16.msra.mxu0 %v1547
  %2177 = vmatmul.bf16.gmra.mxu0 %v425
  %v2178 = vpop.f32.mrf.mxu0
  %v2179 = vadd.f32 %v2165, %v2178
  %v2180 = vpop.f32.mrf.mxu0
  %v2181 = vadd.f32 %v2167, %v2180
  %2182 = vdwg.mxu0
  %2183 = vmatpush.bf16.msra.mxu0 %v1607
  %2184 = vmatpush.bf16.msra.mxu0 %v1603
  %2185 = vmatpush.bf16.msra.mxu0 %v1599
  %2186 = vmatpush.bf16.msra.mxu0 %v1595
  %2187 = vmatpush.bf16.msra.mxu0 %v1591
  %2188 = vmatpush.bf16.msra.mxu0 %v1587
  %2189 = vmatpush.bf16.msra.mxu0 %v1583
  %2190 = vmatpush.bf16.msra.mxu0 %v1579
  %2191 = vmatmul.bf16.gmra.mxu0 %v426
  %v2192 = vpop.f32.mrf.mxu0
  %v2193 = vadd.f32 %v2179, %v2192
  %v2194 = vpop.f32.mrf.mxu0
  %v2195 = vadd.f32 %v2181, %v2194
  %2196 = vdwg.mxu0
  %2197 = vmatpush.bf16.msra.mxu0 %v1639
  %2198 = vmatpush.bf16.msra.mxu0 %v1635
  %2199 = vmatpush.bf16.msra.mxu0 %v1631
  %2200 = vmatpush.bf16.msra.mxu0 %v1627
  %2201 = vmatpush.bf16.msra.mxu0 %v1623
  %2202 = vmatpush.bf16.msra.mxu0 %v1619
  %2203 = vmatpush.bf16.msra.mxu0 %v1615
  %2204 = vmatpush.bf16.msra.mxu0 %v1611
  %2205 = vmatmul.bf16.gmra.mxu0 %v427
  %v2206 = vpop.f32.mrf.mxu0
  %v2207 = vadd.f32 %v2193, %v2206
  %v2208 = vpop.f32.mrf.mxu0
  %v2209 = vadd.f32 %v2195, %v2208
  %2210 = vdwg.mxu0
  %2211 = vmatpush.bf16.msra.mxu0 %v1671
  %2212 = vmatpush.bf16.msra.mxu0 %v1667
  %2213 = vmatpush.bf16.msra.mxu0 %v1663
  %2214 = vmatpush.bf16.msra.mxu0 %v1659
  %2215 = vmatpush.bf16.msra.mxu0 %v1655
  %2216 = vmatpush.bf16.msra.mxu0 %v1651
  %2217 = vmatpush.bf16.msra.mxu0 %v1647
  %2218 = vmatpush.bf16.msra.mxu0 %v1643
  %2219 = vmatmul.bf16.gmra.mxu0 %v428
  %v2220 = vpop.f32.mrf.mxu0
  %v2221 = vadd.f32 %v2207, %v2220
  %v2222 = vpop.f32.mrf.mxu0
  %v2223 = vadd.f32 %v2209, %v2222
  %2224 = vdwg.mxu0
  %2225 = vmatpush.bf16.msra.mxu0 %v1703
  %2226 = vmatpush.bf16.msra.mxu0 %v1699
  %2227 = vmatpush.bf16.msra.mxu0 %v1695
  %2228 = vmatpush.bf16.msra.mxu0 %v1691
  %2229 = vmatpush.bf16.msra.mxu0 %v1687
  %2230 = vmatpush.bf16.msra.mxu0 %v1683
  %2231 = vmatpush.bf16.msra.mxu0 %v1679
  %2232 = vmatpush.bf16.msra.mxu0 %v1675
  %2233 = vmatmul.bf16.gmra.mxu0 %v429
  %v2234 = vpop.f32.mrf.mxu0
  %v2235 = vadd.f32 %v2221, %v2234
  %v2236 = vpop.f32.mrf.mxu0
  %v2237 = vadd.f32 %v2223, %v2236
  %2238 = vdwg.mxu0
  %2239 = vmatpush.bf16.msra.mxu0 %v1735
  %2240 = vmatpush.bf16.msra.mxu0 %v1731
  %2241 = vmatpush.bf16.msra.mxu0 %v1727
  %2242 = vmatpush.bf16.msra.mxu0 %v1723
  %2243 = vmatpush.bf16.msra.mxu0 %v1719
  %2244 = vmatpush.bf16.msra.mxu0 %v1715
  %2245 = vmatpush.bf16.msra.mxu0 %v1711
  %2246 = vmatpush.bf16.msra.mxu0 %v1707
  %2247 = vmatmul.bf16.gmra.mxu0 %v430
  %v2248 = vpop.f32.mrf.mxu0
  %v2249 = vadd.f32 %v2235, %v2248
  %v2250 = vpop.f32.mrf.mxu0
  %v2251 = vadd.f32 %v2237, %v2250
  %2252 = vdwg.mxu0
  %2253 = vmatpush.bf16.msra.mxu0 %v1767
  %2254 = vmatpush.bf16.msra.mxu0 %v1763
  %2255 = vmatpush.bf16.msra.mxu0 %v1759
  %2256 = vmatpush.bf16.msra.mxu0 %v1755
  %2257 = vmatpush.bf16.msra.mxu0 %v1751
  %2258 = vmatpush.bf16.msra.mxu0 %v1747
  %2259 = vmatpush.bf16.msra.mxu0 %v1743
  %2260 = vmatpush.bf16.msra.mxu0 %v1739
  %2261 = vmatmul.bf16.gmra.mxu0 %v431
  %v2262 = vpop.f32.mrf.mxu0
  %v2263 = vadd.f32 %v2249, %v2262
  %v2264 = vpop.f32.mrf.mxu0
  %v2265 = vadd.f32 %v2251, %v2264
  %2266 = vdwg.mxu0
  %2267 = vmatpush.bf16.msra.mxu0 0
  %2268 = vmatpush.bf16.msra.mxu0 0
  %2269 = vmatpush.bf16.msra.mxu0 0
  %2270 = vmatpush.bf16.msra.mxu0 0
  %2271 = vmatpush.bf16.msra.mxu0 %v1783
  %2272 = vmatpush.bf16.msra.mxu0 %v1779
  %2273 = vmatpush.bf16.msra.mxu0 %v1775
  %2274 = vmatpush.bf16.msra.mxu0 %v1771
  %2275 = vmatmul.bf16.gmra.mxu0 %v2125
  %v2276 = vpop.f32.mrf.mxu0
  %v2277 = vadd.f32 %v2263, %v2276
  %v2278 = vpop.f32.mrf.mxu0
  %v2279 = vadd.f32 %v2265, %v2278
  %2280 = vdwg.mxu0
  %2281 = vmatpush.bf16.msra.mxu0 %v1480
  %2282 = vmatpush.bf16.msra.mxu0 %v1476
  %2283 = vmatpush.bf16.msra.mxu0 %v1472
  %2284 = vmatpush.bf16.msra.mxu0 %v1468
  %2285 = vmatpush.bf16.msra.mxu0 %v1464
  %2286 = vmatpush.bf16.msra.mxu0 %v1460
  %2287 = vmatpush.bf16.msra.mxu0 %v1456
  %2288 = vmatpush.bf16.msra.mxu0 %v1452
  %2289 = vmatmul.bf16.gmra.mxu0 %v422
  %v2290 = vpop.f32.mrf.mxu0
  %v2291 = vadd.f32 %v381, %v2290
  %v2292 = vpop.f32.mrf.mxu0
  %v2293 = vadd.f32 %v381, %v2292
  %2294 = vdwg.mxu0
  %2295 = vmatpush.bf16.msra.mxu0 %v1512
  %2296 = vmatpush.bf16.msra.mxu0 %v1508
  %2297 = vmatpush.bf16.msra.mxu0 %v1504
  %2298 = vmatpush.bf16.msra.mxu0 %v1500
  %2299 = vmatpush.bf16.msra.mxu0 %v1496
  %2300 = vmatpush.bf16.msra.mxu0 %v1492
  %2301 = vmatpush.bf16.msra.mxu0 %v1488
  %2302 = vmatpush.bf16.msra.mxu0 %v1484
  %2303 = vmatmul.bf16.gmra.mxu0 %v423
  %v2304 = vpop.f32.mrf.mxu0
  %v2305 = vadd.f32 %v2291, %v2304
  %v2306 = vpop.f32.mrf.mxu0
  %v2307 = vadd.f32 %v2293, %v2306
  %2308 = vdwg.mxu0
  %2309 = vmatpush.bf16.msra.mxu0 %v1544
  %2310 = vmatpush.bf16.msra.mxu0 %v1540
  %2311 = vmatpush.bf16.msra.mxu0 %v1536
  %2312 = vmatpush.bf16.msra.mxu0 %v1532
  %2313 = vmatpush.bf16.msra.mxu0 %v1528
  %2314 = vmatpush.bf16.msra.mxu0 %v1524
  %2315 = vmatpush.bf16.msra.mxu0 %v1520
  %2316 = vmatpush.bf16.msra.mxu0 %v1516
  %2317 = vmatmul.bf16.gmra.mxu0 %v424
  %v2318 = vpop.f32.mrf.mxu0
  %v2319 = vadd.f32 %v2305, %v2318
  %v2320 = vpop.f32.mrf.mxu0
  %v2321 = vadd.f32 %v2307, %v2320
  %2322 = vdwg.mxu0
  %2323 = vmatpush.bf16.msra.mxu0 %v1576
  %2324 = vmatpush.bf16.msra.mxu0 %v1572
  %2325 = vmatpush.bf16.msra.mxu0 %v1568
  %2326 = vmatpush.bf16.msra.mxu0 %v1564
  %2327 = vmatpush.bf16.msra.mxu0 %v1560
  %2328 = vmatpush.bf16.msra.mxu0 %v1556
  %2329 = vmatpush.bf16.msra.mxu0 %v1552
  %2330 = vmatpush.bf16.msra.mxu0 %v1548
  %2331 = vmatmul.bf16.gmra.mxu0 %v425
  %v2332 = vpop.f32.mrf.mxu0
  %v2333 = vadd.f32 %v2319, %v2332
  %v2334 = vpop.f32.mrf.mxu0
  %v2335 = vadd.f32 %v2321, %v2334
  %2336 = vdwg.mxu0
  %2337 = vmatpush.bf16.msra.mxu0 %v1608
  %2338 = vmatpush.bf16.msra.mxu0 %v1604
  %2339 = vmatpush.bf16.msra.mxu0 %v1600
  %2340 = vmatpush.bf16.msra.mxu0 %v1596
  %2341 = vmatpush.bf16.msra.mxu0 %v1592
  %2342 = vmatpush.bf16.msra.mxu0 %v1588
  %2343 = vmatpush.bf16.msra.mxu0 %v1584
  %2344 = vmatpush.bf16.msra.mxu0 %v1580
  %2345 = vmatmul.bf16.gmra.mxu0 %v426
  %v2346 = vpop.f32.mrf.mxu0
  %v2347 = vadd.f32 %v2333, %v2346
  %v2348 = vpop.f32.mrf.mxu0
  %v2349 = vadd.f32 %v2335, %v2348
  %2350 = vdwg.mxu0
  %2351 = vmatpush.bf16.msra.mxu0 %v1640
  %2352 = vmatpush.bf16.msra.mxu0 %v1636
  %2353 = vmatpush.bf16.msra.mxu0 %v1632
  %2354 = vmatpush.bf16.msra.mxu0 %v1628
  %2355 = vmatpush.bf16.msra.mxu0 %v1624
  %2356 = vmatpush.bf16.msra.mxu0 %v1620
  %2357 = vmatpush.bf16.msra.mxu0 %v1616
  %2358 = vmatpush.bf16.msra.mxu0 %v1612
  %2359 = vmatmul.bf16.gmra.mxu0 %v427
  %v2360 = vpop.f32.mrf.mxu0
  %v2361 = vadd.f32 %v2347, %v2360
  %v2362 = vpop.f32.mrf.mxu0
  %v2363 = vadd.f32 %v2349, %v2362
  %2364 = vdwg.mxu0
  %2365 = vmatpush.bf16.msra.mxu0 %v1672
  %2366 = vmatpush.bf16.msra.mxu0 %v1668
  %2367 = vmatpush.bf16.msra.mxu0 %v1664
  %2368 = vmatpush.bf16.msra.mxu0 %v1660
  %2369 = vmatpush.bf16.msra.mxu0 %v1656
  %2370 = vmatpush.bf16.msra.mxu0 %v1652
  %2371 = vmatpush.bf16.msra.mxu0 %v1648
  %2372 = vmatpush.bf16.msra.mxu0 %v1644
  %2373 = vmatmul.bf16.gmra.mxu0 %v428
  %v2374 = vpop.f32.mrf.mxu0
  %v2375 = vadd.f32 %v2361, %v2374
  %v2376 = vpop.f32.mrf.mxu0
  %v2377 = vadd.f32 %v2363, %v2376
  %2378 = vdwg.mxu0
  %2379 = vmatpush.bf16.msra.mxu0 %v1704
  %2380 = vmatpush.bf16.msra.mxu0 %v1700
  %2381 = vmatpush.bf16.msra.mxu0 %v1696
  %2382 = vmatpush.bf16.msra.mxu0 %v1692
  %2383 = vmatpush.bf16.msra.mxu0 %v1688
  %2384 = vmatpush.bf16.msra.mxu0 %v1684
  %2385 = vmatpush.bf16.msra.mxu0 %v1680
  %2386 = vmatpush.bf16.msra.mxu0 %v1676
  %2387 = vmatmul.bf16.gmra.mxu0 %v429
  %v2388 = vpop.f32.mrf.mxu0
  %v2389 = vadd.f32 %v2375, %v2388
  %v2390 = vpop.f32.mrf.mxu0
  %v2391 = vadd.f32 %v2377, %v2390
  %2392 = vdwg.mxu0
  %2393 = vmatpush.bf16.msra.mxu0 %v1736
  %2394 = vmatpush.bf16.msra.mxu0 %v1732
  %2395 = vmatpush.bf16.msra.mxu0 %v1728
  %2396 = vmatpush.bf16.msra.mxu0 %v1724
  %2397 = vmatpush.bf16.msra.mxu0 %v1720
  %2398 = vmatpush.bf16.msra.mxu0 %v1716
  %2399 = vmatpush.bf16.msra.mxu0 %v1712
  %2400 = vmatpush.bf16.msra.mxu0 %v1708
  %2401 = vmatmul.bf16.gmra.mxu0 %v430
  %v2402 = vpop.f32.mrf.mxu0
  %v2403 = vadd.f32 %v2389, %v2402
  %v2404 = vpop.f32.mrf.mxu0
  %v2405 = vadd.f32 %v2391, %v2404
  %2406 = vdwg.mxu0
  %2407 = vmatpush.bf16.msra.mxu0 %v1768
  %2408 = vmatpush.bf16.msra.mxu0 %v1764
  %2409 = vmatpush.bf16.msra.mxu0 %v1760
  %2410 = vmatpush.bf16.msra.mxu0 %v1756
  %2411 = vmatpush.bf16.msra.mxu0 %v1752
  %2412 = vmatpush.bf16.msra.mxu0 %v1748
  %2413 = vmatpush.bf16.msra.mxu0 %v1744
  %2414 = vmatpush.bf16.msra.mxu0 %v1740
  %2415 = vmatmul.bf16.gmra.mxu0 %v431
  %v2416 = vpop.f32.mrf.mxu0
  %v2417 = vadd.f32 %v2403, %v2416
  %v2418 = vpop.f32.mrf.mxu0
  %v2419 = vadd.f32 %v2405, %v2418
  %2420 = vdwg.mxu0
  %2421 = vmatpush.bf16.msra.mxu0 0
  %2422 = vmatpush.bf16.msra.mxu0 0
  %2423 = vmatpush.bf16.msra.mxu0 0
  %2424 = vmatpush.bf16.msra.mxu0 0
  %2425 = vmatpush.bf16.msra.mxu0 %v1784
  %2426 = vmatpush.bf16.msra.mxu0 %v1780
  %2427 = vmatpush.bf16.msra.mxu0 %v1776
  %2428 = vmatpush.bf16.msra.mxu0 %v1772
  %2429 = vmatmul.bf16.gmra.mxu0 %v2125
  %v2430 = vpop.f32.mrf.mxu0
  %v2431 = vadd.f32 %v2417, %v2430
  %v2432 = vpop.f32.mrf.mxu0
  %v2433 = vadd.f32 %v2419, %v2432
  %2434 = vdwg.mxu0
  %2435 = vmatpush.bf16.msra.mxu0 %v1481
  %2436 = vmatpush.bf16.msra.mxu0 %v1477
  %2437 = vmatpush.bf16.msra.mxu0 %v1473
  %2438 = vmatpush.bf16.msra.mxu0 %v1469
  %2439 = vmatpush.bf16.msra.mxu0 %v1465
  %2440 = vmatpush.bf16.msra.mxu0 %v1461
  %2441 = vmatpush.bf16.msra.mxu0 %v1457
  %2442 = vmatpush.bf16.msra.mxu0 %v1453
  %2443 = vmatmul.bf16.gmra.mxu0 %v422
  %v2444 = vpop.f32.mrf.mxu0
  %v2445 = vadd.f32 %v382, %v2444
  %v2446 = vpop.f32.mrf.mxu0
  %v2447 = vadd.f32 %v382, %v2446
  %2448 = vdwg.mxu0
  %2449 = vmatpush.bf16.msra.mxu0 %v1513
  %2450 = vmatpush.bf16.msra.mxu0 %v1509
  %2451 = vmatpush.bf16.msra.mxu0 %v1505
  %2452 = vmatpush.bf16.msra.mxu0 %v1501
  %2453 = vmatpush.bf16.msra.mxu0 %v1497
  %2454 = vmatpush.bf16.msra.mxu0 %v1493
  %2455 = vmatpush.bf16.msra.mxu0 %v1489
  %2456 = vmatpush.bf16.msra.mxu0 %v1485
  %2457 = vmatmul.bf16.gmra.mxu0 %v423
  %v2458 = vpop.f32.mrf.mxu0
  %v2459 = vadd.f32 %v2445, %v2458
  %v2460 = vpop.f32.mrf.mxu0
  %v2461 = vadd.f32 %v2447, %v2460
  %2462 = vdwg.mxu0
  %2463 = vmatpush.bf16.msra.mxu0 %v1545
  %2464 = vmatpush.bf16.msra.mxu0 %v1541
  %2465 = vmatpush.bf16.msra.mxu0 %v1537
  %2466 = vmatpush.bf16.msra.mxu0 %v1533
  %2467 = vmatpush.bf16.msra.mxu0 %v1529
  %2468 = vmatpush.bf16.msra.mxu0 %v1525
  %2469 = vmatpush.bf16.msra.mxu0 %v1521
  %2470 = vmatpush.bf16.msra.mxu0 %v1517
  %2471 = vmatmul.bf16.gmra.mxu0 %v424
  %v2472 = vpop.f32.mrf.mxu0
  %v2473 = vadd.f32 %v2459, %v2472
  %v2474 = vpop.f32.mrf.mxu0
  %v2475 = vadd.f32 %v2461, %v2474
  %2476 = vdwg.mxu0
  %2477 = vmatpush.bf16.msra.mxu0 %v1577
  %2478 = vmatpush.bf16.msra.mxu0 %v1573
  %2479 = vmatpush.bf16.msra.mxu0 %v1569
  %2480 = vmatpush.bf16.msra.mxu0 %v1565
  %2481 = vmatpush.bf16.msra.mxu0 %v1561
  %2482 = vmatpush.bf16.msra.mxu0 %v1557
  %2483 = vmatpush.bf16.msra.mxu0 %v1553
  %2484 = vmatpush.bf16.msra.mxu0 %v1549
  %2485 = vmatmul.bf16.gmra.mxu0 %v425
  %v2486 = vpop.f32.mrf.mxu0
  %v2487 = vadd.f32 %v2473, %v2486
  %v2488 = vpop.f32.mrf.mxu0
  %v2489 = vadd.f32 %v2475, %v2488
  %2490 = vdwg.mxu0
  %2491 = vmatpush.bf16.msra.mxu0 %v1609
  %2492 = vmatpush.bf16.msra.mxu0 %v1605
  %2493 = vmatpush.bf16.msra.mxu0 %v1601
  %2494 = vmatpush.bf16.msra.mxu0 %v1597
  %2495 = vmatpush.bf16.msra.mxu0 %v1593
  %2496 = vmatpush.bf16.msra.mxu0 %v1589
  %2497 = vmatpush.bf16.msra.mxu0 %v1585
  %2498 = vmatpush.bf16.msra.mxu0 %v1581
  %2499 = vmatmul.bf16.gmra.mxu0 %v426
  %v2500 = vpop.f32.mrf.mxu0
  %v2501 = vadd.f32 %v2487, %v2500
  %v2502 = vpop.f32.mrf.mxu0
  %v2503 = vadd.f32 %v2489, %v2502
  %2504 = vdwg.mxu0
  %2505 = vmatpush.bf16.msra.mxu0 %v1641
  %2506 = vmatpush.bf16.msra.mxu0 %v1637
  %2507 = vmatpush.bf16.msra.mxu0 %v1633
  %2508 = vmatpush.bf16.msra.mxu0 %v1629
  %2509 = vmatpush.bf16.msra.mxu0 %v1625
  %2510 = vmatpush.bf16.msra.mxu0 %v1621
  %2511 = vmatpush.bf16.msra.mxu0 %v1617
  %2512 = vmatpush.bf16.msra.mxu0 %v1613
  %2513 = vmatmul.bf16.gmra.mxu0 %v427
  %v2514 = vpop.f32.mrf.mxu0
  %v2515 = vadd.f32 %v2501, %v2514
  %v2516 = vpop.f32.mrf.mxu0
  %v2517 = vadd.f32 %v2503, %v2516
  %2518 = vdwg.mxu0
  %2519 = vmatpush.bf16.msra.mxu0 %v1673
  %2520 = vmatpush.bf16.msra.mxu0 %v1669
  %2521 = vmatpush.bf16.msra.mxu0 %v1665
  %2522 = vmatpush.bf16.msra.mxu0 %v1661
  %2523 = vmatpush.bf16.msra.mxu0 %v1657
  %2524 = vmatpush.bf16.msra.mxu0 %v1653
  %2525 = vmatpush.bf16.msra.mxu0 %v1649
  %2526 = vmatpush.bf16.msra.mxu0 %v1645
  %2527 = vmatmul.bf16.gmra.mxu0 %v428
  %v2528 = vpop.f32.mrf.mxu0
  %v2529 = vadd.f32 %v2515, %v2528
  %v2530 = vpop.f32.mrf.mxu0
  %v2531 = vadd.f32 %v2517, %v2530
  %2532 = vdwg.mxu0
  %2533 = vmatpush.bf16.msra.mxu0 %v1705
  %2534 = vmatpush.bf16.msra.mxu0 %v1701
  %2535 = vmatpush.bf16.msra.mxu0 %v1697
  %2536 = vmatpush.bf16.msra.mxu0 %v1693
  %2537 = vmatpush.bf16.msra.mxu0 %v1689
  %2538 = vmatpush.bf16.msra.mxu0 %v1685
  %2539 = vmatpush.bf16.msra.mxu0 %v1681
  %2540 = vmatpush.bf16.msra.mxu0 %v1677
  %2541 = vmatmul.bf16.gmra.mxu0 %v429
  %v2542 = vpop.f32.mrf.mxu0
  %v2543 = vadd.f32 %v2529, %v2542
  %v2544 = vpop.f32.mrf.mxu0
  %v2545 = vadd.f32 %v2531, %v2544
  %2546 = vdwg.mxu0
  %2547 = vmatpush.bf16.msra.mxu0 %v1737
  %2548 = vmatpush.bf16.msra.mxu0 %v1733
  %2549 = vmatpush.bf16.msra.mxu0 %v1729
  %2550 = vmatpush.bf16.msra.mxu0 %v1725
  %2551 = vmatpush.bf16.msra.mxu0 %v1721
  %2552 = vmatpush.bf16.msra.mxu0 %v1717
  %2553 = vmatpush.bf16.msra.mxu0 %v1713
  %2554 = vmatpush.bf16.msra.mxu0 %v1709
  %2555 = vmatmul.bf16.gmra.mxu0 %v430
  %v2556 = vpop.f32.mrf.mxu0
  %v2557 = vadd.f32 %v2543, %v2556
  %v2558 = vpop.f32.mrf.mxu0
  %v2559 = vadd.f32 %v2545, %v2558
  %2560 = vdwg.mxu0
  %2561 = vmatpush.bf16.msra.mxu0 %v1769
  %2562 = vmatpush.bf16.msra.mxu0 %v1765
  %2563 = vmatpush.bf16.msra.mxu0 %v1761
  %2564 = vmatpush.bf16.msra.mxu0 %v1757
  %2565 = vmatpush.bf16.msra.mxu0 %v1753
  %2566 = vmatpush.bf16.msra.mxu0 %v1749
  %2567 = vmatpush.bf16.msra.mxu0 %v1745
  %2568 = vmatpush.bf16.msra.mxu0 %v1741
  %2569 = vmatmul.bf16.gmra.mxu0 %v431
  %v2570 = vpop.f32.mrf.mxu0
  %v2571 = vadd.f32 %v2557, %v2570
  %v2572 = vpop.f32.mrf.mxu0
  %v2573 = vadd.f32 %v2559, %v2572
  %2574 = vdwg.mxu0
  %2575 = vmatpush.bf16.msra.mxu0 0
  %2576 = vmatpush.bf16.msra.mxu0 0
  %2577 = vmatpush.bf16.msra.mxu0 0
  %2578 = vmatpush.bf16.msra.mxu0 0
  %2579 = vmatpush.bf16.msra.mxu0 %v1785
  %2580 = vmatpush.bf16.msra.mxu0 %v1781
  %2581 = vmatpush.bf16.msra.mxu0 %v1777
  %2582 = vmatpush.bf16.msra.mxu0 %v1773
  %2583 = vmatmul.bf16.gmra.mxu0 %v2125
  %v2584 = vpop.f32.mrf.mxu0
  %v2585 = vadd.f32 %v2571, %v2584
  %v2586 = vpop.f32.mrf.mxu0
  %v2587 = vadd.f32 %v2573, %v2586
  %2588 = vdwg.mxu0
  %2589 = vmatpush.bf16.msra.mxu0 %v1482
  %2590 = vmatpush.bf16.msra.mxu0 %v1478
  %2591 = vmatpush.bf16.msra.mxu0 %v1474
  %2592 = vmatpush.bf16.msra.mxu0 %v1470
  %2593 = vmatpush.bf16.msra.mxu0 %v1466
  %2594 = vmatpush.bf16.msra.mxu0 %v1462
  %2595 = vmatpush.bf16.msra.mxu0 %v1458
  %2596 = vmatpush.bf16.msra.mxu0 %v1454
  %2597 = vmatmul.bf16.gmra.mxu0 %v422
  %v2598 = vpop.f32.mrf.mxu0
  %v2599 = vadd.f32 %v383, %v2598
  %v2600 = vpop.f32.mrf.mxu0
  %v2601 = vadd.f32 %v383, %v2600
  %2602 = vdwg.mxu0
  %2603 = vmatpush.bf16.msra.mxu0 %v1514
  %2604 = vmatpush.bf16.msra.mxu0 %v1510
  %2605 = vmatpush.bf16.msra.mxu0 %v1506
  %2606 = vmatpush.bf16.msra.mxu0 %v1502
  %2607 = vmatpush.bf16.msra.mxu0 %v1498
  %2608 = vmatpush.bf16.msra.mxu0 %v1494
  %2609 = vmatpush.bf16.msra.mxu0 %v1490
  %2610 = vmatpush.bf16.msra.mxu0 %v1486
  %2611 = vmatmul.bf16.gmra.mxu0 %v423
  %v2612 = vpop.f32.mrf.mxu0
  %v2613 = vadd.f32 %v2599, %v2612
  %v2614 = vpop.f32.mrf.mxu0
  %v2615 = vadd.f32 %v2601, %v2614
  %2616 = vdwg.mxu0
  %2617 = vmatpush.bf16.msra.mxu0 %v1546
  %2618 = vmatpush.bf16.msra.mxu0 %v1542
  %2619 = vmatpush.bf16.msra.mxu0 %v1538
  %2620 = vmatpush.bf16.msra.mxu0 %v1534
  %2621 = vmatpush.bf16.msra.mxu0 %v1530
  %2622 = vmatpush.bf16.msra.mxu0 %v1526
  %2623 = vmatpush.bf16.msra.mxu0 %v1522
  %2624 = vmatpush.bf16.msra.mxu0 %v1518
  %2625 = vmatmul.bf16.gmra.mxu0 %v424
  %v2626 = vpop.f32.mrf.mxu0
  %v2627 = vadd.f32 %v2613, %v2626
  %v2628 = vpop.f32.mrf.mxu0
  %v2629 = vadd.f32 %v2615, %v2628
  %2630 = vdwg.mxu0
  %2631 = vmatpush.bf16.msra.mxu0 %v1578
  %2632 = vmatpush.bf16.msra.mxu0 %v1574
  %2633 = vmatpush.bf16.msra.mxu0 %v1570
  %2634 = vmatpush.bf16.msra.mxu0 %v1566
  %2635 = vmatpush.bf16.msra.mxu0 %v1562
  %2636 = vmatpush.bf16.msra.mxu0 %v1558
  %2637 = vmatpush.bf16.msra.mxu0 %v1554
  %2638 = vmatpush.bf16.msra.mxu0 %v1550
  %2639 = vmatmul.bf16.gmra.mxu0 %v425
  %v2640 = vpop.f32.mrf.mxu0
  %v2641 = vadd.f32 %v2627, %v2640
  %v2642 = vpop.f32.mrf.mxu0
  %v2643 = vadd.f32 %v2629, %v2642
  %2644 = vdwg.mxu0
  %2645 = vmatpush.bf16.msra.mxu0 %v1610
  %2646 = vmatpush.bf16.msra.mxu0 %v1606
  %2647 = vmatpush.bf16.msra.mxu0 %v1602
  %2648 = vmatpush.bf16.msra.mxu0 %v1598
  %2649 = vmatpush.bf16.msra.mxu0 %v1594
  %2650 = vmatpush.bf16.msra.mxu0 %v1590
  %2651 = vmatpush.bf16.msra.mxu0 %v1586
  %2652 = vmatpush.bf16.msra.mxu0 %v1582
  %2653 = vmatmul.bf16.gmra.mxu0 %v426
  %v2654 = vpop.f32.mrf.mxu0
  %v2655 = vadd.f32 %v2641, %v2654
  %v2656 = vpop.f32.mrf.mxu0
  %v2657 = vadd.f32 %v2643, %v2656
  %2658 = vdwg.mxu0
  %2659 = vmatpush.bf16.msra.mxu0 %v1642
  %2660 = vmatpush.bf16.msra.mxu0 %v1638
  %2661 = vmatpush.bf16.msra.mxu0 %v1634
  %2662 = vmatpush.bf16.msra.mxu0 %v1630
  %2663 = vmatpush.bf16.msra.mxu0 %v1626
  %2664 = vmatpush.bf16.msra.mxu0 %v1622
  %2665 = vmatpush.bf16.msra.mxu0 %v1618
  %2666 = vmatpush.bf16.msra.mxu0 %v1614
  %2667 = vmatmul.bf16.gmra.mxu0 %v427
  %v2668 = vpop.f32.mrf.mxu0
  %v2669 = vadd.f32 %v2655, %v2668
  %v2670 = vpop.f32.mrf.mxu0
  %v2671 = vadd.f32 %v2657, %v2670
  %2672 = vdwg.mxu0
  %2673 = vmatpush.bf16.msra.mxu0 %v1674
  %2674 = vmatpush.bf16.msra.mxu0 %v1670
  %2675 = vmatpush.bf16.msra.mxu0 %v1666
  %2676 = vmatpush.bf16.msra.mxu0 %v1662
  %2677 = vmatpush.bf16.msra.mxu0 %v1658
  %2678 = vmatpush.bf16.msra.mxu0 %v1654
  %2679 = vmatpush.bf16.msra.mxu0 %v1650
  %2680 = vmatpush.bf16.msra.mxu0 %v1646
  %2681 = vmatmul.bf16.gmra.mxu0 %v428
  %v2682 = vpop.f32.mrf.mxu0
  %v2683 = vadd.f32 %v2669, %v2682
  %v2684 = vpop.f32.mrf.mxu0
  %v2685 = vadd.f32 %v2671, %v2684
  %2686 = vdwg.mxu0
  %2687 = vmatpush.bf16.msra.mxu0 %v1706
  %2688 = vmatpush.bf16.msra.mxu0 %v1702
  %2689 = vmatpush.bf16.msra.mxu0 %v1698
  %2690 = vmatpush.bf16.msra.mxu0 %v1694
  %2691 = vmatpush.bf16.msra.mxu0 %v1690
  %2692 = vmatpush.bf16.msra.mxu0 %v1686
  %2693 = vmatpush.bf16.msra.mxu0 %v1682
  %2694 = vmatpush.bf16.msra.mxu0 %v1678
  %2695 = vmatmul.bf16.gmra.mxu0 %v429
  %v2696 = vpop.f32.mrf.mxu0
  %v2697 = vadd.f32 %v2683, %v2696
  %v2698 = vpop.f32.mrf.mxu0
  %v2699 = vadd.f32 %v2685, %v2698
  %2700 = vdwg.mxu0
  %2701 = vmatpush.bf16.msra.mxu0 %v1738
  %2702 = vmatpush.bf16.msra.mxu0 %v1734
  %2703 = vmatpush.bf16.msra.mxu0 %v1730
  %2704 = vmatpush.bf16.msra.mxu0 %v1726
  %2705 = vmatpush.bf16.msra.mxu0 %v1722
  %2706 = vmatpush.bf16.msra.mxu0 %v1718
  %2707 = vmatpush.bf16.msra.mxu0 %v1714
  %2708 = vmatpush.bf16.msra.mxu0 %v1710
  %2709 = vmatmul.bf16.gmra.mxu0 %v430
  %v2710 = vpop.f32.mrf.mxu0
  %v2711 = vadd.f32 %v2697, %v2710
  %v2712 = vpop.f32.mrf.mxu0
  %v2713 = vadd.f32 %v2699, %v2712
  %2714 = vdwg.mxu0
  %2715 = vmatpush.bf16.msra.mxu0 %v1770
  %2716 = vmatpush.bf16.msra.mxu0 %v1766
  %2717 = vmatpush.bf16.msra.mxu0 %v1762
  %2718 = vmatpush.bf16.msra.mxu0 %v1758
  %2719 = vmatpush.bf16.msra.mxu0 %v1754
  %2720 = vmatpush.bf16.msra.mxu0 %v1750
  %2721 = vmatpush.bf16.msra.mxu0 %v1746
  %2722 = vmatpush.bf16.msra.mxu0 %v1742
  %2723 = vmatmul.bf16.gmra.mxu0 %v431
  %v2724 = vpop.f32.mrf.mxu0
  %v2725 = vadd.f32 %v2711, %v2724
  %v2726 = vpop.f32.mrf.mxu0
  %v2727 = vadd.f32 %v2713, %v2726
  %2728 = vdwg.mxu0
  %2729 = vmatpush.bf16.msra.mxu0 0
  %2730 = vmatpush.bf16.msra.mxu0 0
  %2731 = vmatpush.bf16.msra.mxu0 0
  %2732 = vmatpush.bf16.msra.mxu0 0
  %2733 = vmatpush.bf16.msra.mxu0 %v1786
  %2734 = vmatpush.bf16.msra.mxu0 %v1782
  %2735 = vmatpush.bf16.msra.mxu0 %v1778
  %2736 = vmatpush.bf16.msra.mxu0 %v1774
  %2737 = vmatmul.bf16.gmra.mxu0 %v2125
  %v2738 = vpop.f32.mrf.mxu0
  %v2739 = vadd.f32 %v2725, %v2738
  %v2740 = vpop.f32.mrf.mxu0
  %v2741 = vadd.f32 %v2727, %v2740
  %2742 = vdwg.mxu0
  %v2743 = vld [vmem:[%s3] sm:$0xff]
  %v2744 = vld [vmem:[%s3 + $0x8] sm:$0xff]
  %v2745 = vld [vmem:[%s3 + $0x10] sm:$0xff]
  %v2746 = vld [vmem:[%s3 + $0x18] sm:$0xff]
  %v2747 = vld [vmem:[%s3 + $0x20] sm:$0xff]
  %v2748 = vld [vmem:[%s3 + $0x28] sm:$0xff]
  %v2749 = vld [vmem:[%s3 + $0x30] sm:$0xff]
  %v2750 = vld [vmem:[%s3 + $0x38] sm:$0xff]
  %v2751 = vld [vmem:[%s3 + $0x40] sm:$0xff]
  %v2752 = vld [vmem:[%s3 + $0x48] sm:$0xff]
  %v2753 = vld [vmem:[%s3 + $0x50] sm:$0xff]
  %v2754 = vld [vmem:[%s3 + $0x58] sm:$0xff]
  %v2755 = vld [vmem:[%s3 + $0x60] sm:$0xff]
  %v2756 = vld [vmem:[%s3 + $0x68] sm:$0xff]
  %v2757 = vld [vmem:[%s3 + $0x70] sm:$0xff]
  %v2758 = vld [vmem:[%s3 + $0x78] sm:$0xff]
  %v2759 = vld [vmem:[%s3 + $0x80] sm:$0xff]
  %v2760 = vld [vmem:[%s3 + $0x88] sm:$0xff]
  %v2761 = vld [vmem:[%s3 + $0x90] sm:$0xff]
  %v2762 = vld [vmem:[%s3 + $0x98] sm:$0xff]
  %v2763 = vld [vmem:[%s3 + $0xa0] sm:$0xff]
  %v2764 = vld [vmem:[%s3 + $0xa8] sm:$0xff]
  %v2765 = vld [vmem:[%s3 + $0xb0] sm:$0xff]
  %v2766 = vld [vmem:[%s3 + $0xb8] sm:$0xff]
  %v2767 = vld [vmem:[%s3 + $0xc0] sm:$0xff]
  %v2768 = vld [vmem:[%s3 + $0xc8] sm:$0xff]
  %v2769 = vld [vmem:[%s3 + $0xd0] sm:$0xff]
  %v2770 = vld [vmem:[%s3 + $0xd8] sm:$0xff]
  %v2771 = vld [vmem:[%s3 + $0xe0] sm:$0xff]
  %v2772 = vld [vmem:[%s3 + $0xe8] sm:$0xff]
  %v2773 = vld [vmem:[%s3 + $0xf0] sm:$0xff]
  %v2774 = vld [vmem:[%s3 + $0xf8] sm:$0xff]
  %v2775 = vld [vmem:[%s4] sm:$0xff]
  %v2776 = vld [vmem:[%s4 + $0x8] sm:$0xff]
  %v2777 = vld [vmem:[%s4 + $0x10] sm:$0xff]
  %v2778 = vld [vmem:[%s4 + $0x18] sm:$0xff]
  %v2779 = vld [vmem:[%s4 + $0x20] sm:$0xff]
  %v2780 = vld [vmem:[%s4 + $0x28] sm:$0xff]
  %v2781 = vld [vmem:[%s4 + $0x30] sm:$0xff]
  %v2782 = vld [vmem:[%s4 + $0x38] sm:$0xff]
  %v2783 = vld [vmem:[%s4 + $0x40] sm:$0xff]
  %v2784 = vld [vmem:[%s4 + $0x48] sm:$0xff]
  %v2785 = vld [vmem:[%s4 + $0x50] sm:$0xff]
  %v2786 = vld [vmem:[%s4 + $0x58] sm:$0xff]
  %v2787 = vld [vmem:[%s4 + $0x60] sm:$0xff]
  %v2788 = vld [vmem:[%s4 + $0x68] sm:$0xff]
  %v2789 = vld [vmem:[%s4 + $0x70] sm:$0xff]
  %v2790 = vld [vmem:[%s4 + $0x78] sm:$0xff]
  %v2791 = vld [vmem:[%s4 + $0x80] sm:$0xff]
  %v2792 = vld [vmem:[%s4 + $0x88] sm:$0xff]
  %v2793 = vld [vmem:[%s4 + $0x90] sm:$0xff]
  %v2794 = vld [vmem:[%s4 + $0x98] sm:$0xff]
  %v2795 = vld [vmem:[%s4 + $0xa0] sm:$0xff]
  %v2796 = vld [vmem:[%s4 + $0xa8] sm:$0xff]
  %v2797 = vld [vmem:[%s4 + $0xb0] sm:$0xff]
  %v2798 = vld [vmem:[%s4 + $0xb8] sm:$0xff]
  %v2799 = vld [vmem:[%s4 + $0xc0] sm:$0xff]
  %v2800 = vld [vmem:[%s4 + $0xc8] sm:$0xff]
  %v2801 = vld [vmem:[%s4 + $0xd0] sm:$0xff]
  %v2802 = vld [vmem:[%s4 + $0xd8] sm:$0xff]
  %v2803 = vld [vmem:[%s4 + $0xe0] sm:$0xff]
  %v2804 = vld [vmem:[%s4 + $0xe8] sm:$0xff]
  %v2805 = vld [vmem:[%s4 + $0xf0] sm:$0xff]
  %v2806 = vld [vmem:[%s4 + $0xf8] sm:$0xff]
  %v2807 = vld [vmem:[%s4 + $0x100] sm:$0xff]
  %v2808 = vld [vmem:[%s4 + $0x108] sm:$0xff]
  %v2809 = vld [vmem:[%s4 + $0x110] sm:$0xff]
  %v2810 = vld [vmem:[%s4 + $0x118] sm:$0xff]
  %v2811 = vld [vmem:[%s4 + $0x120] sm:$0xff]
  %v2812 = vld [vmem:[%s4 + $0x128] sm:$0xff]
  %v2813 = vld [vmem:[%s4 + $0x130] sm:$0xff]
  %v2814 = vld [vmem:[%s4 + $0x138] sm:$0xff]
  %v2815 = vld [vmem:[%s4 + $0x140] sm:$0xff]
  %v2816 = vld [vmem:[%s4 + $0x148] sm:$0xff]
  %v2817 = vld [vmem:[%s4 + $0x150] sm:$0xff]
  %v2818 = vld [vmem:[%s4 + $0x158] sm:$0xff]
  %v2819 = vld [vmem:[%s4 + $0x160] sm:$0xff]
  %v2820 = vld [vmem:[%s4 + $0x168] sm:$0xff]
  %v2821 = vld [vmem:[%s4 + $0x170] sm:$0xff]
  %v2822 = vld [vmem:[%s4 + $0x178] sm:$0xff]
  %v2823 = vld [vmem:[%s4 + $0x180] sm:$0xff]
  %v2824 = vld [vmem:[%s4 + $0x188] sm:$0xff]
  %v2825 = vld [vmem:[%s4 + $0x190] sm:$0xff]
  %v2826 = vld [vmem:[%s4 + $0x198] sm:$0xff]
  %v2827 = vld [vmem:[%s4 + $0x1a0] sm:$0xff]
  %v2828 = vld [vmem:[%s4 + $0x1a8] sm:$0xff]
  %v2829 = vld [vmem:[%s4 + $0x1b0] sm:$0xff]
  %v2830 = vld [vmem:[%s4 + $0x1b8] sm:$0xff]
  %v2831 = vld [vmem:[%s4 + $0x1c0] sm:$0xff]
  %v2832 = vld [vmem:[%s4 + $0x1c8] sm:$0xff]
  %v2833 = vld [vmem:[%s4 + $0x1d0] sm:$0xff]
  %v2834 = vld [vmem:[%s4 + $0x1d8] sm:$0xff]
  %v2835 = vld [vmem:[%s4 + $0x1e0] sm:$0xff]
  %v2836 = vld [vmem:[%s4 + $0x1e8] sm:$0xff]
  %v2837 = vld [vmem:[%s4 + $0x1f0] sm:$0xff]
  %v2838 = vld [vmem:[%s4 + $0x1f8] sm:$0xff]
  %v2839 = vld [vmem:[%s5] sm:$0xf]
  %v2840 = vld [vmem:[%s6] sm:$0xf]
  %v2841 = vld [vmem:[%s6 + $0x4] sm:$0xf]
  %v2842 = vld [vmem:[%s6 + $0x8] sm:$0xf]
  %v2843 = vld [vmem:[%s6 + $0xc] sm:$0xf]
  %v2844 = vld [vmem:[%s6 + $0x10] sm:$0xf]
  %v2845 = vld [vmem:[%s6 + $0x14] sm:$0xf]
  %v2846 = vld [vmem:[%s6 + $0x18] sm:$0xf]
  %v2847 = vld [vmem:[%s6 + $0x1c] sm:$0xf]
  %v2848 = vld [vmem:[%s6 + $0x20] sm:$0xf]
  %v2849 = vld [vmem:[%s6 + $0x24] sm:$0xf]
  %v2850 = vld [vmem:[%s6 + $0x28] sm:$0xf]
  %v2851 = vld [vmem:[%s6 + $0x2c] sm:$0xf]
  %v2852 = vld [vmem:[%s6 + $0x30] sm:$0xf]
  %v2853 = vld [vmem:[%s6 + $0x34] sm:$0xf]
  %v2854 = vld [vmem:[%s6 + $0x38] sm:$0xf]
  %v2855 = vld [vmem:[%s6 + $0x3c] sm:$0xf]
  %v2856 = vld [vmem:[%s7] sm:$0x1]
  %v2889 = vunpack.c.l.b16 %v2743
  %v2890 = vunpack.c.h.b16 %v2743
  %v2891 = vunpack.c.l.b16 %v2744
  %v2892 = vunpack.c.h.b16 %v2744
  %v2893 = vunpack.c.l.b16 %v2745
  %v2894 = vunpack.c.h.b16 %v2745
  %v2895 = vunpack.c.l.b16 %v2746
  %v2896 = vunpack.c.h.b16 %v2746
  %v2897 = vunpack.c.l.b16 %v2747
  %v2898 = vunpack.c.h.b16 %v2747
  %v2899 = vunpack.c.l.b16 %v2748
  %v2900 = vunpack.c.h.b16 %v2748
  %v2901 = vunpack.c.l.b16 %v2749
  %v2902 = vunpack.c.h.b16 %v2749
  %v2903 = vunpack.c.l.b16 %v2750
  %v2904 = vunpack.c.h.b16 %v2750
  %v2905 = vunpack.c.l.b16 %v2751
  %v2906 = vunpack.c.h.b16 %v2751
  %v2907 = vunpack.c.l.b16 %v2752
  %v2908 = vunpack.c.h.b16 %v2752
  %v2909 = vunpack.c.l.b16 %v2753
  %v2910 = vunpack.c.h.b16 %v2753
  %v2911 = vunpack.c.l.b16 %v2754
  %v2912 = vunpack.c.h.b16 %v2754
  %v2913 = vunpack.c.l.b16 %v2755
  %v2914 = vunpack.c.h.b16 %v2755
  %v2915 = vunpack.c.l.b16 %v2756
  %v2916 = vunpack.c.h.b16 %v2756
  %v2917 = vunpack.c.l.b16 %v2757
  %v2918 = vunpack.c.h.b16 %v2757
  %v2919 = vunpack.c.l.b16 %v2758
  %v2920 = vunpack.c.h.b16 %v2758
  %v2921 = vunpack.c.l.b16 %v2759
  %v2922 = vunpack.c.h.b16 %v2759
  %v2923 = vunpack.c.l.b16 %v2760
  %v2924 = vunpack.c.h.b16 %v2760
  %v2925 = vunpack.c.l.b16 %v2761
  %v2926 = vunpack.c.h.b16 %v2761
  %v2927 = vunpack.c.l.b16 %v2762
  %v2928 = vunpack.c.h.b16 %v2762
  %v2929 = vunpack.c.l.b16 %v2763
  %v2930 = vunpack.c.h.b16 %v2763
  %v2931 = vunpack.c.l.b16 %v2764
  %v2932 = vunpack.c.h.b16 %v2764
  %v2933 = vunpack.c.l.b16 %v2765
  %v2934 = vunpack.c.h.b16 %v2765
  %v2935 = vunpack.c.l.b16 %v2766
  %v2936 = vunpack.c.h.b16 %v2766
  %v2937 = vunpack.c.l.b16 %v2767
  %v2938 = vunpack.c.h.b16 %v2767
  %v2939 = vunpack.c.l.b16 %v2768
  %v2940 = vunpack.c.h.b16 %v2768
  %v2941 = vunpack.c.l.b16 %v2769
  %v2942 = vunpack.c.h.b16 %v2769
  %v2943 = vunpack.c.l.b16 %v2770
  %v2944 = vunpack.c.h.b16 %v2770
  %v2945 = vunpack.c.l.b16 %v2771
  %v2946 = vunpack.c.h.b16 %v2771
  %v2947 = vunpack.c.l.b16 %v2772
  %v2948 = vunpack.c.h.b16 %v2772
  %v2949 = vunpack.c.l.b16 %v2773
  %v2950 = vunpack.c.h.b16 %v2773
  %v2951 = vunpack.c.l.b16 %v2774
  %v2952 = vunpack.c.h.b16 %v2774
  %v2953 = vpack.c.b16 %v2893, %v2889
  %v2954 = vpack.c.b16 %v2894, %v2890
  %v2955 = vpack.c.b16 %v2895, %v2891
  %v2956 = vpack.c.b16 %v2896, %v2892
  %v2957 = vpack.c.b16 %v2901, %v2897
  %v2958 = vpack.c.b16 %v2902, %v2898
  %v2959 = vpack.c.b16 %v2903, %v2899
  %v2960 = vpack.c.b16 %v2904, %v2900
  %v2961 = vpack.c.b16 %v2909, %v2905
  %v2962 = vpack.c.b16 %v2910, %v2906
  %v2963 = vpack.c.b16 %v2911, %v2907
  %v2964 = vpack.c.b16 %v2912, %v2908
  %v2965 = vpack.c.b16 %v2917, %v2913
  %v2966 = vpack.c.b16 %v2918, %v2914
  %v2967 = vpack.c.b16 %v2919, %v2915
  %v2968 = vpack.c.b16 %v2920, %v2916
  %v2969 = vpack.c.b16 %v2925, %v2921
  %v2970 = vpack.c.b16 %v2926, %v2922
  %v2971 = vpack.c.b16 %v2927, %v2923
  %v2972 = vpack.c.b16 %v2928, %v2924
  %v2973 = vpack.c.b16 %v2933, %v2929
  %v2974 = vpack.c.b16 %v2934, %v2930
  %v2975 = vpack.c.b16 %v2935, %v2931
  %v2976 = vpack.c.b16 %v2936, %v2932
  %v2977 = vpack.c.b16 %v2941, %v2937
  %v2978 = vpack.c.b16 %v2942, %v2938
  %v2979 = vpack.c.b16 %v2943, %v2939
  %v2980 = vpack.c.b16 %v2944, %v2940
  %v2981 = vpack.c.b16 %v2949, %v2945
  %v2982 = vpack.c.b16 %v2950, %v2946
  %v2983 = vpack.c.b16 %v2951, %v2947
  %v2984 = vpack.c.b16 %v2952, %v2948
  %3017 = vmatpush.bf16.msra.mxu0 %v2981
  %3018 = vmatpush.bf16.msra.mxu0 %v2977
  %3019 = vmatpush.bf16.msra.mxu0 %v2973
  %3020 = vmatpush.bf16.msra.mxu0 %v2969
  %3021 = vmatpush.bf16.msra.mxu0 %v2965
  %3022 = vmatpush.bf16.msra.mxu0 %v2961
  %3023 = vmatpush.bf16.msra.mxu0 %v2957
  %3024 = vmatpush.bf16.msra.mxu0 %v2953
  %3025 = vmatmul.bf16.gmra.mxu0 0
  %v3026 = vpop.f32.mrf.mxu0
  %v3027 = vadd.f32 0.0, %v3026
  %v3028 = vpop.f32.mrf.mxu0
  %3029 = vdwg.mxu0
  %3030 = vmatpush.bf16.msra.mxu0 %v2982
  %3031 = vmatpush.bf16.msra.mxu0 %v2978
  %3032 = vmatpush.bf16.msra.mxu0 %v2974
  %3033 = vmatpush.bf16.msra.mxu0 %v2970
  %3034 = vmatpush.bf16.msra.mxu0 %v2966
  %3035 = vmatpush.bf16.msra.mxu0 %v2962
  %3036 = vmatpush.bf16.msra.mxu0 %v2958
  %3037 = vmatpush.bf16.msra.mxu0 %v2954
  %3038 = vmatmul.bf16.gmra.mxu0 0
  %v3039 = vpop.f32.mrf.mxu0
  %v3040 = vadd.f32 0.0, %v3039
  %v3041 = vpop.f32.mrf.mxu0
  %3042 = vdwg.mxu0
  %3043 = vmatpush.bf16.msra.mxu0 %v2983
  %3044 = vmatpush.bf16.msra.mxu0 %v2979
  %3045 = vmatpush.bf16.msra.mxu0 %v2975
  %3046 = vmatpush.bf16.msra.mxu0 %v2971
  %3047 = vmatpush.bf16.msra.mxu0 %v2967
  %3048 = vmatpush.bf16.msra.mxu0 %v2963
  %3049 = vmatpush.bf16.msra.mxu0 %v2959
  %3050 = vmatpush.bf16.msra.mxu0 %v2955
  %3051 = vmatmul.bf16.gmra.mxu0 0
  %v3052 = vpop.f32.mrf.mxu0
  %v3053 = vadd.f32 0.0, %v3052
  %v3054 = vpop.f32.mrf.mxu0
  %3055 = vdwg.mxu0
  %3056 = vmatpush.bf16.msra.mxu0 %v2984
  %3057 = vmatpush.bf16.msra.mxu0 %v2980
  %3058 = vmatpush.bf16.msra.mxu0 %v2976
  %3059 = vmatpush.bf16.msra.mxu0 %v2972
  %3060 = vmatpush.bf16.msra.mxu0 %v2968
  %3061 = vmatpush.bf16.msra.mxu0 %v2964
  %3062 = vmatpush.bf16.msra.mxu0 %v2960
  %3063 = vmatpush.bf16.msra.mxu0 %v2956
  %3064 = vmatmul.bf16.gmra.mxu0 0
  %v3065 = vpop.f32.mrf.mxu0
  %v3066 = vadd.f32 0.0, %v3065
  %v3067 = vpop.f32.mrf.mxu0
  %3068 = vdwg.mxu0
  %v3069 = vadd.f32 %v2277, %v3027
  %v3070 = vadd.f32 %v2431, %v3040
  %v3071 = vadd.f32 %v2585, %v3053
  %v3072 = vadd.f32 %v2739, %v3066
  %v3073 = vxor.u32 %v3069, 2147483648
  %v3074 = vmul.f32 %v3073, 1.442695
  %v3075 = vpow.pop %v3074
  %v3076 = vadd.f32 %v3075, 1.0
  %v3077 = vrcp.pop %v3076
  %v3078 = vmul.f32 %v3076, %v3077
  %v3079 = vsub.f32 1.0, %v3078
  %v3080 = vmul.f32 %v3077, %v3079
  %v3081 = vadd.f32 %v3077, %v3080
  %vm3082 = vweird.f32 %v3076
  %vm3083 = vweird.f32 %v3077
  %vm3084 = vmor %vm3082, %vm3083
  %v3085 = vsel %vm3084, %v3077, %v3081
  %v3086 = vand.u32 2147483647, %v3076
  %vm3087 = vcmp.eq.f32.partialorder %v3086, 8.507059e+37
  %v3088 = vand.u32 %v3076, 2147483648
  %v3089 = vor.u32 1.1754944e-38, %v3088
  %v3090 = vsel %vm3087, %v3089, %v3085
  %v3091 = vmul.f32 1.0, %v3090
  %v3092 = vxor.u32 %v3070, 2147483648
  %v3093 = vmul.f32 %v3092, 1.442695
  %v3094 = vpow.pop %v3093
  %v3095 = vadd.f32 %v3094, 1.0
  %v3096 = vrcp.pop %v3095
  %v3097 = vmul.f32 %v3095, %v3096
  %v3098 = vsub.f32 1.0, %v3097
  %v3099 = vmul.f32 %v3096, %v3098
  %v3100 = vadd.f32 %v3096, %v3099
  %vm3101 = vweird.f32 %v3095
  %vm3102 = vweird.f32 %v3096
  %vm3103 = vmor %vm3101, %vm3102
  %v3104 = vsel %vm3103, %v3096, %v3100
  %v3105 = vand.u32 2147483647, %v3095
  %vm3106 = vcmp.eq.f32.partialorder %v3105, 8.507059e+37
  %v3107 = vand.u32 %v3095, 2147483648
  %v3108 = vor.u32 1.1754944e-38, %v3107
  %v3109 = vsel %vm3106, %v3108, %v3104
  %v3110 = vmul.f32 1.0, %v3109
  %v3111 = vtanh.pop %v3071
  %v3112 = vxor.u32 %v3072, 2147483648
  %v3113 = vmul.f32 %v3112, 1.442695
  %v3114 = vpow.pop %v3113
  %v3115 = vadd.f32 %v3114, 1.0
  %v3116 = vrcp.pop %v3115
  %v3117 = vmul.f32 %v3115, %v3116
  %v3118 = vsub.f32 1.0, %v3117
  %v3119 = vmul.f32 %v3116, %v3118
  %v3120 = vadd.f32 %v3116, %v3119
  %vm3121 = vweird.f32 %v3115
  %vm3122 = vweird.f32 %v3116
  %vm3123 = vmor %vm3121, %vm3122
  %v3124 = vsel %vm3123, %v3116, %v3120
  %v3125 = vand.u32 2147483647, %v3115
  %vm3126 = vcmp.eq.f32.partialorder %v3125, 8.507059e+37
  %v3127 = vand.u32 %v3115, 2147483648
  %v3128 = vor.u32 1.1754944e-38, %v3127
  %v3129 = vsel %vm3126, %v3128, %v3124
  %v3130 = vmul.f32 1.0, %v3129
  %v3131 = vmul.f32 %v3110, 0.0
  %v3132 = vmul.f32 %v3091, %v3111
  %v3133 = vadd.f32 %v3131, %v3132
  %v3134 = vtanh.pop %v3133
  %v3135 = vmul.f32 %v3130, %v3134
  %v3136 = vpack.c.bf16 %v3135, %v3135
  %v3138 = vperm.slane %v2839, 0
  %v3139 = vperm.slane %v2839, 1
  %v3140 = vperm.slane %v2839, 2
  %v3141 = vperm.slane %v2839, 3
  %v3210 = vunpack.c.l.b16 %v2775
  %v3211 = vunpack.c.h.b16 %v2775
  %v3212 = vunpack.c.l.b16 %v2776
  %v3213 = vunpack.c.h.b16 %v2776
  %v3214 = vunpack.c.l.b16 %v2777
  %v3215 = vunpack.c.h.b16 %v2777
  %v3216 = vunpack.c.l.b16 %v2778
  %v3217 = vunpack.c.h.b16 %v2778
  %v3218 = vunpack.c.l.b16 %v2779
  %v3219 = vunpack.c.h.b16 %v2779
  %v3220 = vunpack.c.l.b16 %v2780
  %v3221 = vunpack.c.h.b16 %v2780
  %v3222 = vunpack.c.l.b16 %v2781
  %v3223 = vunpack.c.h.b16 %v2781
  %v3224 = vunpack.c.l.b16 %v2782
  %v3225 = vunpack.c.h.b16 %v2782
  %v3226 = vunpack.c.l.b16 %v2783
  %v3227 = vunpack.c.h.b16 %v2783
  %v3228 = vunpack.c.l.b16 %v2784
  %v3229 = vunpack.c.h.b16 %v2784
  %v3230 = vunpack.c.l.b16 %v2785
  %v3231 = vunpack.c.h.b16 %v2785
  %v3232 = vunpack.c.l.b16 %v2786
  %v3233 = vunpack.c.h.b16 %v2786
  %v3234 = vunpack.c.l.b16 %v2787
  %v3235 = vunpack.c.h.b16 %v2787
  %v3236 = vunpack.c.l.b16 %v2788
  %v3237 = vunpack.c.h.b16 %v2788
  %v3238 = vunpack.c.l.b16 %v2789
  %v3239 = vunpack.c.h.b16 %v2789
  %v3240 = vunpack.c.l.b16 %v2790
  %v3241 = vunpack.c.h.b16 %v2790
  %v3242 = vunpack.c.l.b16 %v2791
  %v3243 = vunpack.c.h.b16 %v2791
  %v3244 = vunpack.c.l.b16 %v2792
  %v3245 = vunpack.c.h.b16 %v2792
  %v3246 = vunpack.c.l.b16 %v2793
  %v3247 = vunpack.c.h.b16 %v2793
  %v3248 = vunpack.c.l.b16 %v2794
  %v3249 = vunpack.c.h.b16 %v2794
  %v3250 = vunpack.c.l.b16 %v2795
  %v3251 = vunpack.c.h.b16 %v2795
  %v3252 = vunpack.c.l.b16 %v2796
  %v3253 = vunpack.c.h.b16 %v2796
  %v3254 = vunpack.c.l.b16 %v2797
  %v3255 = vunpack.c.h.b16 %v2797
  %v3256 = vunpack.c.l.b16 %v2798
  %v3257 = vunpack.c.h.b16 %v2798
  %v3258 = vunpack.c.l.b16 %v2799
  %v3259 = vunpack.c.h.b16 %v2799
  %v3260 = vunpack.c.l.b16 %v2800
  %v3261 = vunpack.c.h.b16 %v2800
  %v3262 = vunpack.c.l.b16 %v2801
  %v3263 = vunpack.c.h.b16 %v2801
  %v3264 = vunpack.c.l.b16 %v2802
  %v3265 = vunpack.c.h.b16 %v2802
  %v3266 = vunpack.c.l.b16 %v2803
  %v3267 = vunpack.c.h.b16 %v2803
  %v3268 = vunpack.c.l.b16 %v2804
  %v3269 = vunpack.c.h.b16 %v2804
  %v3270 = vunpack.c.l.b16 %v2805
  %v3271 = vunpack.c.h.b16 %v2805
  %v3272 = vunpack.c.l.b16 %v2806
  %v3273 = vunpack.c.h.b16 %v2806
  %v3274 = vunpack.c.l.b16 %v2807
  %v3275 = vunpack.c.h.b16 %v2807
  %v3276 = vunpack.c.l.b16 %v2808
  %v3277 = vunpack.c.h.b16 %v2808
  %v3278 = vunpack.c.l.b16 %v2809
  %v3279 = vunpack.c.h.b16 %v2809
  %v3280 = vunpack.c.l.b16 %v2810
  %v3281 = vunpack.c.h.b16 %v2810
  %v3282 = vunpack.c.l.b16 %v2811
  %v3283 = vunpack.c.h.b16 %v2811
  %v3284 = vunpack.c.l.b16 %v2812
  %v3285 = vunpack.c.h.b16 %v2812
  %v3286 = vunpack.c.l.b16 %v2813
  %v3287 = vunpack.c.h.b16 %v2813
  %v3288 = vunpack.c.l.b16 %v2814
  %v3289 = vunpack.c.h.b16 %v2814
  %v3290 = vunpack.c.l.b16 %v2815
  %v3291 = vunpack.c.h.b16 %v2815
  %v3292 = vunpack.c.l.b16 %v2816
  %v3293 = vunpack.c.h.b16 %v2816
  %v3294 = vunpack.c.l.b16 %v2817
  %v3295 = vunpack.c.h.b16 %v2817
  %v3296 = vunpack.c.l.b16 %v2818
  %v3297 = vunpack.c.h.b16 %v2818
  %v3298 = vunpack.c.l.b16 %v2819
  %v3299 = vunpack.c.h.b16 %v2819
  %v3300 = vunpack.c.l.b16 %v2820
  %v3301 = vunpack.c.h.b16 %v2820
  %v3302 = vunpack.c.l.b16 %v2821
  %v3303 = vunpack.c.h.b16 %v2821
  %v3304 = vunpack.c.l.b16 %v2822
  %v3305 = vunpack.c.h.b16 %v2822
  %v3306 = vunpack.c.l.b16 %v2823
  %v3307 = vunpack.c.h.b16 %v2823
  %v3308 = vunpack.c.l.b16 %v2824
  %v3309 = vunpack.c.h.b16 %v2824
  %v3310 = vunpack.c.l.b16 %v2825
  %v3311 = vunpack.c.h.b16 %v2825
  %v3312 = vunpack.c.l.b16 %v2826
  %v3313 = vunpack.c.h.b16 %v2826
  %v3314 = vunpack.c.l.b16 %v2827
  %v3315 = vunpack.c.h.b16 %v2827
  %v3316 = vunpack.c.l.b16 %v2828
  %v3317 = vunpack.c.h.b16 %v2828
  %v3318 = vunpack.c.l.b16 %v2829
  %v3319 = vunpack.c.h.b16 %v2829
  %v3320 = vunpack.c.l.b16 %v2830
  %v3321 = vunpack.c.h.b16 %v2830
  %v3322 = vunpack.c.l.b16 %v2831
  %v3323 = vunpack.c.h.b16 %v2831
  %v3324 = vunpack.c.l.b16 %v2832
  %v3325 = vunpack.c.h.b16 %v2832
  %v3326 = vunpack.c.l.b16 %v2833
  %v3327 = vunpack.c.h.b16 %v2833
  %v3328 = vunpack.c.l.b16 %v2834
  %v3329 = vunpack.c.h.b16 %v2834
  %v3330 = vunpack.c.l.b16 %v2835
  %v3331 = vunpack.c.h.b16 %v2835
  %v3332 = vunpack.c.l.b16 %v2836
  %v3333 = vunpack.c.h.b16 %v2836
  %v3334 = vunpack.c.l.b16 %v2837
  %v3335 = vunpack.c.h.b16 %v2837
  %v3336 = vunpack.c.l.b16 %v2838
  %v3337 = vunpack.c.h.b16 %v2838
  %v3338 = vpack.c.b16 %v3214, %v3210
  %v3339 = vpack.c.b16 %v3215, %v3211
  %v3340 = vpack.c.b16 %v3216, %v3212
  %v3341 = vpack.c.b16 %v3217, %v3213
  %v3342 = vpack.c.b16 %v3222, %v3218
  %v3343 = vpack.c.b16 %v3223, %v3219
  %v3344 = vpack.c.b16 %v3224, %v3220
  %v3345 = vpack.c.b16 %v3225, %v3221
  %v3346 = vpack.c.b16 %v3230, %v3226
  %v3347 = vpack.c.b16 %v3231, %v3227
  %v3348 = vpack.c.b16 %v3232, %v3228
  %v3349 = vpack.c.b16 %v3233, %v3229
  %v3350 = vpack.c.b16 %v3238, %v3234
  %v3351 = vpack.c.b16 %v3239, %v3235
  %v3352 = vpack.c.b16 %v3240, %v3236
  %v3353 = vpack.c.b16 %v3241, %v3237
  %v3354 = vpack.c.b16 %v3246, %v3242
  %v3355 = vpack.c.b16 %v3247, %v3243
  %v3356 = vpack.c.b16 %v3248, %v3244
  %v3357 = vpack.c.b16 %v3249, %v3245
  %v3358 = vpack.c.b16 %v3254, %v3250
  %v3359 = vpack.c.b16 %v3255, %v3251
  %v3360 = vpack.c.b16 %v3256, %v3252
  %v3361 = vpack.c.b16 %v3257, %v3253
  %v3362 = vpack.c.b16 %v3262, %v3258
  %v3363 = vpack.c.b16 %v3263, %v3259
  %v3364 = vpack.c.b16 %v3264, %v3260
  %v3365 = vpack.c.b16 %v3265, %v3261
  %v3366 = vpack.c.b16 %v3270, %v3266
  %v3367 = vpack.c.b16 %v3271, %v3267
  %v3368 = vpack.c.b16 %v3272, %v3268
  %v3369 = vpack.c.b16 %v3273, %v3269
  %v3370 = vpack.c.b16 %v3278, %v3274
  %v3371 = vpack.c.b16 %v3279, %v3275
  %v3372 = vpack.c.b16 %v3280, %v3276
  %v3373 = vpack.c.b16 %v3281, %v3277
  %v3374 = vpack.c.b16 %v3286, %v3282
  %v3375 = vpack.c.b16 %v3287, %v3283
  %v3376 = vpack.c.b16 %v3288, %v3284
  %v3377 = vpack.c.b16 %v3289, %v3285
  %v3378 = vpack.c.b16 %v3294, %v3290
  %v3379 = vpack.c.b16 %v3295, %v3291
  %v3380 = vpack.c.b16 %v3296, %v3292
  %v3381 = vpack.c.b16 %v3297, %v3293
  %v3382 = vpack.c.b16 %v3302, %v3298
  %v3383 = vpack.c.b16 %v3303, %v3299
  %v3384 = vpack.c.b16 %v3304, %v3300
  %v3385 = vpack.c.b16 %v3305, %v3301
  %v3386 = vpack.c.b16 %v3310, %v3306
  %v3387 = vpack.c.b16 %v3311, %v3307
  %v3388 = vpack.c.b16 %v3312, %v3308
  %v3389 = vpack.c.b16 %v3313, %v3309
  %v3390 = vpack.c.b16 %v3318, %v3314
  %v3391 = vpack.c.b16 %v3319, %v3315
  %v3392 = vpack.c.b16 %v3320, %v3316
  %v3393 = vpack.c.b16 %v3321, %v3317
  %v3394 = vpack.c.b16 %v3326, %v3322
  %v3395 = vpack.c.b16 %v3327, %v3323
  %v3396 = vpack.c.b16 %v3328, %v3324
  %v3397 = vpack.c.b16 %v3329, %v3325
  %v3398 = vpack.c.b16 %v3334, %v3330
  %v3399 = vpack.c.b16 %v3335, %v3331
  %v3400 = vpack.c.b16 %v3336, %v3332
  %v3401 = vpack.c.b16 %v3337, %v3333
  %3466 = vmatpush.bf16.msra.mxu0 %v3366
  %3467 = vmatpush.bf16.msra.mxu0 %v3362
  %3468 = vmatpush.bf16.msra.mxu0 %v3358
  %3469 = vmatpush.bf16.msra.mxu0 %v3354
  %3470 = vmatpush.bf16.msra.mxu0 %v3350
  %3471 = vmatpush.bf16.msra.mxu0 %v3346
  %3472 = vmatpush.bf16.msra.mxu0 %v3342
  %3473 = vmatpush.bf16.msra.mxu0 %v3338
  %3474 = vmatmul.bf16.gmra.mxu0 %v3136
  %v3475 = vpop.f32.mrf.mxu0
  %v3476 = vadd.f32 %v3138, %v3475
  %v3477 = vpop.f32.mrf.mxu0
  %3478 = vdwg.mxu0
  %3479 = vmatpush.bf16.msra.mxu0 %v3398
  %3480 = vmatpush.bf16.msra.mxu0 %v3394
  %3481 = vmatpush.bf16.msra.mxu0 %v3390
  %3482 = vmatpush.bf16.msra.mxu0 %v3386
  %3483 = vmatpush.bf16.msra.mxu0 %v3382
  %3484 = vmatpush.bf16.msra.mxu0 %v3378
  %3485 = vmatpush.bf16.msra.mxu0 %v3374
  %3486 = vmatpush.bf16.msra.mxu0 %v3370
  %3487 = vmatmul.bf16.gmra.mxu0 0
  %v3488 = vpop.f32.mrf.mxu0
  %v3489 = vadd.f32 %v3476, %v3488
  %v3490 = vpop.f32.mrf.mxu0
  %3491 = vdwg.mxu0
  %3492 = vmatpush.bf16.msra.mxu0 %v3367
  %3493 = vmatpush.bf16.msra.mxu0 %v3363
  %3494 = vmatpush.bf16.msra.mxu0 %v3359
  %3495 = vmatpush.bf16.msra.mxu0 %v3355
  %3496 = vmatpush.bf16.msra.mxu0 %v3351
  %3497 = vmatpush.bf16.msra.mxu0 %v3347
  %3498 = vmatpush.bf16.msra.mxu0 %v3343
  %3499 = vmatpush.bf16.msra.mxu0 %v3339
  %3500 = vmatmul.bf16.gmra.mxu0 %v3136
  %v3501 = vpop.f32.mrf.mxu0
  %v3502 = vadd.f32 %v3139, %v3501
  %v3503 = vpop.f32.mrf.mxu0
  %3504 = vdwg.mxu0
  %3505 = vmatpush.bf16.msra.mxu0 %v3399
  %3506 = vmatpush.bf16.msra.mxu0 %v3395
  %3507 = vmatpush.bf16.msra.mxu0 %v3391
  %3508 = vmatpush.bf16.msra.mxu0 %v3387
  %3509 = vmatpush.bf16.msra.mxu0 %v3383
  %3510 = vmatpush.bf16.msra.mxu0 %v3379
  %3511 = vmatpush.bf16.msra.mxu0 %v3375
  %3512 = vmatpush.bf16.msra.mxu0 %v3371
  %3513 = vmatmul.bf16.gmra.mxu0 0
  %v3514 = vpop.f32.mrf.mxu0
  %v3515 = vadd.f32 %v3502, %v3514
  %v3516 = vpop.f32.mrf.mxu0
  %3517 = vdwg.mxu0
  %3518 = vmatpush.bf16.msra.mxu0 %v3368
  %3519 = vmatpush.bf16.msra.mxu0 %v3364
  %3520 = vmatpush.bf16.msra.mxu0 %v3360
  %3521 = vmatpush.bf16.msra.mxu0 %v3356
  %3522 = vmatpush.bf16.msra.mxu0 %v3352
  %3523 = vmatpush.bf16.msra.mxu0 %v3348
  %3524 = vmatpush.bf16.msra.mxu0 %v3344
  %3525 = vmatpush.bf16.msra.mxu0 %v3340
  %3526 = vmatmul.bf16.gmra.mxu0 %v3136
  %v3527 = vpop.f32.mrf.mxu0
  %v3528 = vadd.f32 %v3140, %v3527
  %v3529 = vpop.f32.mrf.mxu0
  %3530 = vdwg.mxu0
  %3531 = vmatpush.bf16.msra.mxu0 %v3400
  %3532 = vmatpush.bf16.msra.mxu0 %v3396
  %3533 = vmatpush.bf16.msra.mxu0 %v3392
  %3534 = vmatpush.bf16.msra.mxu0 %v3388
  %3535 = vmatpush.bf16.msra.mxu0 %v3384
  %3536 = vmatpush.bf16.msra.mxu0 %v3380
  %3537 = vmatpush.bf16.msra.mxu0 %v3376
  %3538 = vmatpush.bf16.msra.mxu0 %v3372
  %3539 = vmatmul.bf16.gmra.mxu0 0
  %v3540 = vpop.f32.mrf.mxu0
  %v3541 = vadd.f32 %v3528, %v3540
  %v3542 = vpop.f32.mrf.mxu0
  %3543 = vdwg.mxu0
  %3544 = vmatpush.bf16.msra.mxu0 %v3369
  %3545 = vmatpush.bf16.msra.mxu0 %v3365
  %3546 = vmatpush.bf16.msra.mxu0 %v3361
  %3547 = vmatpush.bf16.msra.mxu0 %v3357
  %3548 = vmatpush.bf16.msra.mxu0 %v3353
  %3549 = vmatpush.bf16.msra.mxu0 %v3349
  %3550 = vmatpush.bf16.msra.mxu0 %v3345
  %3551 = vmatpush.bf16.msra.mxu0 %v3341
  %3552 = vmatmul.bf16.gmra.mxu0 %v3136
  %v3553 = vpop.f32.mrf.mxu0
  %v3554 = vadd.f32 %v3141, %v3553
  %v3555 = vpop.f32.mrf.mxu0
  %3556 = vdwg.mxu0
  %3557 = vmatpush.bf16.msra.mxu0 %v3401
  %3558 = vmatpush.bf16.msra.mxu0 %v3397
  %3559 = vmatpush.bf16.msra.mxu0 %v3393
  %3560 = vmatpush.bf16.msra.mxu0 %v3389
  %3561 = vmatpush.bf16.msra.mxu0 %v3385
  %3562 = vmatpush.bf16.msra.mxu0 %v3381
  %3563 = vmatpush.bf16.msra.mxu0 %v3377
  %3564 = vmatpush.bf16.msra.mxu0 %v3373
  %3565 = vmatmul.bf16.gmra.mxu0 0
  %v3566 = vpop.f32.mrf.mxu0
  %v3567 = vadd.f32 %v3554, %v3566
  %v3568 = vpop.f32.mrf.mxu0
  %3569 = vdwg.mxu0
  %v3570 = vxor.u32 %v3489, 2147483648
  %v3571 = vmul.f32 %v3570, 1.442695
  %v3572 = vpow.pop %v3571
  %v3573 = vadd.f32 %v3572, 1.0
  %v3574 = vrcp.pop %v3573
  %v3575 = vmul.f32 %v3573, %v3574
  %v3576 = vsub.f32 1.0, %v3575
  %v3577 = vmul.f32 %v3574, %v3576
  %v3578 = vadd.f32 %v3574, %v3577
  %vm3579 = vweird.f32 %v3573
  %vm3580 = vweird.f32 %v3574
  %vm3581 = vmor %vm3579, %vm3580
  %v3582 = vsel %vm3581, %v3574, %v3578
  %v3583 = vand.u32 2147483647, %v3573
  %vm3584 = vcmp.eq.f32.partialorder %v3583, 8.507059e+37
  %v3585 = vand.u32 %v3573, 2147483648
  %v3586 = vor.u32 1.1754944e-38, %v3585
  %v3587 = vsel %vm3584, %v3586, %v3582
  %v3588 = vmul.f32 1.0, %v3587
  %v3589 = vxor.u32 %v3515, 2147483648
  %v3590 = vmul.f32 %v3589, 1.442695
  %v3591 = vpow.pop %v3590
  %v3592 = vadd.f32 %v3591, 1.0
  %v3593 = vrcp.pop %v3592
  %v3594 = vmul.f32 %v3592, %v3593
  %v3595 = vsub.f32 1.0, %v3594
  %v3596 = vmul.f32 %v3593, %v3595
  %v3597 = vadd.f32 %v3593, %v3596
  %vm3598 = vweird.f32 %v3592
  %vm3599 = vweird.f32 %v3593
  %vm3600 = vmor %vm3598, %vm3599
  %v3601 = vsel %vm3600, %v3593, %v3597
  %v3602 = vand.u32 2147483647, %v3592
  %vm3603 = vcmp.eq.f32.partialorder %v3602, 8.507059e+37
  %v3604 = vand.u32 %v3592, 2147483648
  %v3605 = vor.u32 1.1754944e-38, %v3604
  %v3606 = vsel %vm3603, %v3605, %v3601
  %v3607 = vmul.f32 1.0, %v3606
  %v3608 = vtanh.pop %v3541
  %v3609 = vxor.u32 %v3567, 2147483648
  %v3610 = vmul.f32 %v3609, 1.442695
  %v3611 = vpow.pop %v3610
  %v3612 = vadd.f32 %v3611, 1.0
  %v3613 = vrcp.pop %v3612
  %v3614 = vmul.f32 %v3612, %v3613
  %v3615 = vsub.f32 1.0, %v3614
  %v3616 = vmul.f32 %v3613, %v3615
  %v3617 = vadd.f32 %v3613, %v3616
  %vm3618 = vweird.f32 %v3612
  %vm3619 = vweird.f32 %v3613
  %vm3620 = vmor %vm3618, %vm3619
  %v3621 = vsel %vm3620, %v3613, %v3617
  %v3622 = vand.u32 2147483647, %v3612
  %vm3623 = vcmp.eq.f32.partialorder %v3622, 8.507059e+37
  %v3624 = vand.u32 %v3612, 2147483648
  %v3625 = vor.u32 1.1754944e-38, %v3624
  %v3626 = vsel %vm3623, %v3625, %v3621
  %v3627 = vmul.f32 1.0, %v3626
  %v3628 = vmul.f32 %v3607, 0.0
  %v3629 = vmul.f32 %v3588, %v3608
  %v3630 = vadd.f32 %v3628, %v3629
  %v3631 = vtanh.pop %v3630
  %v3632 = vmul.f32 %v3627, %v3631
  %v3633 = vpack.c.bf16 %v3632, %v3632
  %v3635 = vperm.slane %v2856, 0
  %v3653 = vunpack.c.l.b16 %v2840
  %v3654 = vunpack.c.l.b16 %v2841
  %v3655 = vunpack.c.l.b16 %v2842
  %v3656 = vunpack.c.l.b16 %v2843
  %v3657 = vunpack.c.l.b16 %v2844
  %v3658 = vunpack.c.l.b16 %v2845
  %v3659 = vunpack.c.l.b16 %v2846
  %v3660 = vunpack.c.l.b16 %v2847
  %v3661 = vunpack.c.l.b16 %v2848
  %v3662 = vunpack.c.l.b16 %v2849
  %v3663 = vunpack.c.l.b16 %v2850
  %v3664 = vunpack.c.l.b16 %v2851
  %v3665 = vunpack.c.l.b16 %v2852
  %v3666 = vunpack.c.l.b16 %v2853
  %v3667 = vunpack.c.l.b16 %v2854
  %v3668 = vunpack.c.l.b16 %v2855
  %v3669 = vpack.c.b16 %v3654, %v3653
  %v3670 = vpack.c.b16 %v3656, %v3655
  %v3671 = vpack.c.b16 %v3658, %v3657
  %v3672 = vpack.c.b16 %v3660, %v3659
  %v3673 = vpack.c.b16 %v3662, %v3661
  %v3674 = vpack.c.b16 %v3664, %v3663
  %v3675 = vpack.c.b16 %v3666, %v3665
  %v3676 = vpack.c.b16 %v3668, %v3667
  %3685 = vmatpush.bf16.msra.mxu0 %v3676
  %3686 = vmatpush.bf16.msra.mxu0 %v3675
  %3687 = vmatpush.bf16.msra.mxu0 %v3674
  %3688 = vmatpush.bf16.msra.mxu0 %v3673
  %3689 = vmatpush.bf16.msra.mxu0 %v3672
  %3690 = vmatpush.bf16.msra.mxu0 %v3671
  %3691 = vmatpush.bf16.msra.mxu0 %v3670
  %3692 = vmatpush.bf16.msra.mxu0 %v3669
  %3693 = vmatmul.bf16.gmra.mxu0 %v3633
  %v3694 = vpop.f32.mrf.mxu0
  %v3695 = vadd.f32 %v3635, %v3694
  %v3696 = vpop.f32.mrf.mxu0
  %3697 = vdwg.mxu0
  %v3699 = vrot.slane %v3695, 1
  %vm3701 = vcmask 499712
  %3702 = vst.msk [vmem:[%s8] sm:$0x1] %vm3701, %v3695
  %3703 = vst.msk [vmem:[%s8 + $0x8] sm:$0x1] %vm3701, %v3699
  %3704 = vmatpush.bf16.msra.mxu0 %v2981
  %3705 = vmatpush.bf16.msra.mxu0 %v2977
  %3706 = vmatpush.bf16.msra.mxu0 %v2973
  %3707 = vmatpush.bf16.msra.mxu0 %v2969
  %3708 = vmatpush.bf16.msra.mxu0 %v2965
  %3709 = vmatpush.bf16.msra.mxu0 %v2961
  %3710 = vmatpush.bf16.msra.mxu0 %v2957
  %3711 = vmatpush.bf16.msra.mxu0 %v2953
  %3712 = vmatmul.bf16.gmra.mxu0 %v3136
  %v3713 = vpop.f32.mrf.mxu0
  %v3714 = vadd.f32 0.0, %v3713
  %v3715 = vpop.f32.mrf.mxu0
  %3716 = vdwg.mxu0
  %3717 = vmatpush.bf16.msra.mxu0 %v2982
  %3718 = vmatpush.bf16.msra.mxu0 %v2978
  %3719 = vmatpush.bf16.msra.mxu0 %v2974
  %3720 = vmatpush.bf16.msra.mxu0 %v2970
  %3721 = vmatpush.bf16.msra.mxu0 %v2966
  %3722 = vmatpush.bf16.msra.mxu0 %v2962
  %3723 = vmatpush.bf16.msra.mxu0 %v2958
  %3724 = vmatpush.bf16.msra.mxu0 %v2954
  %3725 = vmatmul.bf16.gmra.mxu0 %v3136
  %v3726 = vpop.f32.mrf.mxu0
  %v3727 = vadd.f32 0.0, %v3726
  %v3728 = vpop.f32.mrf.mxu0
  %3729 = vdwg.mxu0
  %3730 = vmatpush.bf16.msra.mxu0 %v2983
  %3731 = vmatpush.bf16.msra.mxu0 %v2979
  %3732 = vmatpush.bf16.msra.mxu0 %v2975
  %3733 = vmatpush.bf16.msra.mxu0 %v2971
  %3734 = vmatpush.bf16.msra.mxu0 %v2967
  %3735 = vmatpush.bf16.msra.mxu0 %v2963
  %3736 = vmatpush.bf16.msra.mxu0 %v2959
  %3737 = vmatpush.bf16.msra.mxu0 %v2955
  %3738 = vmatmul.bf16.gmra.mxu0 %v3136
  %v3739 = vpop.f32.mrf.mxu0
  %v3740 = vadd.f32 0.0, %v3739
  %v3741 = vpop.f32.mrf.mxu0
  %3742 = vdwg.mxu0
  %3743 = vmatpush.bf16.msra.mxu0 %v2984
  %3744 = vmatpush.bf16.msra.mxu0 %v2980
  %3745 = vmatpush.bf16.msra.mxu0 %v2976
  %3746 = vmatpush.bf16.msra.mxu0 %v2972
  %3747 = vmatpush.bf16.msra.mxu0 %v2968
  %3748 = vmatpush.bf16.msra.mxu0 %v2964
  %3749 = vmatpush.bf16.msra.mxu0 %v2960
  %3750 = vmatpush.bf16.msra.mxu0 %v2956
  %3751 = vmatmul.bf16.gmra.mxu0 %v3136
  %v3752 = vpop.f32.mrf.mxu0
  %v3753 = vadd.f32 0.0, %v3752
  %v3754 = vpop.f32.mrf.mxu0
  %3755 = vdwg.mxu0
  %v3760 = vrot.slane %v3714, 6
  %v3761 = vrot.slane %v3727, 6
  %v3762 = vrot.slane %v3740, 6
  %v3763 = vrot.slane %v3753, 6
  %v3768 = vadd.f32 %v2277, %v3760
  %v3769 = vadd.f32 %v2431, %v3761
  %v3770 = vadd.f32 %v2585, %v3762
  %v3771 = vadd.f32 %v2739, %v3763
  %v3772 = vxor.u32 %v3768, 2147483648
  %v3773 = vmul.f32 %v3772, 1.442695
  %v3774 = vpow.pop %v3773
  %v3775 = vadd.f32 %v3774, 1.0
  %v3776 = vrcp.pop %v3775
  %v3777 = vmul.f32 %v3775, %v3776
  %v3778 = vsub.f32 1.0, %v3777
  %v3779 = vmul.f32 %v3776, %v3778
  %v3780 = vadd.f32 %v3776, %v3779
  %vm3781 = vweird.f32 %v3775
  %vm3782 = vweird.f32 %v3776
  %vm3783 = vmor %vm3781, %vm3782
  %v3784 = vsel %vm3783, %v3776, %v3780
  %v3785 = vand.u32 2147483647, %v3775
  %vm3786 = vcmp.eq.f32.partialorder %v3785, 8.507059e+37
  %v3787 = vand.u32 %v3775, 2147483648
  %v3788 = vor.u32 1.1754944e-38, %v3787
  %v3789 = vsel %vm3786, %v3788, %v3784
  %v3790 = vmul.f32 1.0, %v3789
  %v3791 = vxor.u32 %v3769, 2147483648
  %v3792 = vmul.f32 %v3791, 1.442695
  %v3793 = vpow.pop %v3792
  %v3794 = vadd.f32 %v3793, 1.0
  %v3795 = vrcp.pop %v3794
  %v3796 = vmul.f32 %v3794, %v3795
  %v3797 = vsub.f32 1.0, %v3796
  %v3798 = vmul.f32 %v3795, %v3797
  %v3799 = vadd.f32 %v3795, %v3798
  %vm3800 = vweird.f32 %v3794
  %vm3801 = vweird.f32 %v3795
  %vm3802 = vmor %vm3800, %vm3801
  %v3803 = vsel %vm3802, %v3795, %v3799
  %v3804 = vand.u32 2147483647, %v3794
  %vm3805 = vcmp.eq.f32.partialorder %v3804, 8.507059e+37
  %v3806 = vand.u32 %v3794, 2147483648
  %v3807 = vor.u32 1.1754944e-38, %v3806
  %v3808 = vsel %vm3805, %v3807, %v3803
  %v3809 = vmul.f32 1.0, %v3808
  %v3810 = vtanh.pop %v3770
  %v3811 = vxor.u32 %v3771, 2147483648
  %v3812 = vmul.f32 %v3811, 1.442695
  %v3813 = vpow.pop %v3812
  %v3814 = vadd.f32 %v3813, 1.0
  %v3815 = vrcp.pop %v3814
  %v3816 = vmul.f32 %v3814, %v3815
  %v3817 = vsub.f32 1.0, %v3816
  %v3818 = vmul.f32 %v3815, %v3817
  %v3819 = vadd.f32 %v3815, %v3818
  %vm3820 = vweird.f32 %v3814
  %vm3821 = vweird.f32 %v3815
  %vm3822 = vmor %vm3820, %vm3821
  %v3823 = vsel %vm3822, %v3815, %v3819
  %v3824 = vand.u32 2147483647, %v3814
  %vm3825 = vcmp.eq.f32.partialorder %v3824, 8.507059e+37
  %v3826 = vand.u32 %v3814, 2147483648
  %v3827 = vor.u32 1.1754944e-38, %v3826
  %v3828 = vsel %vm3825, %v3827, %v3823
  %v3829 = vmul.f32 1.0, %v3828
  %v3831 = vrot.slane %v3133, 6
  %v3833 = vmul.f32 %v3809, %v3831
  %v3834 = vmul.f32 %v3790, %v3810
  %v3835 = vadd.f32 %v3833, %v3834
  %v3836 = vtanh.pop %v3835
  %v3837 = vmul.f32 %v3829, %v3836
  %v3838 = vpack.c.bf16 %v3837, %v3837
  %v3840 = vunpack.c.l.b16 %v3633
  %v3841 = vpack.c.b16 %v3840, %v3840
  %v3842 = vrot.slane %v3841, 7
  %v3844 = vrot.slane %v3838, 1
  %v3845 = vrot.slane %v3842, 1
  %3848 = vmatpush.bf16.msra.mxu0 %v3366
  %3849 = vmatpush.bf16.msra.mxu0 %v3362
  %3850 = vmatpush.bf16.msra.mxu0 %v3358
  %3851 = vmatpush.bf16.msra.mxu0 %v3354
  %3852 = vmatpush.bf16.msra.mxu0 %v3350
  %3853 = vmatpush.bf16.msra.mxu0 %v3346
  %3854 = vmatpush.bf16.msra.mxu0 %v3342
  %3855 = vmatpush.bf16.msra.mxu0 %v3338
  %3856 = vmatmul.bf16.gmra.mxu0 %v3844
  %v3857 = vpop.f32.mrf.mxu0
  %v3858 = vadd.f32 %v3138, %v3857
  %v3859 = vpop.f32.mrf.mxu0
  %3860 = vdwg.mxu0
  %3861 = vmatpush.bf16.msra.mxu0 %v3398
  %3862 = vmatpush.bf16.msra.mxu0 %v3394
  %3863 = vmatpush.bf16.msra.mxu0 %v3390
  %3864 = vmatpush.bf16.msra.mxu0 %v3386
  %3865 = vmatpush.bf16.msra.mxu0 %v3382
  %3866 = vmatpush.bf16.msra.mxu0 %v3378
  %3867 = vmatpush.bf16.msra.mxu0 %v3374
  %3868 = vmatpush.bf16.msra.mxu0 %v3370
  %3869 = vmatmul.bf16.gmra.mxu0 %v3845
  %v3870 = vpop.f32.mrf.mxu0
  %v3871 = vadd.f32 %v3858, %v3870
  %v3872 = vpop.f32.mrf.mxu0
  %3873 = vdwg.mxu0
  %3874 = vmatpush.bf16.msra.mxu0 %v3367
  %3875 = vmatpush.bf16.msra.mxu0 %v3363
  %3876 = vmatpush.bf16.msra.mxu0 %v3359
  %3877 = vmatpush.bf16.msra.mxu0 %v3355
  %3878 = vmatpush.bf16.msra.mxu0 %v3351
  %3879 = vmatpush.bf16.msra.mxu0 %v3347
  %3880 = vmatpush.bf16.msra.mxu0 %v3343
  %3881 = vmatpush.bf16.msra.mxu0 %v3339
  %3882 = vmatmul.bf16.gmra.mxu0 %v3844
  %v3883 = vpop.f32.mrf.mxu0
  %v3884 = vadd.f32 %v3139, %v3883
  %v3885 = vpop.f32.mrf.mxu0
  %3886 = vdwg.mxu0
  %3887 = vmatpush.bf16.msra.mxu0 %v3399
  %3888 = vmatpush.bf16.msra.mxu0 %v3395
  %3889 = vmatpush.bf16.msra.mxu0 %v3391
  %3890 = vmatpush.bf16.msra.mxu0 %v3387
  %3891 = vmatpush.bf16.msra.mxu0 %v3383
  %3892 = vmatpush.bf16.msra.mxu0 %v3379
  %3893 = vmatpush.bf16.msra.mxu0 %v3375
  %3894 = vmatpush.bf16.msra.mxu0 %v3371
  %3895 = vmatmul.bf16.gmra.mxu0 %v3845
  %v3896 = vpop.f32.mrf.mxu0
  %v3897 = vadd.f32 %v3884, %v3896
  %v3898 = vpop.f32.mrf.mxu0
  %3899 = vdwg.mxu0
  %3900 = vmatpush.bf16.msra.mxu0 %v3368
  %3901 = vmatpush.bf16.msra.mxu0 %v3364
  %3902 = vmatpush.bf16.msra.mxu0 %v3360
  %3903 = vmatpush.bf16.msra.mxu0 %v3356
  %3904 = vmatpush.bf16.msra.mxu0 %v3352
  %3905 = vmatpush.bf16.msra.mxu0 %v3348
  %3906 = vmatpush.bf16.msra.mxu0 %v3344
  %3907 = vmatpush.bf16.msra.mxu0 %v3340
  %3908 = vmatmul.bf16.gmra.mxu0 %v3844
  %v3909 = vpop.f32.mrf.mxu0
  %v3910 = vadd.f32 %v3140, %v3909
  %v3911 = vpop.f32.mrf.mxu0
  %3912 = vdwg.mxu0
  %3913 = vmatpush.bf16.msra.mxu0 %v3400
  %3914 = vmatpush.bf16.msra.mxu0 %v3396
  %3915 = vmatpush.bf16.msra.mxu0 %v3392
  %3916 = vmatpush.bf16.msra.mxu0 %v3388
  %3917 = vmatpush.bf16.msra.mxu0 %v3384
  %3918 = vmatpush.bf16.msra.mxu0 %v3380
  %3919 = vmatpush.bf16.msra.mxu0 %v3376
  %3920 = vmatpush.bf16.msra.mxu0 %v3372
  %3921 = vmatmul.bf16.gmra.mxu0 %v3845
  %v3922 = vpop.f32.mrf.mxu0
  %v3923 = vadd.f32 %v3910, %v3922
  %v3924 = vpop.f32.mrf.mxu0
  %3925 = vdwg.mxu0
  %3926 = vmatpush.bf16.msra.mxu0 %v3369
  %3927 = vmatpush.bf16.msra.mxu0 %v3365
  %3928 = vmatpush.bf16.msra.mxu0 %v3361
  %3929 = vmatpush.bf16.msra.mxu0 %v3357
  %3930 = vmatpush.bf16.msra.mxu0 %v3353
  %3931 = vmatpush.bf16.msra.mxu0 %v3349
  %3932 = vmatpush.bf16.msra.mxu0 %v3345
  %3933 = vmatpush.bf16.msra.mxu0 %v3341
  %3934 = vmatmul.bf16.gmra.mxu0 %v3844
  %v3935 = vpop.f32.mrf.mxu0
  %v3936 = vadd.f32 %v3141, %v3935
  %v3937 = vpop.f32.mrf.mxu0
  %3938 = vdwg.mxu0
  %3939 = vmatpush.bf16.msra.mxu0 %v3401
  %3940 = vmatpush.bf16.msra.mxu0 %v3397
  %3941 = vmatpush.bf16.msra.mxu0 %v3393
  %3942 = vmatpush.bf16.msra.mxu0 %v3389
  %3943 = vmatpush.bf16.msra.mxu0 %v3385
  %3944 = vmatpush.bf16.msra.mxu0 %v3381
  %3945 = vmatpush.bf16.msra.mxu0 %v3377
  %3946 = vmatpush.bf16.msra.mxu0 %v3373
  %3947 = vmatmul.bf16.gmra.mxu0 %v3845
  %v3948 = vpop.f32.mrf.mxu0
  %v3949 = vadd.f32 %v3936, %v3948
  %v3950 = vpop.f32.mrf.mxu0
  %3951 = vdwg.mxu0
  %v3952 = vxor.u32 %v3871, 2147483648
  %v3953 = vmul.f32 %v3952, 1.442695
  %v3954 = vpow.pop %v3953
  %v3955 = vadd.f32 %v3954, 1.0
  %v3956 = vrcp.pop %v3955
  %v3957 = vmul.f32 %v3955, %v3956
  %v3958 = vsub.f32 1.0, %v3957
  %v3959 = vmul.f32 %v3956, %v3958
  %v3960 = vadd.f32 %v3956, %v3959
  %vm3961 = vweird.f32 %v3955
  %vm3962 = vweird.f32 %v3956
  %vm3963 = vmor %vm3961, %vm3962
  %v3964 = vsel %vm3963, %v3956, %v3960
  %v3965 = vand.u32 2147483647, %v3955
  %vm3966 = vcmp.eq.f32.partialorder %v3965, 8.507059e+37
  %v3967 = vand.u32 %v3955, 2147483648
  %v3968 = vor.u32 1.1754944e-38, %v3967
  %v3969 = vsel %vm3966, %v3968, %v3964
  %v3970 = vmul.f32 1.0, %v3969
  %v3971 = vxor.u32 %v3897, 2147483648
  %v3972 = vmul.f32 %v3971, 1.442695
  %v3973 = vpow.pop %v3972
  %v3974 = vadd.f32 %v3973, 1.0
  %v3975 = vrcp.pop %v3974
  %v3976 = vmul.f32 %v3974, %v3975
  %v3977 = vsub.f32 1.0, %v3976
  %v3978 = vmul.f32 %v3975, %v3977
  %v3979 = vadd.f32 %v3975, %v3978
  %vm3980 = vweird.f32 %v3974
  %vm3981 = vweird.f32 %v3975
  %vm3982 = vmor %vm3980, %vm3981
  %v3983 = vsel %vm3982, %v3975, %v3979
  %v3984 = vand.u32 2147483647, %v3974
  %vm3985 = vcmp.eq.f32.partialorder %v3984, 8.507059e+37
  %v3986 = vand.u32 %v3974, 2147483648
  %v3987 = vor.u32 1.1754944e-38, %v3986
  %v3988 = vsel %vm3985, %v3987, %v3983
  %v3989 = vmul.f32 1.0, %v3988
  %v3990 = vtanh.pop %v3923
  %v3991 = vxor.u32 %v3949, 2147483648
  %v3992 = vmul.f32 %v3991, 1.442695
  %v3993 = vpow.pop %v3992
  %v3994 = vadd.f32 %v3993, 1.0
  %v3995 = vrcp.pop %v3994
  %v3996 = vmul.f32 %v3994, %v3995
  %v3997 = vsub.f32 1.0, %v3996
  %v3998 = vmul.f32 %v3995, %v3997
  %v3999 = vadd.f32 %v3995, %v3998
  %vm4000 = vweird.f32 %v3994
  %vm4001 = vweird.f32 %v3995
  %vm4002 = vmor %vm4000, %vm4001
  %v4003 = vsel %vm4002, %v3995, %v3999
  %v4004 = vand.u32 2147483647, %v3994
  %vm4005 = vcmp.eq.f32.partialorder %v4004, 8.507059e+37
  %v4006 = vand.u32 %v3994, 2147483648
  %v4007 = vor.u32 1.1754944e-38, %v4006
  %v4008 = vsel %vm4005, %v4007, %v4003
  %v4009 = vmul.f32 1.0, %v4008
  %v4010 = vmul.f32 %v3989, %v3630
  %v4011 = vmul.f32 %v3970, %v3990
  %v4012 = vadd.f32 %v4010, %v4011
  %v4013 = vtanh.pop %v4012
  %v4014 = vmul.f32 %v4009, %v4013
  %v4015 = vpack.c.bf16 %v4014, %v4014
  %4016 = vmatpush.bf16.msra.mxu0 %v3676
  %4017 = vmatpush.bf16.msra.mxu0 %v3675
  %4018 = vmatpush.bf16.msra.mxu0 %v3674
  %4019 = vmatpush.bf16.msra.mxu0 %v3673
  %4020 = vmatpush.bf16.msra.mxu0 %v3672
  %4021 = vmatpush.bf16.msra.mxu0 %v3671
  %4022 = vmatpush.bf16.msra.mxu0 %v3670
  %4023 = vmatpush.bf16.msra.mxu0 %v3669
  %4024 = vmatmul.bf16.gmra.mxu0 %v4015
  %v4025 = vpop.f32.mrf.mxu0
  %v4026 = vadd.f32 %v3635, %v4025
  %v4027 = vpop.f32.mrf.mxu0
  %4028 = vdwg.mxu0
  %v4030 = vrot.slane %v4026, 1
  %4032 = vst.msk [vmem:[%s8 + $0x1] sm:$0x1] %vm3701, %v4026
  %4033 = vst.msk [vmem:[%s8 + $0x9] sm:$0x1] %vm3701, %v4030
  %v4034 = vunpack.c.l.b16 %v3838
  %v4035 = vpack.c.b16 %v4034, %v4034
  %v4036 = vrot.slane %v4035, 1
  %4038 = vmatpush.bf16.msra.mxu0 %v2981
  %4039 = vmatpush.bf16.msra.mxu0 %v2977
  %4040 = vmatpush.bf16.msra.mxu0 %v2973
  %4041 = vmatpush.bf16.msra.mxu0 %v2969
  %4042 = vmatpush.bf16.msra.mxu0 %v2965
  %4043 = vmatpush.bf16.msra.mxu0 %v2961
  %4044 = vmatpush.bf16.msra.mxu0 %v2957
  %4045 = vmatpush.bf16.msra.mxu0 %v2953
  %4046 = vmatmul.bf16.gmra.mxu0 %v4036
  %v4047 = vpop.f32.mrf.mxu0
  %v4048 = vadd.f32 0.0, %v4047
  %v4049 = vpop.f32.mrf.mxu0
  %4050 = vdwg.mxu0
  %4051 = vmatpush.bf16.msra.mxu0 %v2982
  %4052 = vmatpush.bf16.msra.mxu0 %v2978
  %4053 = vmatpush.bf16.msra.mxu0 %v2974
  %4054 = vmatpush.bf16.msra.mxu0 %v2970
  %4055 = vmatpush.bf16.msra.mxu0 %v2966
  %4056 = vmatpush.bf16.msra.mxu0 %v2962
  %4057 = vmatpush.bf16.msra.mxu0 %v2958
  %4058 = vmatpush.bf16.msra.mxu0 %v2954
  %4059 = vmatmul.bf16.gmra.mxu0 %v4036
  %v4060 = vpop.f32.mrf.mxu0
  %v4061 = vadd.f32 0.0, %v4060
  %v4062 = vpop.f32.mrf.mxu0
  %4063 = vdwg.mxu0
  %4064 = vmatpush.bf16.msra.mxu0 %v2983
  %4065 = vmatpush.bf16.msra.mxu0 %v2979
  %4066 = vmatpush.bf16.msra.mxu0 %v2975
  %4067 = vmatpush.bf16.msra.mxu0 %v2971
  %4068 = vmatpush.bf16.msra.mxu0 %v2967
  %4069 = vmatpush.bf16.msra.mxu0 %v2963
  %4070 = vmatpush.bf16.msra.mxu0 %v2959
  %4071 = vmatpush.bf16.msra.mxu0 %v2955
  %4072 = vmatmul.bf16.gmra.mxu0 %v4036
  %v4073 = vpop.f32.mrf.mxu0
  %v4074 = vadd.f32 0.0, %v4073
  %v4075 = vpop.f32.mrf.mxu0
  %4076 = vdwg.mxu0
  %4077 = vmatpush.bf16.msra.mxu0 %v2984
  %4078 = vmatpush.bf16.msra.mxu0 %v2980
  %4079 = vmatpush.bf16.msra.mxu0 %v2976
  %4080 = vmatpush.bf16.msra.mxu0 %v2972
  %4081 = vmatpush.bf16.msra.mxu0 %v2968
  %4082 = vmatpush.bf16.msra.mxu0 %v2964
  %4083 = vmatpush.bf16.msra.mxu0 %v2960
  %4084 = vmatpush.bf16.msra.mxu0 %v2956
  %4085 = vmatmul.bf16.gmra.mxu0 %v4036
  %v4086 = vpop.f32.mrf.mxu0
  %v4087 = vadd.f32 0.0, %v4086
  %v4088 = vpop.f32.mrf.mxu0
  %4089 = vdwg.mxu0
  %v4094 = vrot.slane %v4048, 4
  %v4095 = vrot.slane %v4061, 4
  %v4096 = vrot.slane %v4074, 4
  %v4097 = vrot.slane %v4087, 4
  %v4102 = vadd.f32 %v2277, %v4094
  %v4103 = vadd.f32 %v2431, %v4095
  %v4104 = vadd.f32 %v2585, %v4096
  %v4105 = vadd.f32 %v2739, %v4097
  %v4106 = vxor.u32 %v4102, 2147483648
  %v4107 = vmul.f32 %v4106, 1.442695
  %v4108 = vpow.pop %v4107
  %v4109 = vadd.f32 %v4108, 1.0
  %v4110 = vrcp.pop %v4109
  %v4111 = vmul.f32 %v4109, %v4110
  %v4112 = vsub.f32 1.0, %v4111
  %v4113 = vmul.f32 %v4110, %v4112
  %v4114 = vadd.f32 %v4110, %v4113
  %vm4115 = vweird.f32 %v4109
  %vm4116 = vweird.f32 %v4110
  %vm4117 = vmor %vm4115, %vm4116
  %v4118 = vsel %vm4117, %v4110, %v4114
  %v4119 = vand.u32 2147483647, %v4109
  %vm4120 = vcmp.eq.f32.partialorder %v4119, 8.507059e+37
  %v4121 = vand.u32 %v4109, 2147483648
  %v4122 = vor.u32 1.1754944e-38, %v4121
  %v4123 = vsel %vm4120, %v4122, %v4118
  %v4124 = vmul.f32 1.0, %v4123
  %v4125 = vxor.u32 %v4103, 2147483648
  %v4126 = vmul.f32 %v4125, 1.442695
  %v4127 = vpow.pop %v4126
  %v4128 = vadd.f32 %v4127, 1.0
  %v4129 = vrcp.pop %v4128
  %v4130 = vmul.f32 %v4128, %v4129
  %v4131 = vsub.f32 1.0, %v4130
  %v4132 = vmul.f32 %v4129, %v4131
  %v4133 = vadd.f32 %v4129, %v4132
  %vm4134 = vweird.f32 %v4128
  %vm4135 = vweird.f32 %v4129
  %vm4136 = vmor %vm4134, %vm4135
  %v4137 = vsel %vm4136, %v4129, %v4133
  %v4138 = vand.u32 2147483647, %v4128
  %vm4139 = vcmp.eq.f32.partialorder %v4138, 8.507059e+37
  %v4140 = vand.u32 %v4128, 2147483648
  %v4141 = vor.u32 1.1754944e-38, %v4140
  %v4142 = vsel %vm4139, %v4141, %v4137
  %v4143 = vmul.f32 1.0, %v4142
  %v4144 = vtanh.pop %v4104
  %v4145 = vxor.u32 %v4105, 2147483648
  %v4146 = vmul.f32 %v4145, 1.442695
  %v4147 = vpow.pop %v4146
  %v4148 = vadd.f32 %v4147, 1.0
  %v4149 = vrcp.pop %v4148
  %v4150 = vmul.f32 %v4148, %v4149
  %v4151 = vsub.f32 1.0, %v4150
  %v4152 = vmul.f32 %v4149, %v4151
  %v4153 = vadd.f32 %v4149, %v4152
  %vm4154 = vweird.f32 %v4148
  %vm4155 = vweird.f32 %v4149
  %vm4156 = vmor %vm4154, %vm4155
  %v4157 = vsel %vm4156, %v4149, %v4153
  %v4158 = vand.u32 2147483647, %v4148
  %vm4159 = vcmp.eq.f32.partialorder %v4158, 8.507059e+37
  %v4160 = vand.u32 %v4148, 2147483648
  %v4161 = vor.u32 1.1754944e-38, %v4160
  %v4162 = vsel %vm4159, %v4161, %v4157
  %v4163 = vmul.f32 1.0, %v4162
  %v4165 = vrot.slane %v3835, 6
  %v4167 = vmul.f32 %v4143, %v4165
  %v4168 = vmul.f32 %v4124, %v4144
  %v4169 = vadd.f32 %v4167, %v4168
  %v4170 = vtanh.pop %v4169
  %v4171 = vmul.f32 %v4163, %v4170
  %v4172 = vpack.c.bf16 %v4171, %v4171
  %v4174 = vunpack.c.l.b16 %v4015
  %v4175 = vpack.c.b16 %v4174, %v4174
  %v4176 = vrot.slane %v4175, 6
  %v4178 = vrot.slane %v4172, 2
  %v4179 = vrot.slane %v4176, 2
  %4182 = vmatpush.bf16.msra.mxu0 %v3366
  %4183 = vmatpush.bf16.msra.mxu0 %v3362
  %4184 = vmatpush.bf16.msra.mxu0 %v3358
  %4185 = vmatpush.bf16.msra.mxu0 %v3354
  %4186 = vmatpush.bf16.msra.mxu0 %v3350
  %4187 = vmatpush.bf16.msra.mxu0 %v3346
  %4188 = vmatpush.bf16.msra.mxu0 %v3342
  %4189 = vmatpush.bf16.msra.mxu0 %v3338
  %4190 = vmatmul.bf16.gmra.mxu0 %v4178
  %v4191 = vpop.f32.mrf.mxu0
  %v4192 = vadd.f32 %v3138, %v4191
  %v4193 = vpop.f32.mrf.mxu0
  %4194 = vdwg.mxu0
  %4195 = vmatpush.bf16.msra.mxu0 %v3398
  %4196 = vmatpush.bf16.msra.mxu0 %v3394
  %4197 = vmatpush.bf16.msra.mxu0 %v3390
  %4198 = vmatpush.bf16.msra.mxu0 %v3386
  %4199 = vmatpush.bf16.msra.mxu0 %v3382
  %4200 = vmatpush.bf16.msra.mxu0 %v3378
  %4201 = vmatpush.bf16.msra.mxu0 %v3374
  %4202 = vmatpush.bf16.msra.mxu0 %v3370
  %4203 = vmatmul.bf16.gmra.mxu0 %v4179
  %v4204 = vpop.f32.mrf.mxu0
  %v4205 = vadd.f32 %v4192, %v4204
  %v4206 = vpop.f32.mrf.mxu0
  %4207 = vdwg.mxu0
  %4208 = vmatpush.bf16.msra.mxu0 %v3367
  %4209 = vmatpush.bf16.msra.mxu0 %v3363
  %4210 = vmatpush.bf16.msra.mxu0 %v3359
  %4211 = vmatpush.bf16.msra.mxu0 %v3355
  %4212 = vmatpush.bf16.msra.mxu0 %v3351
  %4213 = vmatpush.bf16.msra.mxu0 %v3347
  %4214 = vmatpush.bf16.msra.mxu0 %v3343
  %4215 = vmatpush.bf16.msra.mxu0 %v3339
  %4216 = vmatmul.bf16.gmra.mxu0 %v4178
  %v4217 = vpop.f32.mrf.mxu0
  %v4218 = vadd.f32 %v3139, %v4217
  %v4219 = vpop.f32.mrf.mxu0
  %4220 = vdwg.mxu0
  %4221 = vmatpush.bf16.msra.mxu0 %v3399
  %4222 = vmatpush.bf16.msra.mxu0 %v3395
  %4223 = vmatpush.bf16.msra.mxu0 %v3391
  %4224 = vmatpush.bf16.msra.mxu0 %v3387
  %4225 = vmatpush.bf16.msra.mxu0 %v3383
  %4226 = vmatpush.bf16.msra.mxu0 %v3379
  %4227 = vmatpush.bf16.msra.mxu0 %v3375
  %4228 = vmatpush.bf16.msra.mxu0 %v3371
  %4229 = vmatmul.bf16.gmra.mxu0 %v4179
  %v4230 = vpop.f32.mrf.mxu0
  %v4231 = vadd.f32 %v4218, %v4230
  %v4232 = vpop.f32.mrf.mxu0
  %4233 = vdwg.mxu0
  %4234 = vmatpush.bf16.msra.mxu0 %v3368
  %4235 = vmatpush.bf16.msra.mxu0 %v3364
  %4236 = vmatpush.bf16.msra.mxu0 %v3360
  %4237 = vmatpush.bf16.msra.mxu0 %v3356
  %4238 = vmatpush.bf16.msra.mxu0 %v3352
  %4239 = vmatpush.bf16.msra.mxu0 %v3348
  %4240 = vmatpush.bf16.msra.mxu0 %v3344
  %4241 = vmatpush.bf16.msra.mxu0 %v3340
  %4242 = vmatmul.bf16.gmra.mxu0 %v4178
  %v4243 = vpop.f32.mrf.mxu0
  %v4244 = vadd.f32 %v3140, %v4243
  %v4245 = vpop.f32.mrf.mxu0
  %4246 = vdwg.mxu0
  %4247 = vmatpush.bf16.msra.mxu0 %v3400
  %4248 = vmatpush.bf16.msra.mxu0 %v3396
  %4249 = vmatpush.bf16.msra.mxu0 %v3392
  %4250 = vmatpush.bf16.msra.mxu0 %v3388
  %4251 = vmatpush.bf16.msra.mxu0 %v3384
  %4252 = vmatpush.bf16.msra.mxu0 %v3380
  %4253 = vmatpush.bf16.msra.mxu0 %v3376
  %4254 = vmatpush.bf16.msra.mxu0 %v3372
  %4255 = vmatmul.bf16.gmra.mxu0 %v4179
  %v4256 = vpop.f32.mrf.mxu0
  %v4257 = vadd.f32 %v4244, %v4256
  %v4258 = vpop.f32.mrf.mxu0
  %4259 = vdwg.mxu0
  %4260 = vmatpush.bf16.msra.mxu0 %v3369
  %4261 = vmatpush.bf16.msra.mxu0 %v3365
  %4262 = vmatpush.bf16.msra.mxu0 %v3361
  %4263 = vmatpush.bf16.msra.mxu0 %v3357
  %4264 = vmatpush.bf16.msra.mxu0 %v3353
  %4265 = vmatpush.bf16.msra.mxu0 %v3349
  %4266 = vmatpush.bf16.msra.mxu0 %v3345
  %4267 = vmatpush.bf16.msra.mxu0 %v3341
  %4268 = vmatmul.bf16.gmra.mxu0 %v4178
  %v4269 = vpop.f32.mrf.mxu0
  %v4270 = vadd.f32 %v3141, %v4269
  %v4271 = vpop.f32.mrf.mxu0
  %4272 = vdwg.mxu0
  %4273 = vmatpush.bf16.msra.mxu0 %v3401
  %4274 = vmatpush.bf16.msra.mxu0 %v3397
  %4275 = vmatpush.bf16.msra.mxu0 %v3393
  %4276 = vmatpush.bf16.msra.mxu0 %v3389
  %4277 = vmatpush.bf16.msra.mxu0 %v3385
  %4278 = vmatpush.bf16.msra.mxu0 %v3381
  %4279 = vmatpush.bf16.msra.mxu0 %v3377
  %4280 = vmatpush.bf16.msra.mxu0 %v3373
  %4281 = vmatmul.bf16.gmra.mxu0 %v4179
  %v4282 = vpop.f32.mrf.mxu0
  %v4283 = vadd.f32 %v4270, %v4282
  %v4284 = vpop.f32.mrf.mxu0
  %4285 = vdwg.mxu0
  %v4286 = vxor.u32 %v4205, 2147483648
  %v4287 = vmul.f32 %v4286, 1.442695
  %v4288 = vpow.pop %v4287
  %v4289 = vadd.f32 %v4288, 1.0
  %v4290 = vrcp.pop %v4289
  %v4291 = vmul.f32 %v4289, %v4290
  %v4292 = vsub.f32 1.0, %v4291
  %v4293 = vmul.f32 %v4290, %v4292
  %v4294 = vadd.f32 %v4290, %v4293
  %vm4295 = vweird.f32 %v4289
  %vm4296 = vweird.f32 %v4290
  %vm4297 = vmor %vm4295, %vm4296
  %v4298 = vsel %vm4297, %v4290, %v4294
  %v4299 = vand.u32 2147483647, %v4289
  %vm4300 = vcmp.eq.f32.partialorder %v4299, 8.507059e+37
  %v4301 = vand.u32 %v4289, 2147483648
  %v4302 = vor.u32 1.1754944e-38, %v4301
  %v4303 = vsel %vm4300, %v4302, %v4298
  %v4304 = vmul.f32 1.0, %v4303
  %v4305 = vxor.u32 %v4231, 2147483648
  %v4306 = vmul.f32 %v4305, 1.442695
  %v4307 = vpow.pop %v4306
  %v4308 = vadd.f32 %v4307, 1.0
  %v4309 = vrcp.pop %v4308
  %v4310 = vmul.f32 %v4308, %v4309
  %v4311 = vsub.f32 1.0, %v4310
  %v4312 = vmul.f32 %v4309, %v4311
  %v4313 = vadd.f32 %v4309, %v4312
  %vm4314 = vweird.f32 %v4308
  %vm4315 = vweird.f32 %v4309
  %vm4316 = vmor %vm4314, %vm4315
  %v4317 = vsel %vm4316, %v4309, %v4313
  %v4318 = vand.u32 2147483647, %v4308
  %vm4319 = vcmp.eq.f32.partialorder %v4318, 8.507059e+37
  %v4320 = vand.u32 %v4308, 2147483648
  %v4321 = vor.u32 1.1754944e-38, %v4320
  %v4322 = vsel %vm4319, %v4321, %v4317
  %v4323 = vmul.f32 1.0, %v4322
  %v4324 = vtanh.pop %v4257
  %v4325 = vxor.u32 %v4283, 2147483648
  %v4326 = vmul.f32 %v4325, 1.442695
  %v4327 = vpow.pop %v4326
  %v4328 = vadd.f32 %v4327, 1.0
  %v4329 = vrcp.pop %v4328
  %v4330 = vmul.f32 %v4328, %v4329
  %v4331 = vsub.f32 1.0, %v4330
  %v4332 = vmul.f32 %v4329, %v4331
  %v4333 = vadd.f32 %v4329, %v4332
  %vm4334 = vweird.f32 %v4328
  %vm4335 = vweird.f32 %v4329
  %vm4336 = vmor %vm4334, %vm4335
  %v4337 = vsel %vm4336, %v4329, %v4333
  %v4338 = vand.u32 2147483647, %v4328
  %vm4339 = vcmp.eq.f32.partialorder %v4338, 8.507059e+37
  %v4340 = vand.u32 %v4328, 2147483648
  %v4341 = vor.u32 1.1754944e-38, %v4340
  %v4342 = vsel %vm4339, %v4341, %v4337
  %v4343 = vmul.f32 1.0, %v4342
  %v4344 = vmul.f32 %v4323, %v4012
  %v4345 = vmul.f32 %v4304, %v4324
  %v4346 = vadd.f32 %v4344, %v4345
  %v4347 = vtanh.pop %v4346
  %v4348 = vmul.f32 %v4343, %v4347
  %v4349 = vpack.c.bf16 %v4348, %v4348
  %4350 = vmatpush.bf16.msra.mxu0 %v3676
  %4351 = vmatpush.bf16.msra.mxu0 %v3675
  %4352 = vmatpush.bf16.msra.mxu0 %v3674
  %4353 = vmatpush.bf16.msra.mxu0 %v3673
  %4354 = vmatpush.bf16.msra.mxu0 %v3672
  %4355 = vmatpush.bf16.msra.mxu0 %v3671
  %4356 = vmatpush.bf16.msra.mxu0 %v3670
  %4357 = vmatpush.bf16.msra.mxu0 %v3669
  %4358 = vmatmul.bf16.gmra.mxu0 %v4349
  %v4359 = vpop.f32.mrf.mxu0
  %v4360 = vadd.f32 %v3635, %v4359
  %v4361 = vpop.f32.mrf.mxu0
  %4362 = vdwg.mxu0
  %v4364 = vrot.slane %v4360, 1
  %4366 = vst.msk [vmem:[%s8 + $0x2] sm:$0x1] %vm3701, %v4360
  %4367 = vst.msk [vmem:[%s8 + $0xa] sm:$0x1] %vm3701, %v4364
  %v4368 = vunpack.c.l.b16 %v4172
  %v4369 = vpack.c.b16 %v4368, %v4368
  %v4370 = vrot.slane %v4369, 2
  %4372 = vmatpush.bf16.msra.mxu0 %v2981
  %4373 = vmatpush.bf16.msra.mxu0 %v2977
  %4374 = vmatpush.bf16.msra.mxu0 %v2973
  %4375 = vmatpush.bf16.msra.mxu0 %v2969
  %4376 = vmatpush.bf16.msra.mxu0 %v2965
  %4377 = vmatpush.bf16.msra.mxu0 %v2961
  %4378 = vmatpush.bf16.msra.mxu0 %v2957
  %4379 = vmatpush.bf16.msra.mxu0 %v2953
  %4380 = vmatmul.bf16.gmra.mxu0 %v4370
  %v4381 = vpop.f32.mrf.mxu0
  %v4382 = vadd.f32 0.0, %v4381
  %v4383 = vpop.f32.mrf.mxu0
  %4384 = vdwg.mxu0
  %4385 = vmatpush.bf16.msra.mxu0 %v2982
  %4386 = vmatpush.bf16.msra.mxu0 %v2978
  %4387 = vmatpush.bf16.msra.mxu0 %v2974
  %4388 = vmatpush.bf16.msra.mxu0 %v2970
  %4389 = vmatpush.bf16.msra.mxu0 %v2966
  %4390 = vmatpush.bf16.msra.mxu0 %v2962
  %4391 = vmatpush.bf16.msra.mxu0 %v2958
  %4392 = vmatpush.bf16.msra.mxu0 %v2954
  %4393 = vmatmul.bf16.gmra.mxu0 %v4370
  %v4394 = vpop.f32.mrf.mxu0
  %v4395 = vadd.f32 0.0, %v4394
  %v4396 = vpop.f32.mrf.mxu0
  %4397 = vdwg.mxu0
  %4398 = vmatpush.bf16.msra.mxu0 %v2983
  %4399 = vmatpush.bf16.msra.mxu0 %v2979
  %4400 = vmatpush.bf16.msra.mxu0 %v2975
  %4401 = vmatpush.bf16.msra.mxu0 %v2971
  %4402 = vmatpush.bf16.msra.mxu0 %v2967
  %4403 = vmatpush.bf16.msra.mxu0 %v2963
  %4404 = vmatpush.bf16.msra.mxu0 %v2959
  %4405 = vmatpush.bf16.msra.mxu0 %v2955
  %4406 = vmatmul.bf16.gmra.mxu0 %v4370
  %v4407 = vpop.f32.mrf.mxu0
  %v4408 = vadd.f32 0.0, %v4407
  %v4409 = vpop.f32.mrf.mxu0
  %4410 = vdwg.mxu0
  %4411 = vmatpush.bf16.msra.mxu0 %v2984
  %4412 = vmatpush.bf16.msra.mxu0 %v2980
  %4413 = vmatpush.bf16.msra.mxu0 %v2976
  %4414 = vmatpush.bf16.msra.mxu0 %v2972
  %4415 = vmatpush.bf16.msra.mxu0 %v2968
  %4416 = vmatpush.bf16.msra.mxu0 %v2964
  %4417 = vmatpush.bf16.msra.mxu0 %v2960
  %4418 = vmatpush.bf16.msra.mxu0 %v2956
  %4419 = vmatmul.bf16.gmra.mxu0 %v4370
  %v4420 = vpop.f32.mrf.mxu0
  %v4421 = vadd.f32 0.0, %v4420
  %v4422 = vpop.f32.mrf.mxu0
  %4423 = vdwg.mxu0
  %v4428 = vrot.slane %v4382, 2
  %v4429 = vrot.slane %v4395, 2
  %v4430 = vrot.slane %v4408, 2
  %v4431 = vrot.slane %v4421, 2
  %v4436 = vadd.f32 %v2277, %v4428
  %v4437 = vadd.f32 %v2431, %v4429
  %v4438 = vadd.f32 %v2585, %v4430
  %v4439 = vadd.f32 %v2739, %v4431
  %v4440 = vxor.u32 %v4436, 2147483648
  %v4441 = vmul.f32 %v4440, 1.442695
  %v4442 = vpow.pop %v4441
  %v4443 = vadd.f32 %v4442, 1.0
  %v4444 = vrcp.pop %v4443
  %v4445 = vmul.f32 %v4443, %v4444
  %v4446 = vsub.f32 1.0, %v4445
  %v4447 = vmul.f32 %v4444, %v4446
  %v4448 = vadd.f32 %v4444, %v4447
  %vm4449 = vweird.f32 %v4443
  %vm4450 = vweird.f32 %v4444
  %vm4451 = vmor %vm4449, %vm4450
  %v4452 = vsel %vm4451, %v4444, %v4448
  %v4453 = vand.u32 2147483647, %v4443
  %vm4454 = vcmp.eq.f32.partialorder %v4453, 8.507059e+37
  %v4455 = vand.u32 %v4443, 2147483648
  %v4456 = vor.u32 1.1754944e-38, %v4455
  %v4457 = vsel %vm4454, %v4456, %v4452
  %v4458 = vmul.f32 1.0, %v4457
  %v4459 = vxor.u32 %v4437, 2147483648
  %v4460 = vmul.f32 %v4459, 1.442695
  %v4461 = vpow.pop %v4460
  %v4462 = vadd.f32 %v4461, 1.0
  %v4463 = vrcp.pop %v4462
  %v4464 = vmul.f32 %v4462, %v4463
  %v4465 = vsub.f32 1.0, %v4464
  %v4466 = vmul.f32 %v4463, %v4465
  %v4467 = vadd.f32 %v4463, %v4466
  %vm4468 = vweird.f32 %v4462
  %vm4469 = vweird.f32 %v4463
  %vm4470 = vmor %vm4468, %vm4469
  %v4471 = vsel %vm4470, %v4463, %v4467
  %v4472 = vand.u32 2147483647, %v4462
  %vm4473 = vcmp.eq.f32.partialorder %v4472, 8.507059e+37
  %v4474 = vand.u32 %v4462, 2147483648
  %v4475 = vor.u32 1.1754944e-38, %v4474
  %v4476 = vsel %vm4473, %v4475, %v4471
  %v4477 = vmul.f32 1.0, %v4476
  %v4478 = vtanh.pop %v4438
  %v4479 = vxor.u32 %v4439, 2147483648
  %v4480 = vmul.f32 %v4479, 1.442695
  %v4481 = vpow.pop %v4480
  %v4482 = vadd.f32 %v4481, 1.0
  %v4483 = vrcp.pop %v4482
  %v4484 = vmul.f32 %v4482, %v4483
  %v4485 = vsub.f32 1.0, %v4484
  %v4486 = vmul.f32 %v4483, %v4485
  %v4487 = vadd.f32 %v4483, %v4486
  %vm4488 = vweird.f32 %v4482
  %vm4489 = vweird.f32 %v4483
  %vm4490 = vmor %vm4488, %vm4489
  %v4491 = vsel %vm4490, %v4483, %v4487
  %v4492 = vand.u32 2147483647, %v4482
  %vm4493 = vcmp.eq.f32.partialorder %v4492, 8.507059e+37
  %v4494 = vand.u32 %v4482, 2147483648
  %v4495 = vor.u32 1.1754944e-38, %v4494
  %v4496 = vsel %vm4493, %v4495, %v4491
  %v4497 = vmul.f32 1.0, %v4496
  %v4499 = vrot.slane %v4169, 6
  %v4501 = vmul.f32 %v4477, %v4499
  %v4502 = vmul.f32 %v4458, %v4478
  %v4503 = vadd.f32 %v4501, %v4502
  %v4504 = vtanh.pop %v4503
  %v4505 = vmul.f32 %v4497, %v4504
  %v4506 = vpack.c.bf16 %v4505, %v4505
  %v4508 = vunpack.c.l.b16 %v4349
  %v4509 = vpack.c.b16 %v4508, %v4508
  %v4510 = vrot.slane %v4509, 5
  %v4512 = vrot.slane %v4506, 3
  %v4513 = vrot.slane %v4510, 3
  %4516 = vmatpush.bf16.msra.mxu0 %v3366
  %4517 = vmatpush.bf16.msra.mxu0 %v3362
  %4518 = vmatpush.bf16.msra.mxu0 %v3358
  %4519 = vmatpush.bf16.msra.mxu0 %v3354
  %4520 = vmatpush.bf16.msra.mxu0 %v3350
  %4521 = vmatpush.bf16.msra.mxu0 %v3346
  %4522 = vmatpush.bf16.msra.mxu0 %v3342
  %4523 = vmatpush.bf16.msra.mxu0 %v3338
  %4524 = vmatmul.bf16.gmra.mxu0 %v4512
  %v4525 = vpop.f32.mrf.mxu0
  %v4526 = vadd.f32 %v3138, %v4525
  %v4527 = vpop.f32.mrf.mxu0
  %4528 = vdwg.mxu0
  %4529 = vmatpush.bf16.msra.mxu0 %v3398
  %4530 = vmatpush.bf16.msra.mxu0 %v3394
  %4531 = vmatpush.bf16.msra.mxu0 %v3390
  %4532 = vmatpush.bf16.msra.mxu0 %v3386
  %4533 = vmatpush.bf16.msra.mxu0 %v3382
  %4534 = vmatpush.bf16.msra.mxu0 %v3378
  %4535 = vmatpush.bf16.msra.mxu0 %v3374
  %4536 = vmatpush.bf16.msra.mxu0 %v3370
  %4537 = vmatmul.bf16.gmra.mxu0 %v4513
  %v4538 = vpop.f32.mrf.mxu0
  %v4539 = vadd.f32 %v4526, %v4538
  %v4540 = vpop.f32.mrf.mxu0
  %4541 = vdwg.mxu0
  %4542 = vmatpush.bf16.msra.mxu0 %v3367
  %4543 = vmatpush.bf16.msra.mxu0 %v3363
  %4544 = vmatpush.bf16.msra.mxu0 %v3359
  %4545 = vmatpush.bf16.msra.mxu0 %v3355
  %4546 = vmatpush.bf16.msra.mxu0 %v3351
  %4547 = vmatpush.bf16.msra.mxu0 %v3347
  %4548 = vmatpush.bf16.msra.mxu0 %v3343
  %4549 = vmatpush.bf16.msra.mxu0 %v3339
  %4550 = vmatmul.bf16.gmra.mxu0 %v4512
  %v4551 = vpop.f32.mrf.mxu0
  %v4552 = vadd.f32 %v3139, %v4551
  %v4553 = vpop.f32.mrf.mxu0
  %4554 = vdwg.mxu0
  %4555 = vmatpush.bf16.msra.mxu0 %v3399
  %4556 = vmatpush.bf16.msra.mxu0 %v3395
  %4557 = vmatpush.bf16.msra.mxu0 %v3391
  %4558 = vmatpush.bf16.msra.mxu0 %v3387
  %4559 = vmatpush.bf16.msra.mxu0 %v3383
  %4560 = vmatpush.bf16.msra.mxu0 %v3379
  %4561 = vmatpush.bf16.msra.mxu0 %v3375
  %4562 = vmatpush.bf16.msra.mxu0 %v3371
  %4563 = vmatmul.bf16.gmra.mxu0 %v4513
  %v4564 = vpop.f32.mrf.mxu0
  %v4565 = vadd.f32 %v4552, %v4564
  %v4566 = vpop.f32.mrf.mxu0
  %4567 = vdwg.mxu0
  %4568 = vmatpush.bf16.msra.mxu0 %v3368
  %4569 = vmatpush.bf16.msra.mxu0 %v3364
  %4570 = vmatpush.bf16.msra.mxu0 %v3360
  %4571 = vmatpush.bf16.msra.mxu0 %v3356
  %4572 = vmatpush.bf16.msra.mxu0 %v3352
  %4573 = vmatpush.bf16.msra.mxu0 %v3348
  %4574 = vmatpush.bf16.msra.mxu0 %v3344
  %4575 = vmatpush.bf16.msra.mxu0 %v3340
  %4576 = vmatmul.bf16.gmra.mxu0 %v4512
  %v4577 = vpop.f32.mrf.mxu0
  %v4578 = vadd.f32 %v3140, %v4577
  %v4579 = vpop.f32.mrf.mxu0
  %4580 = vdwg.mxu0
  %4581 = vmatpush.bf16.msra.mxu0 %v3400
  %4582 = vmatpush.bf16.msra.mxu0 %v3396
  %4583 = vmatpush.bf16.msra.mxu0 %v3392
  %4584 = vmatpush.bf16.msra.mxu0 %v3388
  %4585 = vmatpush.bf16.msra.mxu0 %v3384
  %4586 = vmatpush.bf16.msra.mxu0 %v3380
  %4587 = vmatpush.bf16.msra.mxu0 %v3376
  %4588 = vmatpush.bf16.msra.mxu0 %v3372
  %4589 = vmatmul.bf16.gmra.mxu0 %v4513
  %v4590 = vpop.f32.mrf.mxu0
  %v4591 = vadd.f32 %v4578, %v4590
  %v4592 = vpop.f32.mrf.mxu0
  %4593 = vdwg.mxu0
  %4594 = vmatpush.bf16.msra.mxu0 %v3369
  %4595 = vmatpush.bf16.msra.mxu0 %v3365
  %4596 = vmatpush.bf16.msra.mxu0 %v3361
  %4597 = vmatpush.bf16.msra.mxu0 %v3357
  %4598 = vmatpush.bf16.msra.mxu0 %v3353
  %4599 = vmatpush.bf16.msra.mxu0 %v3349
  %4600 = vmatpush.bf16.msra.mxu0 %v3345
  %4601 = vmatpush.bf16.msra.mxu0 %v3341
  %4602 = vmatmul.bf16.gmra.mxu0 %v4512
  %v4603 = vpop.f32.mrf.mxu0
  %v4604 = vadd.f32 %v3141, %v4603
  %v4605 = vpop.f32.mrf.mxu0
  %4606 = vdwg.mxu0
  %4607 = vmatpush.bf16.msra.mxu0 %v3401
  %4608 = vmatpush.bf16.msra.mxu0 %v3397
  %4609 = vmatpush.bf16.msra.mxu0 %v3393
  %4610 = vmatpush.bf16.msra.mxu0 %v3389
  %4611 = vmatpush.bf16.msra.mxu0 %v3385
  %4612 = vmatpush.bf16.msra.mxu0 %v3381
  %4613 = vmatpush.bf16.msra.mxu0 %v3377
  %4614 = vmatpush.bf16.msra.mxu0 %v3373
  %4615 = vmatmul.bf16.gmra.mxu0 %v4513
  %v4616 = vpop.f32.mrf.mxu0
  %v4617 = vadd.f32 %v4604, %v4616
  %v4618 = vpop.f32.mrf.mxu0
  %4619 = vdwg.mxu0
  %v4620 = vxor.u32 %v4539, 2147483648
  %v4621 = vmul.f32 %v4620, 1.442695
  %v4622 = vpow.pop %v4621
  %v4623 = vadd.f32 %v4622, 1.0
  %v4624 = vrcp.pop %v4623
  %v4625 = vmul.f32 %v4623, %v4624
  %v4626 = vsub.f32 1.0, %v4625
  %v4627 = vmul.f32 %v4624, %v4626
  %v4628 = vadd.f32 %v4624, %v4627
  %vm4629 = vweird.f32 %v4623
  %vm4630 = vweird.f32 %v4624
  %vm4631 = vmor %vm4629, %vm4630
  %v4632 = vsel %vm4631, %v4624, %v4628
  %v4633 = vand.u32 2147483647, %v4623
  %vm4634 = vcmp.eq.f32.partialorder %v4633, 8.507059e+37
  %v4635 = vand.u32 %v4623, 2147483648
  %v4636 = vor.u32 1.1754944e-38, %v4635
  %v4637 = vsel %vm4634, %v4636, %v4632
  %v4638 = vmul.f32 1.0, %v4637
  %v4639 = vxor.u32 %v4565, 2147483648
  %v4640 = vmul.f32 %v4639, 1.442695
  %v4641 = vpow.pop %v4640
  %v4642 = vadd.f32 %v4641, 1.0
  %v4643 = vrcp.pop %v4642
  %v4644 = vmul.f32 %v4642, %v4643
  %v4645 = vsub.f32 1.0, %v4644
  %v4646 = vmul.f32 %v4643, %v4645
  %v4647 = vadd.f32 %v4643, %v4646
  %vm4648 = vweird.f32 %v4642
  %vm4649 = vweird.f32 %v4643
  %vm4650 = vmor %vm4648, %vm4649
  %v4651 = vsel %vm4650, %v4643, %v4647
  %v4652 = vand.u32 2147483647, %v4642
  %vm4653 = vcmp.eq.f32.partialorder %v4652, 8.507059e+37
  %v4654 = vand.u32 %v4642, 2147483648
  %v4655 = vor.u32 1.1754944e-38, %v4654
  %v4656 = vsel %vm4653, %v4655, %v4651
  %v4657 = vmul.f32 1.0, %v4656
  %v4658 = vtanh.pop %v4591
  %v4659 = vxor.u32 %v4617, 2147483648
  %v4660 = vmul.f32 %v4659, 1.442695
  %v4661 = vpow.pop %v4660
  %v4662 = vadd.f32 %v4661, 1.0
  %v4663 = vrcp.pop %v4662
  %v4664 = vmul.f32 %v4662, %v4663
  %v4665 = vsub.f32 1.0, %v4664
  %v4666 = vmul.f32 %v4663, %v4665
  %v4667 = vadd.f32 %v4663, %v4666
  %vm4668 = vweird.f32 %v4662
  %vm4669 = vweird.f32 %v4663
  %vm4670 = vmor %vm4668, %vm4669
  %v4671 = vsel %vm4670, %v4663, %v4667
  %v4672 = vand.u32 2147483647, %v4662
  %vm4673 = vcmp.eq.f32.partialorder %v4672, 8.507059e+37
  %v4674 = vand.u32 %v4662, 2147483648
  %v4675 = vor.u32 1.1754944e-38, %v4674
  %v4676 = vsel %vm4673, %v4675, %v4671
  %v4677 = vmul.f32 1.0, %v4676
  %v4678 = vmul.f32 %v4657, %v4346
  %v4679 = vmul.f32 %v4638, %v4658
  %v4680 = vadd.f32 %v4678, %v4679
  %v4681 = vtanh.pop %v4680
  %v4682 = vmul.f32 %v4677, %v4681
  %v4683 = vpack.c.bf16 %v4682, %v4682
  %4684 = vmatpush.bf16.msra.mxu0 %v3676
  %4685 = vmatpush.bf16.msra.mxu0 %v3675
  %4686 = vmatpush.bf16.msra.mxu0 %v3674
  %4687 = vmatpush.bf16.msra.mxu0 %v3673
  %4688 = vmatpush.bf16.msra.mxu0 %v3672
  %4689 = vmatpush.bf16.msra.mxu0 %v3671
  %4690 = vmatpush.bf16.msra.mxu0 %v3670
  %4691 = vmatpush.bf16.msra.mxu0 %v3669
  %4692 = vmatmul.bf16.gmra.mxu0 %v4683
  %v4693 = vpop.f32.mrf.mxu0
  %v4694 = vadd.f32 %v3635, %v4693
  %v4695 = vpop.f32.mrf.mxu0
  %4696 = vdwg.mxu0
  %v4698 = vrot.slane %v4694, 1
  %4700 = vst.msk [vmem:[%s8 + $0x3] sm:$0x1] %vm3701, %v4694
  %4701 = vst.msk [vmem:[%s8 + $0xb] sm:$0x1] %vm3701, %v4698
  %v4702 = vunpack.c.l.b16 %v4506
  %v4703 = vpack.c.b16 %v4702, %v4702
  %v4704 = vrot.slane %v4703, 3
  %4706 = vmatpush.bf16.msra.mxu0 %v2981
  %4707 = vmatpush.bf16.msra.mxu0 %v2977
  %4708 = vmatpush.bf16.msra.mxu0 %v2973
  %4709 = vmatpush.bf16.msra.mxu0 %v2969
  %4710 = vmatpush.bf16.msra.mxu0 %v2965
  %4711 = vmatpush.bf16.msra.mxu0 %v2961
  %4712 = vmatpush.bf16.msra.mxu0 %v2957
  %4713 = vmatpush.bf16.msra.mxu0 %v2953
  %4714 = vmatmul.bf16.gmra.mxu0 %v4704
  %v4715 = vpop.f32.mrf.mxu0
  %v4716 = vadd.f32 0.0, %v4715
  %v4717 = vpop.f32.mrf.mxu0
  %4718 = vdwg.mxu0
  %4719 = vmatpush.bf16.msra.mxu0 %v2982
  %4720 = vmatpush.bf16.msra.mxu0 %v2978
  %4721 = vmatpush.bf16.msra.mxu0 %v2974
  %4722 = vmatpush.bf16.msra.mxu0 %v2970
  %4723 = vmatpush.bf16.msra.mxu0 %v2966
  %4724 = vmatpush.bf16.msra.mxu0 %v2962
  %4725 = vmatpush.bf16.msra.mxu0 %v2958
  %4726 = vmatpush.bf16.msra.mxu0 %v2954
  %4727 = vmatmul.bf16.gmra.mxu0 %v4704
  %v4728 = vpop.f32.mrf.mxu0
  %v4729 = vadd.f32 0.0, %v4728
  %v4730 = vpop.f32.mrf.mxu0
  %4731 = vdwg.mxu0
  %4732 = vmatpush.bf16.msra.mxu0 %v2983
  %4733 = vmatpush.bf16.msra.mxu0 %v2979
  %4734 = vmatpush.bf16.msra.mxu0 %v2975
  %4735 = vmatpush.bf16.msra.mxu0 %v2971
  %4736 = vmatpush.bf16.msra.mxu0 %v2967
  %4737 = vmatpush.bf16.msra.mxu0 %v2963
  %4738 = vmatpush.bf16.msra.mxu0 %v2959
  %4739 = vmatpush.bf16.msra.mxu0 %v2955
  %4740 = vmatmul.bf16.gmra.mxu0 %v4704
  %v4741 = vpop.f32.mrf.mxu0
  %v4742 = vadd.f32 0.0, %v4741
  %v4743 = vpop.f32.mrf.mxu0
  %4744 = vdwg.mxu0
  %4745 = vmatpush.bf16.msra.mxu0 %v2984
  %4746 = vmatpush.bf16.msra.mxu0 %v2980
  %4747 = vmatpush.bf16.msra.mxu0 %v2976
  %4748 = vmatpush.bf16.msra.mxu0 %v2972
  %4749 = vmatpush.bf16.msra.mxu0 %v2968
  %4750 = vmatpush.bf16.msra.mxu0 %v2964
  %4751 = vmatpush.bf16.msra.mxu0 %v2960
  %4752 = vmatpush.bf16.msra.mxu0 %v2956
  %4753 = vmatmul.bf16.gmra.mxu0 %v4704
  %v4754 = vpop.f32.mrf.mxu0
  %v4755 = vadd.f32 0.0, %v4754
  %v4756 = vpop.f32.mrf.mxu0
  %4757 = vdwg.mxu0
  %v4758 = vadd.f32 %v2279, %v4716
  %v4759 = vadd.f32 %v2433, %v4729
  %v4760 = vadd.f32 %v2587, %v4742
  %v4761 = vadd.f32 %v2741, %v4755
  %v4762 = vxor.u32 %v4758, 2147483648
  %v4763 = vmul.f32 %v4762, 1.442695
  %v4764 = vpow.pop %v4763
  %v4765 = vadd.f32 %v4764, 1.0
  %v4766 = vrcp.pop %v4765
  %v4767 = vmul.f32 %v4765, %v4766
  %v4768 = vsub.f32 1.0, %v4767
  %v4769 = vmul.f32 %v4766, %v4768
  %v4770 = vadd.f32 %v4766, %v4769
  %vm4771 = vweird.f32 %v4765
  %vm4772 = vweird.f32 %v4766
  %vm4773 = vmor %vm4771, %vm4772
  %v4774 = vsel %vm4773, %v4766, %v4770
  %v4775 = vand.u32 2147483647, %v4765
  %vm4776 = vcmp.eq.f32.partialorder %v4775, 8.507059e+37
  %v4777 = vand.u32 %v4765, 2147483648
  %v4778 = vor.u32 1.1754944e-38, %v4777
  %v4779 = vsel %vm4776, %v4778, %v4774
  %v4780 = vmul.f32 1.0, %v4779
  %v4781 = vxor.u32 %v4759, 2147483648
  %v4782 = vmul.f32 %v4781, 1.442695
  %v4783 = vpow.pop %v4782
  %v4784 = vadd.f32 %v4783, 1.0
  %v4785 = vrcp.pop %v4784
  %v4786 = vmul.f32 %v4784, %v4785
  %v4787 = vsub.f32 1.0, %v4786
  %v4788 = vmul.f32 %v4785, %v4787
  %v4789 = vadd.f32 %v4785, %v4788
  %vm4790 = vweird.f32 %v4784
  %vm4791 = vweird.f32 %v4785
  %vm4792 = vmor %vm4790, %vm4791
  %v4793 = vsel %vm4792, %v4785, %v4789
  %v4794 = vand.u32 2147483647, %v4784
  %vm4795 = vcmp.eq.f32.partialorder %v4794, 8.507059e+37
  %v4796 = vand.u32 %v4784, 2147483648
  %v4797 = vor.u32 1.1754944e-38, %v4796
  %v4798 = vsel %vm4795, %v4797, %v4793
  %v4799 = vmul.f32 1.0, %v4798
  %v4800 = vtanh.pop %v4760
  %v4801 = vxor.u32 %v4761, 2147483648
  %v4802 = vmul.f32 %v4801, 1.442695
  %v4803 = vpow.pop %v4802
  %v4804 = vadd.f32 %v4803, 1.0
  %v4805 = vrcp.pop %v4804
  %v4806 = vmul.f32 %v4804, %v4805
  %v4807 = vsub.f32 1.0, %v4806
  %v4808 = vmul.f32 %v4805, %v4807
  %v4809 = vadd.f32 %v4805, %v4808
  %vm4810 = vweird.f32 %v4804
  %vm4811 = vweird.f32 %v4805
  %vm4812 = vmor %vm4810, %vm4811
  %v4813 = vsel %vm4812, %v4805, %v4809
  %v4814 = vand.u32 2147483647, %v4804
  %vm4815 = vcmp.eq.f32.partialorder %v4814, 8.507059e+37
  %v4816 = vand.u32 %v4804, 2147483648
  %v4817 = vor.u32 1.1754944e-38, %v4816
  %v4818 = vsel %vm4815, %v4817, %v4813
  %v4819 = vmul.f32 1.0, %v4818
  %v4821 = vrot.slane %v4503, 6
  %v4823 = vmul.f32 %v4799, %v4821
  %v4824 = vmul.f32 %v4780, %v4800
  %v4825 = vadd.f32 %v4823, %v4824
  %v4826 = vtanh.pop %v4825
  %v4827 = vmul.f32 %v4819, %v4826
  %v4828 = vpack.c.bf16 %v4827, %v4827
  %4829 = vmatpush.bf16.msra.mxu0 %v3366
  %4830 = vmatpush.bf16.msra.mxu0 %v3362
  %4831 = vmatpush.bf16.msra.mxu0 %v3358
  %4832 = vmatpush.bf16.msra.mxu0 %v3354
  %4833 = vmatpush.bf16.msra.mxu0 %v3350
  %4834 = vmatpush.bf16.msra.mxu0 %v3346
  %4835 = vmatpush.bf16.msra.mxu0 %v3342
  %4836 = vmatpush.bf16.msra.mxu0 %v3338
  %4837 = vmatmul.bf16.gmra.mxu0 %v4828
  %v4838 = vpop.f32.mrf.mxu0
  %v4839 = vadd.f32 %v3138, %v4838
  %v4840 = vpop.f32.mrf.mxu0
  %4841 = vdwg.mxu0
  %4842 = vmatpush.bf16.msra.mxu0 %v3398
  %4843 = vmatpush.bf16.msra.mxu0 %v3394
  %4844 = vmatpush.bf16.msra.mxu0 %v3390
  %4845 = vmatpush.bf16.msra.mxu0 %v3386
  %4846 = vmatpush.bf16.msra.mxu0 %v3382
  %4847 = vmatpush.bf16.msra.mxu0 %v3378
  %4848 = vmatpush.bf16.msra.mxu0 %v3374
  %4849 = vmatpush.bf16.msra.mxu0 %v3370
  %4850 = vmatmul.bf16.gmra.mxu0 %v4683
  %v4851 = vpop.f32.mrf.mxu0
  %v4852 = vadd.f32 %v4839, %v4851
  %v4853 = vpop.f32.mrf.mxu0
  %4854 = vdwg.mxu0
  %4855 = vmatpush.bf16.msra.mxu0 %v3367
  %4856 = vmatpush.bf16.msra.mxu0 %v3363
  %4857 = vmatpush.bf16.msra.mxu0 %v3359
  %4858 = vmatpush.bf16.msra.mxu0 %v3355
  %4859 = vmatpush.bf16.msra.mxu0 %v3351
  %4860 = vmatpush.bf16.msra.mxu0 %v3347
  %4861 = vmatpush.bf16.msra.mxu0 %v3343
  %4862 = vmatpush.bf16.msra.mxu0 %v3339
  %4863 = vmatmul.bf16.gmra.mxu0 %v4828
  %v4864 = vpop.f32.mrf.mxu0
  %v4865 = vadd.f32 %v3139, %v4864
  %v4866 = vpop.f32.mrf.mxu0
  %4867 = vdwg.mxu0
  %4868 = vmatpush.bf16.msra.mxu0 %v3399
  %4869 = vmatpush.bf16.msra.mxu0 %v3395
  %4870 = vmatpush.bf16.msra.mxu0 %v3391
  %4871 = vmatpush.bf16.msra.mxu0 %v3387
  %4872 = vmatpush.bf16.msra.mxu0 %v3383
  %4873 = vmatpush.bf16.msra.mxu0 %v3379
  %4874 = vmatpush.bf16.msra.mxu0 %v3375
  %4875 = vmatpush.bf16.msra.mxu0 %v3371
  %4876 = vmatmul.bf16.gmra.mxu0 %v4683
  %v4877 = vpop.f32.mrf.mxu0
  %v4878 = vadd.f32 %v4865, %v4877
  %v4879 = vpop.f32.mrf.mxu0
  %4880 = vdwg.mxu0
  %4881 = vmatpush.bf16.msra.mxu0 %v3368
  %4882 = vmatpush.bf16.msra.mxu0 %v3364
  %4883 = vmatpush.bf16.msra.mxu0 %v3360
  %4884 = vmatpush.bf16.msra.mxu0 %v3356
  %4885 = vmatpush.bf16.msra.mxu0 %v3352
  %4886 = vmatpush.bf16.msra.mxu0 %v3348
  %4887 = vmatpush.bf16.msra.mxu0 %v3344
  %4888 = vmatpush.bf16.msra.mxu0 %v3340
  %4889 = vmatmul.bf16.gmra.mxu0 %v4828
  %v4890 = vpop.f32.mrf.mxu0
  %v4891 = vadd.f32 %v3140, %v4890
  %v4892 = vpop.f32.mrf.mxu0
  %4893 = vdwg.mxu0
  %4894 = vmatpush.bf16.msra.mxu0 %v3400
  %4895 = vmatpush.bf16.msra.mxu0 %v3396
  %4896 = vmatpush.bf16.msra.mxu0 %v3392
  %4897 = vmatpush.bf16.msra.mxu0 %v3388
  %4898 = vmatpush.bf16.msra.mxu0 %v3384
  %4899 = vmatpush.bf16.msra.mxu0 %v3380
  %4900 = vmatpush.bf16.msra.mxu0 %v3376
  %4901 = vmatpush.bf16.msra.mxu0 %v3372
  %4902 = vmatmul.bf16.gmra.mxu0 %v4683
  %v4903 = vpop.f32.mrf.mxu0
  %v4904 = vadd.f32 %v4891, %v4903
  %v4905 = vpop.f32.mrf.mxu0
  %4906 = vdwg.mxu0
  %4907 = vmatpush.bf16.msra.mxu0 %v3369
  %4908 = vmatpush.bf16.msra.mxu0 %v3365
  %4909 = vmatpush.bf16.msra.mxu0 %v3361
  %4910 = vmatpush.bf16.msra.mxu0 %v3357
  %4911 = vmatpush.bf16.msra.mxu0 %v3353
  %4912 = vmatpush.bf16.msra.mxu0 %v3349
  %4913 = vmatpush.bf16.msra.mxu0 %v3345
  %4914 = vmatpush.bf16.msra.mxu0 %v3341
  %4915 = vmatmul.bf16.gmra.mxu0 %v4828
  %v4916 = vpop.f32.mrf.mxu0
  %v4917 = vadd.f32 %v3141, %v4916
  %v4918 = vpop.f32.mrf.mxu0
  %4919 = vdwg.mxu0
  %4920 = vmatpush.bf16.msra.mxu0 %v3401
  %4921 = vmatpush.bf16.msra.mxu0 %v3397
  %4922 = vmatpush.bf16.msra.mxu0 %v3393
  %4923 = vmatpush.bf16.msra.mxu0 %v3389
  %4924 = vmatpush.bf16.msra.mxu0 %v3385
  %4925 = vmatpush.bf16.msra.mxu0 %v3381
  %4926 = vmatpush.bf16.msra.mxu0 %v3377
  %4927 = vmatpush.bf16.msra.mxu0 %v3373
  %4928 = vmatmul.bf16.gmra.mxu0 %v4683
  %v4929 = vpop.f32.mrf.mxu0
  %v4930 = vadd.f32 %v4917, %v4929
  %v4931 = vpop.f32.mrf.mxu0
  %4932 = vdwg.mxu0
  %v4933 = vxor.u32 %v4852, 2147483648
  %v4934 = vmul.f32 %v4933, 1.442695
  %v4935 = vpow.pop %v4934
  %v4936 = vadd.f32 %v4935, 1.0
  %v4937 = vrcp.pop %v4936
  %v4938 = vmul.f32 %v4936, %v4937
  %v4939 = vsub.f32 1.0, %v4938
  %v4940 = vmul.f32 %v4937, %v4939
  %v4941 = vadd.f32 %v4937, %v4940
  %vm4942 = vweird.f32 %v4936
  %vm4943 = vweird.f32 %v4937
  %vm4944 = vmor %vm4942, %vm4943
  %v4945 = vsel %vm4944, %v4937, %v4941
  %v4946 = vand.u32 2147483647, %v4936
  %vm4947 = vcmp.eq.f32.partialorder %v4946, 8.507059e+37
  %v4948 = vand.u32 %v4936, 2147483648
  %v4949 = vor.u32 1.1754944e-38, %v4948
  %v4950 = vsel %vm4947, %v4949, %v4945
  %v4951 = vmul.f32 1.0, %v4950
  %v4952 = vxor.u32 %v4878, 2147483648
  %v4953 = vmul.f32 %v4952, 1.442695
  %v4954 = vpow.pop %v4953
  %v4955 = vadd.f32 %v4954, 1.0
  %v4956 = vrcp.pop %v4955
  %v4957 = vmul.f32 %v4955, %v4956
  %v4958 = vsub.f32 1.0, %v4957
  %v4959 = vmul.f32 %v4956, %v4958
  %v4960 = vadd.f32 %v4956, %v4959
  %vm4961 = vweird.f32 %v4955
  %vm4962 = vweird.f32 %v4956
  %vm4963 = vmor %vm4961, %vm4962
  %v4964 = vsel %vm4963, %v4956, %v4960
  %v4965 = vand.u32 2147483647, %v4955
  %vm4966 = vcmp.eq.f32.partialorder %v4965, 8.507059e+37
  %v4967 = vand.u32 %v4955, 2147483648
  %v4968 = vor.u32 1.1754944e-38, %v4967
  %v4969 = vsel %vm4966, %v4968, %v4964
  %v4970 = vmul.f32 1.0, %v4969
  %v4971 = vtanh.pop %v4904
  %v4972 = vxor.u32 %v4930, 2147483648
  %v4973 = vmul.f32 %v4972, 1.442695
  %v4974 = vpow.pop %v4973
  %v4975 = vadd.f32 %v4974, 1.0
  %v4976 = vrcp.pop %v4975
  %v4977 = vmul.f32 %v4975, %v4976
  %v4978 = vsub.f32 1.0, %v4977
  %v4979 = vmul.f32 %v4976, %v4978
  %v4980 = vadd.f32 %v4976, %v4979
  %vm4981 = vweird.f32 %v4975
  %vm4982 = vweird.f32 %v4976
  %vm4983 = vmor %vm4981, %vm4982
  %v4984 = vsel %vm4983, %v4976, %v4980
  %v4985 = vand.u32 2147483647, %v4975
  %vm4986 = vcmp.eq.f32.partialorder %v4985, 8.507059e+37
  %v4987 = vand.u32 %v4975, 2147483648
  %v4988 = vor.u32 1.1754944e-38, %v4987
  %v4989 = vsel %vm4986, %v4988, %v4984
  %v4990 = vmul.f32 1.0, %v4989
  %v4991 = vmul.f32 %v4970, %v4680
  %v4992 = vmul.f32 %v4951, %v4971
  %v4993 = vadd.f32 %v4991, %v4992
  %v4994 = vtanh.pop %v4993
  %v4995 = vmul.f32 %v4990, %v4994
  %v4996 = vpack.c.bf16 %v4995, %v4995
  %4997 = vmatpush.bf16.msra.mxu0 %v3676
  %4998 = vmatpush.bf16.msra.mxu0 %v3675
  %4999 = vmatpush.bf16.msra.mxu0 %v3674
  %5000 = vmatpush.bf16.msra.mxu0 %v3673
  %5001 = vmatpush.bf16.msra.mxu0 %v3672
  %5002 = vmatpush.bf16.msra.mxu0 %v3671
  %5003 = vmatpush.bf16.msra.mxu0 %v3670
  %5004 = vmatpush.bf16.msra.mxu0 %v3669
  %5005 = vmatmul.bf16.gmra.mxu0 %v4996
  %v5006 = vpop.f32.mrf.mxu0
  %v5007 = vadd.f32 %v3635, %v5006
  %v5008 = vpop.f32.mrf.mxu0
  %5009 = vdwg.mxu0
  %v5011 = vrot.slane %v5007, 1
  %5013 = vst.msk [vmem:[%s8 + $0x4] sm:$0x1] %vm3701, %v5007
  %5014 = vst.msk [vmem:[%s8 + $0xc] sm:$0x1] %vm3701, %v5011
  // Predicated region
  $region34: #{net_forward.5} parent=0 // pred_check
    _
  $region35: #{net_forward.5} parent=0 // pred_check_branch
    %5016 = sbr.rel (0) target = $region37
  $region36: #{net_forward.5} parent=0 // pred_region
    _
  $region37: #{net_forward.5} parent=0 // pred_fallthru
    _
  // Predicated region
  $region38: #{net_forward.5} parent=0 // pred_check
    _
  $region39: #{net_forward.5} parent=0 // pred_check_branch
    %5018 = sbr.rel (0) target = $region41
  $region40: #{net_forward.5} parent=0 // pred_region
    _
  $region41: #{net_forward.5} parent=0 // pred_fallthru
    _

</llo_original>
